<compile_context>
chip_gen: v7x
topology: tpu7x:2x2x1
jax: 0.10.0
libtpu: 0.0.40
codegen_flags: <defaults>
</compile_context>

<pallas_src>
import functools

import jax
import jax.numpy as jnp
from jax import lax
from jax.experimental import pallas as pl
from jax.experimental.pallas import tpu as pltpu

NEG_SLOPE = 0.2


# ----------------------------------------------------------------------------
# In-kernel helpers (operate on VMEM refs / values).
# ----------------------------------------------------------------------------
def _lrelu(x):
    return jnp.where(x > 0, x, NEG_SLOPE * x)


def _border_masks(S, W, batched=False):
    """0/1 bf16 masks killing the wrapped-around dj=-1 / dj=+1 taps."""
    if batched:
        col = lax.broadcasted_iota(jnp.int32, (1, S, 1), 1) % W
    else:
        col = lax.broadcasted_iota(jnp.int32, (S, 1), 0) % W
    mask_l = (col >= 1).astype(jnp.bfloat16)          # tap dj = -1 valid iff w > 0
    mask_r = (col <= W - 2).astype(jnp.bfloat16)      # tap dj = +1 valid iff w < W-1
    return mask_l, mask_r


def _zero_pad_rows(xpad_ref, S, W):
    """Zero only the 2*(W+1) padding rows of the flattened padded slab."""
    pad = W + 1
    if len(xpad_ref.shape) == 2:
        z = jnp.zeros((pad, xpad_ref.shape[1]), xpad_ref.dtype)
        xpad_ref[:pad, :] = z
        xpad_ref[pad + S:, :] = z
    else:
        z = jnp.zeros((xpad_ref.shape[0], pad, xpad_ref.shape[2]), xpad_ref.dtype)
        xpad_ref[:, :pad, :] = z
        xpad_ref[:, pad + S:, :] = z


def _conv3x3_lrelu(patch_fn, w_ref, b_ref, S, W, mask_l, mask_r):
    """3x3 'same' conv + LeakyReLU as ONE im2col matmul (K = 9*Cin), f32 accum.

    patch_fn(base) returns the (..., S, Cin) slice of the zero-padded,
    row-flattened slab at constant offset `base`.  Weight rows are ordered
    (kh, kw, cin); the lane-concatenation below matches that ordering.
    """
    pieces = []
    for di in (-1, 0, 1):
        for dj in (-1, 0, 1):
            base = (di + 1) * W + (dj + 1)
            p = patch_fn(base).astype(jnp.bfloat16)
            if dj == -1:
                p = p * mask_l
            elif dj == 1:
                p = p * mask_r
            pieces.append(p)
    col = jnp.concatenate(pieces, axis=-1)             # (..., S, 9*Cin) bf16
    if col.ndim == 3:
        col = col.reshape(col.shape[0] * S, col.shape[-1])
    acc = jnp.dot(col, w_ref[...], preferred_element_type=jnp.float32) + b_ref[...]
    return _lrelu(acc)


def _avg_pool2(x, H, W, scratch_ref):
    """2x2 average pool of a row-flattened (H*W, C) value -> (H/2*W/2, C).

    Vertical pairs via contiguous slices, horizontal pairs via stride-2 loads
    from `scratch_ref` (shape (H/2*W, C)).  3 VPU adds, no matmul.
    """
    Ho, Wo = H // 2, W // 2
    C = x.shape[-1]
    xr = x.reshape(Ho, 2 * W, C)
    vsum = xr[:, :W, :] + xr[:, W:, :]                 # rows 2ho + rows 2ho+1
    scratch_ref[...] = vsum.reshape(Ho * W, C)         # row index = ho*W + w
    even = scratch_ref[pl.ds(0, Ho * Wo, stride=2), :]  # (ho, 2wo)
    odd = scratch_ref[pl.ds(1, Ho * Wo, stride=2), :]   # (ho, 2wo+1)
    return (even + odd) * 0.25                          # row index = ho*Wo + wo


# ----------------------------------------------------------------------------
# Kernels
# ----------------------------------------------------------------------------
def _entry_kernel(alpha_ref, x_ref, wn_ref, bn_ref, wo_ref, bo_ref,
                  w1_ref, b1_ref, w2_ref, b2_ref, o_ref,
                  xpad_ref, pmid_ref, pimg_ref, *, H, W):
    """Fused fade-in entry: pool(img)+fromRGB_old, fromRGB_new+MiddleBlock, lerp."""
    S = H * W
    mask_l, mask_r = _border_masks(S, W)
    _zero_pad_rows(xpad_ref, S, W)

    img = x_ref[0]                                               # (S, Cimg) f32

    # new path: fromRGB at full resolution (1x1 conv == per-pixel matmul) ...
    new = jnp.dot(img.astype(jnp.bfloat16), wn_ref[...],
                  preferred_element_type=jnp.float32) + bn_ref[...]
    new = _lrelu(new)

    # ... then the first MiddleBlock; the intermediate never leaves VMEM.
    patch = lambda b: xpad_ref[b:b + S, :]
    xpad_ref[W + 1:W + 1 + S, :] = new
    h1 = _conv3x3_lrelu(patch, w1_ref, b1_ref, S, W, mask_l, mask_r)
    xpad_ref[W + 1:W + 1 + S, :] = h1
    h2 = _conv3x3_lrelu(patch, w2_ref, b2_ref, S, W, mask_l, mask_r)
    new_res = _avg_pool2(h2, H, W, pmid_ref)                     # (S/4, C1)

    # old path: avg-pool the raw image, fromRGB at the lower resolution.
    img_p = _avg_pool2(img, H, W, pimg_ref)                      # (S/4, Cimg)
    old = jnp.dot(img_p.astype(jnp.bfloat16), wo_ref[...],
                  preferred_element_type=jnp.float32) + bo_ref[...]
    old = _lrelu(old)

    a = alpha_ref[0, 0]
    o_ref[0] = (a * new_res + (1.0 - a) * old).astype(o_ref.dtype)


def _middle_kernel(x_ref, w1_ref, b1_ref, w2_ref, b2_ref, o_ref,
                   xpad_ref, pool_ref, *, H, W):
    """Fused MiddleBlock: conv3x3+LReLU -> conv3x3+LReLU -> 2x2 avg-pool."""
    S = H * W
    mask_l, mask_r = _border_masks(S, W)
    _zero_pad_rows(xpad_ref, S, W)
    patch = lambda b: xpad_ref[b:b + S, :]
    xpad_ref[W + 1:W + 1 + S, :] = x_ref[0]
    h1 = _conv3x3_lrelu(patch, w1_ref, b1_ref, S, W, mask_l, mask_r)
    xpad_ref[W + 1:W + 1 + S, :] = h1
    h2 = _conv3x3_lrelu(patch, w2_ref, b2_ref, S, W, mask_l, mask_r)
    o_ref[0] = _avg_pool2(h2, H, W, pool_ref).astype(o_ref.dtype)


def _final_kernel(x_ref, w1_ref, b1_ref, w2_ref, b2_ref, wl_ref, bl_ref,
                  o_ref, xpad_ref, *, H, W):
    """Fused FinalBlock over the whole batch: conv3x3 + 4x4-valid conv + linear."""
    N, S, C = x_ref.shape
    mask_l, mask_r = _border_masks(S, W, batched=True)
    _zero_pad_rows(xpad_ref, S, W)
    xpad_ref[:, W + 1:W + 1 + S, :] = x_ref[...]
    h1 = _conv3x3_lrelu(lambda b: xpad_ref[:, b:b + S, :],
                        w1_ref, b1_ref, S, W, mask_l, mask_r)    # (N*S, C)
    # 4x4 'valid' conv at the 4x4 base resolution == one matmul over the
    # flattened (kh, kw, c) patch; build the patch by lane-concatenation.
    h1 = h1.reshape(N, S, C)
    flat = jnp.concatenate([h1[:, s, :] for s in range(S)], axis=-1)  # (N, S*C)
    h2 = jnp.dot(flat.astype(jnp.bfloat16), w2_ref[...],
                 preferred_element_type=jnp.float32) + b2_ref[...]
    h2 = _lrelu(h2)
    # TODO(synk): ProGAN usually adds a minibatch-stddev feature here; the spec's
    # FinalBlock is undefined, so it is omitted.
    out = jnp.dot(h2.astype(jnp.bfloat16), wl_ref[...],
                  preferred_element_type=jnp.float32) + bl_ref[...]
    o_ref[...] = out.astype(o_ref.dtype)


# ----------------------------------------------------------------------------
# Wrappers (pallas_call setup only; no HBM-side pad / cast passes)
# ----------------------------------------------------------------------------
def entry_block(mid_p, init_new_p, init_old_p, x_flat, H, W, alpha):
    N, S, Cimg = x_flat.shape
    C0 = mid_p["w1"].shape[1]
    C1 = mid_p["w2"].shape[1]
    assert init_new_p["w"].shape[1] == C0 and init_old_p["w"].shape[1] == C1
    Ho, Wo = H // 2, W // 2
    PADN = S + 2 * W + 2
    alpha2d = jnp.full((1, 1), alpha, jnp.float32)

    flops = N * (2 * S * Cimg * C0 + 18 * S * C0 * C0 + 18 * S * C0 * C1
                 + 2 * Ho * Wo * Cimg * C1)
    bytes_accessed = (N * S * Cimg * 4 + N * Ho * Wo * C1 * 4
                      + 2 * (Cimg * (C0 + C1) + 9 * C0 * (C0 + C1))
                      + 4 * (2 * C0 + 2 * C1))

    return pl.pallas_call(
        functools.partial(_entry_kernel, H=H, W=W),
        out_shape=jax.ShapeDtypeStruct((N, Ho * Wo, C1), jnp.float32),
        grid=(N,),
        in_specs=[pl.BlockSpec(memory_space=pltpu.MemorySpace.SMEM),
                  pl.BlockSpec((1, S, Cimg), lambda n: (n, 0, 0)),
                  pl.BlockSpec((Cimg, C0), lambda n: (0, 0)),
                  pl.BlockSpec((1, C0), lambda n: (0, 0)),
                  pl.BlockSpec((Cimg, C1), lambda n: (0, 0)),
                  pl.BlockSpec((1, C1), lambda n: (0, 0)),
                  pl.BlockSpec((9 * C0, C0), lambda n: (0, 0)),
                  pl.BlockSpec((1, C0), lambda n: (0, 0)),
                  pl.BlockSpec((9 * C0, C1), lambda n: (0, 0)),
                  pl.BlockSpec((1, C1), lambda n: (0, 0))],
        out_specs=pl.BlockSpec((1, Ho * Wo, C1), lambda n: (n, 0, 0)),
        scratch_shapes=[pltpu.VMEM((PADN, C0), jnp.float32),
                        pltpu.VMEM((Ho * W, C1), jnp.float32),
                        pltpu.VMEM((Ho * W, Cimg), jnp.float32)],
        compiler_params=pltpu.CompilerParams(dimension_semantics=("parallel",)),
        cost_estimate=pl.CostEstimate(flops=flops, transcendentals=0,
                                      bytes_accessed=bytes_accessed),
    )(alpha2d, x_flat, init_new_p["w"], init_new_p["b"],
      init_old_p["w"], init_old_p["b"],
      mid_p["w1"], mid_p["b1"], mid_p["w2"], mid_p["b2"])


def middle_block(p, x_flat, H, W):
    N, S, Cin = x_flat.shape
    Cout = p["w2"].shape[1]
    Ho, Wo = H // 2, W // 2
    PADN = S + 2 * W + 2

    flops = N * (18 * S * Cin * Cin + 18 * S * Cin * Cout)
    bytes_accessed = (N * S * Cin * 4 + N * Ho * Wo * Cout * 4
                      + 2 * 9 * Cin * (Cin + Cout) + 4 * (Cin + Cout))

    return pl.pallas_call(
        functools.partial(_middle_kernel, H=H, W=W),
        out_shape=jax.ShapeDtypeStruct((N, Ho * Wo, Cout), jnp.float32),
        grid=(N,),
        in_specs=[pl.BlockSpec((1, S, Cin), lambda n: (n, 0, 0)),
                  pl.BlockSpec((9 * Cin, Cin), lambda n: (0, 0)),
                  pl.BlockSpec((1, Cin), lambda n: (0, 0)),
                  pl.BlockSpec((9 * Cin, Cout), lambda n: (0, 0)),
                  pl.BlockSpec((1, Cout), lambda n: (0, 0))],
        out_specs=pl.BlockSpec((1, Ho * Wo, Cout), lambda n: (n, 0, 0)),
        scratch_shapes=[pltpu.VMEM((PADN, Cin), jnp.float32),
                        pltpu.VMEM((Ho * W, Cout), jnp.float32)],
        compiler_params=pltpu.CompilerParams(dimension_semantics=("parallel",)),
        cost_estimate=pl.CostEstimate(flops=flops, transcendentals=0,
                                      bytes_accessed=bytes_accessed),
    )(x_flat, p["w1"], p["b1"], p["w2"], p["b2"])


def initial_block(p, x_flat):
    """1x1 'fromRGB' conv + LeakyReLU (only used on the current_depth == 0 path)."""
    N, S, Cin = x_flat.shape
    Cout = p["w"].shape[1]

    def kernel(x_ref, w_ref, b_ref, o_ref):
        y = jnp.dot(x_ref[0].astype(jnp.bfloat16), w_ref[...],
                    preferred_element_type=jnp.float32) + b_ref[...]
        o_ref[0] = _lrelu(y).astype(o_ref.dtype)

    return pl.pallas_call(
        kernel,
        out_shape=jax.ShapeDtypeStruct((N, S, Cout), jnp.float32),
        grid=(N,),
        in_specs=[pl.BlockSpec((1, S, Cin), lambda n: (n, 0, 0)),
                  pl.BlockSpec((Cin, Cout), lambda n: (0, 0)),
                  pl.BlockSpec((1, Cout), lambda n: (0, 0))],
        out_specs=pl.BlockSpec((1, S, Cout), lambda n: (n, 0, 0)),
        compiler_params=pltpu.CompilerParams(dimension_semantics=("parallel",)),
    )(x_flat, p["w"], p["b"])


def final_block(p, x_flat, H, W):
    N, S, C = x_flat.shape
    PADN = S + 2 * W + 2
    return pl.pallas_call(
        functools.partial(_final_kernel, H=H, W=W),
        out_shape=jax.ShapeDtypeStruct((N, 1), jnp.float32),
        scratch_shapes=[pltpu.VMEM((N, PADN, C), jnp.float32)],
    )(x_flat, p["w1"], p["b1"], p["w2"], p["b2"], p["wl"], p["bl"])


def discriminator_forward(params, x_nchw, current_depth, alpha=1.0):
    # External interface is NCHW; internally flattened channels-last (N, H*W, C).
    N, _, H, W = x_nchw.shape
    x = jnp.transpose(x_nchw, (0, 2, 3, 1)).astype(jnp.float32).reshape(N, H * W, -1)
    init_p, mid_p = params["initial"], params["middle"]
    if current_depth != 0:
        # pool + fromRGB(old) + fromRGB(new) + MiddleBlock + fade-in: one kernel.
        x = entry_block(mid_p[current_depth - 1], init_p[current_depth],
                        init_p[current_depth - 1], x, H, W, alpha)
        cH, cW = H // 2, W // 2
        for i in reversed(range(current_depth - 1)):
            x = middle_block(mid_p[i], x, cH, cW)
            cH, cW = cH // 2, cW // 2
    else:
        x = initial_block(init_p[0], x)
        cH, cW = H, W
    return final_block(params["final"], x, cH, cW)


# ----------------------------------------------------------------------------
# Parameters: PyTorch-layout init, then one-time kernel-ready preparation
# (transpose/reshape to (kh*kw*cin, cout), bf16 weights, (1, C) f32 biases).
# ----------------------------------------------------------------------------
def init_params(key, cfg):
    depth, nc = cfg["depth"], cfg["num_channels"]
    mx, in_dim = cfg["max_channels"], cfg["image_channels"]
    keys = iter(jax.random.split(key, 64))

    def conv_init(out_c, in_c, kh, kw):
        w = jax.random.normal(next(keys), (out_c, in_c, kh, kw), jnp.float32) * 0.1
        b = jax.random.normal(next(keys), (out_c,), jnp.float32) * 0.01
        return w, b

    initial = []
    for i in reversed(range(depth + 1)):
        out_c = min(mx, nc * 2 ** i)
        w, b = conv_init(out_c, in_dim, 1, 1)
        initial.append({"w": w, "b": b})

    middle = []
    for i in reversed(range(depth)):
        in_c = min(mx, nc * 2 ** i)
        out_c = min(mx, nc * 2 ** (i + 1))
        w1, b1 = conv_init(in_c, in_c, 3, 3)
        w2, b2 = conv_init(out_c, in_c, 3, 3)
        middle.append({"w1": w1, "b1": b1, "w2": w2, "b2": b2})

    out_c = min(mx, nc * 2 ** depth)
    w1, b1 = conv_init(out_c, out_c, 3, 3)
    w2, b2 = conv_init(out_c, out_c, 4, 4)
    wl = jax.random.normal(next(keys), (out_c, 1), jnp.float32) * 0.1
    bl = jnp.zeros((1,), jnp.float32)
    final = {"w1": w1, "b1": b1, "w2": w2, "b2": b2, "wl": wl, "bl": bl}
    return {"initial": initial, "middle": middle, "final": final}


def prepare_params(raw):
    def conv_w(w):   # (out, in, kh, kw) -> (kh*kw*in, out) bf16, rows = (kh, kw, cin)
        o, i, kh, kw = w.shape
        return jnp.transpose(w, (2, 3, 1, 0)).reshape(kh * kw * i, o).astype(jnp.bfloat16)

    def bias(b):
        return jnp.asarray(b, jnp.float32).reshape(1, -1)

    initial = [{"w": conv_w(p["w"]), "b": bias(p["b"])} for p in raw["initial"]]
    middle = [{"w1": conv_w(p["w1"]), "b1": bias(p["b1"]),
               "w2": conv_w(p["w2"]), "b2": bias(p["b2"])} for p in raw["middle"]]
    f = raw["final"]
    final = {"w1": conv_w(f["w1"]), "b1": bias(f["b1"]),
             "w2": conv_w(f["w2"]), "b2": bias(f["b2"]),
             "wl": f["wl"].astype(jnp.bfloat16), "bl": bias(f["bl"])}
    return {"initial": initial, "middle": middle, "final": final}


if __name__ == "__main__":
    # GANConfig: latent_dim=32, image_channels=3, num_channels=8, max_channels=32, depth=2
    cfg = dict(latent_dim=32, image_channels=3, num_channels=8, max_channels=32, depth=2)
    current_depth = 2                     # fully grown: 4x4 base res * 2**2 = 16x16 input
    key = jax.random.PRNGKey(0)
    pkey, xkey = jax.random.split(key)
    params = prepare_params(init_params(pkey, cfg))

    x = jax.random.normal(xkey, (2, cfg["image_channels"], 16, 16), jnp.float32)  # NCHW

    # alpha is a traced argument (SMEM scalar inside the entry kernel).
    fwd = jax.jit(lambda p, xx, a: discriminator_forward(p, xx, current_depth, a))
    out = jax.block_until_ready(fwd(params, x, jnp.float32(0.7)))

    assert out.shape == (2, 1), out.shape
    assert bool(jnp.all(jnp.isfinite(out)))
    print("KERNEL_OK")
</pallas_src>

<mosaic_0001>
module attributes {stable_mosaic.version = 11 : i64} {
  func.func @_entry_kernel(%arg0: i32, %arg1: memref<1x1xf32, #tpu.memory_space<smem>>, %arg2: memref<1x256x3xf32, #tpu.memory_space<vmem>>, %arg3: memref<3x8xbf16, #tpu.memory_space<vmem>>, %arg4: memref<1x8xf32, #tpu.memory_space<vmem>>, %arg5: memref<3x16xbf16, #tpu.memory_space<vmem>>, %arg6: memref<1x16xf32, #tpu.memory_space<vmem>>, %arg7: memref<72x8xbf16, #tpu.memory_space<vmem>>, %arg8: memref<1x8xf32, #tpu.memory_space<vmem>>, %arg9: memref<72x16xbf16, #tpu.memory_space<vmem>>, %arg10: memref<1x16xf32, #tpu.memory_space<vmem>>, %arg11: memref<1x64x16xf32, #tpu.memory_space<vmem>>, %arg12: memref<290x8xf32, #tpu.memory_space<vmem>>, %arg13: memref<128x16xf32, #tpu.memory_space<vmem>>, %arg14: memref<128x3xf32, #tpu.memory_space<vmem>>) attributes {dimension_semantics = [#tpu.dimension_semantics<parallel>], iteration_bounds = array<i64: 2>, scalar_prefetch = 0 : i64, scratch_operands = 3 : i64, tpu.core_type = #tpu.core_type<tc>, window_params = [{transform_indices = @transform_0, window_bounds = array<i64: 1, 1>}, {transform_indices = @transform_1, window_bounds = array<i64: 1, 256, 3>}, {pipeline_mode = #tpu.pipeline_mode<synchronous>, transform_indices = @transform_2, window_bounds = array<i64: 3, 8>}, {pipeline_mode = #tpu.pipeline_mode<synchronous>, transform_indices = @transform_3, window_bounds = array<i64: 1, 8>}, {pipeline_mode = #tpu.pipeline_mode<synchronous>, transform_indices = @transform_4, window_bounds = array<i64: 3, 16>}, {pipeline_mode = #tpu.pipeline_mode<synchronous>, transform_indices = @transform_5, window_bounds = array<i64: 1, 16>}, {pipeline_mode = #tpu.pipeline_mode<synchronous>, transform_indices = @transform_6, window_bounds = array<i64: 72, 8>}, {pipeline_mode = #tpu.pipeline_mode<synchronous>, transform_indices = @transform_7, window_bounds = array<i64: 1, 8>}, {pipeline_mode = #tpu.pipeline_mode<synchronous>, transform_indices = @transform_8, window_bounds = array<i64: 72, 16>}, {pipeline_mode = #tpu.pipeline_mode<synchronous>, transform_indices = @transform_9, window_bounds = array<i64: 1, 16>}, {transform_indices = @transform_10, window_bounds = array<i64: 1, 64, 16>}]} {
    %0 = tpu.iota {dimensions = array<i32: 0>} : vector<256x1xi32>
    %c16_i32 = arith.constant 16 : i32
    %c0_i32 = arith.constant 0 : i32
    %1 = arith.cmpi eq, %c16_i32, %c0_i32 : i32
    %c1_i32 = arith.constant 1 : i32
    %2 = arith.select %1, %c1_i32, %c16_i32 : i32
    %3 = vector.broadcast %2 : i32 to vector<256x1xi32>
    %4 = arith.remsi %0, %3 : vector<256x1xi32>
    %c0_i32_0 = arith.constant 0 : i32
    %5 = vector.broadcast %c0_i32_0 : i32 to vector<256x1xi32>
    %6 = arith.cmpi ne, %4, %5 : vector<256x1xi32>
    %c0_i32_1 = arith.constant 0 : i32
    %7 = vector.broadcast %c0_i32_1 : i32 to vector<256x1xi32>
    %8 = arith.cmpi slt, %4, %7 : vector<256x1xi32>
    %c0_i32_2 = arith.constant 0 : i32
    %9 = arith.cmpi slt, %2, %c0_i32_2 : i32
    %10 = vector.broadcast %9 : i1 to vector<256x1xi1>
    %11 = vector.broadcast %10 : vector<256x1xi1> to vector<256x1xi1>
    %12 = arith.xori %8, %11 : vector<256x1xi1>
    %13 = arith.andi %12, %6 : vector<256x1xi1>
    %14 = vector.broadcast %2 : i32 to vector<256x1xi32>
    %15 = arith.addi %4, %14 : vector<256x1xi32>
    %16 = arith.select %13, %15, %4 : vector<256x1xi1>, vector<256x1xi32>
    %c1_i32_3 = arith.constant 1 : i32
    %17 = vector.broadcast %c1_i32_3 : i32 to vector<256x1xi32>
    %18 = arith.cmpi sge, %16, %17 : vector<256x1xi32>
    %19 = arith.extui %18 : vector<256x1xi1> to vector<256x1xi32>
    %20 = arith.sitofp %19 : vector<256x1xi32> to vector<256x1xf32>
    %21 = arith.truncf %20 : vector<256x1xf32> to vector<256x1xbf16>
    %c14_i32 = arith.constant 14 : i32
    %22 = vector.broadcast %c14_i32 : i32 to vector<256x1xi32>
    %23 = arith.cmpi sle, %16, %22 : vector<256x1xi32>
    %24 = arith.extui %23 : vector<256x1xi1> to vector<256x1xi32>
    %25 = arith.sitofp %24 : vector<256x1xi32> to vector<256x1xf32>
    %26 = arith.truncf %25 : vector<256x1xf32> to vector<256x1xbf16>
    %cst = arith.constant 0.000000e+00 : f32
    %27 = vector.broadcast %cst : f32 to vector<17x8xf32>
    %c0 = arith.constant 0 : index
    %c0_4 = arith.constant 0 : index
    %28 = vector.load %arg12[%c0, %c0_4] : memref<290x8xf32, #tpu.memory_space<vmem>>, vector<17x8xf32>
    tpu.vector_store %arg12[%c0, %c0_4], %27 {strides = array<i32>} : memref<290x8xf32, #tpu.memory_space<vmem>>, vector<17x8xf32>,
    %c273 = arith.constant 273 : index
    %c0_5 = arith.constant 0 : index
    %29 = vector.load %arg12[%c273, %c0_5] : memref<290x8xf32, #tpu.memory_space<vmem>>, vector<17x8xf32>
    tpu.vector_store %arg12[%c273, %c0_5], %27 {strides = array<i32>} : memref<290x8xf32, #tpu.memory_space<vmem>>, vector<17x8xf32>,
    %c0_6 = arith.constant 0 : index
    %c0_7 = arith.constant 0 : index
    %c0_8 = arith.constant 0 : index
    %30 = vector.load %arg2[%c0_6, %c0_7, %c0_8] : memref<1x256x3xf32, #tpu.memory_space<vmem>>, vector<1x256x3xf32>
    %31 = vector.shape_cast %30 : vector<1x256x3xf32> to vector<256x3xf32>
    %32 = arith.truncf %31 : vector<256x3xf32> to vector<256x3xbf16>
    %c0_9 = arith.constant 0 : index
    %c0_10 = arith.constant 0 : index
    %33 = vector.load %arg3[%c0_9, %c0_10] : memref<3x8xbf16, #tpu.memory_space<vmem>>, vector<3x8xbf16>
    %cst_11 = arith.constant dense<0.000000e+00> : vector<256x8xf32>
    %34 = tpu.matmul %32, %33, %cst_11 {dimension_numbers = #tpu.dot_dimension_numbers<[1], [0], [0], [1], [0, 0, 1, 1], [], []>} : vector<256x3xbf16>, vector<3x8xbf16>, vector<256x8xf32> -> vector<256x8xf32>
    %c0_12 = arith.constant 0 : index
    %c0_13 = arith.constant 0 : index
    %35 = vector.load %arg4[%c0_12, %c0_13] : memref<1x8xf32, #tpu.memory_space<vmem>>, vector<1x8xf32>
    %36 = vector.broadcast %35 : vector<1x8xf32> to vector<256x8xf32>
    %37 = arith.addf %34, %36 : vector<256x8xf32>
    %cst_14 = arith.constant 0.000000e+00 : f32
    %38 = vector.broadcast %cst_14 : f32 to vector<256x8xf32>
    %39 = arith.cmpf ogt, %37, %38 : vector<256x8xf32>
    %cst_15 = arith.constant 2.000000e-01 : f32
    %40 = vector.broadcast %cst_15 : f32 to vector<256x8xf32>
    %41 = arith.mulf %40, %37 : vector<256x8xf32>
    %42 = arith.select %39, %37, %41 : vector<256x8xi1>, vector<256x8xf32>
    %c17 = arith.constant 17 : index
    %c0_16 = arith.constant 0 : index
    %43 = vector.load %arg12[%c17, %c0_16] : memref<290x8xf32, #tpu.memory_space<vmem>>, vector<256x8xf32>
    tpu.vector_store %arg12[%c17, %c0_16], %42 {strides = array<i32>} : memref<290x8xf32, #tpu.memory_space<vmem>>, vector<256x8xf32>,
    %c0_17 = arith.constant 0 : index
    %c0_18 = arith.constant 0 : index
    %44 = vector.load %arg12[%c0_17, %c0_18] : memref<290x8xf32, #tpu.memory_space<vmem>>, vector<256x8xf32>
    %45 = arith.truncf %44 : vector<256x8xf32> to vector<256x8xbf16>
    %46 = vector.broadcast %21 : vector<256x1xbf16> to vector<256x8xbf16>
    %47 = arith.mulf %45, %46 : vector<256x8xbf16>
    %c1 = arith.constant 1 : index
    %c0_19 = arith.constant 0 : index
    %48 = vector.load %arg12[%c1, %c0_19] : memref<290x8xf32, #tpu.memory_space<vmem>>, vector<256x8xf32>
    %49 = arith.truncf %48 : vector<256x8xf32> to vector<256x8xbf16>
    %c2 = arith.constant 2 : index
    %c0_20 = arith.constant 0 : index
    %50 = vector.load %arg12[%c2, %c0_20] : memref<290x8xf32, #tpu.memory_space<vmem>>, vector<256x8xf32>
    %51 = arith.truncf %50 : vector<256x8xf32> to vector<256x8xbf16>
    %52 = vector.broadcast %26 : vector<256x1xbf16> to vector<256x8xbf16>
    %53 = arith.mulf %51, %52 : vector<256x8xbf16>
    %c16 = arith.constant 16 : index
    %c0_21 = arith.constant 0 : index
    %54 = vector.load %arg12[%c16, %c0_21] : memref<290x8xf32, #tpu.memory_space<vmem>>, vector<256x8xf32>
    %55 = arith.truncf %54 : vector<256x8xf32> to vector<256x8xbf16>
    %56 = vector.broadcast %21 : vector<256x1xbf16> to vector<256x8xbf16>
    %57 = arith.mulf %55, %56 : vector<256x8xbf16>
    %c17_22 = arith.constant 17 : index
    %c0_23 = arith.constant 0 : index
    %58 = vector.load %arg12[%c17_22, %c0_23] : memref<290x8xf32, #tpu.memory_space<vmem>>, vector<256x8xf32>
    %59 = arith.truncf %58 : vector<256x8xf32> to vector<256x8xbf16>
    %c18 = arith.constant 18 : index
    %c0_24 = arith.constant 0 : index
    %60 = vector.load %arg12[%c18, %c0_24] : memref<290x8xf32, #tpu.memory_space<vmem>>, vector<256x8xf32>
    %61 = arith.truncf %60 : vector<256x8xf32> to vector<256x8xbf16>
    %62 = vector.broadcast %26 : vector<256x1xbf16> to vector<256x8xbf16>
    %63 = arith.mulf %61, %62 : vector<256x8xbf16>
    %c32 = arith.constant 32 : index
    %c0_25 = arith.constant 0 : index
    %64 = vector.load %arg12[%c32, %c0_25] : memref<290x8xf32, #tpu.memory_space<vmem>>, vector<256x8xf32>
    %65 = arith.truncf %64 : vector<256x8xf32> to vector<256x8xbf16>
    %66 = vector.broadcast %21 : vector<256x1xbf16> to vector<256x8xbf16>
    %67 = arith.mulf %65, %66 : vector<256x8xbf16>
    %c33 = arith.constant 33 : index
    %c0_26 = arith.constant 0 : index
    %68 = vector.load %arg12[%c33, %c0_26] : memref<290x8xf32, #tpu.memory_space<vmem>>, vector<256x8xf32>
    %69 = arith.truncf %68 : vector<256x8xf32> to vector<256x8xbf16>
    %c34 = arith.constant 34 : index
    %c0_27 = arith.constant 0 : index
    %70 = vector.load %arg12[%c34, %c0_27] : memref<290x8xf32, #tpu.memory_space<vmem>>, vector<256x8xf32>
    %71 = arith.truncf %70 : vector<256x8xf32> to vector<256x8xbf16>
    %72 = vector.broadcast %26 : vector<256x1xbf16> to vector<256x8xbf16>
    %73 = arith.mulf %71, %72 : vector<256x8xbf16>
    %74 = tpu.concatenate %47, %49, %53, %57, %59, %63, %67, %69, %73 in 1 : vector<256x8xbf16>, vector<256x8xbf16>, vector<256x8xbf16>, vector<256x8xbf16>, vector<256x8xbf16>, vector<256x8xbf16>, vector<256x8xbf16>, vector<256x8xbf16>, vector<256x8xbf16> -> vector<256x72xbf16>
    %c0_28 = arith.constant 0 : index
    %c0_29 = arith.constant 0 : index
    %75 = vector.load %arg7[%c0_28, %c0_29] : memref<72x8xbf16, #tpu.memory_space<vmem>>, vector<72x8xbf16>
    %cst_30 = arith.constant dense<0.000000e+00> : vector<256x8xf32>
    %76 = tpu.matmul %74, %75, %cst_30 {dimension_numbers = #tpu.dot_dimension_numbers<[1], [0], [0], [1], [0, 0, 1, 1], [], []>} : vector<256x72xbf16>, vector<72x8xbf16>, vector<256x8xf32> -> vector<256x8xf32>
    %c0_31 = arith.constant 0 : index
    %c0_32 = arith.constant 0 : index
    %77 = vector.load %arg8[%c0_31, %c0_32] : memref<1x8xf32, #tpu.memory_space<vmem>>, vector<1x8xf32>
    %78 = vector.broadcast %77 : vector<1x8xf32> to vector<256x8xf32>
    %79 = arith.addf %76, %78 : vector<256x8xf32>
    %cst_33 = arith.constant 0.000000e+00 : f32
    %80 = vector.broadcast %cst_33 : f32 to vector<256x8xf32>
    %81 = arith.cmpf ogt, %79, %80 : vector<256x8xf32>
    %cst_34 = arith.constant 2.000000e-01 : f32
    %82 = vector.broadcast %cst_34 : f32 to vector<256x8xf32>
    %83 = arith.mulf %82, %79 : vector<256x8xf32>
    %84 = arith.select %81, %79, %83 : vector<256x8xi1>, vector<256x8xf32>
    %c17_35 = arith.constant 17 : index
    %c0_36 = arith.constant 0 : index
    %85 = vector.load %arg12[%c17_35, %c0_36] : memref<290x8xf32, #tpu.memory_space<vmem>>, vector<256x8xf32>
    tpu.vector_store %arg12[%c17_35, %c0_36], %84 {strides = array<i32>} : memref<290x8xf32, #tpu.memory_space<vmem>>, vector<256x8xf32>,
    %c0_37 = arith.constant 0 : index
    %c0_38 = arith.constant 0 : index
    %86 = vector.load %arg12[%c0_37, %c0_38] : memref<290x8xf32, #tpu.memory_space<vmem>>, vector<256x8xf32>
    %87 = arith.truncf %86 : vector<256x8xf32> to vector<256x8xbf16>
    %88 = vector.broadcast %21 : vector<256x1xbf16> to vector<256x8xbf16>
    %89 = arith.mulf %87, %88 : vector<256x8xbf16>
    %c1_39 = arith.constant 1 : index
    %c0_40 = arith.constant 0 : index
    %90 = vector.load %arg12[%c1_39, %c0_40] : memref<290x8xf32, #tpu.memory_space<vmem>>, vector<256x8xf32>
    %91 = arith.truncf %90 : vector<256x8xf32> to vector<256x8xbf16>
    %c2_41 = arith.constant 2 : index
    %c0_42 = arith.constant 0 : index
    %92 = vector.load %arg12[%c2_41, %c0_42] : memref<290x8xf32, #tpu.memory_space<vmem>>, vector<256x8xf32>
    %93 = arith.truncf %92 : vector<256x8xf32> to vector<256x8xbf16>
    %94 = vector.broadcast %26 : vector<256x1xbf16> to vector<256x8xbf16>
    %95 = arith.mulf %93, %94 : vector<256x8xbf16>
    %c16_43 = arith.constant 16 : index
    %c0_44 = arith.constant 0 : index
    %96 = vector.load %arg12[%c16_43, %c0_44] : memref<290x8xf32, #tpu.memory_space<vmem>>, vector<256x8xf32>
    %97 = arith.truncf %96 : vector<256x8xf32> to vector<256x8xbf16>
    %98 = vector.broadcast %21 : vector<256x1xbf16> to vector<256x8xbf16>
    %99 = arith.mulf %97, %98 : vector<256x8xbf16>
    %c17_45 = arith.constant 17 : index
    %c0_46 = arith.constant 0 : index
    %100 = vector.load %arg12[%c17_45, %c0_46] : memref<290x8xf32, #tpu.memory_space<vmem>>, vector<256x8xf32>
    %101 = arith.truncf %100 : vector<256x8xf32> to vector<256x8xbf16>
    %c18_47 = arith.constant 18 : index
    %c0_48 = arith.constant 0 : index
    %102 = vector.load %arg12[%c18_47, %c0_48] : memref<290x8xf32, #tpu.memory_space<vmem>>, vector<256x8xf32>
    %103 = arith.truncf %102 : vector<256x8xf32> to vector<256x8xbf16>
    %104 = vector.broadcast %26 : vector<256x1xbf16> to vector<256x8xbf16>
    %105 = arith.mulf %103, %104 : vector<256x8xbf16>
    %c32_49 = arith.constant 32 : index
    %c0_50 = arith.constant 0 : index
    %106 = vector.load %arg12[%c32_49, %c0_50] : memref<290x8xf32, #tpu.memory_space<vmem>>, vector<256x8xf32>
    %107 = arith.truncf %106 : vector<256x8xf32> to vector<256x8xbf16>
    %108 = vector.broadcast %21 : vector<256x1xbf16> to vector<256x8xbf16>
    %109 = arith.mulf %107, %108 : vector<256x8xbf16>
    %c33_51 = arith.constant 33 : index
    %c0_52 = arith.constant 0 : index
    %110 = vector.load %arg12[%c33_51, %c0_52] : memref<290x8xf32, #tpu.memory_space<vmem>>, vector<256x8xf32>
    %111 = arith.truncf %110 : vector<256x8xf32> to vector<256x8xbf16>
    %c34_53 = arith.constant 34 : index
    %c0_54 = arith.constant 0 : index
    %112 = vector.load %arg12[%c34_53, %c0_54] : memref<290x8xf32, #tpu.memory_space<vmem>>, vector<256x8xf32>
    %113 = arith.truncf %112 : vector<256x8xf32> to vector<256x8xbf16>
    %114 = vector.broadcast %26 : vector<256x1xbf16> to vector<256x8xbf16>
    %115 = arith.mulf %113, %114 : vector<256x8xbf16>
    %116 = tpu.concatenate %89, %91, %95, %99, %101, %105, %109, %111, %115 in 1 : vector<256x8xbf16>, vector<256x8xbf16>, vector<256x8xbf16>, vector<256x8xbf16>, vector<256x8xbf16>, vector<256x8xbf16>, vector<256x8xbf16>, vector<256x8xbf16>, vector<256x8xbf16> -> vector<256x72xbf16>
    %c0_55 = arith.constant 0 : index
    %c0_56 = arith.constant 0 : index
    %117 = vector.load %arg9[%c0_55, %c0_56] : memref<72x16xbf16, #tpu.memory_space<vmem>>, vector<72x16xbf16>
    %cst_57 = arith.constant dense<0.000000e+00> : vector<256x16xf32>
    %118 = tpu.matmul %116, %117, %cst_57 {dimension_numbers = #tpu.dot_dimension_numbers<[1], [0], [0], [1], [0, 0, 1, 1], [], []>} : vector<256x72xbf16>, vector<72x16xbf16>, vector<256x16xf32> -> vector<256x16xf32>
    %c0_58 = arith.constant 0 : index
    %c0_59 = arith.constant 0 : index
    %119 = vector.load %arg10[%c0_58, %c0_59] : memref<1x16xf32, #tpu.memory_space<vmem>>, vector<1x16xf32>
    %120 = vector.broadcast %119 : vector<1x16xf32> to vector<256x16xf32>
    %121 = arith.addf %118, %120 : vector<256x16xf32>
    %cst_60 = arith.constant 0.000000e+00 : f32
    %122 = vector.broadcast %cst_60 : f32 to vector<256x16xf32>
    %123 = arith.cmpf ogt, %121, %122 : vector<256x16xf32>
    %cst_61 = arith.constant 2.000000e-01 : f32
    %124 = vector.broadcast %cst_61 : f32 to vector<256x16xf32>
    %125 = arith.mulf %124, %121 : vector<256x16xf32>
    %126 = arith.select %123, %121, %125 : vector<256x16xi1>, vector<256x16xf32>
    %127 = vector.shape_cast %126 : vector<256x16xf32> to vector<8x32x16xf32>
    %128 = vector.extract_strided_slice %127 {offsets = [0, 0, 0], sizes = [8, 16, 16], strides = [1, 1, 1]} : vector<8x32x16xf32> to vector<8x16x16xf32>
    %129 = vector.extract_strided_slice %127 {offsets = [0, 16, 0], sizes = [8, 16, 16], strides = [1, 1, 1]} : vector<8x32x16xf32> to vector<8x16x16xf32>
    %130 = arith.addf %128, %129 : vector<8x16x16xf32>
    %131 = vector.shape_cast %130 : vector<8x16x16xf32> to vector<128x16xf32>
    %c0_62 = arith.constant 0 : index
    %c0_63 = arith.constant 0 : index
    %132 = vector.load %arg13[%c0_62, %c0_63] : memref<128x16xf32, #tpu.memory_space<vmem>>, vector<128x16xf32>
    tpu.vector_store %arg13[%c0_62, %c0_63], %131 {strides = array<i32>} : memref<128x16xf32, #tpu.memory_space<vmem>>, vector<128x16xf32>,
    %c0_64 = arith.constant 0 : index
    %c0_65 = arith.constant 0 : index
    %133 = tpu.strided_load %arg13[%c0_64, %c0_65] {strides = array<i32: 2, 1>} : memref<128x16xf32, #tpu.memory_space<vmem>>, vector<64x16xf32>
    %c1_66 = arith.constant 1 : index
    %c0_67 = arith.constant 0 : index
    %134 = tpu.strided_load %arg13[%c1_66, %c0_67] {strides = array<i32: 2, 1>} : memref<128x16xf32, #tpu.memory_space<vmem>>, vector<64x16xf32>
    %135 = arith.addf %133, %134 : vector<64x16xf32>
    %cst_68 = arith.constant 2.500000e-01 : f32
    %136 = vector.broadcast %cst_68 : f32 to vector<64x16xf32>
    %137 = arith.mulf %135, %136 : vector<64x16xf32>
    %138 = vector.shape_cast %31 : vector<256x3xf32> to vector<8x32x3xf32>
    %139 = vector.extract_strided_slice %138 {offsets = [0, 0, 0], sizes = [8, 16, 3], strides = [1, 1, 1]} : vector<8x32x3xf32> to vector<8x16x3xf32>
    %140 = vector.extract_strided_slice %138 {offsets = [0, 16, 0], sizes = [8, 16, 3], strides = [1, 1, 1]} : vector<8x32x3xf32> to vector<8x16x3xf32>
    %141 = arith.addf %139, %140 : vector<8x16x3xf32>
    %142 = vector.shape_cast %141 : vector<8x16x3xf32> to vector<128x3xf32>
    %c0_69 = arith.constant 0 : index
    %c0_70 = arith.constant 0 : index
    %143 = vector.load %arg14[%c0_69, %c0_70] : memref<128x3xf32, #tpu.memory_space<vmem>>, vector<128x3xf32>
    tpu.vector_store %arg14[%c0_69, %c0_70], %142 {strides = array<i32>} : memref<128x3xf32, #tpu.memory_space<vmem>>, vector<128x3xf32>,
    %c0_71 = arith.constant 0 : index
    %c0_72 = arith.constant 0 : index
    %144 = tpu.strided_load %arg14[%c0_71, %c0_72] {strides = array<i32: 2, 1>} : memref<128x3xf32, #tpu.memory_space<vmem>>, vector<64x3xf32>
    %c1_73 = arith.constant 1 : index
    %c0_74 = arith.constant 0 : index
    %145 = tpu.strided_load %arg14[%c1_73, %c0_74] {strides = array<i32: 2, 1>} : memref<128x3xf32, #tpu.memory_space<vmem>>, vector<64x3xf32>
    %146 = arith.addf %144, %145 : vector<64x3xf32>
    %cst_75 = arith.constant 2.500000e-01 : f32
    %147 = vector.broadcast %cst_75 : f32 to vector<64x3xf32>
    %148 = arith.mulf %146, %147 : vector<64x3xf32>
    %149 = arith.truncf %148 : vector<64x3xf32> to vector<64x3xbf16>
    %c0_76 = arith.constant 0 : index
    %c0_77 = arith.constant 0 : index
    %150 = vector.load %arg5[%c0_76, %c0_77] : memref<3x16xbf16, #tpu.memory_space<vmem>>, vector<3x16xbf16>
    %cst_78 = arith.constant dense<0.000000e+00> : vector<64x16xf32>
    %151 = tpu.matmul %149, %150, %cst_78 {dimension_numbers = #tpu.dot_dimension_numbers<[1], [0], [0], [1], [0, 0, 1, 1], [], []>} : vector<64x3xbf16>, vector<3x16xbf16>, vector<64x16xf32> -> vector<64x16xf32>
    %c0_79 = arith.constant 0 : index
    %c0_80 = arith.constant 0 : index
    %152 = vector.load %arg6[%c0_79, %c0_80] : memref<1x16xf32, #tpu.memory_space<vmem>>, vector<1x16xf32>
    %153 = vector.broadcast %152 : vector<1x16xf32> to vector<64x16xf32>
    %154 = arith.addf %151, %153 : vector<64x16xf32>
    %cst_81 = arith.constant 0.000000e+00 : f32
    %155 = vector.broadcast %cst_81 : f32 to vector<64x16xf32>
    %156 = arith.cmpf ogt, %154, %155 : vector<64x16xf32>
    %cst_82 = arith.constant 2.000000e-01 : f32
    %157 = vector.broadcast %cst_82 : f32 to vector<64x16xf32>
    %158 = arith.mulf %157, %154 : vector<64x16xf32>
    %159 = arith.select %156, %154, %158 : vector<64x16xi1>, vector<64x16xf32>
    %c0_83 = arith.constant 0 : index
    %c0_84 = arith.constant 0 : index
    %160 = memref.load %arg1[%c0_83, %c0_84] : memref<1x1xf32, #tpu.memory_space<smem>>
    %161 = vector.broadcast %160 : f32 to vector<64x16xf32>
    %162 = arith.mulf %161, %137 : vector<64x16xf32>
    %cst_85 = arith.constant 1.000000e+00 : f32
    %163 = arith.subf %cst_85, %160 : f32
    %164 = vector.broadcast %163 : f32 to vector<64x16xf32>
    %165 = arith.mulf %164, %159 : vector<64x16xf32>
    %166 = arith.addf %162, %165 : vector<64x16xf32>
    %c0_86 = arith.constant 0 : index
    %c0_87 = arith.constant 0 : index
    %c0_88 = arith.constant 0 : index
    %167 = vector.load %arg11[%c0_86, %c0_87, %c0_88] : memref<1x64x16xf32, #tpu.memory_space<vmem>>, vector<1x64x16xf32>
    %168 = vector.shape_cast %167 : vector<1x64x16xf32> to vector<64x16xf32>
    %169 = vector.shape_cast %166 : vector<64x16xf32> to vector<1x64x16xf32>
    tpu.vector_store %arg11[%c0_86, %c0_87, %c0_88], %169 {strides = array<i32>} : memref<1x64x16xf32, #tpu.memory_space<vmem>>, vector<1x64x16xf32>,
    return
  }
  func.func @transform_0(%arg0: i32) -> (i32, i32) {
    %c0_i32 = arith.constant 0 : i32
    %c0_i32_0 = arith.constant 0 : i32
    %c0_i32_1 = arith.constant 0 : i32
    return %c0_i32, %c0_i32_0 : i32, i32
  }
  func.func @transform_1(%arg0: i32) -> (i32, i32, i32) {
    %c0_i32 = arith.constant 0 : i32
    %c0_i32_0 = arith.constant 0 : i32
    %c0_i32_1 = arith.constant 0 : i32
    return %arg0, %c0_i32, %c0_i32_0 : i32, i32, i32
  }
  func.func @transform_2(%arg0: i32) -> (i32, i32) {
    %c0_i32 = arith.constant 0 : i32
    %c0_i32_0 = arith.constant 0 : i32
    %c0_i32_1 = arith.constant 0 : i32
    return %c0_i32, %c0_i32_0 : i32, i32
  }
  func.func @transform_3(%arg0: i32) -> (i32, i32) {
    %c0_i32 = arith.constant 0 : i32
    %c0_i32_0 = arith.constant 0 : i32
    %c0_i32_1 = arith.constant 0 : i32
    return %c0_i32, %c0_i32_0 : i32, i32
  }
  func.func @transform_4(%arg0: i32) -> (i32, i32) {
    %c0_i32 = arith.constant 0 : i32
    %c0_i32_0 = arith.constant 0 : i32
    %c0_i32_1 = arith.constant 0 : i32
    return %c0_i32, %c0_i32_0 : i32, i32
  }
  func.func @transform_5(%arg0: i32) -> (i32, i32) {
    %c0_i32 = arith.constant 0 : i32
    %c0_i32_0 = arith.constant 0 : i32
    %c0_i32_1 = arith.constant 0 : i32
    return %c0_i32, %c0_i32_0 : i32, i32
  }
  func.func @transform_6(%arg0: i32) -> (i32, i32) {
    %c0_i32 = arith.constant 0 : i32
    %c0_i32_0 = arith.constant 0 : i32
    %c0_i32_1 = arith.constant 0 : i32
    return %c0_i32, %c0_i32_0 : i32, i32
  }
  func.func @transform_7(%arg0: i32) -> (i32, i32) {
    %c0_i32 = arith.constant 0 : i32
    %c0_i32_0 = arith.constant 0 : i32
    %c0_i32_1 = arith.constant 0 : i32
    return %c0_i32, %c0_i32_0 : i32, i32
  }
  func.func @transform_8(%arg0: i32) -> (i32, i32) {
    %c0_i32 = arith.constant 0 : i32
    %c0_i32_0 = arith.constant 0 : i32
    %c0_i32_1 = arith.constant 0 : i32
    return %c0_i32, %c0_i32_0 : i32, i32
  }
  func.func @transform_9(%arg0: i32) -> (i32, i32) {
    %c0_i32 = arith.constant 0 : i32
    %c0_i32_0 = arith.constant 0 : i32
    %c0_i32_1 = arith.constant 0 : i32
    return %c0_i32, %c0_i32_0 : i32, i32
  }
  func.func @transform_10(%arg0: i32) -> (i32, i32, i32) {
    %c0_i32 = arith.constant 0 : i32
    %c0_i32_0 = arith.constant 0 : i32
    %c0_i32_1 = arith.constant 0 : i32
    return %arg0, %c0_i32, %c0_i32_0 : i32, i32, i32
  }
}

module attributes {stable_mosaic.version = 11 : i64} {
  func.func @_middle_kernel(%arg0: i32, %arg1: memref<1x64x16xf32, #tpu.memory_space<vmem>>, %arg2: memref<144x16xbf16, #tpu.memory_space<vmem>>, %arg3: memref<1x16xf32, #tpu.memory_space<vmem>>, %arg4: memref<144x32xbf16, #tpu.memory_space<vmem>>, %arg5: memref<1x32xf32, #tpu.memory_space<vmem>>, %arg6: memref<1x16x32xf32, #tpu.memory_space<vmem>>, %arg7: memref<82x16xf32, #tpu.memory_space<vmem>>, %arg8: memref<32x32xf32, #tpu.memory_space<vmem>>) attributes {dimension_semantics = [#tpu.dimension_semantics<parallel>], iteration_bounds = array<i64: 2>, scalar_prefetch = 0 : i64, scratch_operands = 2 : i64, tpu.core_type = #tpu.core_type<tc>, window_params = [{transform_indices = @transform_0, window_bounds = array<i64: 1, 64, 16>}, {pipeline_mode = #tpu.pipeline_mode<synchronous>, transform_indices = @transform_1, window_bounds = array<i64: 144, 16>}, {pipeline_mode = #tpu.pipeline_mode<synchronous>, transform_indices = @transform_2, window_bounds = array<i64: 1, 16>}, {pipeline_mode = #tpu.pipeline_mode<synchronous>, transform_indices = @transform_3, window_bounds = array<i64: 144, 32>}, {pipeline_mode = #tpu.pipeline_mode<synchronous>, transform_indices = @transform_4, window_bounds = array<i64: 1, 32>}, {transform_indices = @transform_5, window_bounds = array<i64: 1, 16, 32>}]} {
    %0 = tpu.iota {dimensions = array<i32: 0>} : vector<64x1xi32>
    %c8_i32 = arith.constant 8 : i32
    %c0_i32 = arith.constant 0 : i32
    %1 = arith.cmpi eq, %c8_i32, %c0_i32 : i32
    %c1_i32 = arith.constant 1 : i32
    %2 = arith.select %1, %c1_i32, %c8_i32 : i32
    %3 = vector.broadcast %2 : i32 to vector<64x1xi32>
    %4 = arith.remsi %0, %3 : vector<64x1xi32>
    %c0_i32_0 = arith.constant 0 : i32
    %5 = vector.broadcast %c0_i32_0 : i32 to vector<64x1xi32>
    %6 = arith.cmpi ne, %4, %5 : vector<64x1xi32>
    %c0_i32_1 = arith.constant 0 : i32
    %7 = vector.broadcast %c0_i32_1 : i32 to vector<64x1xi32>
    %8 = arith.cmpi slt, %4, %7 : vector<64x1xi32>
    %c0_i32_2 = arith.constant 0 : i32
    %9 = arith.cmpi slt, %2, %c0_i32_2 : i32
    %10 = vector.broadcast %9 : i1 to vector<64x1xi1>
    %11 = vector.broadcast %10 : vector<64x1xi1> to vector<64x1xi1>
    %12 = arith.xori %8, %11 : vector<64x1xi1>
    %13 = arith.andi %12, %6 : vector<64x1xi1>
    %14 = vector.broadcast %2 : i32 to vector<64x1xi32>
    %15 = arith.addi %4, %14 : vector<64x1xi32>
    %16 = arith.select %13, %15, %4 : vector<64x1xi1>, vector<64x1xi32>
    %c1_i32_3 = arith.constant 1 : i32
    %17 = vector.broadcast %c1_i32_3 : i32 to vector<64x1xi32>
    %18 = arith.cmpi sge, %16, %17 : vector<64x1xi32>
    %19 = arith.extui %18 : vector<64x1xi1> to vector<64x1xi32>
    %20 = arith.sitofp %19 : vector<64x1xi32> to vector<64x1xf32>
    %21 = arith.truncf %20 : vector<64x1xf32> to vector<64x1xbf16>
    %c6_i32 = arith.constant 6 : i32
    %22 = vector.broadcast %c6_i32 : i32 to vector<64x1xi32>
    %23 = arith.cmpi sle, %16, %22 : vector<64x1xi32>
    %24 = arith.extui %23 : vector<64x1xi1> to vector<64x1xi32>
    %25 = arith.sitofp %24 : vector<64x1xi32> to vector<64x1xf32>
    %26 = arith.truncf %25 : vector<64x1xf32> to vector<64x1xbf16>
    %cst = arith.constant 0.000000e+00 : f32
    %27 = vector.broadcast %cst : f32 to vector<9x16xf32>
    %c0 = arith.constant 0 : index
    %c0_4 = arith.constant 0 : index
    %28 = vector.load %arg7[%c0, %c0_4] : memref<82x16xf32, #tpu.memory_space<vmem>>, vector<9x16xf32>
    tpu.vector_store %arg7[%c0, %c0_4], %27 {strides = array<i32>} : memref<82x16xf32, #tpu.memory_space<vmem>>, vector<9x16xf32>,
    %c73 = arith.constant 73 : index
    %c0_5 = arith.constant 0 : index
    %29 = vector.load %arg7[%c73, %c0_5] : memref<82x16xf32, #tpu.memory_space<vmem>>, vector<9x16xf32>
    tpu.vector_store %arg7[%c73, %c0_5], %27 {strides = array<i32>} : memref<82x16xf32, #tpu.memory_space<vmem>>, vector<9x16xf32>,
    %c0_6 = arith.constant 0 : index
    %c0_7 = arith.constant 0 : index
    %c0_8 = arith.constant 0 : index
    %30 = vector.load %arg1[%c0_6, %c0_7, %c0_8] : memref<1x64x16xf32, #tpu.memory_space<vmem>>, vector<1x64x16xf32>
    %31 = vector.shape_cast %30 : vector<1x64x16xf32> to vector<64x16xf32>
    %c9 = arith.constant 9 : index
    %c0_9 = arith.constant 0 : index
    %32 = vector.load %arg7[%c9, %c0_9] : memref<82x16xf32, #tpu.memory_space<vmem>>, vector<64x16xf32>
    tpu.vector_store %arg7[%c9, %c0_9], %31 {strides = array<i32>} : memref<82x16xf32, #tpu.memory_space<vmem>>, vector<64x16xf32>,
    %c0_10 = arith.constant 0 : index
    %c0_11 = arith.constant 0 : index
    %33 = vector.load %arg7[%c0_10, %c0_11] : memref<82x16xf32, #tpu.memory_space<vmem>>, vector<64x16xf32>
    %34 = arith.truncf %33 : vector<64x16xf32> to vector<64x16xbf16>
    %35 = vector.broadcast %21 : vector<64x1xbf16> to vector<64x16xbf16>
    %36 = arith.mulf %34, %35 : vector<64x16xbf16>
    %c1 = arith.constant 1 : index
    %c0_12 = arith.constant 0 : index
    %37 = vector.load %arg7[%c1, %c0_12] : memref<82x16xf32, #tpu.memory_space<vmem>>, vector<64x16xf32>
    %38 = arith.truncf %37 : vector<64x16xf32> to vector<64x16xbf16>
    %c2 = arith.constant 2 : index
    %c0_13 = arith.constant 0 : index
    %39 = vector.load %arg7[%c2, %c0_13] : memref<82x16xf32, #tpu.memory_space<vmem>>, vector<64x16xf32>
    %40 = arith.truncf %39 : vector<64x16xf32> to vector<64x16xbf16>
    %41 = vector.broadcast %26 : vector<64x1xbf16> to vector<64x16xbf16>
    %42 = arith.mulf %40, %41 : vector<64x16xbf16>
    %c8 = arith.constant 8 : index
    %c0_14 = arith.constant 0 : index
    %43 = vector.load %arg7[%c8, %c0_14] : memref<82x16xf32, #tpu.memory_space<vmem>>, vector<64x16xf32>
    %44 = arith.truncf %43 : vector<64x16xf32> to vector<64x16xbf16>
    %45 = vector.broadcast %21 : vector<64x1xbf16> to vector<64x16xbf16>
    %46 = arith.mulf %44, %45 : vector<64x16xbf16>
    %c9_15 = arith.constant 9 : index
    %c0_16 = arith.constant 0 : index
    %47 = vector.load %arg7[%c9_15, %c0_16] : memref<82x16xf32, #tpu.memory_space<vmem>>, vector<64x16xf32>
    %48 = arith.truncf %47 : vector<64x16xf32> to vector<64x16xbf16>
    %c10 = arith.constant 10 : index
    %c0_17 = arith.constant 0 : index
    %49 = vector.load %arg7[%c10, %c0_17] : memref<82x16xf32, #tpu.memory_space<vmem>>, vector<64x16xf32>
    %50 = arith.truncf %49 : vector<64x16xf32> to vector<64x16xbf16>
    %51 = vector.broadcast %26 : vector<64x1xbf16> to vector<64x16xbf16>
    %52 = arith.mulf %50, %51 : vector<64x16xbf16>
    %c16 = arith.constant 16 : index
    %c0_18 = arith.constant 0 : index
    %53 = vector.load %arg7[%c16, %c0_18] : memref<82x16xf32, #tpu.memory_space<vmem>>, vector<64x16xf32>
    %54 = arith.truncf %53 : vector<64x16xf32> to vector<64x16xbf16>
    %55 = vector.broadcast %21 : vector<64x1xbf16> to vector<64x16xbf16>
    %56 = arith.mulf %54, %55 : vector<64x16xbf16>
    %c17 = arith.constant 17 : index
    %c0_19 = arith.constant 0 : index
    %57 = vector.load %arg7[%c17, %c0_19] : memref<82x16xf32, #tpu.memory_space<vmem>>, vector<64x16xf32>
    %58 = arith.truncf %57 : vector<64x16xf32> to vector<64x16xbf16>
    %c18 = arith.constant 18 : index
    %c0_20 = arith.constant 0 : index
    %59 = vector.load %arg7[%c18, %c0_20] : memref<82x16xf32, #tpu.memory_space<vmem>>, vector<64x16xf32>
    %60 = arith.truncf %59 : vector<64x16xf32> to vector<64x16xbf16>
    %61 = vector.broadcast %26 : vector<64x1xbf16> to vector<64x16xbf16>
    %62 = arith.mulf %60, %61 : vector<64x16xbf16>
    %63 = tpu.concatenate %36, %38, %42, %46, %48, %52, %56, %58, %62 in 1 : vector<64x16xbf16>, vector<64x16xbf16>, vector<64x16xbf16>, vector<64x16xbf16>, vector<64x16xbf16>, vector<64x16xbf16>, vector<64x16xbf16>, vector<64x16xbf16>, vector<64x16xbf16> -> vector<64x144xbf16>
    %c0_21 = arith.constant 0 : index
    %c0_22 = arith.constant 0 : index
    %64 = vector.load %arg2[%c0_21, %c0_22] : memref<144x16xbf16, #tpu.memory_space<vmem>>, vector<144x16xbf16>
    %cst_23 = arith.constant dense<0.000000e+00> : vector<64x16xf32>
    %65 = tpu.matmul %63, %64, %cst_23 {dimension_numbers = #tpu.dot_dimension_numbers<[1], [0], [0], [1], [0, 0, 1, 1], [], []>} : vector<64x144xbf16>, vector<144x16xbf16>, vector<64x16xf32> -> vector<64x16xf32>
    %c0_24 = arith.constant 0 : index
    %c0_25 = arith.constant 0 : index
    %66 = vector.load %arg3[%c0_24, %c0_25] : memref<1x16xf32, #tpu.memory_space<vmem>>, vector<1x16xf32>
    %67 = vector.broadcast %66 : vector<1x16xf32> to vector<64x16xf32>
    %68 = arith.addf %65, %67 : vector<64x16xf32>
    %cst_26 = arith.constant 0.000000e+00 : f32
    %69 = vector.broadcast %cst_26 : f32 to vector<64x16xf32>
    %70 = arith.cmpf ogt, %68, %69 : vector<64x16xf32>
    %cst_27 = arith.constant 2.000000e-01 : f32
    %71 = vector.broadcast %cst_27 : f32 to vector<64x16xf32>
    %72 = arith.mulf %71, %68 : vector<64x16xf32>
    %73 = arith.select %70, %68, %72 : vector<64x16xi1>, vector<64x16xf32>
    %c9_28 = arith.constant 9 : index
    %c0_29 = arith.constant 0 : index
    %74 = vector.load %arg7[%c9_28, %c0_29] : memref<82x16xf32, #tpu.memory_space<vmem>>, vector<64x16xf32>
    tpu.vector_store %arg7[%c9_28, %c0_29], %73 {strides = array<i32>} : memref<82x16xf32, #tpu.memory_space<vmem>>, vector<64x16xf32>,
    %c0_30 = arith.constant 0 : index
    %c0_31 = arith.constant 0 : index
    %75 = vector.load %arg7[%c0_30, %c0_31] : memref<82x16xf32, #tpu.memory_space<vmem>>, vector<64x16xf32>
    %76 = arith.truncf %75 : vector<64x16xf32> to vector<64x16xbf16>
    %77 = vector.broadcast %21 : vector<64x1xbf16> to vector<64x16xbf16>
    %78 = arith.mulf %76, %77 : vector<64x16xbf16>
    %c1_32 = arith.constant 1 : index
    %c0_33 = arith.constant 0 : index
    %79 = vector.load %arg7[%c1_32, %c0_33] : memref<82x16xf32, #tpu.memory_space<vmem>>, vector<64x16xf32>
    %80 = arith.truncf %79 : vector<64x16xf32> to vector<64x16xbf16>
    %c2_34 = arith.constant 2 : index
    %c0_35 = arith.constant 0 : index
    %81 = vector.load %arg7[%c2_34, %c0_35] : memref<82x16xf32, #tpu.memory_space<vmem>>, vector<64x16xf32>
    %82 = arith.truncf %81 : vector<64x16xf32> to vector<64x16xbf16>
    %83 = vector.broadcast %26 : vector<64x1xbf16> to vector<64x16xbf16>
    %84 = arith.mulf %82, %83 : vector<64x16xbf16>
    %c8_36 = arith.constant 8 : index
    %c0_37 = arith.constant 0 : index
    %85 = vector.load %arg7[%c8_36, %c0_37] : memref<82x16xf32, #tpu.memory_space<vmem>>, vector<64x16xf32>
    %86 = arith.truncf %85 : vector<64x16xf32> to vector<64x16xbf16>
    %87 = vector.broadcast %21 : vector<64x1xbf16> to vector<64x16xbf16>
    %88 = arith.mulf %86, %87 : vector<64x16xbf16>
    %c9_38 = arith.constant 9 : index
    %c0_39 = arith.constant 0 : index
    %89 = vector.load %arg7[%c9_38, %c0_39] : memref<82x16xf32, #tpu.memory_space<vmem>>, vector<64x16xf32>
    %90 = arith.truncf %89 : vector<64x16xf32> to vector<64x16xbf16>
    %c10_40 = arith.constant 10 : index
    %c0_41 = arith.constant 0 : index
    %91 = vector.load %arg7[%c10_40, %c0_41] : memref<82x16xf32, #tpu.memory_space<vmem>>, vector<64x16xf32>
    %92 = arith.truncf %91 : vector<64x16xf32> to vector<64x16xbf16>
    %93 = vector.broadcast %26 : vector<64x1xbf16> to vector<64x16xbf16>
    %94 = arith.mulf %92, %93 : vector<64x16xbf16>
    %c16_42 = arith.constant 16 : index
    %c0_43 = arith.constant 0 : index
    %95 = vector.load %arg7[%c16_42, %c0_43] : memref<82x16xf32, #tpu.memory_space<vmem>>, vector<64x16xf32>
    %96 = arith.truncf %95 : vector<64x16xf32> to vector<64x16xbf16>
    %97 = vector.broadcast %21 : vector<64x1xbf16> to vector<64x16xbf16>
    %98 = arith.mulf %96, %97 : vector<64x16xbf16>
    %c17_44 = arith.constant 17 : index
    %c0_45 = arith.constant 0 : index
    %99 = vector.load %arg7[%c17_44, %c0_45] : memref<82x16xf32, #tpu.memory_space<vmem>>, vector<64x16xf32>
    %100 = arith.truncf %99 : vector<64x16xf32> to vector<64x16xbf16>
    %c18_46 = arith.constant 18 : index
    %c0_47 = arith.constant 0 : index
    %101 = vector.load %arg7[%c18_46, %c0_47] : memref<82x16xf32, #tpu.memory_space<vmem>>, vector<64x16xf32>
    %102 = arith.truncf %101 : vector<64x16xf32> to vector<64x16xbf16>
    %103 = vector.broadcast %26 : vector<64x1xbf16> to vector<64x16xbf16>
    %104 = arith.mulf %102, %103 : vector<64x16xbf16>
    %105 = tpu.concatenate %78, %80, %84, %88, %90, %94, %98, %100, %104 in 1 : vector<64x16xbf16>, vector<64x16xbf16>, vector<64x16xbf16>, vector<64x16xbf16>, vector<64x16xbf16>, vector<64x16xbf16>, vector<64x16xbf16>, vector<64x16xbf16>, vector<64x16xbf16> -> vector<64x144xbf16>
    %c0_48 = arith.constant 0 : index
    %c0_49 = arith.constant 0 : index
    %106 = vector.load %arg4[%c0_48, %c0_49] : memref<144x32xbf16, #tpu.memory_space<vmem>>, vector<144x32xbf16>
    %cst_50 = arith.constant dense<0.000000e+00> : vector<64x32xf32>
    %107 = tpu.matmul %105, %106, %cst_50 {dimension_numbers = #tpu.dot_dimension_numbers<[1], [0], [0], [1], [0, 0, 1, 1], [], []>} : vector<64x144xbf16>, vector<144x32xbf16>, vector<64x32xf32> -> vector<64x32xf32>
    %c0_51 = arith.constant 0 : index
    %c0_52 = arith.constant 0 : index
    %108 = vector.load %arg5[%c0_51, %c0_52] : memref<1x32xf32, #tpu.memory_space<vmem>>, vector<1x32xf32>
    %109 = vector.broadcast %108 : vector<1x32xf32> to vector<64x32xf32>
    %110 = arith.addf %107, %109 : vector<64x32xf32>
    %cst_53 = arith.constant 0.000000e+00 : f32
    %111 = vector.broadcast %cst_53 : f32 to vector<64x32xf32>
    %112 = arith.cmpf ogt, %110, %111 : vector<64x32xf32>
    %cst_54 = arith.constant 2.000000e-01 : f32
    %113 = vector.broadcast %cst_54 : f32 to vector<64x32xf32>
    %114 = arith.mulf %113, %110 : vector<64x32xf32>
    %115 = arith.select %112, %110, %114 : vector<64x32xi1>, vector<64x32xf32>
    %116 = vector.shape_cast %115 : vector<64x32xf32> to vector<4x16x32xf32>
    %117 = vector.extract_strided_slice %116 {offsets = [0, 0, 0], sizes = [4, 8, 32], strides = [1, 1, 1]} : vector<4x16x32xf32> to vector<4x8x32xf32>
    %118 = vector.extract_strided_slice %116 {offsets = [0, 8, 0], sizes = [4, 8, 32], strides = [1, 1, 1]} : vector<4x16x32xf32> to vector<4x8x32xf32>
    %119 = arith.addf %117, %118 : vector<4x8x32xf32>
    %120 = vector.shape_cast %119 : vector<4x8x32xf32> to vector<32x32xf32>
    %c0_55 = arith.constant 0 : index
    %c0_56 = arith.constant 0 : index
    %121 = vector.load %arg8[%c0_55, %c0_56] : memref<32x32xf32, #tpu.memory_space<vmem>>, vector<32x32xf32>
    tpu.vector_store %arg8[%c0_55, %c0_56], %120 {strides = array<i32>} : memref<32x32xf32, #tpu.memory_space<vmem>>, vector<32x32xf32>,
    %c0_57 = arith.constant 0 : index
    %c0_58 = arith.constant 0 : index
    %122 = tpu.strided_load %arg8[%c0_57, %c0_58] {strides = array<i32: 2, 1>} : memref<32x32xf32, #tpu.memory_space<vmem>>, vector<16x32xf32>
    %c1_59 = arith.constant 1 : index
    %c0_60 = arith.constant 0 : index
    %123 = tpu.strided_load %arg8[%c1_59, %c0_60] {strides = array<i32: 2, 1>} : memref<32x32xf32, #tpu.memory_space<vmem>>, vector<16x32xf32>
    %124 = arith.addf %122, %123 : vector<16x32xf32>
    %cst_61 = arith.constant 2.500000e-01 : f32
    %125 = vector.broadcast %cst_61 : f32 to vector<16x32xf32>
    %126 = arith.mulf %124, %125 : vector<16x32xf32>
    %c0_62 = arith.constant 0 : index
    %c0_63 = arith.constant 0 : index
    %c0_64 = arith.constant 0 : index
    %127 = vector.load %arg6[%c0_62, %c0_63, %c0_64] : memref<1x16x32xf32, #tpu.memory_space<vmem>>, vector<1x16x32xf32>
    %128 = vector.shape_cast %127 : vector<1x16x32xf32> to vector<16x32xf32>
    %129 = vector.shape_cast %126 : vector<16x32xf32> to vector<1x16x32xf32>
    tpu.vector_store %arg6[%c0_62, %c0_63, %c0_64], %129 {strides = array<i32>} : memref<1x16x32xf32, #tpu.memory_space<vmem>>, vector<1x16x32xf32>,
    return
  }
  func.func @transform_0(%arg0: i32) -> (i32, i32, i32) {
    %c0_i32 = arith.constant 0 : i32
    %c0_i32_0 = arith.constant 0 : i32
    %c0_i32_1 = arith.constant 0 : i32
    return %arg0, %c0_i32, %c0_i32_0 : i32, i32, i32
  }
  func.func @transform_1(%arg0: i32) -> (i32, i32) {
    %c0_i32 = arith.constant 0 : i32
    %c0_i32_0 = arith.constant 0 : i32
    %c0_i32_1 = arith.constant 0 : i32
    return %c0_i32, %c0_i32_0 : i32, i32
  }
  func.func @transform_2(%arg0: i32) -> (i32, i32) {
    %c0_i32 = arith.constant 0 : i32
    %c0_i32_0 = arith.constant 0 : i32
    %c0_i32_1 = arith.constant 0 : i32
    return %c0_i32, %c0_i32_0 : i32, i32
  }
  func.func @transform_3(%arg0: i32) -> (i32, i32) {
    %c0_i32 = arith.constant 0 : i32
    %c0_i32_0 = arith.constant 0 : i32
    %c0_i32_1 = arith.constant 0 : i32
    return %c0_i32, %c0_i32_0 : i32, i32
  }
  func.func @transform_4(%arg0: i32) -> (i32, i32) {
    %c0_i32 = arith.constant 0 : i32
    %c0_i32_0 = arith.constant 0 : i32
    %c0_i32_1 = arith.constant 0 : i32
    return %c0_i32, %c0_i32_0 : i32, i32
  }
  func.func @transform_5(%arg0: i32) -> (i32, i32, i32) {
    %c0_i32 = arith.constant 0 : i32
    %c0_i32_0 = arith.constant 0 : i32
    %c0_i32_1 = arith.constant 0 : i32
    return %arg0, %c0_i32, %c0_i32_0 : i32, i32, i32
  }
}

module attributes {stable_mosaic.version = 11 : i64} {
  func.func @_final_kernel(%arg0: memref<2x16x32xf32, #tpu.memory_space<vmem>>, %arg1: memref<288x32xbf16, #tpu.memory_space<vmem>>, %arg2: memref<1x32xf32, #tpu.memory_space<vmem>>, %arg3: memref<512x32xbf16, #tpu.memory_space<vmem>>, %arg4: memref<1x32xf32, #tpu.memory_space<vmem>>, %arg5: memref<32x1xbf16, #tpu.memory_space<vmem>>, %arg6: memref<1x1xf32, #tpu.memory_space<vmem>>, %arg7: memref<2x1xf32, #tpu.memory_space<vmem>>, %arg8: memref<2x26x32xf32, #tpu.memory_space<vmem>>) attributes {dimension_semantics = [], scalar_prefetch = 0 : i64, scratch_operands = 1 : i64, tpu.core_type = #tpu.core_type<tc>} {
    %0 = tpu.iota {dimensions = array<i32: 1>} : vector<1x16x1xi32>
    %c4_i32 = arith.constant 4 : i32
    %c0_i32 = arith.constant 0 : i32
    %1 = arith.cmpi eq, %c4_i32, %c0_i32 : i32
    %c1_i32 = arith.constant 1 : i32
    %2 = arith.select %1, %c1_i32, %c4_i32 : i32
    %3 = vector.broadcast %2 : i32 to vector<1x16x1xi32>
    %4 = arith.remsi %0, %3 : vector<1x16x1xi32>
    %c0_i32_0 = arith.constant 0 : i32
    %5 = vector.broadcast %c0_i32_0 : i32 to vector<1x16x1xi32>
    %6 = arith.cmpi ne, %4, %5 : vector<1x16x1xi32>
    %c0_i32_1 = arith.constant 0 : i32
    %7 = vector.broadcast %c0_i32_1 : i32 to vector<1x16x1xi32>
    %8 = arith.cmpi slt, %4, %7 : vector<1x16x1xi32>
    %c0_i32_2 = arith.constant 0 : i32
    %9 = arith.cmpi slt, %2, %c0_i32_2 : i32
    %10 = vector.broadcast %9 : i1 to vector<1x16x1xi1>
    %11 = vector.broadcast %10 : vector<1x16x1xi1> to vector<1x16x1xi1>
    %12 = arith.xori %8, %11 : vector<1x16x1xi1>
    %13 = arith.andi %12, %6 : vector<1x16x1xi1>
    %14 = vector.broadcast %2 : i32 to vector<1x16x1xi32>
    %15 = arith.addi %4, %14 : vector<1x16x1xi32>
    %16 = arith.select %13, %15, %4 : vector<1x16x1xi1>, vector<1x16x1xi32>
    %c1_i32_3 = arith.constant 1 : i32
    %17 = vector.broadcast %c1_i32_3 : i32 to vector<1x16x1xi32>
    %18 = arith.cmpi sge, %16, %17 : vector<1x16x1xi32>
    %19 = arith.extui %18 : vector<1x16x1xi1> to vector<1x16x1xi32>
    %20 = arith.sitofp %19 : vector<1x16x1xi32> to vector<1x16x1xf32>
    %21 = arith.truncf %20 : vector<1x16x1xf32> to vector<1x16x1xbf16>
    %c2_i32 = arith.constant 2 : i32
    %22 = vector.broadcast %c2_i32 : i32 to vector<1x16x1xi32>
    %23 = arith.cmpi sle, %16, %22 : vector<1x16x1xi32>
    %24 = arith.extui %23 : vector<1x16x1xi1> to vector<1x16x1xi32>
    %25 = arith.sitofp %24 : vector<1x16x1xi32> to vector<1x16x1xf32>
    %26 = arith.truncf %25 : vector<1x16x1xf32> to vector<1x16x1xbf16>
    %cst = arith.constant 0.000000e+00 : f32
    %27 = vector.broadcast %cst : f32 to vector<2x5x32xf32>
    %c0 = arith.constant 0 : index
    %c0_4 = arith.constant 0 : index
    %c0_5 = arith.constant 0 : index
    %28 = vector.load %arg8[%c0, %c0_4, %c0_5] : memref<2x26x32xf32, #tpu.memory_space<vmem>>, vector<2x5x32xf32>
    tpu.vector_store %arg8[%c0, %c0_4, %c0_5], %27 {strides = array<i32>} : memref<2x26x32xf32, #tpu.memory_space<vmem>>, vector<2x5x32xf32>,
    %c0_6 = arith.constant 0 : index
    %c21 = arith.constant 21 : index
    %c0_7 = arith.constant 0 : index
    %29 = vector.load %arg8[%c0_6, %c21, %c0_7] : memref<2x26x32xf32, #tpu.memory_space<vmem>>, vector<2x5x32xf32>
    tpu.vector_store %arg8[%c0_6, %c21, %c0_7], %27 {strides = array<i32>} : memref<2x26x32xf32, #tpu.memory_space<vmem>>, vector<2x5x32xf32>,
    %c0_8 = arith.constant 0 : index
    %c0_9 = arith.constant 0 : index
    %c0_10 = arith.constant 0 : index
    %30 = vector.load %arg0[%c0_8, %c0_9, %c0_10] : memref<2x16x32xf32, #tpu.memory_space<vmem>>, vector<2x16x32xf32>
    %c0_11 = arith.constant 0 : index
    %c5 = arith.constant 5 : index
    %c0_12 = arith.constant 0 : index
    %31 = vector.load %arg8[%c0_11, %c5, %c0_12] : memref<2x26x32xf32, #tpu.memory_space<vmem>>, vector<2x16x32xf32>
    tpu.vector_store %arg8[%c0_11, %c5, %c0_12], %30 {strides = array<i32>} : memref<2x26x32xf32, #tpu.memory_space<vmem>>, vector<2x16x32xf32>,
    %c0_13 = arith.constant 0 : index
    %c0_14 = arith.constant 0 : index
    %c0_15 = arith.constant 0 : index
    %32 = vector.load %arg8[%c0_13, %c0_14, %c0_15] : memref<2x26x32xf32, #tpu.memory_space<vmem>>, vector<2x16x32xf32>
    %33 = arith.truncf %32 : vector<2x16x32xf32> to vector<2x16x32xbf16>
    %34 = vector.broadcast %21 : vector<1x16x1xbf16> to vector<2x16x32xbf16>
    %35 = arith.mulf %33, %34 : vector<2x16x32xbf16>
    %c0_16 = arith.constant 0 : index
    %c1 = arith.constant 1 : index
    %c0_17 = arith.constant 0 : index
    %36 = vector.load %arg8[%c0_16, %c1, %c0_17] : memref<2x26x32xf32, #tpu.memory_space<vmem>>, vector<2x16x32xf32>
    %37 = arith.truncf %36 : vector<2x16x32xf32> to vector<2x16x32xbf16>
    %c0_18 = arith.constant 0 : index
    %c2 = arith.constant 2 : index
    %c0_19 = arith.constant 0 : index
    %38 = vector.load %arg8[%c0_18, %c2, %c0_19] : memref<2x26x32xf32, #tpu.memory_space<vmem>>, vector<2x16x32xf32>
    %39 = arith.truncf %38 : vector<2x16x32xf32> to vector<2x16x32xbf16>
    %40 = vector.broadcast %26 : vector<1x16x1xbf16> to vector<2x16x32xbf16>
    %41 = arith.mulf %39, %40 : vector<2x16x32xbf16>
    %c0_20 = arith.constant 0 : index
    %c4 = arith.constant 4 : index
    %c0_21 = arith.constant 0 : index
    %42 = vector.load %arg8[%c0_20, %c4, %c0_21] : memref<2x26x32xf32, #tpu.memory_space<vmem>>, vector<2x16x32xf32>
    %43 = arith.truncf %42 : vector<2x16x32xf32> to vector<2x16x32xbf16>
    %44 = vector.broadcast %21 : vector<1x16x1xbf16> to vector<2x16x32xbf16>
    %45 = arith.mulf %43, %44 : vector<2x16x32xbf16>
    %c0_22 = arith.constant 0 : index
    %c5_23 = arith.constant 5 : index
    %c0_24 = arith.constant 0 : index
    %46 = vector.load %arg8[%c0_22, %c5_23, %c0_24] : memref<2x26x32xf32, #tpu.memory_space<vmem>>, vector<2x16x32xf32>
    %47 = arith.truncf %46 : vector<2x16x32xf32> to vector<2x16x32xbf16>
    %c0_25 = arith.constant 0 : index
    %c6 = arith.constant 6 : index
    %c0_26 = arith.constant 0 : index
    %48 = vector.load %arg8[%c0_25, %c6, %c0_26] : memref<2x26x32xf32, #tpu.memory_space<vmem>>, vector<2x16x32xf32>
    %49 = arith.truncf %48 : vector<2x16x32xf32> to vector<2x16x32xbf16>
    %50 = vector.broadcast %26 : vector<1x16x1xbf16> to vector<2x16x32xbf16>
    %51 = arith.mulf %49, %50 : vector<2x16x32xbf16>
    %c0_27 = arith.constant 0 : index
    %c8 = arith.constant 8 : index
    %c0_28 = arith.constant 0 : index
    %52 = vector.load %arg8[%c0_27, %c8, %c0_28] : memref<2x26x32xf32, #tpu.memory_space<vmem>>, vector<2x16x32xf32>
    %53 = arith.truncf %52 : vector<2x16x32xf32> to vector<2x16x32xbf16>
    %54 = vector.broadcast %21 : vector<1x16x1xbf16> to vector<2x16x32xbf16>
    %55 = arith.mulf %53, %54 : vector<2x16x32xbf16>
    %c0_29 = arith.constant 0 : index
    %c9 = arith.constant 9 : index
    %c0_30 = arith.constant 0 : index
    %56 = vector.load %arg8[%c0_29, %c9, %c0_30] : memref<2x26x32xf32, #tpu.memory_space<vmem>>, vector<2x16x32xf32>
    %57 = arith.truncf %56 : vector<2x16x32xf32> to vector<2x16x32xbf16>
    %c0_31 = arith.constant 0 : index
    %c10 = arith.constant 10 : index
    %c0_32 = arith.constant 0 : index
    %58 = vector.load %arg8[%c0_31, %c10, %c0_32] : memref<2x26x32xf32, #tpu.memory_space<vmem>>, vector<2x16x32xf32>
    %59 = arith.truncf %58 : vector<2x16x32xf32> to vector<2x16x32xbf16>
    %60 = vector.broadcast %26 : vector<1x16x1xbf16> to vector<2x16x32xbf16>
    %61 = arith.mulf %59, %60 : vector<2x16x32xbf16>
    %62 = tpu.concatenate %35, %37, %41, %45, %47, %51, %55, %57, %61 in 2 : vector<2x16x32xbf16>, vector<2x16x32xbf16>, vector<2x16x32xbf16>, vector<2x16x32xbf16>, vector<2x16x32xbf16>, vector<2x16x32xbf16>, vector<2x16x32xbf16>, vector<2x16x32xbf16>, vector<2x16x32xbf16> -> vector<2x16x288xbf16>
    %63 = vector.shape_cast %62 : vector<2x16x288xbf16> to vector<32x288xbf16>
    %c0_33 = arith.constant 0 : index
    %c0_34 = arith.constant 0 : index
    %64 = vector.load %arg1[%c0_33, %c0_34] : memref<288x32xbf16, #tpu.memory_space<vmem>>, vector<288x32xbf16>
    %cst_35 = arith.constant dense<0.000000e+00> : vector<32x32xf32>
    %65 = tpu.matmul %63, %64, %cst_35 {dimension_numbers = #tpu.dot_dimension_numbers<[1], [0], [0], [1], [0, 0, 1, 1], [], []>} : vector<32x288xbf16>, vector<288x32xbf16>, vector<32x32xf32> -> vector<32x32xf32>
    %c0_36 = arith.constant 0 : index
    %c0_37 = arith.constant 0 : index
    %66 = vector.load %arg2[%c0_36, %c0_37] : memref<1x32xf32, #tpu.memory_space<vmem>>, vector<1x32xf32>
    %67 = vector.broadcast %66 : vector<1x32xf32> to vector<32x32xf32>
    %68 = arith.addf %65, %67 : vector<32x32xf32>
    %cst_38 = arith.constant 0.000000e+00 : f32
    %69 = vector.broadcast %cst_38 : f32 to vector<32x32xf32>
    %70 = arith.cmpf ogt, %68, %69 : vector<32x32xf32>
    %cst_39 = arith.constant 2.000000e-01 : f32
    %71 = vector.broadcast %cst_39 : f32 to vector<32x32xf32>
    %72 = arith.mulf %71, %68 : vector<32x32xf32>
    %73 = arith.select %70, %68, %72 : vector<32x32xi1>, vector<32x32xf32>
    %74 = vector.shape_cast %73 : vector<32x32xf32> to vector<2x16x32xf32>
    %75 = vector.extract_strided_slice %74 {offsets = [0, 0, 0], sizes = [2, 1, 32], strides = [1, 1, 1]} : vector<2x16x32xf32> to vector<2x1x32xf32>
    %76 = vector.shape_cast %75 : vector<2x1x32xf32> to vector<2x32xf32>
    %77 = vector.extract_strided_slice %74 {offsets = [0, 1, 0], sizes = [2, 1, 32], strides = [1, 1, 1]} : vector<2x16x32xf32> to vector<2x1x32xf32>
    %78 = vector.shape_cast %77 : vector<2x1x32xf32> to vector<2x32xf32>
    %79 = vector.extract_strided_slice %74 {offsets = [0, 2, 0], sizes = [2, 1, 32], strides = [1, 1, 1]} : vector<2x16x32xf32> to vector<2x1x32xf32>
    %80 = vector.shape_cast %79 : vector<2x1x32xf32> to vector<2x32xf32>
    %81 = vector.extract_strided_slice %74 {offsets = [0, 3, 0], sizes = [2, 1, 32], strides = [1, 1, 1]} : vector<2x16x32xf32> to vector<2x1x32xf32>
    %82 = vector.shape_cast %81 : vector<2x1x32xf32> to vector<2x32xf32>
    %83 = vector.extract_strided_slice %74 {offsets = [0, 4, 0], sizes = [2, 1, 32], strides = [1, 1, 1]} : vector<2x16x32xf32> to vector<2x1x32xf32>
    %84 = vector.shape_cast %83 : vector<2x1x32xf32> to vector<2x32xf32>
    %85 = vector.extract_strided_slice %74 {offsets = [0, 5, 0], sizes = [2, 1, 32], strides = [1, 1, 1]} : vector<2x16x32xf32> to vector<2x1x32xf32>
    %86 = vector.shape_cast %85 : vector<2x1x32xf32> to vector<2x32xf32>
    %87 = vector.extract_strided_slice %74 {offsets = [0, 6, 0], sizes = [2, 1, 32], strides = [1, 1, 1]} : vector<2x16x32xf32> to vector<2x1x32xf32>
    %88 = vector.shape_cast %87 : vector<2x1x32xf32> to vector<2x32xf32>
    %89 = vector.extract_strided_slice %74 {offsets = [0, 7, 0], sizes = [2, 1, 32], strides = [1, 1, 1]} : vector<2x16x32xf32> to vector<2x1x32xf32>
    %90 = vector.shape_cast %89 : vector<2x1x32xf32> to vector<2x32xf32>
    %91 = vector.extract_strided_slice %74 {offsets = [0, 8, 0], sizes = [2, 1, 32], strides = [1, 1, 1]} : vector<2x16x32xf32> to vector<2x1x32xf32>
    %92 = vector.shape_cast %91 : vector<2x1x32xf32> to vector<2x32xf32>
    %93 = vector.extract_strided_slice %74 {offsets = [0, 9, 0], sizes = [2, 1, 32], strides = [1, 1, 1]} : vector<2x16x32xf32> to vector<2x1x32xf32>
    %94 = vector.shape_cast %93 : vector<2x1x32xf32> to vector<2x32xf32>
    %95 = vector.extract_strided_slice %74 {offsets = [0, 10, 0], sizes = [2, 1, 32], strides = [1, 1, 1]} : vector<2x16x32xf32> to vector<2x1x32xf32>
    %96 = vector.shape_cast %95 : vector<2x1x32xf32> to vector<2x32xf32>
    %97 = vector.extract_strided_slice %74 {offsets = [0, 11, 0], sizes = [2, 1, 32], strides = [1, 1, 1]} : vector<2x16x32xf32> to vector<2x1x32xf32>
    %98 = vector.shape_cast %97 : vector<2x1x32xf32> to vector<2x32xf32>
    %99 = vector.extract_strided_slice %74 {offsets = [0, 12, 0], sizes = [2, 1, 32], strides = [1, 1, 1]} : vector<2x16x32xf32> to vector<2x1x32xf32>
    %100 = vector.shape_cast %99 : vector<2x1x32xf32> to vector<2x32xf32>
    %101 = vector.extract_strided_slice %74 {offsets = [0, 13, 0], sizes = [2, 1, 32], strides = [1, 1, 1]} : vector<2x16x32xf32> to vector<2x1x32xf32>
    %102 = vector.shape_cast %101 : vector<2x1x32xf32> to vector<2x32xf32>
    %103 = vector.extract_strided_slice %74 {offsets = [0, 14, 0], sizes = [2, 1, 32], strides = [1, 1, 1]} : vector<2x16x32xf32> to vector<2x1x32xf32>
    %104 = vector.shape_cast %103 : vector<2x1x32xf32> to vector<2x32xf32>
    %105 = vector.extract_strided_slice %74 {offsets = [0, 15, 0], sizes = [2, 1, 32], strides = [1, 1, 1]} : vector<2x16x32xf32> to vector<2x1x32xf32>
    %106 = vector.shape_cast %105 : vector<2x1x32xf32> to vector<2x32xf32>
    %107 = tpu.concatenate %76, %78, %80, %82, %84, %86, %88, %90, %92, %94, %96, %98, %100, %102, %104, %106 in 1 : vector<2x32xf32>, vector<2x32xf32>, vector<2x32xf32>, vector<2x32xf32>, vector<2x32xf32>, vector<2x32xf32>, vector<2x32xf32>, vector<2x32xf32>, vector<2x32xf32>, vector<2x32xf32>, vector<2x32xf32>, vector<2x32xf32>, vector<2x32xf32>, vector<2x32xf32>, vector<2x32xf32>, vector<2x32xf32> -> vector<2x512xf32>
    %108 = arith.truncf %107 : vector<2x512xf32> to vector<2x512xbf16>
    %c0_40 = arith.constant 0 : index
    %c0_41 = arith.constant 0 : index
    %109 = vector.load %arg3[%c0_40, %c0_41] : memref<512x32xbf16, #tpu.memory_space<vmem>>, vector<512x32xbf16>
    %cst_42 = arith.constant dense<0.000000e+00> : vector<2x32xf32>
    %110 = tpu.matmul %108, %109, %cst_42 {dimension_numbers = #tpu.dot_dimension_numbers<[1], [0], [0], [1], [0, 0, 1, 1], [], []>} : vector<2x512xbf16>, vector<512x32xbf16>, vector<2x32xf32> -> vector<2x32xf32>
    %c0_43 = arith.constant 0 : index
    %c0_44 = arith.constant 0 : index
    %111 = vector.load %arg4[%c0_43, %c0_44] : memref<1x32xf32, #tpu.memory_space<vmem>>, vector<1x32xf32>
    %112 = vector.broadcast %111 : vector<1x32xf32> to vector<2x32xf32>
    %113 = arith.addf %110, %112 : vector<2x32xf32>
    %cst_45 = arith.constant 0.000000e+00 : f32
    %114 = vector.broadcast %cst_45 : f32 to vector<2x32xf32>
    %115 = arith.cmpf ogt, %113, %114 : vector<2x32xf32>
    %cst_46 = arith.constant 2.000000e-01 : f32
    %116 = vector.broadcast %cst_46 : f32 to vector<2x32xf32>
    %117 = arith.mulf %116, %113 : vector<2x32xf32>
    %118 = arith.select %115, %113, %117 : vector<2x32xi1>, vector<2x32xf32>
    %119 = arith.truncf %118 : vector<2x32xf32> to vector<2x32xbf16>
    %c0_47 = arith.constant 0 : index
    %c0_48 = arith.constant 0 : index
    %120 = vector.load %arg5[%c0_47, %c0_48] : memref<32x1xbf16, #tpu.memory_space<vmem>>, vector<32x1xbf16>
    %cst_49 = arith.constant dense<0.000000e+00> : vector<2x1xf32>
    %121 = tpu.matmul %119, %120, %cst_49 {dimension_numbers = #tpu.dot_dimension_numbers<[1], [0], [0], [1], [0, 0, 1, 1], [], []>} : vector<2x32xbf16>, vector<32x1xbf16>, vector<2x1xf32> -> vector<2x1xf32>
    %c0_50 = arith.constant 0 : index
    %c0_51 = arith.constant 0 : index
    %122 = vector.load %arg6[%c0_50, %c0_51] : memref<1x1xf32, #tpu.memory_space<vmem>>, vector<1x1xf32>
    %123 = vector.broadcast %122 : vector<1x1xf32> to vector<2x1xf32>
    %124 = arith.addf %121, %123 : vector<2x1xf32>
    %c0_52 = arith.constant 0 : index
    %c0_53 = arith.constant 0 : index
    %125 = vector.load %arg7[%c0_52, %c0_53] : memref<2x1xf32, #tpu.memory_space<vmem>>, vector<2x1xf32>
    tpu.vector_store %arg7[%c0_52, %c0_53], %124 {strides = array<i32>} : memref<2x1xf32, #tpu.memory_space<vmem>>, vector<2x1xf32>,
    return
  }
}

</mosaic_0001>

<llo_original>
// kernel: _lambda_.5
$region0: #{_lambda_.5}
  #allocation0 [shape = 'u32[]', space=smem, size = 0x4, offset = 0x4, fixed_abs, tag = 'smem constant byte address 0x4 - core index']
  #allocation1 [shape = 'u32[144,128]{1,0:T(1,128)}', space=vmem, size = 0x12000, scoped, tag = 'internal scratch']
  #allocation2 [shape = 'f32[2,26,32]{2,1,0:T(8,128)}', space=vmem, size = 0x8000, scoped, tag = 'scratch operand']
  #allocation3 [shape = 'f32[1,1]{1,0:T(1,128)S(1)}', space=vmem, size = 0x200, scoped, tag = 'scoped memory for _lambda_.5']
  %s0 = inlined_call_operand.vmem [shape: f32[2,16,32], index: 0, kind: input, shape index: {}]
  %s1 = inlined_call_operand.vmem [shape: bf16[288,32], index: 1, kind: input, shape index: {}]
  %s2 = inlined_call_operand.vmem [shape: f32[1,32], index: 2, kind: input, shape index: {}]
  %s3 = inlined_call_operand.vmem [shape: bf16[512,32], index: 3, kind: input, shape index: {}]
  %s4 = inlined_call_operand.vmem [shape: f32[1,32], index: 4, kind: input, shape index: {}]
  %s5 = inlined_call_operand.vmem [shape: bf16[32,1], index: 5, kind: input, shape index: {}]
  %s6 = inlined_call_operand.<no memory space> [shape: f32[1,1], index: 6, kind: input, shape index: {}]
  %s7 = inlined_call_operand.vmem [shape: f32[2,1], index: 7, kind: output, shape index: {}]
  %s8 = sld [smem:[#allocation0]]
  $region38: #{_lambda_.5} parent=0
    _
  %s10 = ssub.s32 1, %s8
  %s11 = scalar_select 0, %s10, %s8
  %v12 = vstv %s6
  %13 = vst [vmem:[#allocation3] sm:$0x1] %v12
  // Predicated region
  $region2: #{_lambda_.5} parent=0 // pred_check
    _
  $region3: #{_lambda_.5} parent=0 // pred_check_branch
    %15 = sbr.rel (0) target = $region5
  $region4: #{_lambda_.5} parent=0 // pred_region
    _
  $region5: #{_lambda_.5} parent=0 // pred_fallthru
    _
  // Predicated region
  $region6: #{_lambda_.5} parent=0 // pred_check
    _
  $region7: #{_lambda_.5} parent=0 // pred_check_branch
    %17 = sbr.rel (0) target = $region9
  $region8: #{_lambda_.5} parent=0 // pred_region
    _
  $region9: #{_lambda_.5} parent=0 // pred_fallthru
    _
  // Predicated region
  $region10: #{_lambda_.5} parent=0 // pred_check
    _
  $region11: #{_lambda_.5} parent=0 // pred_check_branch
    %19 = sbr.rel (0) target = $region13
  $region12: #{_lambda_.5} parent=0 // pred_region
    _
  $region13: #{_lambda_.5} parent=0 // pred_fallthru
    _
  // Predicated region
  $region14: #{_lambda_.5} parent=0 // pred_check
    _
  $region15: #{_lambda_.5} parent=0 // pred_check_branch
    %21 = sbr.rel (0) target = $region17
  $region16: #{_lambda_.5} parent=0 // pred_region
    _
  $region17: #{_lambda_.5} parent=0 // pred_fallthru
    _
  // Predicated region
  $region18: #{_lambda_.5} parent=0 // pred_check
    _
  $region19: #{_lambda_.5} parent=0 // pred_check_branch
    %23 = sbr.rel (0) target = $region21
  $region20: #{_lambda_.5} parent=0 // pred_region
    _
  $region21: #{_lambda_.5} parent=0 // pred_fallthru
    _
  // Predicated region
  $region22: #{_lambda_.5} parent=0 // pred_check
    _
  $region23: #{_lambda_.5} parent=0 // pred_check_branch
    %25 = sbr.rel (0) target = $region25
  $region24: #{_lambda_.5} parent=0 // pred_region
    _
  $region25: #{_lambda_.5} parent=0 // pred_fallthru
    _
  // Predicated region
  $region26: #{_lambda_.5} parent=0 // pred_check
    _
  $region27: #{_lambda_.5} parent=0 // pred_check_branch
    %27 = sbr.rel (0) target = $region29
  $region28: #{_lambda_.5} parent=0 // pred_region
    _
  $region29: #{_lambda_.5} parent=0 // pred_fallthru
    _
  %v29 = vlaneseq
  %v30 = vshrl.u32 %v29, 7
  %v31 = vadd.s32 %v30, 8
  %vm32 = vcmp.lt.s32.totalorder %v30, 0
  %v33 = vsub.s32 0, %v30
  %v34 = vsel %vm32, %v33, %v30
  %v35 = vshrl.u32 %v34, 2
  %v36 = vand.u32 %v34, 3
  %v37 = vsub.s32 0, %v36
  %v38 = vsel %vm32, %v37, %v36
  %vm39 = vcmp.lt.s32.totalorder %v31, 0
  %v40 = vsub.s32 0, %v31
  %v41 = vsel %vm39, %v40, %v31
  %v42 = vshrl.u32 %v41, 2
  %v43 = vand.u32 %v41, 3
  %v44 = vsub.s32 0, %v43
  %v45 = vsel %vm39, %v44, %v43
  %vm46 = vcmp.ne.s32.totalorder %v38, 0
  %vm47 = vcmp.ne.s32.totalorder %v45, 0
  %vm48 = vcmp.lt.s32.totalorder %v38, 0
  %vm49 = vcmp.lt.s32.totalorder %v45, 0
  %vm50 = vmand %vm48, %vm46
  %vm51 = vmand %vm49, %vm47
  %v52 = vadd.s32 %v38, 4
  %v53 = vadd.s32 %v45, 4
  %v54 = vsel %vm50, %v52, %v38
  %v55 = vsel %vm51, %v53, %v45
  %vm56 = vcmp.ge.s32.totalorder %v54, 1
  %vm57 = vcmp.ge.s32.totalorder %v55, 1
  %v58 = vsel %vm56, 1, 0
  %v59 = vsel %vm57, 1, 0
  %v60 = vcvt.s32.f32 %v58
  %v61 = vcvt.s32.f32 %v59
  %v62 = vpack.c.bf16 %v61, %v60
  %vm63 = vcmp.le.s32.totalorder %v54, 2
  %vm64 = vcmp.le.s32.totalorder %v55, 2
  %v65 = vsel %vm63, 1, 0
  %v66 = vsel %vm64, 1, 0
  %v67 = vcvt.s32.f32 %v65
  %v68 = vcvt.s32.f32 %v66
  %v69 = vpack.c.bf16 %v68, %v67
  %vm70 = vcmask 258048
  %71 = vst.msk [vmem:[#allocation2] sm:$0x1f] %vm70, 0.0
  %72 = vst.msk [vmem:[#allocation2 + $0x20] sm:$0x1f] %vm70, 0.0
  %73 = vst.msk [vmem:[#allocation2 + $0x15] sm:$0x1f] %vm70, 0.0
  %74 = vst.msk [vmem:[#allocation2 + $0x35] sm:$0x1f] %vm70, 0.0
  %v75 = vld [vmem:[%s0] sm:$0xff]
  %v76 = vld [vmem:[%s0 + $0x8] sm:$0xff]
  %v77 = vld [vmem:[%s0 + $0x10] sm:$0xff]
  %v78 = vld [vmem:[%s0 + $0x18] sm:$0xff]
  %vm79 = vcmask 261120
  %80 = vst.msk [vmem:[#allocation2 + $0x5] sm:$0xff] %vm79, %v75
  %81 = vst.msk [vmem:[#allocation2 + $0xd] sm:$0xff] %vm79, %v76
  %82 = vst.msk [vmem:[#allocation2 + $0x25] sm:$0xff] %vm79, %v77
  %83 = vst.msk [vmem:[#allocation2 + $0x2d] sm:$0xff] %vm79, %v78
  %v84 = vld [vmem:[#allocation2] sm:$0xff]
  %v85 = vld [vmem:[#allocation2 + $0x8] sm:$0xff]
  %v86 = vld [vmem:[#allocation2 + $0x20] sm:$0xff]
  %v87 = vld [vmem:[#allocation2 + $0x28] sm:$0xff]
  %v88 = vpack.c.bf16 %v85, %v84
  %v89 = vpack.c.bf16 %v87, %v86
  %v90 = vmul.bf16 %v88, %v62
  %v91 = vmul.bf16 %v89, %v62
  %v92 = vld [vmem:[#allocation2 + $0x1] sm:$0xff]
  %v93 = vld [vmem:[#allocation2 + $0x9] sm:$0xff]
  %v94 = vld [vmem:[#allocation2 + $0x21] sm:$0xff]
  %v95 = vld [vmem:[#allocation2 + $0x29] sm:$0xff]
  %v96 = vpack.c.bf16 %v93, %v92
  %v97 = vpack.c.bf16 %v95, %v94
  %v98 = vld [vmem:[#allocation2 + $0x2] sm:$0xff]
  %v99 = vld [vmem:[#allocation2 + $0xa] sm:$0xff]
  %v100 = vld [vmem:[#allocation2 + $0x22] sm:$0xff]
  %v101 = vld [vmem:[#allocation2 + $0x2a] sm:$0xff]
  %v102 = vpack.c.bf16 %v99, %v98
  %v103 = vpack.c.bf16 %v101, %v100
  %v104 = vmul.bf16 %v102, %v69
  %v105 = vmul.bf16 %v103, %v69
  %v106 = vld [vmem:[#allocation2 + $0x4] sm:$0xff]
  %v107 = vld [vmem:[#allocation2 + $0xc] sm:$0xff]
  %v108 = vld [vmem:[#allocation2 + $0x24] sm:$0xff]
  %v109 = vld [vmem:[#allocation2 + $0x2c] sm:$0xff]
  %v110 = vpack.c.bf16 %v107, %v106
  %v111 = vpack.c.bf16 %v109, %v108
  %v112 = vmul.bf16 %v110, %v62
  %v113 = vmul.bf16 %v111, %v62
  %v114 = vld [vmem:[#allocation2 + $0x5] sm:$0xff]
  %v115 = vld [vmem:[#allocation2 + $0xd] sm:$0xff]
  %v116 = vld [vmem:[#allocation2 + $0x25] sm:$0xff]
  %v117 = vld [vmem:[#allocation2 + $0x2d] sm:$0xff]
  %v118 = vpack.c.bf16 %v115, %v114
  %v119 = vpack.c.bf16 %v117, %v116
  %v120 = vld [vmem:[#allocation2 + $0x6] sm:$0xff]
  %v121 = vld [vmem:[#allocation2 + $0xe] sm:$0xff]
  %v122 = vld [vmem:[#allocation2 + $0x26] sm:$0xff]
  %v123 = vld [vmem:[#allocation2 + $0x2e] sm:$0xff]
  %v124 = vpack.c.bf16 %v121, %v120
  %v125 = vpack.c.bf16 %v123, %v122
  %v126 = vmul.bf16 %v124, %v69
  %v127 = vmul.bf16 %v125, %v69
  %v128 = vld [vmem:[#allocation2 + $0x10] sm:$0xff]
  %v129 = vld [vmem:[#allocation2 + $0x30] sm:$0xff]
  %v130 = vpack.c.bf16 %v128, %v85
  %v131 = vpack.c.bf16 %v129, %v87
  %v132 = vmul.bf16 %v130, %v62
  %v133 = vmul.bf16 %v131, %v62
  %v134 = vld [vmem:[#allocation2 + $0x11] sm:$0xff]
  %v135 = vld [vmem:[#allocation2 + $0x31] sm:$0xff]
  %v136 = vpack.c.bf16 %v134, %v93
  %v137 = vpack.c.bf16 %v135, %v95
  %v138 = vld [vmem:[#allocation2 + $0x12] sm:$0xff]
  %v139 = vld [vmem:[#allocation2 + $0x32] sm:$0xff]
  %v140 = vpack.c.bf16 %v138, %v99
  %v141 = vpack.c.bf16 %v139, %v101
  %v142 = vmul.bf16 %v140, %v69
  %v143 = vmul.bf16 %v141, %v69
  %146 = vrot.lane.b32.xlu0 %v96, 32
  %v147 = vpop.permute.xlu0 %146
  %148 = vrot.lane.b32.xlu0 %v97, 32
  %v149 = vpop.permute.xlu0 %148
  %152 = vrot.lane.b32.xlu0 %v104, 64
  %v153 = vpop.permute.xlu0 %152
  %154 = vrot.lane.b32.xlu0 %v105, 64
  %v155 = vpop.permute.xlu0 %154
  %158 = vrot.lane.b32.xlu0 %v112, 96
  %v159 = vpop.permute.xlu0 %158
  %160 = vrot.lane.b32.xlu0 %v113, 96
  %v161 = vpop.permute.xlu0 %160
  %164 = vrot.lane.b32.xlu0 %v126, 32
  %v165 = vpop.permute.xlu0 %164
  %166 = vrot.lane.b32.xlu0 %v127, 32
  %v167 = vpop.permute.xlu0 %166
  %170 = vrot.lane.b32.xlu0 %v132, 64
  %v171 = vpop.permute.xlu0 %170
  %172 = vrot.lane.b32.xlu0 %v133, 64
  %v173 = vpop.permute.xlu0 %172
  %176 = vrot.lane.b32.xlu0 %v136, 96
  %v177 = vpop.permute.xlu0 %176
  %178 = vrot.lane.b32.xlu0 %v137, 96
  %v179 = vpop.permute.xlu0 %178
  %v182 = vsel %vm79, %v90, %v147
  %v185 = vsel %vm79, %v91, %v149
  %vm186 = vcmask 523264
  %v188 = vsel %vm186, %v182, %v153
  %v190 = vsel %vm186, %v185, %v155
  %vm191 = vcmask 785408
  %v193 = vsel %vm191, %v188, %v159
  %v196 = vsel %vm191, %v190, %v161
  %v200 = vsel %vm79, %v118, %v165
  %v203 = vsel %vm79, %v119, %v167
  %v205 = vsel %vm186, %v200, %v171
  %v207 = vsel %vm186, %v203, %v173
  %v209 = vsel %vm191, %v205, %v177
  %v212 = vsel %vm191, %v207, %v179
  %v214 = vld [vmem:[%s1] sm:$0xf]
  %v215 = vld [vmem:[%s1 + $0x4] sm:$0xf]
  %v216 = vld [vmem:[%s1 + $0x8] sm:$0xf]
  %v217 = vld [vmem:[%s1 + $0xc] sm:$0xf]
  %v218 = vld [vmem:[%s1 + $0x10] sm:$0xf]
  %v219 = vld [vmem:[%s1 + $0x14] sm:$0xf]
  %v220 = vld [vmem:[%s1 + $0x18] sm:$0xf]
  %v221 = vld [vmem:[%s1 + $0x1c] sm:$0xf]
  %v222 = vld [vmem:[%s1 + $0x20] sm:$0xf]
  %v223 = vld [vmem:[%s1 + $0x24] sm:$0xf]
  %v224 = vld [vmem:[%s1 + $0x28] sm:$0xf]
  %v225 = vld [vmem:[%s1 + $0x2c] sm:$0xf]
  %v226 = vld [vmem:[%s1 + $0x30] sm:$0xf]
  %v227 = vld [vmem:[%s1 + $0x34] sm:$0xf]
  %v228 = vld [vmem:[%s1 + $0x38] sm:$0xf]
  %v229 = vld [vmem:[%s1 + $0x3c] sm:$0xf]
  %v230 = vld [vmem:[%s1 + $0x40] sm:$0xf]
  %v231 = vld [vmem:[%s1 + $0x44] sm:$0xf]
  %v232 = vld [vmem:[%s1 + $0x48] sm:$0xf]
  %v233 = vld [vmem:[%s1 + $0x4c] sm:$0xf]
  %v234 = vld [vmem:[%s1 + $0x50] sm:$0xf]
  %v235 = vld [vmem:[%s1 + $0x54] sm:$0xf]
  %v236 = vld [vmem:[%s1 + $0x58] sm:$0xf]
  %v237 = vld [vmem:[%s1 + $0x5c] sm:$0xf]
  %v238 = vld [vmem:[%s1 + $0x60] sm:$0xf]
  %v239 = vld [vmem:[%s1 + $0x64] sm:$0xf]
  %v240 = vld [vmem:[%s1 + $0x68] sm:$0xf]
  %v241 = vld [vmem:[%s1 + $0x6c] sm:$0xf]
  %v242 = vld [vmem:[%s1 + $0x70] sm:$0xf]
  %v243 = vld [vmem:[%s1 + $0x74] sm:$0xf]
  %v244 = vld [vmem:[%s1 + $0x78] sm:$0xf]
  %v245 = vld [vmem:[%s1 + $0x7c] sm:$0xf]
  %v246 = vld [vmem:[%s1 + $0x80] sm:$0xf]
  %v247 = vld [vmem:[%s1 + $0x84] sm:$0xf]
  %v248 = vld [vmem:[%s1 + $0x88] sm:$0xf]
  %v249 = vld [vmem:[%s1 + $0x8c] sm:$0xf]
  %v250 = vld [vmem:[%s2] sm:$0x1]
  %v252 = vlaneseq
  %v253 = vshrl.u32 %v252, 7
  %v254 = vsub.s32 0, %v253
  %v255 = vrot.slane %v250, %v254
  %v293 = vunpack.c.l.b16 %v214
  %v294 = vunpack.c.l.b16 %v215
  %v295 = vunpack.c.l.b16 %v216
  %v296 = vunpack.c.l.b16 %v217
  %v297 = vunpack.c.l.b16 %v218
  %v298 = vunpack.c.l.b16 %v219
  %v299 = vunpack.c.l.b16 %v220
  %v300 = vunpack.c.l.b16 %v221
  %v301 = vunpack.c.l.b16 %v222
  %v302 = vunpack.c.l.b16 %v223
  %v303 = vunpack.c.l.b16 %v224
  %v304 = vunpack.c.l.b16 %v225
  %v305 = vunpack.c.l.b16 %v226
  %v306 = vunpack.c.l.b16 %v227
  %v307 = vunpack.c.l.b16 %v228
  %v308 = vunpack.c.l.b16 %v229
  %v309 = vunpack.c.l.b16 %v230
  %v310 = vunpack.c.l.b16 %v231
  %v311 = vunpack.c.l.b16 %v232
  %v312 = vunpack.c.l.b16 %v233
  %v313 = vunpack.c.l.b16 %v234
  %v314 = vunpack.c.l.b16 %v235
  %v315 = vunpack.c.l.b16 %v236
  %v316 = vunpack.c.l.b16 %v237
  %v317 = vunpack.c.l.b16 %v238
  %v318 = vunpack.c.l.b16 %v239
  %v319 = vunpack.c.l.b16 %v240
  %v320 = vunpack.c.l.b16 %v241
  %v321 = vunpack.c.l.b16 %v242
  %v322 = vunpack.c.l.b16 %v243
  %v323 = vunpack.c.l.b16 %v244
  %v324 = vunpack.c.l.b16 %v245
  %v325 = vunpack.c.l.b16 %v246
  %v326 = vunpack.c.l.b16 %v247
  %v327 = vunpack.c.l.b16 %v248
  %v328 = vunpack.c.l.b16 %v249
  %v329 = vpack.c.b16 %v294, %v293
  %v330 = vpack.c.b16 %v296, %v295
  %v331 = vpack.c.b16 %v298, %v297
  %v332 = vpack.c.b16 %v300, %v299
  %v333 = vpack.c.b16 %v302, %v301
  %v334 = vpack.c.b16 %v304, %v303
  %v335 = vpack.c.b16 %v306, %v305
  %v336 = vpack.c.b16 %v308, %v307
  %v337 = vpack.c.b16 %v310, %v309
  %v338 = vpack.c.b16 %v312, %v311
  %v339 = vpack.c.b16 %v314, %v313
  %v340 = vpack.c.b16 %v316, %v315
  %v341 = vpack.c.b16 %v318, %v317
  %v342 = vpack.c.b16 %v320, %v319
  %v343 = vpack.c.b16 %v322, %v321
  %v344 = vpack.c.b16 %v324, %v323
  %v345 = vpack.c.b16 %v326, %v325
  %v346 = vpack.c.b16 %v328, %v327
  %v366 = vsel %vm79, %v142, 0
  %v369 = vsel %vm79, %v143, 0
  %371 = vmatprep.subr.bf16.mxu0 0
  %372 = vmatpush1.bf16.msra.mxu0 %v329
  %373 = vmatprep.subr.bf16.mxu0 0
  %374 = vmatpush1.bf16.msra.mxu0 %v330
  %375 = vmatprep.subr.bf16.mxu0 0
  %376 = vmatpush1.bf16.msra.mxu0 %v331
  %377 = vmatprep.subr.bf16.mxu0 0
  %378 = vmatpush1.bf16.msra.mxu0 %v332
  %379 = vmatprep.subr.bf16.mxu0 0
  %380 = vmatpush1.bf16.msra.mxu0 %v333
  %381 = vmatprep.subr.bf16.mxu0 0
  %382 = vmatpush1.bf16.msra.mxu0 %v334
  %383 = vmatprep.subr.bf16.mxu0 0
  %384 = vmatpush1.bf16.msra.mxu0 %v335
  %385 = vmatprep.subr.bf16.mxu0 0
  %386 = vmatpush1.bf16.msra.mxu0 %v336
  %387 = vmatprep.subr.bf16.mxu0 0
  %388 = vmatpush1.bf16.msra.mxu0 %v337
  %389 = vmatprep.subr.bf16.mxu0 0
  %390 = vmatpush1.bf16.msra.mxu0 %v338
  %391 = vmatprep.subr.bf16.mxu0 0
  %392 = vmatpush1.bf16.msra.mxu0 %v339
  %393 = vmatprep.subr.bf16.mxu0 0
  %394 = vmatpush1.bf16.msra.mxu0 %v340
  %395 = vmatprep.subr.bf16.mxu0 0
  %396 = vmatpush1.bf16.msra.mxu0 %v341
  %397 = vmatprep.subr.bf16.mxu0 0
  %398 = vmatpush1.bf16.msra.mxu0 %v342
  %399 = vmatprep.subr.bf16.mxu0 0
  %400 = vmatpush1.bf16.msra.mxu0 %v343
  %401 = vmatprep.subr.bf16.mxu0 0
  %402 = vmatpush1.bf16.msra.mxu0 %v344
  %403 = vmatprep.mubr.bf16.mxu0 %v209
  %404 = vmatmul.mubr.bf16.gmra.mrb[0].mxu0 %v193
  %v405 = vpop.f32.mrb[0].mxu0
  %v406 = vadd.f32 %v255, %v405
  %v407 = vpop.f32.mrb[0].mxu0
  %v408 = vpop.f32.mrb[0].mxu0
  %v409 = vadd.f32 %v255, %v408
  %v410 = vpop.f32.mrb[0].mxu0
  %411 = vmatprep.mubr.bf16.mxu0 %v212
  %412 = vmatmul.mubr.bf16.gmra.mrb[0].mxu0 %v196
  %v413 = vpop.f32.mrb[0].mxu0
  %v414 = vadd.f32 %v255, %v413
  %v415 = vpop.f32.mrb[0].mxu0
  %v416 = vpop.f32.mrb[0].mxu0
  %v417 = vadd.f32 %v255, %v416
  %v418 = vpop.f32.mrb[0].mxu0
  %419 = vdwg.mxu0
  %420 = vmatprep.subr.bf16.mxu0 0
  %421 = vmatpush1.bf16.msra.mxu0 %v345
  %422 = vmatprep.subr.bf16.mxu0 0
  %423 = vmatpush1.bf16.msra.mxu0 %v346
  %424 = vmatprep.subr.bf16.mxu0 0
  %425 = vmatpush1.bf16.msra.mxu0 0
  %426 = vmatprep.subr.bf16.mxu0 0
  %427 = vmatpush1.bf16.msra.mxu0 0
  %428 = vmatprep.subr.bf16.mxu0 0
  %429 = vmatpush1.bf16.msra.mxu0 0
  %430 = vmatprep.subr.bf16.mxu0 0
  %431 = vmatpush1.bf16.msra.mxu0 0
  %432 = vmatprep.subr.bf16.mxu0 0
  %433 = vmatpush1.bf16.msra.mxu0 0
  %434 = vmatprep.subr.bf16.mxu0 0
  %435 = vmatpush1.bf16.msra.mxu0 0
  %436 = vmatprep.subr.bf16.mxu0 0
  %437 = vmatpush1.bf16.msra.mxu0 0
  %438 = vmatprep.subr.bf16.mxu0 0
  %439 = vmatpush1.bf16.msra.mxu0 0
  %440 = vmatprep.subr.bf16.mxu0 0
  %441 = vmatpush1.bf16.msra.mxu0 0
  %442 = vmatprep.subr.bf16.mxu0 0
  %443 = vmatpush1.bf16.msra.mxu0 0
  %444 = vmatprep.subr.bf16.mxu0 0
  %445 = vmatpush1.bf16.msra.mxu0 0
  %446 = vmatprep.subr.bf16.mxu0 0
  %447 = vmatpush1.bf16.msra.mxu0 0
  %448 = vmatprep.subr.bf16.mxu0 0
  %449 = vmatpush1.bf16.msra.mxu0 0
  %450 = vmatprep.subr.bf16.mxu0 0
  %451 = vmatpush1.bf16.msra.mxu0 0
  %452 = vmatprep.mubr.bf16.mxu0 0
  %453 = vmatmul.mubr.bf16.gmra.mrb[0].mxu0 %v366
  %v454 = vpop.f32.mrb[0].mxu0
  %v455 = vadd.f32 %v406, %v454
  %v456 = vpop.f32.mrb[0].mxu0
  %v457 = vpop.f32.mrb[0].mxu0
  %v458 = vadd.f32 %v409, %v457
  %v459 = vpop.f32.mrb[0].mxu0
  %460 = vmatprep.mubr.bf16.mxu0 0
  %461 = vmatmul.mubr.bf16.gmra.mrb[0].mxu0 %v369
  %v462 = vpop.f32.mrb[0].mxu0
  %v463 = vadd.f32 %v414, %v462
  %v464 = vpop.f32.mrb[0].mxu0
  %v465 = vpop.f32.mrb[0].mxu0
  %v466 = vadd.f32 %v417, %v465
  %v467 = vpop.f32.mrb[0].mxu0
  %468 = vdwg.mxu0
  %vm469 = vcmp.gt.f32.partialorder %v455, 0.0
  %vm470 = vcmp.gt.f32.partialorder %v458, 0.0
  %vm471 = vcmp.gt.f32.partialorder %v463, 0.0
  %vm472 = vcmp.gt.f32.partialorder %v466, 0.0
  %v473 = vmul.f32 %v455, 0.2
  %v474 = vmul.f32 %v458, 0.2
  %v475 = vmul.f32 %v463, 0.2
  %v476 = vmul.f32 %v466, 0.2
  %v477 = vsel %vm469, %v455, %v473
  %v478 = vsel %vm470, %v458, %v474
  %v479 = vsel %vm471, %v463, %v475
  %v480 = vsel %vm472, %v466, %v476
  %v483 = vrot.slane %v479, 7
  %vm484 = vcmask 1041409
  %v485 = vsel %vm484, %v483, %v477
  %v487 = vrot.slane %v477, 1
  %v488 = vsel %vm484, %v479, %v487
  %489 = vrot.lane.b32.xlu0 %v488, 32
  %v490 = vpop.permute.xlu0 %489
  %v492 = vrot.slane %v477, 2
  %v493 = vrot.slane %v479, 1
  %v494 = vsel %vm484, %v493, %v492
  %495 = vrot.lane.b32.xlu0 %v494, 64
  %v496 = vpop.permute.xlu0 %495
  %v498 = vrot.slane %v477, 3
  %v499 = vrot.slane %v479, 2
  %v500 = vsel %vm484, %v499, %v498
  %501 = vrot.lane.b32.xlu0 %v500, 96
  %v502 = vpop.permute.xlu0 %501
  %v504 = vrot.slane %v477, 4
  %v505 = vrot.slane %v479, 3
  %v506 = vsel %vm484, %v505, %v504
  %v508 = vrot.slane %v477, 5
  %v509 = vrot.slane %v479, 4
  %v510 = vsel %vm484, %v509, %v508
  %511 = vrot.lane.b32.xlu0 %v510, 32
  %v512 = vpop.permute.xlu0 %511
  %v514 = vrot.slane %v477, 6
  %v515 = vrot.slane %v479, 5
  %v516 = vsel %vm484, %v515, %v514
  %517 = vrot.lane.b32.xlu0 %v516, 64
  %v518 = vpop.permute.xlu0 %517
  %v520 = vrot.slane %v477, 7
  %v521 = vrot.slane %v479, 6
  %v522 = vsel %vm484, %v521, %v520
  %523 = vrot.lane.b32.xlu0 %v522, 96
  %v524 = vpop.permute.xlu0 %523
  %v528 = vrot.slane %v480, 7
  %v529 = vsel %vm484, %v528, %v478
  %v531 = vrot.slane %v478, 1
  %v532 = vsel %vm484, %v480, %v531
  %533 = vrot.lane.b32.xlu0 %v532, 32
  %v534 = vpop.permute.xlu0 %533
  %v536 = vrot.slane %v478, 2
  %v537 = vrot.slane %v480, 1
  %v538 = vsel %vm484, %v537, %v536
  %539 = vrot.lane.b32.xlu0 %v538, 64
  %v540 = vpop.permute.xlu0 %539
  %v542 = vrot.slane %v478, 3
  %v543 = vrot.slane %v480, 2
  %v544 = vsel %vm484, %v543, %v542
  %545 = vrot.lane.b32.xlu0 %v544, 96
  %v546 = vpop.permute.xlu0 %545
  %v548 = vrot.slane %v478, 4
  %v549 = vrot.slane %v480, 3
  %v550 = vsel %vm484, %v549, %v548
  %v552 = vrot.slane %v478, 5
  %v553 = vrot.slane %v480, 4
  %v554 = vsel %vm484, %v553, %v552
  %555 = vrot.lane.b32.xlu0 %v554, 32
  %v556 = vpop.permute.xlu0 %555
  %v558 = vrot.slane %v478, 6
  %v559 = vrot.slane %v480, 5
  %v560 = vsel %vm484, %v559, %v558
  %561 = vrot.lane.b32.xlu0 %v560, 64
  %v562 = vpop.permute.xlu0 %561
  %v564 = vrot.slane %v478, 7
  %v565 = vrot.slane %v480, 6
  %v566 = vsel %vm484, %v565, %v564
  %567 = vrot.lane.b32.xlu0 %v566, 96
  %v568 = vpop.permute.xlu0 %567
  %v570 = vsel %vm79, %v485, %v490
  %v571 = vsel %vm186, %v570, %v496
  %v572 = vsel %vm191, %v571, %v502
  %v573 = vsel %vm79, %v506, %v512
  %v574 = vsel %vm186, %v573, %v518
  %v575 = vsel %vm191, %v574, %v524
  %v576 = vsel %vm79, %v529, %v534
  %v577 = vsel %vm186, %v576, %v540
  %v578 = vsel %vm191, %v577, %v546
  %v579 = vsel %vm79, %v550, %v556
  %v580 = vsel %vm186, %v579, %v562
  %v581 = vsel %vm191, %v580, %v568
  %v582 = vpack.c.bf16 %v572, %v572
  %v583 = vpack.c.bf16 %v575, %v575
  %v584 = vpack.c.bf16 %v578, %v578
  %v585 = vpack.c.bf16 %v581, %v581
  %v586 = vld [vmem:[%s3] sm:$0xf]
  %v587 = vld [vmem:[%s3 + $0x4] sm:$0xf]
  %v588 = vld [vmem:[%s3 + $0x8] sm:$0xf]
  %v589 = vld [vmem:[%s3 + $0xc] sm:$0xf]
  %v590 = vld [vmem:[%s3 + $0x10] sm:$0xf]
  %v591 = vld [vmem:[%s3 + $0x14] sm:$0xf]
  %v592 = vld [vmem:[%s3 + $0x18] sm:$0xf]
  %v593 = vld [vmem:[%s3 + $0x1c] sm:$0xf]
  %v594 = vld [vmem:[%s3 + $0x20] sm:$0xf]
  %v595 = vld [vmem:[%s3 + $0x24] sm:$0xf]
  %v596 = vld [vmem:[%s3 + $0x28] sm:$0xf]
  %v597 = vld [vmem:[%s3 + $0x2c] sm:$0xf]
  %v598 = vld [vmem:[%s3 + $0x30] sm:$0xf]
  %v599 = vld [vmem:[%s3 + $0x34] sm:$0xf]
  %v600 = vld [vmem:[%s3 + $0x38] sm:$0xf]
  %v601 = vld [vmem:[%s3 + $0x3c] sm:$0xf]
  %v602 = vld [vmem:[%s3 + $0x40] sm:$0xf]
  %v603 = vld [vmem:[%s3 + $0x44] sm:$0xf]
  %v604 = vld [vmem:[%s3 + $0x48] sm:$0xf]
  %v605 = vld [vmem:[%s3 + $0x4c] sm:$0xf]
  %v606 = vld [vmem:[%s3 + $0x50] sm:$0xf]
  %v607 = vld [vmem:[%s3 + $0x54] sm:$0xf]
  %v608 = vld [vmem:[%s3 + $0x58] sm:$0xf]
  %v609 = vld [vmem:[%s3 + $0x5c] sm:$0xf]
  %v610 = vld [vmem:[%s3 + $0x60] sm:$0xf]
  %v611 = vld [vmem:[%s3 + $0x64] sm:$0xf]
  %v612 = vld [vmem:[%s3 + $0x68] sm:$0xf]
  %v613 = vld [vmem:[%s3 + $0x6c] sm:$0xf]
  %v614 = vld [vmem:[%s3 + $0x70] sm:$0xf]
  %v615 = vld [vmem:[%s3 + $0x74] sm:$0xf]
  %v616 = vld [vmem:[%s3 + $0x78] sm:$0xf]
  %v617 = vld [vmem:[%s3 + $0x7c] sm:$0xf]
  %v618 = vld [vmem:[%s3 + $0x80] sm:$0xf]
  %v619 = vld [vmem:[%s3 + $0x84] sm:$0xf]
  %v620 = vld [vmem:[%s3 + $0x88] sm:$0xf]
  %v621 = vld [vmem:[%s3 + $0x8c] sm:$0xf]
  %v622 = vld [vmem:[%s3 + $0x90] sm:$0xf]
  %v623 = vld [vmem:[%s3 + $0x94] sm:$0xf]
  %v624 = vld [vmem:[%s3 + $0x98] sm:$0xf]
  %v625 = vld [vmem:[%s3 + $0x9c] sm:$0xf]
  %v626 = vld [vmem:[%s3 + $0xa0] sm:$0xf]
  %v627 = vld [vmem:[%s3 + $0xa4] sm:$0xf]
  %v628 = vld [vmem:[%s3 + $0xa8] sm:$0xf]
  %v629 = vld [vmem:[%s3 + $0xac] sm:$0xf]
  %v630 = vld [vmem:[%s3 + $0xb0] sm:$0xf]
  %v631 = vld [vmem:[%s3 + $0xb4] sm:$0xf]
  %v632 = vld [vmem:[%s3 + $0xb8] sm:$0xf]
  %v633 = vld [vmem:[%s3 + $0xbc] sm:$0xf]
  %v634 = vld [vmem:[%s3 + $0xc0] sm:$0xf]
  %v635 = vld [vmem:[%s3 + $0xc4] sm:$0xf]
  %v636 = vld [vmem:[%s3 + $0xc8] sm:$0xf]
  %v637 = vld [vmem:[%s3 + $0xcc] sm:$0xf]
  %v638 = vld [vmem:[%s3 + $0xd0] sm:$0xf]
  %v639 = vld [vmem:[%s3 + $0xd4] sm:$0xf]
  %v640 = vld [vmem:[%s3 + $0xd8] sm:$0xf]
  %v641 = vld [vmem:[%s3 + $0xdc] sm:$0xf]
  %v642 = vld [vmem:[%s3 + $0xe0] sm:$0xf]
  %v643 = vld [vmem:[%s3 + $0xe4] sm:$0xf]
  %v644 = vld [vmem:[%s3 + $0xe8] sm:$0xf]
  %v645 = vld [vmem:[%s3 + $0xec] sm:$0xf]
  %v646 = vld [vmem:[%s3 + $0xf0] sm:$0xf]
  %v647 = vld [vmem:[%s3 + $0xf4] sm:$0xf]
  %v648 = vld [vmem:[%s3 + $0xf8] sm:$0xf]
  %v649 = vld [vmem:[%s3 + $0xfc] sm:$0xf]
  %v650 = vld [vmem:[%s4] sm:$0x1]
  %v652 = vlaneseq
  %v653 = vshrl.u32 %v652, 7
  %v654 = vsub.s32 0, %v653
  %v655 = vrot.slane %v650, %v654
  %v721 = vunpack.c.l.b16 %v586
  %v722 = vunpack.c.l.b16 %v587
  %v723 = vunpack.c.l.b16 %v588
  %v724 = vunpack.c.l.b16 %v589
  %v725 = vunpack.c.l.b16 %v590
  %v726 = vunpack.c.l.b16 %v591
  %v727 = vunpack.c.l.b16 %v592
  %v728 = vunpack.c.l.b16 %v593
  %v729 = vunpack.c.l.b16 %v594
  %v730 = vunpack.c.l.b16 %v595
  %v731 = vunpack.c.l.b16 %v596
  %v732 = vunpack.c.l.b16 %v597
  %v733 = vunpack.c.l.b16 %v598
  %v734 = vunpack.c.l.b16 %v599
  %v735 = vunpack.c.l.b16 %v600
  %v736 = vunpack.c.l.b16 %v601
  %v737 = vunpack.c.l.b16 %v602
  %v738 = vunpack.c.l.b16 %v603
  %v739 = vunpack.c.l.b16 %v604
  %v740 = vunpack.c.l.b16 %v605
  %v741 = vunpack.c.l.b16 %v606
  %v742 = vunpack.c.l.b16 %v607
  %v743 = vunpack.c.l.b16 %v608
  %v744 = vunpack.c.l.b16 %v609
  %v745 = vunpack.c.l.b16 %v610
  %v746 = vunpack.c.l.b16 %v611
  %v747 = vunpack.c.l.b16 %v612
  %v748 = vunpack.c.l.b16 %v613
  %v749 = vunpack.c.l.b16 %v614
  %v750 = vunpack.c.l.b16 %v615
  %v751 = vunpack.c.l.b16 %v616
  %v752 = vunpack.c.l.b16 %v617
  %v753 = vunpack.c.l.b16 %v618
  %v754 = vunpack.c.l.b16 %v619
  %v755 = vunpack.c.l.b16 %v620
  %v756 = vunpack.c.l.b16 %v621
  %v757 = vunpack.c.l.b16 %v622
  %v758 = vunpack.c.l.b16 %v623
  %v759 = vunpack.c.l.b16 %v624
  %v760 = vunpack.c.l.b16 %v625
  %v761 = vunpack.c.l.b16 %v626
  %v762 = vunpack.c.l.b16 %v627
  %v763 = vunpack.c.l.b16 %v628
  %v764 = vunpack.c.l.b16 %v629
  %v765 = vunpack.c.l.b16 %v630
  %v766 = vunpack.c.l.b16 %v631
  %v767 = vunpack.c.l.b16 %v632
  %v768 = vunpack.c.l.b16 %v633
  %v769 = vunpack.c.l.b16 %v634
  %v770 = vunpack.c.l.b16 %v635
  %v771 = vunpack.c.l.b16 %v636
  %v772 = vunpack.c.l.b16 %v637
  %v773 = vunpack.c.l.b16 %v638
  %v774 = vunpack.c.l.b16 %v639
  %v775 = vunpack.c.l.b16 %v640
  %v776 = vunpack.c.l.b16 %v641
  %v777 = vunpack.c.l.b16 %v642
  %v778 = vunpack.c.l.b16 %v643
  %v779 = vunpack.c.l.b16 %v644
  %v780 = vunpack.c.l.b16 %v645
  %v781 = vunpack.c.l.b16 %v646
  %v782 = vunpack.c.l.b16 %v647
  %v783 = vunpack.c.l.b16 %v648
  %v784 = vunpack.c.l.b16 %v649
  %v785 = vpack.c.b16 %v722, %v721
  %v786 = vpack.c.b16 %v724, %v723
  %v787 = vpack.c.b16 %v726, %v725
  %v788 = vpack.c.b16 %v728, %v727
  %v789 = vpack.c.b16 %v730, %v729
  %v790 = vpack.c.b16 %v732, %v731
  %v791 = vpack.c.b16 %v734, %v733
  %v792 = vpack.c.b16 %v736, %v735
  %v793 = vpack.c.b16 %v738, %v737
  %v794 = vpack.c.b16 %v740, %v739
  %v795 = vpack.c.b16 %v742, %v741
  %v796 = vpack.c.b16 %v744, %v743
  %v797 = vpack.c.b16 %v746, %v745
  %v798 = vpack.c.b16 %v748, %v747
  %v799 = vpack.c.b16 %v750, %v749
  %v800 = vpack.c.b16 %v752, %v751
  %v801 = vpack.c.b16 %v754, %v753
  %v802 = vpack.c.b16 %v756, %v755
  %v803 = vpack.c.b16 %v758, %v757
  %v804 = vpack.c.b16 %v760, %v759
  %v805 = vpack.c.b16 %v762, %v761
  %v806 = vpack.c.b16 %v764, %v763
  %v807 = vpack.c.b16 %v766, %v765
  %v808 = vpack.c.b16 %v768, %v767
  %v809 = vpack.c.b16 %v770, %v769
  %v810 = vpack.c.b16 %v772, %v771
  %v811 = vpack.c.b16 %v774, %v773
  %v812 = vpack.c.b16 %v776, %v775
  %v813 = vpack.c.b16 %v778, %v777
  %v814 = vpack.c.b16 %v780, %v779
  %v815 = vpack.c.b16 %v782, %v781
  %v816 = vpack.c.b16 %v784, %v783
  %849 = vmatprep.subr.bf16.mxu0 0
  %850 = vmatpush1.bf16.msra.mxu0 %v785
  %851 = vmatprep.subr.bf16.mxu0 0
  %852 = vmatpush1.bf16.msra.mxu0 %v786
  %853 = vmatprep.subr.bf16.mxu0 0
  %854 = vmatpush1.bf16.msra.mxu0 %v787
  %855 = vmatprep.subr.bf16.mxu0 0
  %856 = vmatpush1.bf16.msra.mxu0 %v788
  %857 = vmatprep.subr.bf16.mxu0 0
  %858 = vmatpush1.bf16.msra.mxu0 %v789
  %859 = vmatprep.subr.bf16.mxu0 0
  %860 = vmatpush1.bf16.msra.mxu0 %v790
  %861 = vmatprep.subr.bf16.mxu0 0
  %862 = vmatpush1.bf16.msra.mxu0 %v791
  %863 = vmatprep.subr.bf16.mxu0 0
  %864 = vmatpush1.bf16.msra.mxu0 %v792
  %865 = vmatprep.subr.bf16.mxu0 0
  %866 = vmatpush1.bf16.msra.mxu0 %v793
  %867 = vmatprep.subr.bf16.mxu0 0
  %868 = vmatpush1.bf16.msra.mxu0 %v794
  %869 = vmatprep.subr.bf16.mxu0 0
  %870 = vmatpush1.bf16.msra.mxu0 %v795
  %871 = vmatprep.subr.bf16.mxu0 0
  %872 = vmatpush1.bf16.msra.mxu0 %v796
  %873 = vmatprep.subr.bf16.mxu0 0
  %874 = vmatpush1.bf16.msra.mxu0 %v797
  %875 = vmatprep.subr.bf16.mxu0 0
  %876 = vmatpush1.bf16.msra.mxu0 %v798
  %877 = vmatprep.subr.bf16.mxu0 0
  %878 = vmatpush1.bf16.msra.mxu0 %v799
  %879 = vmatprep.subr.bf16.mxu0 0
  %880 = vmatpush1.bf16.msra.mxu0 %v800
  %881 = vmatprep.mubr.bf16.mxu0 %v583
  %882 = vmatmul.mubr.bf16.gmra.mrb[0].mxu0 %v582
  %v883 = vpop.f32.mrb[0].mxu0
  %v884 = vadd.f32 %v655, %v883
  %v885 = vpop.f32.mrb[0].mxu0
  %v886 = vpop.f32.mrb[0].mxu0
  %v887 = vpop.f32.mrb[0].mxu0
  %888 = vdwg.mxu0
  %889 = vmatprep.subr.bf16.mxu0 0
  %890 = vmatpush1.bf16.msra.mxu0 %v801
  %891 = vmatprep.subr.bf16.mxu0 0
  %892 = vmatpush1.bf16.msra.mxu0 %v802
  %893 = vmatprep.subr.bf16.mxu0 0
  %894 = vmatpush1.bf16.msra.mxu0 %v803
  %895 = vmatprep.subr.bf16.mxu0 0
  %896 = vmatpush1.bf16.msra.mxu0 %v804
  %897 = vmatprep.subr.bf16.mxu0 0
  %898 = vmatpush1.bf16.msra.mxu0 %v805
  %899 = vmatprep.subr.bf16.mxu0 0
  %900 = vmatpush1.bf16.msra.mxu0 %v806
  %901 = vmatprep.subr.bf16.mxu0 0
  %902 = vmatpush1.bf16.msra.mxu0 %v807
  %903 = vmatprep.subr.bf16.mxu0 0
  %904 = vmatpush1.bf16.msra.mxu0 %v808
  %905 = vmatprep.subr.bf16.mxu0 0
  %906 = vmatpush1.bf16.msra.mxu0 %v809
  %907 = vmatprep.subr.bf16.mxu0 0
  %908 = vmatpush1.bf16.msra.mxu0 %v810
  %909 = vmatprep.subr.bf16.mxu0 0
  %910 = vmatpush1.bf16.msra.mxu0 %v811
  %911 = vmatprep.subr.bf16.mxu0 0
  %912 = vmatpush1.bf16.msra.mxu0 %v812
  %913 = vmatprep.subr.bf16.mxu0 0
  %914 = vmatpush1.bf16.msra.mxu0 %v813
  %915 = vmatprep.subr.bf16.mxu0 0
  %916 = vmatpush1.bf16.msra.mxu0 %v814
  %917 = vmatprep.subr.bf16.mxu0 0
  %918 = vmatpush1.bf16.msra.mxu0 %v815
  %919 = vmatprep.subr.bf16.mxu0 0
  %920 = vmatpush1.bf16.msra.mxu0 %v816
  %921 = vmatprep.mubr.bf16.mxu0 %v585
  %922 = vmatmul.mubr.bf16.gmra.mrb[0].mxu0 %v584
  %v923 = vpop.f32.mrb[0].mxu0
  %v924 = vadd.f32 %v884, %v923
  %v925 = vpop.f32.mrb[0].mxu0
  %v926 = vpop.f32.mrb[0].mxu0
  %v927 = vpop.f32.mrb[0].mxu0
  %928 = vdwg.mxu0
  %vm929 = vcmp.gt.f32.partialorder %v924, 0.0
  %v930 = vmul.f32 %v924, 0.2
  %v931 = vsel %vm929, %v924, %v930
  %v932 = vpack.c.bf16 %v931, %v931
  %v933 = vld [vmem:[%s5] sm:$0xf]
  %v934 = vld [vmem:[%s5 + $0x4] sm:$0xf]
  %v935 = vld [vmem:[%s5 + $0x8] sm:$0xf]
  %v936 = vld [vmem:[%s5 + $0xc] sm:$0xf]
  %v937 = vld [vmem:[#allocation3] sm:$0x1]
  %v939 = vlaneseq
  %v940 = vshrl.u32 %v939, 7
  %v941 = vsub.s32 0, %v940
  %v942 = vrot.slane %v937, %v941
  %v948 = vunpack.c.l.b16 %v933
  %v949 = vunpack.c.l.b16 %v934
  %v950 = vunpack.c.l.b16 %v935
  %v951 = vunpack.c.l.b16 %v936
  %v952 = vpack.c.b16 %v949, %v948
  %v953 = vpack.c.b16 %v951, %v950
  %v957 = vsel %vm79, %v932, 0
  %959 = vmatprep.subr.bf16.mxu0 0
  %960 = vmatpush1.bf16.msra.mxu0 %v952
  %961 = vmatprep.subr.bf16.mxu0 0
  %962 = vmatpush1.bf16.msra.mxu0 %v953
  %963 = vmatprep.subr.bf16.mxu0 0
  %964 = vmatpush1.bf16.msra.mxu0 0
  %965 = vmatprep.subr.bf16.mxu0 0
  %966 = vmatpush1.bf16.msra.mxu0 0
  %967 = vmatprep.subr.bf16.mxu0 0
  %968 = vmatpush1.bf16.msra.mxu0 0
  %969 = vmatprep.subr.bf16.mxu0 0
  %970 = vmatpush1.bf16.msra.mxu0 0
  %971 = vmatprep.subr.bf16.mxu0 0
  %972 = vmatpush1.bf16.msra.mxu0 0
  %973 = vmatprep.subr.bf16.mxu0 0
  %974 = vmatpush1.bf16.msra.mxu0 0
  %975 = vmatprep.subr.bf16.mxu0 0
  %976 = vmatpush1.bf16.msra.mxu0 0
  %977 = vmatprep.subr.bf16.mxu0 0
  %978 = vmatpush1.bf16.msra.mxu0 0
  %979 = vmatprep.subr.bf16.mxu0 0
  %980 = vmatpush1.bf16.msra.mxu0 0
  %981 = vmatprep.subr.bf16.mxu0 0
  %982 = vmatpush1.bf16.msra.mxu0 0
  %983 = vmatprep.subr.bf16.mxu0 0
  %984 = vmatpush1.bf16.msra.mxu0 0
  %985 = vmatprep.subr.bf16.mxu0 0
  %986 = vmatpush1.bf16.msra.mxu0 0
  %987 = vmatprep.subr.bf16.mxu0 0
  %988 = vmatpush1.bf16.msra.mxu0 0
  %989 = vmatprep.subr.bf16.mxu0 0
  %990 = vmatpush1.bf16.msra.mxu0 0
  %991 = vmatprep.mubr.bf16.mxu0 0
  %992 = vmatmul.mubr.bf16.gmra.mrb[0].mxu0 %v957
  %v993 = vpop.f32.mrb[0].mxu0
  %v994 = vadd.f32 %v942, %v993
  %v995 = vpop.f32.mrb[0].mxu0
  %v996 = vpop.f32.mrb[0].mxu0
  %v997 = vpop.f32.mrb[0].mxu0
  %998 = vdwg.mxu0
  %vm999 = vcmask 1024
  %1000 = vst.msk [vmem:[%s7] sm:$0x3] %vm999, %v994
  // Predicated region
  $region30: #{_lambda_.5} parent=0 // pred_check
    _
  $region31: #{_lambda_.5} parent=0 // pred_check_branch
    %1002 = sbr.rel (0) target = $region33
  $region32: #{_lambda_.5} parent=0 // pred_region
    _
  $region33: #{_lambda_.5} parent=0 // pred_fallthru
    _
  // Predicated region
  $region34: #{_lambda_.5} parent=0 // pred_check
    _
  $region35: #{_lambda_.5} parent=0 // pred_check_branch
    %1004 = sbr.rel (0) target = $region37
  $region36: #{_lambda_.5} parent=0 // pred_region
    _
  $region37: #{_lambda_.5} parent=0 // pred_fallthru
    _

// kernel: _lambda_.4
$region0: #{_lambda_.4}
  #allocation0 [shape = 'u32[]', space=smem, size = 0x4, offset = 0x4, fixed_abs, tag = 'smem constant byte address 0x4 - core index']
  #allocation1 [shape = 'u32[144,128]{1,0:T(1,128)}', space=vmem, size = 0x12000, scoped, tag = 'internal scratch']
  #allocation2 [shape = 'f32[82,16]{1,0:T(8,128)}', space=vmem, size = 0xb000, scoped, tag = 'scratch operand']
  #allocation3 [shape = 'f32[32,32]{1,0:T(8,128)}', space=vmem, size = 0x4000, scoped, tag = 'scratch operand']
  %s0 = inlined_call_operand.vmem [shape: f32[2,64,16], index: 0, kind: input, shape index: {}]
  %s1 = inlined_call_operand.vmem [shape: bf16[144,16], index: 1, kind: input, shape index: {}]
  %s2 = inlined_call_operand.vmem [shape: f32[1,16], index: 2, kind: input, shape index: {}]
  %s3 = inlined_call_operand.vmem [shape: bf16[144,32], index: 3, kind: input, shape index: {}]
  %s4 = inlined_call_operand.vmem [shape: f32[1,32], index: 4, kind: input, shape index: {}]
  %s5 = inlined_call_operand.vmem [shape: f32[2,16,32], index: 5, kind: output, shape index: {}]
  %s6 = sld [smem:[#allocation0]]
  $region53: #{_lambda_.4} parent=0
    _
  %s8 = ssub.s32 1, %s6
  %s9 = scalar_select 0, %s8, %s6
  loop: start=0, step=1, limit=4
  $region2: #{_lambda_.4} parent=0 // loop_pre_header
    _
  $region3: #{_lambda_.4} parent=0 // loop_header
    %s11 = sphi 0, %s15
    %p12 = scmp.ge.s32.totalorder %s11, 4
    %s21 = sphi 0, %s23
    %s24 = sphi 0, %s21
    %s25 = sphi 0, %s24
    %s41 = sphi 0, %s25
    %s45 = sphi 0, %s45
    %s47 = sphi 0, %s45
    %s48 = sphi 0, %s47
    %s62 = sphi 0, %s48
    %s66 = sphi 0, %s66
    %s68 = sphi 0, %s66
    %s69 = sphi 0, %s68
    %s83 = sphi 0, %s69
    %s87 = sphi 0, %s87
    %s89 = sphi 0, %s87
    %s90 = sphi 0, %s89
    %s104 = sphi 0, %s90
    %s108 = sphi 0, %s108
    %s110 = sphi 0, %s108
    %s111 = sphi 0, %s110
    %s125 = sphi 0, %s111
    %s131 = sphi 0, %s133
    %s134 = sphi 0, %s131
    %s135 = sphi 0, %s134
    %s151 = sphi 0, %s135
  $region4: #{_lambda_.4} parent=0 // loop_header_branch
    %14 = sbr.rel (%p12) target = $region8
  $region5: #{_lambda_.4} parent=0 // loop_body
    %s16 = ssub.s32 %s11, 1
    %s17 = ssub.s32 %s11, 2
    %s18 = sadd.s32 %s11, 1
    %s19 = ssub.s32 %s11, %s18
    %p20 = scmp.eq.s32.totalorder %s19, 0
    %s22 = sadd.s32 %s21, 1
    %s23 = scalar_select %p20, %s21, %s22
    %p26 = pneg %p20
    %p27 = scmp.eq.s32.totalorder %s11, 1
    %p28 = por %p26, %p27
    %p29 = scmp.ne.s32.totalorder %s21, %s24
    %p30 = scmp.eq.s32.totalorder %s11, 0
    %p31 = por %p29, %p30
    %p32 = scmp.ne.s32.totalorder %s21, %s24
    %p33 = scmp.eq.s32.totalorder %s16, 1
    %p34 = por %p32, %p33
    %p35 = scmp.ne.s32.totalorder %s24, %s25
    %p36 = scmp.eq.s32.totalorder %s16, 0
    %p37 = por %p35, %p36
    %p38 = scmp.ne.s32.totalorder %s24, %s25
    %p39 = scmp.eq.s32.totalorder %s17, 1
    %p40 = por %p38, %p39
    %p42 = scmp.ne.s32.totalorder %s25, %s41
    %p43 = scmp.eq.s32.totalorder %s17, 0
    %p44 = por %p42, %p43
    %s46 = sadd.s32 %s45, 1
    %p49 = scmp.eq.s32.totalorder %s11, 1
    %p50 = scmp.ne.s32.totalorder %s45, %s47
    %p51 = scmp.eq.s32.totalorder %s11, 0
    %p52 = por %p50, %p51
    %p53 = scmp.ne.s32.totalorder %s45, %s47
    %p54 = scmp.eq.s32.totalorder %s16, 1
    %p55 = por %p53, %p54
    %p56 = scmp.ne.s32.totalorder %s47, %s48
    %p57 = scmp.eq.s32.totalorder %s16, 0
    %p58 = por %p56, %p57
    %p59 = scmp.ne.s32.totalorder %s47, %s48
    %p60 = scmp.eq.s32.totalorder %s17, 1
    %p61 = por %p59, %p60
    %p63 = scmp.ne.s32.totalorder %s48, %s62
    %p64 = scmp.eq.s32.totalorder %s17, 0
    %p65 = por %p63, %p64
    %s67 = sadd.s32 %s66, 1
    %p70 = scmp.eq.s32.totalorder %s11, 1
    %p71 = scmp.ne.s32.totalorder %s66, %s68
    %p72 = scmp.eq.s32.totalorder %s11, 0
    %p73 = por %p71, %p72
    %p74 = scmp.ne.s32.totalorder %s66, %s68
    %p75 = scmp.eq.s32.totalorder %s16, 1
    %p76 = por %p74, %p75
    %p77 = scmp.ne.s32.totalorder %s68, %s69
    %p78 = scmp.eq.s32.totalorder %s16, 0
    %p79 = por %p77, %p78
    %p80 = scmp.ne.s32.totalorder %s68, %s69
    %p81 = scmp.eq.s32.totalorder %s17, 1
    %p82 = por %p80, %p81
    %p84 = scmp.ne.s32.totalorder %s69, %s83
    %p85 = scmp.eq.s32.totalorder %s17, 0
    %p86 = por %p84, %p85
    %s88 = sadd.s32 %s87, 1
    %p91 = scmp.eq.s32.totalorder %s11, 1
    %p92 = scmp.ne.s32.totalorder %s87, %s89
    %p93 = scmp.eq.s32.totalorder %s11, 0
    %p94 = por %p92, %p93
    %p95 = scmp.ne.s32.totalorder %s87, %s89
    %p96 = scmp.eq.s32.totalorder %s16, 1
    %p97 = por %p95, %p96
    %p98 = scmp.ne.s32.totalorder %s89, %s90
    %p99 = scmp.eq.s32.totalorder %s16, 0
    %p100 = por %p98, %p99
    %p101 = scmp.ne.s32.totalorder %s89, %s90
    %p102 = scmp.eq.s32.totalorder %s17, 1
    %p103 = por %p101, %p102
    %p105 = scmp.ne.s32.totalorder %s90, %s104
    %p106 = scmp.eq.s32.totalorder %s17, 0
    %p107 = por %p105, %p106
    %s109 = sadd.s32 %s108, 1
    %p112 = scmp.eq.s32.totalorder %s11, 1
    %p113 = scmp.ne.s32.totalorder %s108, %s110
    %p114 = scmp.eq.s32.totalorder %s11, 0
    %p115 = por %p113, %p114
    %p116 = scmp.ne.s32.totalorder %s108, %s110
    %p117 = scmp.eq.s32.totalorder %s16, 1
    %p118 = por %p116, %p117
    %p119 = scmp.ne.s32.totalorder %s110, %s111
    %p120 = scmp.eq.s32.totalorder %s16, 0
    %p121 = por %p119, %p120
    %p122 = scmp.ne.s32.totalorder %s110, %s111
    %p123 = scmp.eq.s32.totalorder %s17, 1
    %p124 = por %p122, %p123
    %p126 = scmp.ne.s32.totalorder %s111, %s125
    %p127 = scmp.eq.s32.totalorder %s17, 0
    %p128 = por %p126, %p127
    %s129 = ssub.s32 %s11, %s18
    %p130 = scmp.eq.s32.totalorder %s129, 0
    %s132 = sadd.s32 %s131, 1
    %s133 = scalar_select %p130, %s131, %s132
    %p136 = pneg %p130
    %p137 = scmp.eq.s32.totalorder %s11, 1
    %p138 = por %p136, %p137
    %p139 = scmp.ne.s32.totalorder %s131, %s134
    %p140 = scmp.eq.s32.totalorder %s11, 0
    %p141 = por %p139, %p140
    %p142 = scmp.ne.s32.totalorder %s131, %s134
    %p143 = scmp.eq.s32.totalorder %s16, 1
    %p144 = por %p142, %p143
    %p145 = scmp.ne.s32.totalorder %s134, %s135
    %p146 = scmp.eq.s32.totalorder %s16, 0
    %p147 = por %p145, %p146
    %p148 = scmp.ne.s32.totalorder %s134, %s135
    %p149 = scmp.eq.s32.totalorder %s17, 1
    %p150 = por %p148, %p149
    %p152 = scmp.ne.s32.totalorder %s135, %s151
    %p153 = scmp.eq.s32.totalorder %s17, 0
    %p154 = por %p152, %p153
    %p155 = scmp.le.s32.totalorder 1, %s11
    %p156 = scmp.lt.s32.totalorder %s11, 3
    %p157 = pnand %p155, %p156
    %p158 = pneg %p157
    // Predicated region
    $region9: #{_lambda_.4} parent=5 // pred_check
      _
    $region10: #{_lambda_.4} parent=5 // pred_check_branch
      %160 = sbr.rel (%p157) target = $region12
    $region11: #{_lambda_.4} parent=5 // pred_region
      %s161 = ssub.s32 %s11, 1
      // Predicated region
      $region13: #{_lambda_.4} parent=11 // pred_check
        %p162 = pneg %p58
      $region14: #{_lambda_.4} parent=11 // pred_check_branch
        %164 = sbr.rel (%p162) target = $region16
      $region15: #{_lambda_.4} parent=11 // pred_region
        _
      $region16: #{_lambda_.4} parent=11 // pred_fallthru
        _
      // Predicated region
      $region17: #{_lambda_.4} parent=11 // pred_check
        %p165 = pneg %p79
      $region18: #{_lambda_.4} parent=11 // pred_check_branch
        %167 = sbr.rel (%p165) target = $region20
      $region19: #{_lambda_.4} parent=11 // pred_region
        _
      $region20: #{_lambda_.4} parent=11 // pred_fallthru
        _
      // Predicated region
      $region21: #{_lambda_.4} parent=11 // pred_check
        %p168 = pneg %p100
      $region22: #{_lambda_.4} parent=11 // pred_check_branch
        %170 = sbr.rel (%p168) target = $region24
      $region23: #{_lambda_.4} parent=11 // pred_region
        _
      $region24: #{_lambda_.4} parent=11 // pred_fallthru
        _
      // Predicated region
      $region25: #{_lambda_.4} parent=11 // pred_check
        %p171 = pneg %p121
      $region26: #{_lambda_.4} parent=11 // pred_check_branch
        %173 = sbr.rel (%p171) target = $region28
      $region27: #{_lambda_.4} parent=11 // pred_region
        _
      $region28: #{_lambda_.4} parent=11 // pred_fallthru
        _
    $region12: #{_lambda_.4} parent=5 // pred_fallthru
      _
    %p174 = scmp.lt.s32.totalorder %s11, 2
    // Predicated region
    $region29: #{_lambda_.4} parent=5 // pred_check
      %p175 = pneg %p174
    $region30: #{_lambda_.4} parent=5 // pred_check_branch
      %177 = sbr.rel (%p175) target = $region32
    $region31: #{_lambda_.4} parent=5 // pred_region
      // Predicated region
      $region33: #{_lambda_.4} parent=31 // pred_check
        %p178 = pneg %p31
      $region34: #{_lambda_.4} parent=31 // pred_check_branch
        %180 = sbr.rel (%p178) target = $region36
      $region35: #{_lambda_.4} parent=31 // pred_region
        %p181 = scmp.lt.s32.totalorder %s11, 1
        %s182 = scalar_select %p181, %s11, 1
        %s183 = smul.addr %s182, 8
        %s184 = smul.addr %s183, 8
        %s185 = scalar_lea.vmem %s0, %s184
      $region36: #{_lambda_.4} parent=31 // pred_fallthru
        _
    $region32: #{_lambda_.4} parent=5 // pred_fallthru
      _
    %p186 = scmp.le.s32.totalorder 1, %s11
    %p187 = scmp.lt.s32.totalorder %s11, 3
    %p188 = pnand %p186, %p187
    %p189 = pneg %p188
    // Predicated region
    $region37: #{_lambda_.4} parent=5 // pred_check
      _
    $region38: #{_lambda_.4} parent=5 // pred_check_branch
      %191 = sbr.rel (%p188) target = $region40
    $region39: #{_lambda_.4} parent=5 // pred_region
      %s192 = ssub.s32 %s11, 1
      %p193 = scmp.lt.s32.totalorder %s16, 1
      %s194 = scalar_select %p193, %s16, 1
      %s195 = smul.addr %s194, 8
      %s196 = smul.addr %s195, 8
      %s197 = scalar_lea.vmem %s0, %s196
      %p198 = pneg %p37
      %p199 = pneg %p34
      %p200 = pneg %p58
      %p201 = pneg %p55
      %p202 = pneg %p79
      %p203 = pneg %p76
      %p204 = pneg %p100
      %p205 = pneg %p97
      %p206 = pneg %p121
      %p207 = pneg %p118
      %p208 = pneg %p147
      %p209 = pneg %p144
      %p210 = scmp.lt.s32.totalorder %s16, 1
      %s211 = scalar_select %p210, %s16, 1
      %s212 = smul.addr %s211, 2
      %s213 = smul.addr %s212, 8
      %s214 = scalar_lea.vmem %s5, %s213
      %p215 = scmp.lt.s32.totalorder %s16, 1
      %s216 = scalar_select %p215, %s16, 1
      %s217 = smul.addr %s216, 8
      %s218 = smul.addr %s217, 8
      %s219 = scalar_lea.vmem %s0, %s218
      %p220 = scmp.lt.s32.totalorder %s16, 1
      %s221 = scalar_select %p220, %s16, 1
      %s222 = smul.addr %s221, 2
      %s223 = smul.addr %s222, 8
      %s224 = scalar_lea.vmem %s5, %s223
      %v226 = vlaneseq
      %v227 = vshrl.u32 %v226, 7
      %v228 = vadd.s32 %v227, 8
      %v229 = vadd.s32 %v227, 16
      %v230 = vadd.s32 %v227, 24
      %v231 = vadd.s32 %v227, 32
      %v232 = vadd.s32 %v227, 40
      %v233 = vadd.s32 %v227, 48
      %v234 = vadd.s32 %v227, 56
      %vm235 = vcmp.lt.s32.totalorder %v227, 0
      %v236 = vsub.s32 0, %v227
      %v237 = vsel %vm235, %v236, %v227
      %v238 = vshrl.u32 %v237, 3
      %v239 = vand.u32 %v237, 7
      %v240 = vsub.s32 0, %v239
      %v241 = vsel %vm235, %v240, %v239
      %vm242 = vcmp.lt.s32.totalorder %v228, 0
      %v243 = vsub.s32 0, %v228
      %v244 = vsel %vm242, %v243, %v228
      %v245 = vshrl.u32 %v244, 3
      %v246 = vand.u32 %v244, 7
      %v247 = vsub.s32 0, %v246
      %v248 = vsel %vm242, %v247, %v246
      %vm249 = vcmp.lt.s32.totalorder %v229, 0
      %v250 = vsub.s32 0, %v229
      %v251 = vsel %vm249, %v250, %v229
      %v252 = vshrl.u32 %v251, 3
      %v253 = vand.u32 %v251, 7
      %v254 = vsub.s32 0, %v253
      %v255 = vsel %vm249, %v254, %v253
      %vm256 = vcmp.lt.s32.totalorder %v230, 0
      %v257 = vsub.s32 0, %v230
      %v258 = vsel %vm256, %v257, %v230
      %v259 = vshrl.u32 %v258, 3
      %v260 = vand.u32 %v258, 7
      %v261 = vsub.s32 0, %v260
      %v262 = vsel %vm256, %v261, %v260
      %vm263 = vcmp.lt.s32.totalorder %v231, 0
      %v264 = vsub.s32 0, %v231
      %v265 = vsel %vm263, %v264, %v231
      %v266 = vshrl.u32 %v265, 3
      %v267 = vand.u32 %v265, 7
      %v268 = vsub.s32 0, %v267
      %v269 = vsel %vm263, %v268, %v267
      %vm270 = vcmp.lt.s32.totalorder %v232, 0
      %v271 = vsub.s32 0, %v232
      %v272 = vsel %vm270, %v271, %v232
      %v273 = vshrl.u32 %v272, 3
      %v274 = vand.u32 %v272, 7
      %v275 = vsub.s32 0, %v274
      %v276 = vsel %vm270, %v275, %v274
      %vm277 = vcmp.lt.s32.totalorder %v233, 0
      %v278 = vsub.s32 0, %v233
      %v279 = vsel %vm277, %v278, %v233
      %v280 = vshrl.u32 %v279, 3
      %v281 = vand.u32 %v279, 7
      %v282 = vsub.s32 0, %v281
      %v283 = vsel %vm277, %v282, %v281
      %vm284 = vcmp.lt.s32.totalorder %v234, 0
      %v285 = vsub.s32 0, %v234
      %v286 = vsel %vm284, %v285, %v234
      %v287 = vshrl.u32 %v286, 3
      %v288 = vand.u32 %v286, 7
      %v289 = vsub.s32 0, %v288
      %v290 = vsel %vm284, %v289, %v288
      %vm291 = vcmp.ne.s32.totalorder %v241, 0
      %vm292 = vcmp.ne.s32.totalorder %v248, 0
      %vm293 = vcmp.ne.s32.totalorder %v255, 0
      %vm294 = vcmp.ne.s32.totalorder %v262, 0
      %vm295 = vcmp.ne.s32.totalorder %v269, 0
      %vm296 = vcmp.ne.s32.totalorder %v276, 0
      %vm297 = vcmp.ne.s32.totalorder %v283, 0
      %vm298 = vcmp.ne.s32.totalorder %v290, 0
      %vm299 = vcmp.lt.s32.totalorder %v241, 0
      %vm300 = vcmp.lt.s32.totalorder %v248, 0
      %vm301 = vcmp.lt.s32.totalorder %v255, 0
      %vm302 = vcmp.lt.s32.totalorder %v262, 0
      %vm303 = vcmp.lt.s32.totalorder %v269, 0
      %vm304 = vcmp.lt.s32.totalorder %v276, 0
      %vm305 = vcmp.lt.s32.totalorder %v283, 0
      %vm306 = vcmp.lt.s32.totalorder %v290, 0
      %vm307 = vmand %vm299, %vm291
      %vm308 = vmand %vm300, %vm292
      %vm309 = vmand %vm301, %vm293
      %vm310 = vmand %vm302, %vm294
      %vm311 = vmand %vm303, %vm295
      %vm312 = vmand %vm304, %vm296
      %vm313 = vmand %vm305, %vm297
      %vm314 = vmand %vm306, %vm298
      %v315 = vadd.s32 %v241, 8
      %v316 = vadd.s32 %v248, 8
      %v317 = vadd.s32 %v255, 8
      %v318 = vadd.s32 %v262, 8
      %v319 = vadd.s32 %v269, 8
      %v320 = vadd.s32 %v276, 8
      %v321 = vadd.s32 %v283, 8
      %v322 = vadd.s32 %v290, 8
      %v323 = vsel %vm307, %v315, %v241
      %v324 = vsel %vm308, %v316, %v248
      %v325 = vsel %vm309, %v317, %v255
      %v326 = vsel %vm310, %v318, %v262
      %v327 = vsel %vm311, %v319, %v269
      %v328 = vsel %vm312, %v320, %v276
      %v329 = vsel %vm313, %v321, %v283
      %v330 = vsel %vm314, %v322, %v290
      %vm331 = vcmp.ge.s32.totalorder %v323, 1
      %vm332 = vcmp.ge.s32.totalorder %v324, 1
      %vm333 = vcmp.ge.s32.totalorder %v325, 1
      %vm334 = vcmp.ge.s32.totalorder %v326, 1
      %vm335 = vcmp.ge.s32.totalorder %v327, 1
      %vm336 = vcmp.ge.s32.totalorder %v328, 1
      %vm337 = vcmp.ge.s32.totalorder %v329, 1
      %vm338 = vcmp.ge.s32.totalorder %v330, 1
      %v339 = vsel %vm331, 1, 0
      %v340 = vsel %vm332, 1, 0
      %v341 = vsel %vm333, 1, 0
      %v342 = vsel %vm334, 1, 0
      %v343 = vsel %vm335, 1, 0
      %v344 = vsel %vm336, 1, 0
      %v345 = vsel %vm337, 1, 0
      %v346 = vsel %vm338, 1, 0
      %v347 = vcvt.s32.f32 %v339
      %v348 = vcvt.s32.f32 %v340
      %v349 = vcvt.s32.f32 %v341
      %v350 = vcvt.s32.f32 %v342
      %v351 = vcvt.s32.f32 %v343
      %v352 = vcvt.s32.f32 %v344
      %v353 = vcvt.s32.f32 %v345
      %v354 = vcvt.s32.f32 %v346
      %v355 = vpack.c.bf16 %v348, %v347
      %v356 = vpack.c.bf16 %v350, %v349
      %v357 = vpack.c.bf16 %v352, %v351
      %v358 = vpack.c.bf16 %v354, %v353
      %vm359 = vcmp.le.s32.totalorder %v323, 6
      %vm360 = vcmp.le.s32.totalorder %v324, 6
      %vm361 = vcmp.le.s32.totalorder %v325, 6
      %vm362 = vcmp.le.s32.totalorder %v326, 6
      %vm363 = vcmp.le.s32.totalorder %v327, 6
      %vm364 = vcmp.le.s32.totalorder %v328, 6
      %vm365 = vcmp.le.s32.totalorder %v329, 6
      %vm366 = vcmp.le.s32.totalorder %v330, 6
      %v367 = vsel %vm359, 1, 0
      %v368 = vsel %vm360, 1, 0
      %v369 = vsel %vm361, 1, 0
      %v370 = vsel %vm362, 1, 0
      %v371 = vsel %vm363, 1, 0
      %v372 = vsel %vm364, 1, 0
      %v373 = vsel %vm365, 1, 0
      %v374 = vsel %vm366, 1, 0
      %v375 = vcvt.s32.f32 %v367
      %v376 = vcvt.s32.f32 %v368
      %v377 = vcvt.s32.f32 %v369
      %v378 = vcvt.s32.f32 %v370
      %v379 = vcvt.s32.f32 %v371
      %v380 = vcvt.s32.f32 %v372
      %v381 = vcvt.s32.f32 %v373
      %v382 = vcvt.s32.f32 %v374
      %v383 = vpack.c.bf16 %v376, %v375
      %v384 = vpack.c.bf16 %v378, %v377
      %v385 = vpack.c.bf16 %v380, %v379
      %v386 = vpack.c.bf16 %v382, %v381
      %vm387 = vcmask 130048
      %388 = vst.msk [vmem:[#allocation2] sm:$0xff] %vm387, 0.0
      %vm389 = vcmask 122880
      %390 = vst.msk [vmem:[#allocation2 + $0x8] sm:$0x1] %vm389, 0.0
      %391 = vst.msk [vmem:[#allocation2 + $0x49] sm:$0xff] %vm387, 0.0
      %392 = vst.msk [vmem:[#allocation2 + $0x51] sm:$0x1] %vm389, 0.0
      %v393 = vld [vmem:[%s219] sm:$0xff]
      %v394 = vld [vmem:[%s219 + $0x8] sm:$0xff]
      %v395 = vld [vmem:[%s219 + $0x10] sm:$0xff]
      %v396 = vld [vmem:[%s219 + $0x18] sm:$0xff]
      %v397 = vld [vmem:[%s219 + $0x20] sm:$0xff]
      %v398 = vld [vmem:[%s219 + $0x28] sm:$0xff]
      %v399 = vld [vmem:[%s219 + $0x30] sm:$0xff]
      %v400 = vld [vmem:[%s219 + $0x38] sm:$0xff]
      %401 = vst.msk [vmem:[#allocation2 + $0x9] sm:$0xff] %vm387, %v393
      %402 = vst.msk [vmem:[#allocation2 + $0x11] sm:$0xff] %vm387, %v394
      %403 = vst.msk [vmem:[#allocation2 + $0x19] sm:$0xff] %vm387, %v395
      %404 = vst.msk [vmem:[#allocation2 + $0x21] sm:$0xff] %vm387, %v396
      %405 = vst.msk [vmem:[#allocation2 + $0x29] sm:$0xff] %vm387, %v397
      %406 = vst.msk [vmem:[#allocation2 + $0x31] sm:$0xff] %vm387, %v398
      %407 = vst.msk [vmem:[#allocation2 + $0x39] sm:$0xff] %vm387, %v399
      %408 = vst.msk [vmem:[#allocation2 + $0x41] sm:$0xff] %vm387, %v400
      %v409 = vld [vmem:[#allocation2] sm:$0xff]
      %v410 = vld [vmem:[#allocation2 + $0x8] sm:$0xff]
      %v411 = vld [vmem:[#allocation2 + $0x10] sm:$0xff]
      %v412 = vld [vmem:[#allocation2 + $0x18] sm:$0xff]
      %v413 = vld [vmem:[#allocation2 + $0x20] sm:$0xff]
      %v414 = vld [vmem:[#allocation2 + $0x28] sm:$0xff]
      %v415 = vld [vmem:[#allocation2 + $0x30] sm:$0xff]
      %v416 = vld [vmem:[#allocation2 + $0x38] sm:$0xff]
      %v417 = vpack.c.bf16 %v410, %v409
      %v418 = vpack.c.bf16 %v412, %v411
      %v419 = vpack.c.bf16 %v414, %v413
      %v420 = vpack.c.bf16 %v416, %v415
      %v421 = vmul.bf16 %v417, %v355
      %v422 = vmul.bf16 %v418, %v356
      %v423 = vmul.bf16 %v419, %v357
      %v424 = vmul.bf16 %v420, %v358
      %v425 = vld [vmem:[#allocation2 + $0x1] sm:$0xff]
      %v426 = vld [vmem:[#allocation2 + $0x9] sm:$0xff]
      %v427 = vld [vmem:[#allocation2 + $0x11] sm:$0xff]
      %v428 = vld [vmem:[#allocation2 + $0x19] sm:$0xff]
      %v429 = vld [vmem:[#allocation2 + $0x21] sm:$0xff]
      %v430 = vld [vmem:[#allocation2 + $0x29] sm:$0xff]
      %v431 = vld [vmem:[#allocation2 + $0x31] sm:$0xff]
      %v432 = vld [vmem:[#allocation2 + $0x39] sm:$0xff]
      %v433 = vpack.c.bf16 %v426, %v425
      %v434 = vpack.c.bf16 %v428, %v427
      %v435 = vpack.c.bf16 %v430, %v429
      %v436 = vpack.c.bf16 %v432, %v431
      %v437 = vld [vmem:[#allocation2 + $0x2] sm:$0xff]
      %v438 = vld [vmem:[#allocation2 + $0xa] sm:$0xff]
      %v439 = vld [vmem:[#allocation2 + $0x12] sm:$0xff]
      %v440 = vld [vmem:[#allocation2 + $0x1a] sm:$0xff]
      %v441 = vld [vmem:[#allocation2 + $0x22] sm:$0xff]
      %v442 = vld [vmem:[#allocation2 + $0x2a] sm:$0xff]
      %v443 = vld [vmem:[#allocation2 + $0x32] sm:$0xff]
      %v444 = vld [vmem:[#allocation2 + $0x3a] sm:$0xff]
      %v445 = vpack.c.bf16 %v438, %v437
      %v446 = vpack.c.bf16 %v440, %v439
      %v447 = vpack.c.bf16 %v442, %v441
      %v448 = vpack.c.bf16 %v444, %v443
      %v449 = vmul.bf16 %v445, %v383
      %v450 = vmul.bf16 %v446, %v384
      %v451 = vmul.bf16 %v447, %v385
      %v452 = vmul.bf16 %v448, %v386
      %v453 = vld [vmem:[#allocation2 + $0x40] sm:$0xff]
      %v454 = vpack.c.bf16 %v411, %v410
      %v455 = vpack.c.bf16 %v413, %v412
      %v456 = vpack.c.bf16 %v415, %v414
      %v457 = vpack.c.bf16 %v453, %v416
      %v458 = vmul.bf16 %v454, %v355
      %v459 = vmul.bf16 %v455, %v356
      %v460 = vmul.bf16 %v456, %v357
      %v461 = vmul.bf16 %v457, %v358
      %v462 = vld [vmem:[#allocation2 + $0x41] sm:$0xff]
      %v463 = vpack.c.bf16 %v427, %v426
      %v464 = vpack.c.bf16 %v429, %v428
      %v465 = vpack.c.bf16 %v431, %v430
      %v466 = vpack.c.bf16 %v462, %v432
      %v467 = vld [vmem:[#allocation2 + $0x42] sm:$0xff]
      %v468 = vpack.c.bf16 %v439, %v438
      %v469 = vpack.c.bf16 %v441, %v440
      %v470 = vpack.c.bf16 %v443, %v442
      %v471 = vpack.c.bf16 %v467, %v444
      %v472 = vmul.bf16 %v468, %v383
      %v473 = vmul.bf16 %v469, %v384
      %v474 = vmul.bf16 %v470, %v385
      %v475 = vmul.bf16 %v471, %v386
      %v476 = vld [vmem:[#allocation2 + $0x48] sm:$0xff]
      %v477 = vpack.c.bf16 %v476, %v453
      %v478 = vmul.bf16 %v418, %v355
      %v479 = vmul.bf16 %v419, %v356
      %v480 = vmul.bf16 %v420, %v357
      %v481 = vmul.bf16 %v477, %v358
      %v482 = vld [vmem:[#allocation2 + $0x49] sm:$0xff]
      %v483 = vpack.c.bf16 %v482, %v462
      %v484 = vld [vmem:[#allocation2 + $0x4a] sm:$0xff]
      %v485 = vpack.c.bf16 %v484, %v467
      %v486 = vmul.bf16 %v446, %v383
      %v487 = vmul.bf16 %v447, %v384
      %v488 = vmul.bf16 %v448, %v385
      %v489 = vmul.bf16 %v485, %v386
      %494 = vrot.lane.b32.xlu0 %v433, 16
      %v495 = vpop.permute.xlu0 %494
      %496 = vrot.lane.b32.xlu0 %v434, 16
      %v497 = vpop.permute.xlu0 %496
      %498 = vrot.lane.b32.xlu0 %v435, 16
      %v499 = vpop.permute.xlu0 %498
      %500 = vrot.lane.b32.xlu0 %v436, 16
      %v501 = vpop.permute.xlu0 %500
      %506 = vrot.lane.b32.xlu0 %v449, 32
      %v507 = vpop.permute.xlu0 %506
      %508 = vrot.lane.b32.xlu0 %v450, 32
      %v509 = vpop.permute.xlu0 %508
      %510 = vrot.lane.b32.xlu0 %v451, 32
      %v511 = vpop.permute.xlu0 %510
      %512 = vrot.lane.b32.xlu0 %v452, 32
      %v513 = vpop.permute.xlu0 %512
      %518 = vrot.lane.b32.xlu0 %v458, 48
      %v519 = vpop.permute.xlu0 %518
      %520 = vrot.lane.b32.xlu0 %v459, 48
      %v521 = vpop.permute.xlu0 %520
      %522 = vrot.lane.b32.xlu0 %v460, 48
      %v523 = vpop.permute.xlu0 %522
      %524 = vrot.lane.b32.xlu0 %v461, 48
      %v525 = vpop.permute.xlu0 %524
      %530 = vrot.lane.b32.xlu0 %v463, 64
      %v531 = vpop.permute.xlu0 %530
      %532 = vrot.lane.b32.xlu0 %v464, 64
      %v533 = vpop.permute.xlu0 %532
      %534 = vrot.lane.b32.xlu0 %v465, 64
      %v535 = vpop.permute.xlu0 %534
      %536 = vrot.lane.b32.xlu0 %v466, 64
      %v537 = vpop.permute.xlu0 %536
      %542 = vrot.lane.b32.xlu0 %v472, 80
      %v543 = vpop.permute.xlu0 %542
      %544 = vrot.lane.b32.xlu0 %v473, 80
      %v545 = vpop.permute.xlu0 %544
      %546 = vrot.lane.b32.xlu0 %v474, 80
      %v547 = vpop.permute.xlu0 %546
      %548 = vrot.lane.b32.xlu0 %v475, 80
      %v549 = vpop.permute.xlu0 %548
      %554 = vrot.lane.b32.xlu0 %v478, 96
      %v555 = vpop.permute.xlu0 %554
      %556 = vrot.lane.b32.xlu0 %v479, 96
      %v557 = vpop.permute.xlu0 %556
      %558 = vrot.lane.b32.xlu0 %v480, 96
      %v559 = vpop.permute.xlu0 %558
      %560 = vrot.lane.b32.xlu0 %v481, 96
      %v561 = vpop.permute.xlu0 %560
      %563 = vrot.lane.b32.xlu0 %v434, 112
      %v564 = vpop.permute.xlu0 %563
      %565 = vrot.lane.b32.xlu0 %v435, 112
      %v566 = vpop.permute.xlu0 %565
      %567 = vrot.lane.b32.xlu0 %v436, 112
      %v568 = vpop.permute.xlu0 %567
      %569 = vrot.lane.b32.xlu0 %v483, 112
      %v570 = vpop.permute.xlu0 %569
      %v573 = vsel %vm387, %v421, %v495
      %v576 = vsel %vm387, %v422, %v497
      %v579 = vsel %vm387, %v423, %v499
      %v582 = vsel %vm387, %v424, %v501
      %vm583 = vcmask 261120
      %v585 = vsel %vm583, %v573, %v507
      %v587 = vsel %vm583, %v576, %v509
      %v589 = vsel %vm583, %v579, %v511
      %v591 = vsel %vm583, %v582, %v513
      %vm592 = vcmask 392192
      %v594 = vsel %vm592, %v585, %v519
      %v596 = vsel %vm592, %v587, %v521
      %v598 = vsel %vm592, %v589, %v523
      %v600 = vsel %vm592, %v591, %v525
      %vm601 = vcmask 523264
      %v603 = vsel %vm601, %v594, %v531
      %v605 = vsel %vm601, %v596, %v533
      %v607 = vsel %vm601, %v598, %v535
      %v609 = vsel %vm601, %v600, %v537
      %vm610 = vcmask 654336
      %v612 = vsel %vm610, %v603, %v543
      %v614 = vsel %vm610, %v605, %v545
      %v616 = vsel %vm610, %v607, %v547
      %v618 = vsel %vm610, %v609, %v549
      %vm619 = vcmask 785408
      %v621 = vsel %vm619, %v612, %v555
      %v623 = vsel %vm619, %v614, %v557
      %v625 = vsel %vm619, %v616, %v559
      %v627 = vsel %vm619, %v618, %v561
      %vm628 = vcmask 916480
      %v630 = vsel %vm628, %v621, %v564
      %v633 = vsel %vm628, %v623, %v566
      %v636 = vsel %vm628, %v625, %v568
      %v639 = vsel %vm628, %v627, %v570
      %v641 = vld [vmem:[%s1] sm:$0xf]
      %v642 = vld [vmem:[%s1 + $0x4] sm:$0xf]
      %v643 = vld [vmem:[%s1 + $0x8] sm:$0xf]
      %v644 = vld [vmem:[%s1 + $0xc] sm:$0xf]
      %v645 = vld [vmem:[%s1 + $0x10] sm:$0xf]
      %v646 = vld [vmem:[%s1 + $0x14] sm:$0xf]
      %v647 = vld [vmem:[%s1 + $0x18] sm:$0xf]
      %v648 = vld [vmem:[%s1 + $0x1c] sm:$0xf]
      %v649 = vld [vmem:[%s1 + $0x20] sm:$0xf]
      %v650 = vld [vmem:[%s1 + $0x24] sm:$0xf]
      %v651 = vld [vmem:[%s1 + $0x28] sm:$0xf]
      %v652 = vld [vmem:[%s1 + $0x2c] sm:$0xf]
      %v653 = vld [vmem:[%s1 + $0x30] sm:$0xf]
      %v654 = vld [vmem:[%s1 + $0x34] sm:$0xf]
      %v655 = vld [vmem:[%s1 + $0x38] sm:$0xf]
      %v656 = vld [vmem:[%s1 + $0x3c] sm:$0xf]
      %v657 = vld [vmem:[%s1 + $0x40] sm:$0xf]
      %v658 = vld [vmem:[%s1 + $0x44] sm:$0xf]
      %v659 = vld [vmem:[%s2] sm:$0x1]
      %v661 = vlaneseq
      %v662 = vshrl.u32 %v661, 7
      %v663 = vsub.s32 0, %v662
      %v664 = vrot.slane %v659, %v663
      %v684 = vunpack.c.l.b16 %v641
      %v685 = vunpack.c.l.b16 %v642
      %v686 = vunpack.c.l.b16 %v643
      %v687 = vunpack.c.l.b16 %v644
      %v688 = vunpack.c.l.b16 %v645
      %v689 = vunpack.c.l.b16 %v646
      %v690 = vunpack.c.l.b16 %v647
      %v691 = vunpack.c.l.b16 %v648
      %v692 = vunpack.c.l.b16 %v649
      %v693 = vunpack.c.l.b16 %v650
      %v694 = vunpack.c.l.b16 %v651
      %v695 = vunpack.c.l.b16 %v652
      %v696 = vunpack.c.l.b16 %v653
      %v697 = vunpack.c.l.b16 %v654
      %v698 = vunpack.c.l.b16 %v655
      %v699 = vunpack.c.l.b16 %v656
      %v700 = vunpack.c.l.b16 %v657
      %v701 = vunpack.c.l.b16 %v658
      %v702 = vpack.c.b16 %v685, %v684
      %v703 = vpack.c.b16 %v687, %v686
      %v704 = vpack.c.b16 %v689, %v688
      %v705 = vpack.c.b16 %v691, %v690
      %v706 = vpack.c.b16 %v693, %v692
      %v707 = vpack.c.b16 %v695, %v694
      %v708 = vpack.c.b16 %v697, %v696
      %v709 = vpack.c.b16 %v699, %v698
      %v710 = vpack.c.b16 %v701, %v700
      %v721 = vsel %vm387, %v486, 0
      %v724 = vsel %vm387, %v487, 0
      %v727 = vsel %vm387, %v488, 0
      %v730 = vsel %vm387, %v489, 0
      %732 = vmatprep.subr.bf16.mxu0 0
      %733 = vmatpush1.bf16.msra.mxu0 %v702
      %734 = vmatprep.subr.bf16.mxu0 0
      %735 = vmatpush1.bf16.msra.mxu0 %v703
      %736 = vmatprep.subr.bf16.mxu0 0
      %737 = vmatpush1.bf16.msra.mxu0 %v704
      %738 = vmatprep.subr.bf16.mxu0 0
      %739 = vmatpush1.bf16.msra.mxu0 %v705
      %740 = vmatprep.subr.bf16.mxu0 0
      %741 = vmatpush1.bf16.msra.mxu0 %v706
      %742 = vmatprep.subr.bf16.mxu0 0
      %743 = vmatpush1.bf16.msra.mxu0 %v707
      %744 = vmatprep.subr.bf16.mxu0 0
      %745 = vmatpush1.bf16.msra.mxu0 %v708
      %746 = vmatprep.subr.bf16.mxu0 0
      %747 = vmatpush1.bf16.msra.mxu0 %v709
      %748 = vmatprep.subr.bf16.mxu0 0
      %749 = vmatpush1.bf16.msra.mxu0 %v710
      %750 = vmatprep.subr.bf16.mxu0 0
      %751 = vmatpush1.bf16.msra.mxu0 0
      %752 = vmatprep.subr.bf16.mxu0 0
      %753 = vmatpush1.bf16.msra.mxu0 0
      %754 = vmatprep.subr.bf16.mxu0 0
      %755 = vmatpush1.bf16.msra.mxu0 0
      %756 = vmatprep.subr.bf16.mxu0 0
      %757 = vmatpush1.bf16.msra.mxu0 0
      %758 = vmatprep.subr.bf16.mxu0 0
      %759 = vmatpush1.bf16.msra.mxu0 0
      %760 = vmatprep.subr.bf16.mxu0 0
      %761 = vmatpush1.bf16.msra.mxu0 0
      %762 = vmatprep.subr.bf16.mxu0 0
      %763 = vmatpush1.bf16.msra.mxu0 0
      %764 = vmatprep.mubr.bf16.mxu0 %v721
      %765 = vmatmul.mubr.bf16.gmra.mrb[0].mxu0 %v630
      %v766 = vpop.f32.mrb[0].mxu0
      %v767 = vadd.f32 %v664, %v766
      %v768 = vpop.f32.mrb[0].mxu0
      %v769 = vpop.f32.mrb[0].mxu0
      %v770 = vadd.f32 %v664, %v769
      %v771 = vpop.f32.mrb[0].mxu0
      %772 = vmatprep.mubr.bf16.mxu0 %v724
      %773 = vmatmul.mubr.bf16.gmra.mrb[0].mxu0 %v633
      %v774 = vpop.f32.mrb[0].mxu0
      %v775 = vadd.f32 %v664, %v774
      %v776 = vpop.f32.mrb[0].mxu0
      %v777 = vpop.f32.mrb[0].mxu0
      %v778 = vadd.f32 %v664, %v777
      %v779 = vpop.f32.mrb[0].mxu0
      %780 = vmatprep.mubr.bf16.mxu0 %v727
      %781 = vmatmul.mubr.bf16.gmra.mrb[0].mxu0 %v636
      %v782 = vpop.f32.mrb[0].mxu0
      %v783 = vadd.f32 %v664, %v782
      %v784 = vpop.f32.mrb[0].mxu0
      %v785 = vpop.f32.mrb[0].mxu0
      %v786 = vadd.f32 %v664, %v785
      %v787 = vpop.f32.mrb[0].mxu0
      %788 = vmatprep.mubr.bf16.mxu0 %v730
      %789 = vmatmul.mubr.bf16.gmra.mrb[0].mxu0 %v639
      %v790 = vpop.f32.mrb[0].mxu0
      %v791 = vadd.f32 %v664, %v790
      %v792 = vpop.f32.mrb[0].mxu0
      %v793 = vpop.f32.mrb[0].mxu0
      %v794 = vadd.f32 %v664, %v793
      %v795 = vpop.f32.mrb[0].mxu0
      %796 = vdwg.mxu0
      %vm797 = vcmp.gt.f32.partialorder %v767, 0.0
      %vm798 = vcmp.gt.f32.partialorder %v770, 0.0
      %vm799 = vcmp.gt.f32.partialorder %v775, 0.0
      %vm800 = vcmp.gt.f32.partialorder %v778, 0.0
      %vm801 = vcmp.gt.f32.partialorder %v783, 0.0
      %vm802 = vcmp.gt.f32.partialorder %v786, 0.0
      %vm803 = vcmp.gt.f32.partialorder %v791, 0.0
      %vm804 = vcmp.gt.f32.partialorder %v794, 0.0
      %v805 = vmul.f32 %v767, 0.2
      %v806 = vmul.f32 %v770, 0.2
      %v807 = vmul.f32 %v775, 0.2
      %v808 = vmul.f32 %v778, 0.2
      %v809 = vmul.f32 %v783, 0.2
      %v810 = vmul.f32 %v786, 0.2
      %v811 = vmul.f32 %v791, 0.2
      %v812 = vmul.f32 %v794, 0.2
      %v813 = vsel %vm797, %v767, %v805
      %v814 = vsel %vm798, %v770, %v806
      %v815 = vsel %vm799, %v775, %v807
      %v816 = vsel %vm800, %v778, %v808
      %v817 = vsel %vm801, %v783, %v809
      %v818 = vsel %vm802, %v786, %v810
      %v819 = vsel %vm803, %v791, %v811
      %v820 = vsel %vm804, %v794, %v812
      %821 = vst.msk [vmem:[#allocation2 + $0x9] sm:$0xff] %vm387, %v813
      %822 = vst.msk [vmem:[#allocation2 + $0x11] sm:$0xff] %vm387, %v814
      %823 = vst.msk [vmem:[#allocation2 + $0x19] sm:$0xff] %vm387, %v815
      %824 = vst.msk [vmem:[#allocation2 + $0x21] sm:$0xff] %vm387, %v816
      %825 = vst.msk [vmem:[#allocation2 + $0x29] sm:$0xff] %vm387, %v817
      %826 = vst.msk [vmem:[#allocation2 + $0x31] sm:$0xff] %vm387, %v818
      %827 = vst.msk [vmem:[#allocation2 + $0x39] sm:$0xff] %vm387, %v819
      %828 = vst.msk [vmem:[#allocation2 + $0x41] sm:$0xff] %vm387, %v820
      %v829 = vld [vmem:[#allocation2] sm:$0xff]
      %v830 = vld [vmem:[#allocation2 + $0x8] sm:$0xff]
      %v831 = vld [vmem:[#allocation2 + $0x10] sm:$0xff]
      %v832 = vld [vmem:[#allocation2 + $0x18] sm:$0xff]
      %v833 = vld [vmem:[#allocation2 + $0x20] sm:$0xff]
      %v834 = vld [vmem:[#allocation2 + $0x28] sm:$0xff]
      %v835 = vld [vmem:[#allocation2 + $0x30] sm:$0xff]
      %v836 = vld [vmem:[#allocation2 + $0x38] sm:$0xff]
      %v837 = vpack.c.bf16 %v830, %v829
      %v838 = vpack.c.bf16 %v832, %v831
      %v839 = vpack.c.bf16 %v834, %v833
      %v840 = vpack.c.bf16 %v836, %v835
      %v841 = vmul.bf16 %v837, %v355
      %v842 = vmul.bf16 %v838, %v356
      %v843 = vmul.bf16 %v839, %v357
      %v844 = vmul.bf16 %v840, %v358
      %v845 = vld [vmem:[#allocation2 + $0x1] sm:$0xff]
      %v846 = vld [vmem:[#allocation2 + $0x9] sm:$0xff]
      %v847 = vld [vmem:[#allocation2 + $0x11] sm:$0xff]
      %v848 = vld [vmem:[#allocation2 + $0x19] sm:$0xff]
      %v849 = vld [vmem:[#allocation2 + $0x21] sm:$0xff]
      %v850 = vld [vmem:[#allocation2 + $0x29] sm:$0xff]
      %v851 = vld [vmem:[#allocation2 + $0x31] sm:$0xff]
      %v852 = vld [vmem:[#allocation2 + $0x39] sm:$0xff]
      %v853 = vpack.c.bf16 %v846, %v845
      %v854 = vpack.c.bf16 %v848, %v847
      %v855 = vpack.c.bf16 %v850, %v849
      %v856 = vpack.c.bf16 %v852, %v851
      %v857 = vld [vmem:[#allocation2 + $0x2] sm:$0xff]
      %v858 = vld [vmem:[#allocation2 + $0xa] sm:$0xff]
      %v859 = vld [vmem:[#allocation2 + $0x12] sm:$0xff]
      %v860 = vld [vmem:[#allocation2 + $0x1a] sm:$0xff]
      %v861 = vld [vmem:[#allocation2 + $0x22] sm:$0xff]
      %v862 = vld [vmem:[#allocation2 + $0x2a] sm:$0xff]
      %v863 = vld [vmem:[#allocation2 + $0x32] sm:$0xff]
      %v864 = vld [vmem:[#allocation2 + $0x3a] sm:$0xff]
      %v865 = vpack.c.bf16 %v858, %v857
      %v866 = vpack.c.bf16 %v860, %v859
      %v867 = vpack.c.bf16 %v862, %v861
      %v868 = vpack.c.bf16 %v864, %v863
      %v869 = vmul.bf16 %v865, %v383
      %v870 = vmul.bf16 %v866, %v384
      %v871 = vmul.bf16 %v867, %v385
      %v872 = vmul.bf16 %v868, %v386
      %v873 = vld [vmem:[#allocation2 + $0x40] sm:$0xff]
      %v874 = vpack.c.bf16 %v831, %v830
      %v875 = vpack.c.bf16 %v833, %v832
      %v876 = vpack.c.bf16 %v835, %v834
      %v877 = vpack.c.bf16 %v873, %v836
      %v878 = vmul.bf16 %v874, %v355
      %v879 = vmul.bf16 %v875, %v356
      %v880 = vmul.bf16 %v876, %v357
      %v881 = vmul.bf16 %v877, %v358
      %v882 = vld [vmem:[#allocation2 + $0x41] sm:$0xff]
      %v883 = vpack.c.bf16 %v847, %v846
      %v884 = vpack.c.bf16 %v849, %v848
      %v885 = vpack.c.bf16 %v851, %v850
      %v886 = vpack.c.bf16 %v882, %v852
      %v887 = vld [vmem:[#allocation2 + $0x42] sm:$0xff]
      %v888 = vpack.c.bf16 %v859, %v858
      %v889 = vpack.c.bf16 %v861, %v860
      %v890 = vpack.c.bf16 %v863, %v862
      %v891 = vpack.c.bf16 %v887, %v864
      %v892 = vmul.bf16 %v888, %v383
      %v893 = vmul.bf16 %v889, %v384
      %v894 = vmul.bf16 %v890, %v385
      %v895 = vmul.bf16 %v891, %v386
      %v896 = vld [vmem:[#allocation2 + $0x48] sm:$0xff]
      %v897 = vpack.c.bf16 %v896, %v873
      %v898 = vmul.bf16 %v838, %v355
      %v899 = vmul.bf16 %v839, %v356
      %v900 = vmul.bf16 %v840, %v357
      %v901 = vmul.bf16 %v897, %v358
      %v902 = vld [vmem:[#allocation2 + $0x49] sm:$0xff]
      %v903 = vpack.c.bf16 %v902, %v882
      %v904 = vld [vmem:[#allocation2 + $0x4a] sm:$0xff]
      %v905 = vpack.c.bf16 %v904, %v887
      %v906 = vmul.bf16 %v866, %v383
      %v907 = vmul.bf16 %v867, %v384
      %v908 = vmul.bf16 %v868, %v385
      %v909 = vmul.bf16 %v905, %v386
      %914 = vrot.lane.b32.xlu0 %v853, 16
      %v915 = vpop.permute.xlu0 %914
      %916 = vrot.lane.b32.xlu0 %v854, 16
      %v917 = vpop.permute.xlu0 %916
      %918 = vrot.lane.b32.xlu0 %v855, 16
      %v919 = vpop.permute.xlu0 %918
      %920 = vrot.lane.b32.xlu0 %v856, 16
      %v921 = vpop.permute.xlu0 %920
      %926 = vrot.lane.b32.xlu0 %v869, 32
      %v927 = vpop.permute.xlu0 %926
      %928 = vrot.lane.b32.xlu0 %v870, 32
      %v929 = vpop.permute.xlu0 %928
      %930 = vrot.lane.b32.xlu0 %v871, 32
      %v931 = vpop.permute.xlu0 %930
      %932 = vrot.lane.b32.xlu0 %v872, 32
      %v933 = vpop.permute.xlu0 %932
      %938 = vrot.lane.b32.xlu0 %v878, 48
      %v939 = vpop.permute.xlu0 %938
      %940 = vrot.lane.b32.xlu0 %v879, 48
      %v941 = vpop.permute.xlu0 %940
      %942 = vrot.lane.b32.xlu0 %v880, 48
      %v943 = vpop.permute.xlu0 %942
      %944 = vrot.lane.b32.xlu0 %v881, 48
      %v945 = vpop.permute.xlu0 %944
      %950 = vrot.lane.b32.xlu0 %v883, 64
      %v951 = vpop.permute.xlu0 %950
      %952 = vrot.lane.b32.xlu0 %v884, 64
      %v953 = vpop.permute.xlu0 %952
      %954 = vrot.lane.b32.xlu0 %v885, 64
      %v955 = vpop.permute.xlu0 %954
      %956 = vrot.lane.b32.xlu0 %v886, 64
      %v957 = vpop.permute.xlu0 %956
      %962 = vrot.lane.b32.xlu0 %v892, 80
      %v963 = vpop.permute.xlu0 %962
      %964 = vrot.lane.b32.xlu0 %v893, 80
      %v965 = vpop.permute.xlu0 %964
      %966 = vrot.lane.b32.xlu0 %v894, 80
      %v967 = vpop.permute.xlu0 %966
      %968 = vrot.lane.b32.xlu0 %v895, 80
      %v969 = vpop.permute.xlu0 %968
      %974 = vrot.lane.b32.xlu0 %v898, 96
      %v975 = vpop.permute.xlu0 %974
      %976 = vrot.lane.b32.xlu0 %v899, 96
      %v977 = vpop.permute.xlu0 %976
      %978 = vrot.lane.b32.xlu0 %v900, 96
      %v979 = vpop.permute.xlu0 %978
      %980 = vrot.lane.b32.xlu0 %v901, 96
      %v981 = vpop.permute.xlu0 %980
      %983 = vrot.lane.b32.xlu0 %v854, 112
      %v984 = vpop.permute.xlu0 %983
      %985 = vrot.lane.b32.xlu0 %v855, 112
      %v986 = vpop.permute.xlu0 %985
      %987 = vrot.lane.b32.xlu0 %v856, 112
      %v988 = vpop.permute.xlu0 %987
      %989 = vrot.lane.b32.xlu0 %v903, 112
      %v990 = vpop.permute.xlu0 %989
      %v993 = vsel %vm387, %v841, %v915
      %v996 = vsel %vm387, %v842, %v917
      %v999 = vsel %vm387, %v843, %v919
      %v1002 = vsel %vm387, %v844, %v921
      %v1004 = vsel %vm583, %v993, %v927
      %v1006 = vsel %vm583, %v996, %v929
      %v1008 = vsel %vm583, %v999, %v931
      %v1010 = vsel %vm583, %v1002, %v933
      %v1012 = vsel %vm592, %v1004, %v939
      %v1014 = vsel %vm592, %v1006, %v941
      %v1016 = vsel %vm592, %v1008, %v943
      %v1018 = vsel %vm592, %v1010, %v945
      %v1020 = vsel %vm601, %v1012, %v951
      %v1022 = vsel %vm601, %v1014, %v953
      %v1024 = vsel %vm601, %v1016, %v955
      %v1026 = vsel %vm601, %v1018, %v957
      %v1028 = vsel %vm610, %v1020, %v963
      %v1030 = vsel %vm610, %v1022, %v965
      %v1032 = vsel %vm610, %v1024, %v967
      %v1034 = vsel %vm610, %v1026, %v969
      %v1036 = vsel %vm619, %v1028, %v975
      %v1038 = vsel %vm619, %v1030, %v977
      %v1040 = vsel %vm619, %v1032, %v979
      %v1042 = vsel %vm619, %v1034, %v981
      %v1044 = vsel %vm628, %v1036, %v984
      %v1047 = vsel %vm628, %v1038, %v986
      %v1050 = vsel %vm628, %v1040, %v988
      %v1053 = vsel %vm628, %v1042, %v990
      %v1055 = vld [vmem:[%s3] sm:$0xf]
      %v1056 = vld [vmem:[%s3 + $0x4] sm:$0xf]
      %v1057 = vld [vmem:[%s3 + $0x8] sm:$0xf]
      %v1058 = vld [vmem:[%s3 + $0xc] sm:$0xf]
      %v1059 = vld [vmem:[%s3 + $0x10] sm:$0xf]
      %v1060 = vld [vmem:[%s3 + $0x14] sm:$0xf]
      %v1061 = vld [vmem:[%s3 + $0x18] sm:$0xf]
      %v1062 = vld [vmem:[%s3 + $0x1c] sm:$0xf]
      %v1063 = vld [vmem:[%s3 + $0x20] sm:$0xf]
      %v1064 = vld [vmem:[%s3 + $0x24] sm:$0xf]
      %v1065 = vld [vmem:[%s3 + $0x28] sm:$0xf]
      %v1066 = vld [vmem:[%s3 + $0x2c] sm:$0xf]
      %v1067 = vld [vmem:[%s3 + $0x30] sm:$0xf]
      %v1068 = vld [vmem:[%s3 + $0x34] sm:$0xf]
      %v1069 = vld [vmem:[%s3 + $0x38] sm:$0xf]
      %v1070 = vld [vmem:[%s3 + $0x3c] sm:$0xf]
      %v1071 = vld [vmem:[%s3 + $0x40] sm:$0xf]
      %v1072 = vld [vmem:[%s3 + $0x44] sm:$0xf]
      %v1073 = vld [vmem:[%s4] sm:$0x1]
      %v1075 = vlaneseq
      %v1076 = vshrl.u32 %v1075, 7
      %v1077 = vsub.s32 0, %v1076
      %v1078 = vrot.slane %v1073, %v1077
      %v1098 = vunpack.c.l.b16 %v1055
      %v1099 = vunpack.c.l.b16 %v1056
      %v1100 = vunpack.c.l.b16 %v1057
      %v1101 = vunpack.c.l.b16 %v1058
      %v1102 = vunpack.c.l.b16 %v1059
      %v1103 = vunpack.c.l.b16 %v1060
      %v1104 = vunpack.c.l.b16 %v1061
      %v1105 = vunpack.c.l.b16 %v1062
      %v1106 = vunpack.c.l.b16 %v1063
      %v1107 = vunpack.c.l.b16 %v1064
      %v1108 = vunpack.c.l.b16 %v1065
      %v1109 = vunpack.c.l.b16 %v1066
      %v1110 = vunpack.c.l.b16 %v1067
      %v1111 = vunpack.c.l.b16 %v1068
      %v1112 = vunpack.c.l.b16 %v1069
      %v1113 = vunpack.c.l.b16 %v1070
      %v1114 = vunpack.c.l.b16 %v1071
      %v1115 = vunpack.c.l.b16 %v1072
      %v1116 = vpack.c.b16 %v1099, %v1098
      %v1117 = vpack.c.b16 %v1101, %v1100
      %v1118 = vpack.c.b16 %v1103, %v1102
      %v1119 = vpack.c.b16 %v1105, %v1104
      %v1120 = vpack.c.b16 %v1107, %v1106
      %v1121 = vpack.c.b16 %v1109, %v1108
      %v1122 = vpack.c.b16 %v1111, %v1110
      %v1123 = vpack.c.b16 %v1113, %v1112
      %v1124 = vpack.c.b16 %v1115, %v1114
      %v1135 = vsel %vm387, %v906, 0
      %v1138 = vsel %vm387, %v907, 0
      %v1141 = vsel %vm387, %v908, 0
      %v1144 = vsel %vm387, %v909, 0
      %1146 = vmatprep.subr.bf16.mxu0 0
      %1147 = vmatpush1.bf16.msra.mxu0 %v1116
      %1148 = vmatprep.subr.bf16.mxu0 0
      %1149 = vmatpush1.bf16.msra.mxu0 %v1117
      %1150 = vmatprep.subr.bf16.mxu0 0
      %1151 = vmatpush1.bf16.msra.mxu0 %v1118
      %1152 = vmatprep.subr.bf16.mxu0 0
      %1153 = vmatpush1.bf16.msra.mxu0 %v1119
      %1154 = vmatprep.subr.bf16.mxu0 0
      %1155 = vmatpush1.bf16.msra.mxu0 %v1120
      %1156 = vmatprep.subr.bf16.mxu0 0
      %1157 = vmatpush1.bf16.msra.mxu0 %v1121
      %1158 = vmatprep.subr.bf16.mxu0 0
      %1159 = vmatpush1.bf16.msra.mxu0 %v1122
      %1160 = vmatprep.subr.bf16.mxu0 0
      %1161 = vmatpush1.bf16.msra.mxu0 %v1123
      %1162 = vmatprep.subr.bf16.mxu0 0
      %1163 = vmatpush1.bf16.msra.mxu0 %v1124
      %1164 = vmatprep.subr.bf16.mxu0 0
      %1165 = vmatpush1.bf16.msra.mxu0 0
      %1166 = vmatprep.subr.bf16.mxu0 0
      %1167 = vmatpush1.bf16.msra.mxu0 0
      %1168 = vmatprep.subr.bf16.mxu0 0
      %1169 = vmatpush1.bf16.msra.mxu0 0
      %1170 = vmatprep.subr.bf16.mxu0 0
      %1171 = vmatpush1.bf16.msra.mxu0 0
      %1172 = vmatprep.subr.bf16.mxu0 0
      %1173 = vmatpush1.bf16.msra.mxu0 0
      %1174 = vmatprep.subr.bf16.mxu0 0
      %1175 = vmatpush1.bf16.msra.mxu0 0
      %1176 = vmatprep.subr.bf16.mxu0 0
      %1177 = vmatpush1.bf16.msra.mxu0 0
      %1178 = vmatprep.mubr.bf16.mxu0 %v1135
      %1179 = vmatmul.mubr.bf16.gmra.mrb[0].mxu0 %v1044
      %v1180 = vpop.f32.mrb[0].mxu0
      %v1181 = vadd.f32 %v1078, %v1180
      %v1182 = vpop.f32.mrb[0].mxu0
      %v1183 = vpop.f32.mrb[0].mxu0
      %v1184 = vadd.f32 %v1078, %v1183
      %v1185 = vpop.f32.mrb[0].mxu0
      %1186 = vmatprep.mubr.bf16.mxu0 %v1138
      %1187 = vmatmul.mubr.bf16.gmra.mrb[0].mxu0 %v1047
      %v1188 = vpop.f32.mrb[0].mxu0
      %v1189 = vadd.f32 %v1078, %v1188
      %v1190 = vpop.f32.mrb[0].mxu0
      %v1191 = vpop.f32.mrb[0].mxu0
      %v1192 = vadd.f32 %v1078, %v1191
      %v1193 = vpop.f32.mrb[0].mxu0
      %1194 = vmatprep.mubr.bf16.mxu0 %v1141
      %1195 = vmatmul.mubr.bf16.gmra.mrb[0].mxu0 %v1050
      %v1196 = vpop.f32.mrb[0].mxu0
      %v1197 = vadd.f32 %v1078, %v1196
      %v1198 = vpop.f32.mrb[0].mxu0
      %v1199 = vpop.f32.mrb[0].mxu0
      %v1200 = vadd.f32 %v1078, %v1199
      %v1201 = vpop.f32.mrb[0].mxu0
      %1202 = vmatprep.mubr.bf16.mxu0 %v1144
      %1203 = vmatmul.mubr.bf16.gmra.mrb[0].mxu0 %v1053
      %v1204 = vpop.f32.mrb[0].mxu0
      %v1205 = vadd.f32 %v1078, %v1204
      %v1206 = vpop.f32.mrb[0].mxu0
      %v1207 = vpop.f32.mrb[0].mxu0
      %v1208 = vadd.f32 %v1078, %v1207
      %v1209 = vpop.f32.mrb[0].mxu0
      %1210 = vdwg.mxu0
      %vm1211 = vcmp.gt.f32.partialorder %v1181, 0.0
      %vm1212 = vcmp.gt.f32.partialorder %v1184, 0.0
      %vm1213 = vcmp.gt.f32.partialorder %v1189, 0.0
      %vm1214 = vcmp.gt.f32.partialorder %v1192, 0.0
      %vm1215 = vcmp.gt.f32.partialorder %v1197, 0.0
      %vm1216 = vcmp.gt.f32.partialorder %v1200, 0.0
      %vm1217 = vcmp.gt.f32.partialorder %v1205, 0.0
      %vm1218 = vcmp.gt.f32.partialorder %v1208, 0.0
      %v1219 = vmul.f32 %v1181, 0.2
      %v1220 = vmul.f32 %v1184, 0.2
      %v1221 = vmul.f32 %v1189, 0.2
      %v1222 = vmul.f32 %v1192, 0.2
      %v1223 = vmul.f32 %v1197, 0.2
      %v1224 = vmul.f32 %v1200, 0.2
      %v1225 = vmul.f32 %v1205, 0.2
      %v1226 = vmul.f32 %v1208, 0.2
      %v1227 = vsel %vm1211, %v1181, %v1219
      %v1228 = vsel %vm1212, %v1184, %v1220
      %v1229 = vsel %vm1213, %v1189, %v1221
      %v1230 = vsel %vm1214, %v1192, %v1222
      %v1231 = vsel %vm1215, %v1197, %v1223
      %v1232 = vsel %vm1216, %v1200, %v1224
      %v1233 = vsel %vm1217, %v1205, %v1225
      %v1234 = vsel %vm1218, %v1208, %v1226
      %v1235 = vadd.f32 %v1227, %v1228
      %v1236 = vadd.f32 %v1229, %v1230
      %v1237 = vadd.f32 %v1231, %v1232
      %v1238 = vadd.f32 %v1233, %v1234
      %1239 = vst.msk [vmem:[#allocation3] sm:$0xff] %vm583, %v1235
      %1240 = vst.msk [vmem:[#allocation3 + $0x8] sm:$0xff] %vm583, %v1236
      %1241 = vst.msk [vmem:[#allocation3 + $0x10] sm:$0xff] %vm583, %v1237
      %1242 = vst.msk [vmem:[#allocation3 + $0x18] sm:$0xff] %vm583, %v1238
      %v1243 = vld [vmem:[#allocation3] ss:$2 sm:$0xff]
      %s1244 = scalar_lea.vmem [#allocation3], 16
      %v1245 = vld [vmem:[%s1244] ss:$2 sm:$0xff]
      %s1246 = scalar_lea.vmem [#allocation3], 1
      %v1247 = vld [vmem:[%s1246] ss:$2 sm:$0xff]
      %s1248 = scalar_lea.vmem [#allocation3], 17
      %v1249 = vld [vmem:[%s1248] ss:$2 sm:$0xff]
      %v1250 = vadd.f32 %v1243, %v1247
      %v1251 = vadd.f32 %v1245, %v1249
      %v1252 = vmul.f32 %v1250, 0.25
      %v1253 = vmul.f32 %v1251, 0.25
      %1254 = vst.msk [vmem:[%s224] sm:$0xff] %vm583, %v1252
      %1255 = vst.msk [vmem:[%s224 + $0x8] sm:$0xff] %vm583, %v1253
      %p1256 = scmp.lt.s32.totalorder %s16, 1
      %s1257 = scalar_select %p1256, %s16, 1
      %s1258 = smul.addr %s1257, 2
      %s1259 = smul.addr %s1258, 8
      %s1260 = scalar_lea.vmem %s5, %s1259
      // Predicated region
      $region41: #{_lambda_.4} parent=39 // pred_check
        %p1261 = pneg %p144
      $region42: #{_lambda_.4} parent=39 // pred_check_branch
        %1263 = sbr.rel (%p1261) target = $region44
      $region43: #{_lambda_.4} parent=39 // pred_region
        _
      $region44: #{_lambda_.4} parent=39 // pred_fallthru
        _
    $region40: #{_lambda_.4} parent=5 // pred_fallthru
      _
    %p1264 = scmp.le.s32.totalorder 2, %s11
    // Predicated region
    $region45: #{_lambda_.4} parent=5 // pred_check
      %p1265 = pneg %p1264
    $region46: #{_lambda_.4} parent=5 // pred_check_branch
      %1267 = sbr.rel (%p1265) target = $region48
    $region47: #{_lambda_.4} parent=5 // pred_region
      %s1268 = ssub.s32 %s11, 2
      // Predicated region
      $region49: #{_lambda_.4} parent=47 // pred_check
        %p1269 = pneg %p150
      $region50: #{_lambda_.4} parent=47 // pred_check_branch
        %1271 = sbr.rel (%p1269) target = $region52
      $region51: #{_lambda_.4} parent=47 // pred_region
        %p1272 = scmp.lt.s32.totalorder %s17, 1
        %s1273 = scalar_select %p1272, %s17, 1
        %s1274 = smul.addr %s1273, 2
        %s1275 = smul.addr %s1274, 8
        %s1276 = scalar_lea.vmem %s5, %s1275
      $region52: #{_lambda_.4} parent=47 // pred_fallthru
        _
    $region48: #{_lambda_.4} parent=5 // pred_fallthru
      _
  $region6: #{_lambda_.4} parent=0 // loop_footer
    %s15 = sadd.s32 1, %s11
  $region7: #{_lambda_.4} parent=0 // loop_footer_branch
    %10 = sbr.rel target = $region3
  $region8: #{_lambda_.4} parent=0 // loop_exit
    _

// kernel: _lambda_.3
$region0: #{_lambda_.3}
  #allocation0 [shape = 'u32[]', space=smem, size = 0x4, offset = 0x4, fixed_abs, tag = 'smem constant byte address 0x4 - core index']
  #allocation1 [shape = 'u32[144,128]{1,0:T(1,128)}', space=vmem, size = 0x12000, scoped, tag = 'internal scratch']
  #allocation2 [shape = 'f32[290,8]{1,0:T(8,128)}', space=vmem, size = 0x25000, scoped, tag = 'scratch operand']
  #allocation3 [shape = 'f32[128,16]{1,0:T(8,128)}', space=vmem, size = 0x10000, scoped, tag = 'scratch operand']
  #allocation4 [shape = 'f32[128,3]{1,0:T(8,128)}', space=vmem, size = 0x10000, scoped, tag = 'scratch operand']
  #allocation5 [shape = 'f32[1,1]{1,0:T(1,128)S(6)}', space=smem, size = 0x200, scoped, tag = 'scoped memory for _lambda_.3']
  %s0 = inlined_call_operand.<no memory space> [shape: f32[1,1], index: 0, kind: input, shape index: {}]
  %s1 = inlined_call_operand.vmem [shape: f32[2,256,3], index: 1, kind: input, shape index: {}]
  %s2 = inlined_call_operand.vmem [shape: bf16[3,8], index: 2, kind: input, shape index: {}]
  %s3 = inlined_call_operand.vmem [shape: f32[1,8], index: 3, kind: input, shape index: {}]
  %s4 = inlined_call_operand.vmem [shape: bf16[3,16], index: 4, kind: input, shape index: {}]
  %s5 = inlined_call_operand.vmem [shape: f32[1,16], index: 5, kind: input, shape index: {}]
  %s6 = inlined_call_operand.vmem [shape: bf16[72,8], index: 6, kind: input, shape index: {}]
  %s7 = inlined_call_operand.vmem [shape: f32[1,8], index: 7, kind: input, shape index: {}]
  %s8 = inlined_call_operand.vmem [shape: bf16[72,16], index: 8, kind: input, shape index: {}]
  %s9 = inlined_call_operand.vmem [shape: f32[1,16], index: 9, kind: input, shape index: {}]
  %s10 = inlined_call_operand.vmem [shape: f32[2,64,16], index: 10, kind: output, shape index: {}]
  %s11 = sld [smem:[#allocation0]]
  $region73: #{_lambda_.3} parent=0
    _
  %s13 = ssub.s32 1, %s11
  %s14 = scalar_select 0, %s13, %s11
  %15 = sst [smem:[#allocation5]] %s0
  loop: start=0, step=1, limit=4
  $region2: #{_lambda_.3} parent=0 // loop_pre_header
    _
  $region3: #{_lambda_.3} parent=0 // loop_header
    %s17 = sphi 0, %s21
    %p18 = scmp.ge.s32.totalorder %s17, 4
    %s25 = sphi 0, %s25
    %s27 = sphi 0, %s25
    %s28 = sphi 0, %s27
    %s42 = sphi 0, %s28
    %s48 = sphi 0, %s50
    %s51 = sphi 0, %s48
    %s52 = sphi 0, %s51
    %s68 = sphi 0, %s52
    %s72 = sphi 0, %s72
    %s74 = sphi 0, %s72
    %s75 = sphi 0, %s74
    %s89 = sphi 0, %s75
    %s93 = sphi 0, %s93
    %s95 = sphi 0, %s93
    %s96 = sphi 0, %s95
    %s110 = sphi 0, %s96
    %s114 = sphi 0, %s114
    %s116 = sphi 0, %s114
    %s117 = sphi 0, %s116
    %s131 = sphi 0, %s117
    %s135 = sphi 0, %s135
    %s137 = sphi 0, %s135
    %s138 = sphi 0, %s137
    %s152 = sphi 0, %s138
    %s156 = sphi 0, %s156
    %s158 = sphi 0, %s156
    %s159 = sphi 0, %s158
    %s173 = sphi 0, %s159
    %s177 = sphi 0, %s177
    %s179 = sphi 0, %s177
    %s180 = sphi 0, %s179
    %s194 = sphi 0, %s180
    %s198 = sphi 0, %s198
    %s200 = sphi 0, %s198
    %s201 = sphi 0, %s200
    %s215 = sphi 0, %s201
    %s219 = sphi 0, %s219
    %s221 = sphi 0, %s219
    %s222 = sphi 0, %s221
    %s236 = sphi 0, %s222
    %s242 = sphi 0, %s244
    %s245 = sphi 0, %s242
    %s246 = sphi 0, %s245
    %s262 = sphi 0, %s246
  $region4: #{_lambda_.3} parent=0 // loop_header_branch
    %20 = sbr.rel (%p18) target = $region8
  $region5: #{_lambda_.3} parent=0 // loop_body
    %s22 = ssub.s32 %s17, 1
    %s23 = ssub.s32 %s17, 2
    %s24 = sadd.s32 %s17, 1
    %s26 = sadd.s32 %s25, 1
    %p29 = scmp.eq.s32.totalorder %s17, 1
    %p30 = scmp.ne.s32.totalorder %s25, %s27
    %p31 = scmp.eq.s32.totalorder %s17, 0
    %p32 = por %p30, %p31
    %p33 = scmp.ne.s32.totalorder %s25, %s27
    %p34 = scmp.eq.s32.totalorder %s22, 1
    %p35 = por %p33, %p34
    %p36 = scmp.ne.s32.totalorder %s27, %s28
    %p37 = scmp.eq.s32.totalorder %s22, 0
    %p38 = por %p36, %p37
    %p39 = scmp.ne.s32.totalorder %s27, %s28
    %p40 = scmp.eq.s32.totalorder %s23, 1
    %p41 = por %p39, %p40
    %p43 = scmp.ne.s32.totalorder %s28, %s42
    %p44 = scmp.eq.s32.totalorder %s23, 0
    %p45 = por %p43, %p44
    %s46 = ssub.s32 %s17, %s24
    %p47 = scmp.eq.s32.totalorder %s46, 0
    %s49 = sadd.s32 %s48, 1
    %s50 = scalar_select %p47, %s48, %s49
    %p53 = pneg %p47
    %p54 = scmp.eq.s32.totalorder %s17, 1
    %p55 = por %p53, %p54
    %p56 = scmp.ne.s32.totalorder %s48, %s51
    %p57 = scmp.eq.s32.totalorder %s17, 0
    %p58 = por %p56, %p57
    %p59 = scmp.ne.s32.totalorder %s48, %s51
    %p60 = scmp.eq.s32.totalorder %s22, 1
    %p61 = por %p59, %p60
    %p62 = scmp.ne.s32.totalorder %s51, %s52
    %p63 = scmp.eq.s32.totalorder %s22, 0
    %p64 = por %p62, %p63
    %p65 = scmp.ne.s32.totalorder %s51, %s52
    %p66 = scmp.eq.s32.totalorder %s23, 1
    %p67 = por %p65, %p66
    %p69 = scmp.ne.s32.totalorder %s52, %s68
    %p70 = scmp.eq.s32.totalorder %s23, 0
    %p71 = por %p69, %p70
    %s73 = sadd.s32 %s72, 1
    %p76 = scmp.eq.s32.totalorder %s17, 1
    %p77 = scmp.ne.s32.totalorder %s72, %s74
    %p78 = scmp.eq.s32.totalorder %s17, 0
    %p79 = por %p77, %p78
    %p80 = scmp.ne.s32.totalorder %s72, %s74
    %p81 = scmp.eq.s32.totalorder %s22, 1
    %p82 = por %p80, %p81
    %p83 = scmp.ne.s32.totalorder %s74, %s75
    %p84 = scmp.eq.s32.totalorder %s22, 0
    %p85 = por %p83, %p84
    %p86 = scmp.ne.s32.totalorder %s74, %s75
    %p87 = scmp.eq.s32.totalorder %s23, 1
    %p88 = por %p86, %p87
    %p90 = scmp.ne.s32.totalorder %s75, %s89
    %p91 = scmp.eq.s32.totalorder %s23, 0
    %p92 = por %p90, %p91
    %s94 = sadd.s32 %s93, 1
    %p97 = scmp.eq.s32.totalorder %s17, 1
    %p98 = scmp.ne.s32.totalorder %s93, %s95
    %p99 = scmp.eq.s32.totalorder %s17, 0
    %p100 = por %p98, %p99
    %p101 = scmp.ne.s32.totalorder %s93, %s95
    %p102 = scmp.eq.s32.totalorder %s22, 1
    %p103 = por %p101, %p102
    %p104 = scmp.ne.s32.totalorder %s95, %s96
    %p105 = scmp.eq.s32.totalorder %s22, 0
    %p106 = por %p104, %p105
    %p107 = scmp.ne.s32.totalorder %s95, %s96
    %p108 = scmp.eq.s32.totalorder %s23, 1
    %p109 = por %p107, %p108
    %p111 = scmp.ne.s32.totalorder %s96, %s110
    %p112 = scmp.eq.s32.totalorder %s23, 0
    %p113 = por %p111, %p112
    %s115 = sadd.s32 %s114, 1
    %p118 = scmp.eq.s32.totalorder %s17, 1
    %p119 = scmp.ne.s32.totalorder %s114, %s116
    %p120 = scmp.eq.s32.totalorder %s17, 0
    %p121 = por %p119, %p120
    %p122 = scmp.ne.s32.totalorder %s114, %s116
    %p123 = scmp.eq.s32.totalorder %s22, 1
    %p124 = por %p122, %p123
    %p125 = scmp.ne.s32.totalorder %s116, %s117
    %p126 = scmp.eq.s32.totalorder %s22, 0
    %p127 = por %p125, %p126
    %p128 = scmp.ne.s32.totalorder %s116, %s117
    %p129 = scmp.eq.s32.totalorder %s23, 1
    %p130 = por %p128, %p129
    %p132 = scmp.ne.s32.totalorder %s117, %s131
    %p133 = scmp.eq.s32.totalorder %s23, 0
    %p134 = por %p132, %p133
    %s136 = sadd.s32 %s135, 1
    %p139 = scmp.eq.s32.totalorder %s17, 1
    %p140 = scmp.ne.s32.totalorder %s135, %s137
    %p141 = scmp.eq.s32.totalorder %s17, 0
    %p142 = por %p140, %p141
    %p143 = scmp.ne.s32.totalorder %s135, %s137
    %p144 = scmp.eq.s32.totalorder %s22, 1
    %p145 = por %p143, %p144
    %p146 = scmp.ne.s32.totalorder %s137, %s138
    %p147 = scmp.eq.s32.totalorder %s22, 0
    %p148 = por %p146, %p147
    %p149 = scmp.ne.s32.totalorder %s137, %s138
    %p150 = scmp.eq.s32.totalorder %s23, 1
    %p151 = por %p149, %p150
    %p153 = scmp.ne.s32.totalorder %s138, %s152
    %p154 = scmp.eq.s32.totalorder %s23, 0
    %p155 = por %p153, %p154
    %s157 = sadd.s32 %s156, 1
    %p160 = scmp.eq.s32.totalorder %s17, 1
    %p161 = scmp.ne.s32.totalorder %s156, %s158
    %p162 = scmp.eq.s32.totalorder %s17, 0
    %p163 = por %p161, %p162
    %p164 = scmp.ne.s32.totalorder %s156, %s158
    %p165 = scmp.eq.s32.totalorder %s22, 1
    %p166 = por %p164, %p165
    %p167 = scmp.ne.s32.totalorder %s158, %s159
    %p168 = scmp.eq.s32.totalorder %s22, 0
    %p169 = por %p167, %p168
    %p170 = scmp.ne.s32.totalorder %s158, %s159
    %p171 = scmp.eq.s32.totalorder %s23, 1
    %p172 = por %p170, %p171
    %p174 = scmp.ne.s32.totalorder %s159, %s173
    %p175 = scmp.eq.s32.totalorder %s23, 0
    %p176 = por %p174, %p175
    %s178 = sadd.s32 %s177, 1
    %p181 = scmp.eq.s32.totalorder %s17, 1
    %p182 = scmp.ne.s32.totalorder %s177, %s179
    %p183 = scmp.eq.s32.totalorder %s17, 0
    %p184 = por %p182, %p183
    %p185 = scmp.ne.s32.totalorder %s177, %s179
    %p186 = scmp.eq.s32.totalorder %s22, 1
    %p187 = por %p185, %p186
    %p188 = scmp.ne.s32.totalorder %s179, %s180
    %p189 = scmp.eq.s32.totalorder %s22, 0
    %p190 = por %p188, %p189
    %p191 = scmp.ne.s32.totalorder %s179, %s180
    %p192 = scmp.eq.s32.totalorder %s23, 1
    %p193 = por %p191, %p192
    %p195 = scmp.ne.s32.totalorder %s180, %s194
    %p196 = scmp.eq.s32.totalorder %s23, 0
    %p197 = por %p195, %p196
    %s199 = sadd.s32 %s198, 1
    %p202 = scmp.eq.s32.totalorder %s17, 1
    %p203 = scmp.ne.s32.totalorder %s198, %s200
    %p204 = scmp.eq.s32.totalorder %s17, 0
    %p205 = por %p203, %p204
    %p206 = scmp.ne.s32.totalorder %s198, %s200
    %p207 = scmp.eq.s32.totalorder %s22, 1
    %p208 = por %p206, %p207
    %p209 = scmp.ne.s32.totalorder %s200, %s201
    %p210 = scmp.eq.s32.totalorder %s22, 0
    %p211 = por %p209, %p210
    %p212 = scmp.ne.s32.totalorder %s200, %s201
    %p213 = scmp.eq.s32.totalorder %s23, 1
    %p214 = por %p212, %p213
    %p216 = scmp.ne.s32.totalorder %s201, %s215
    %p217 = scmp.eq.s32.totalorder %s23, 0
    %p218 = por %p216, %p217
    %s220 = sadd.s32 %s219, 1
    %p223 = scmp.eq.s32.totalorder %s17, 1
    %p224 = scmp.ne.s32.totalorder %s219, %s221
    %p225 = scmp.eq.s32.totalorder %s17, 0
    %p226 = por %p224, %p225
    %p227 = scmp.ne.s32.totalorder %s219, %s221
    %p228 = scmp.eq.s32.totalorder %s22, 1
    %p229 = por %p227, %p228
    %p230 = scmp.ne.s32.totalorder %s221, %s222
    %p231 = scmp.eq.s32.totalorder %s22, 0
    %p232 = por %p230, %p231
    %p233 = scmp.ne.s32.totalorder %s221, %s222
    %p234 = scmp.eq.s32.totalorder %s23, 1
    %p235 = por %p233, %p234
    %p237 = scmp.ne.s32.totalorder %s222, %s236
    %p238 = scmp.eq.s32.totalorder %s23, 0
    %p239 = por %p237, %p238
    %s240 = ssub.s32 %s17, %s24
    %p241 = scmp.eq.s32.totalorder %s240, 0
    %s243 = sadd.s32 %s242, 1
    %s244 = scalar_select %p241, %s242, %s243
    %p247 = pneg %p241
    %p248 = scmp.eq.s32.totalorder %s17, 1
    %p249 = por %p247, %p248
    %p250 = scmp.ne.s32.totalorder %s242, %s245
    %p251 = scmp.eq.s32.totalorder %s17, 0
    %p252 = por %p250, %p251
    %p253 = scmp.ne.s32.totalorder %s242, %s245
    %p254 = scmp.eq.s32.totalorder %s22, 1
    %p255 = por %p253, %p254
    %p256 = scmp.ne.s32.totalorder %s245, %s246
    %p257 = scmp.eq.s32.totalorder %s22, 0
    %p258 = por %p256, %p257
    %p259 = scmp.ne.s32.totalorder %s245, %s246
    %p260 = scmp.eq.s32.totalorder %s23, 1
    %p261 = por %p259, %p260
    %p263 = scmp.ne.s32.totalorder %s246, %s262
    %p264 = scmp.eq.s32.totalorder %s23, 0
    %p265 = por %p263, %p264
    %p266 = scmp.le.s32.totalorder 1, %s17
    %p267 = scmp.lt.s32.totalorder %s17, 3
    %p268 = pnand %p266, %p267
    %p269 = pneg %p268
    // Predicated region
    $region9: #{_lambda_.3} parent=5 // pred_check
      _
    $region10: #{_lambda_.3} parent=5 // pred_check_branch
      %271 = sbr.rel (%p268) target = $region12
    $region11: #{_lambda_.3} parent=5 // pred_region
      %s272 = ssub.s32 %s17, 1
      // Predicated region
      $region13: #{_lambda_.3} parent=11 // pred_check
        %p273 = pneg %p38
      $region14: #{_lambda_.3} parent=11 // pred_check_branch
        %275 = sbr.rel (%p273) target = $region16
      $region15: #{_lambda_.3} parent=11 // pred_region
        _
      $region16: #{_lambda_.3} parent=11 // pred_fallthru
        _
      // Predicated region
      $region17: #{_lambda_.3} parent=11 // pred_check
        %p276 = pneg %p85
      $region18: #{_lambda_.3} parent=11 // pred_check_branch
        %278 = sbr.rel (%p276) target = $region20
      $region19: #{_lambda_.3} parent=11 // pred_region
        _
      $region20: #{_lambda_.3} parent=11 // pred_fallthru
        _
      // Predicated region
      $region21: #{_lambda_.3} parent=11 // pred_check
        %p279 = pneg %p106
      $region22: #{_lambda_.3} parent=11 // pred_check_branch
        %281 = sbr.rel (%p279) target = $region24
      $region23: #{_lambda_.3} parent=11 // pred_region
        _
      $region24: #{_lambda_.3} parent=11 // pred_fallthru
        _
      // Predicated region
      $region25: #{_lambda_.3} parent=11 // pred_check
        %p282 = pneg %p127
      $region26: #{_lambda_.3} parent=11 // pred_check_branch
        %284 = sbr.rel (%p282) target = $region28
      $region27: #{_lambda_.3} parent=11 // pred_region
        _
      $region28: #{_lambda_.3} parent=11 // pred_fallthru
        _
      // Predicated region
      $region29: #{_lambda_.3} parent=11 // pred_check
        %p285 = pneg %p148
      $region30: #{_lambda_.3} parent=11 // pred_check_branch
        %287 = sbr.rel (%p285) target = $region32
      $region31: #{_lambda_.3} parent=11 // pred_region
        _
      $region32: #{_lambda_.3} parent=11 // pred_fallthru
        _
      // Predicated region
      $region33: #{_lambda_.3} parent=11 // pred_check
        %p288 = pneg %p169
      $region34: #{_lambda_.3} parent=11 // pred_check_branch
        %290 = sbr.rel (%p288) target = $region36
      $region35: #{_lambda_.3} parent=11 // pred_region
        _
      $region36: #{_lambda_.3} parent=11 // pred_fallthru
        _
      // Predicated region
      $region37: #{_lambda_.3} parent=11 // pred_check
        %p291 = pneg %p190
      $region38: #{_lambda_.3} parent=11 // pred_check_branch
        %293 = sbr.rel (%p291) target = $region40
      $region39: #{_lambda_.3} parent=11 // pred_region
        _
      $region40: #{_lambda_.3} parent=11 // pred_fallthru
        _
      // Predicated region
      $region41: #{_lambda_.3} parent=11 // pred_check
        %p294 = pneg %p211
      $region42: #{_lambda_.3} parent=11 // pred_check_branch
        %296 = sbr.rel (%p294) target = $region44
      $region43: #{_lambda_.3} parent=11 // pred_region
        _
      $region44: #{_lambda_.3} parent=11 // pred_fallthru
        _
      // Predicated region
      $region45: #{_lambda_.3} parent=11 // pred_check
        %p297 = pneg %p232
      $region46: #{_lambda_.3} parent=11 // pred_check_branch
        %299 = sbr.rel (%p297) target = $region48
      $region47: #{_lambda_.3} parent=11 // pred_region
        _
      $region48: #{_lambda_.3} parent=11 // pred_fallthru
        _
    $region12: #{_lambda_.3} parent=5 // pred_fallthru
      _
    %p300 = scmp.lt.s32.totalorder %s17, 2
    // Predicated region
    $region49: #{_lambda_.3} parent=5 // pred_check
      %p301 = pneg %p300
    $region50: #{_lambda_.3} parent=5 // pred_check_branch
      %303 = sbr.rel (%p301) target = $region52
    $region51: #{_lambda_.3} parent=5 // pred_region
      // Predicated region
      $region53: #{_lambda_.3} parent=51 // pred_check
        %p304 = pneg %p58
      $region54: #{_lambda_.3} parent=51 // pred_check_branch
        %306 = sbr.rel (%p304) target = $region56
      $region55: #{_lambda_.3} parent=51 // pred_region
        %p307 = scmp.lt.s32.totalorder %s17, 1
        %s308 = scalar_select %p307, %s17, 1
        %s309 = smul.addr %s308, 32
        %s310 = smul.addr %s309, 8
        %s311 = scalar_lea.vmem %s1, %s310
      $region56: #{_lambda_.3} parent=51 // pred_fallthru
        _
    $region52: #{_lambda_.3} parent=5 // pred_fallthru
      _
    %p312 = scmp.le.s32.totalorder 1, %s17
    %p313 = scmp.lt.s32.totalorder %s17, 3
    %p314 = pnand %p312, %p313
    %p315 = pneg %p314
    // Predicated region
    $region57: #{_lambda_.3} parent=5 // pred_check
      _
    $region58: #{_lambda_.3} parent=5 // pred_check_branch
      %317 = sbr.rel (%p314) target = $region60
    $region59: #{_lambda_.3} parent=5 // pred_region
      %s318 = ssub.s32 %s17, 1
      %p319 = pneg %p38
      %p320 = pneg %p35
      %p321 = scmp.lt.s32.totalorder %s22, 1
      %s322 = scalar_select %p321, %s22, 1
      %s323 = smul.addr %s322, 32
      %s324 = smul.addr %s323, 8
      %s325 = scalar_lea.vmem %s1, %s324
      %p326 = pneg %p64
      %p327 = pneg %p61
      %p328 = pneg %p85
      %p329 = pneg %p82
      %p330 = pneg %p106
      %p331 = pneg %p103
      %p332 = pneg %p127
      %p333 = pneg %p124
      %p334 = pneg %p148
      %p335 = pneg %p145
      %p336 = pneg %p169
      %p337 = pneg %p166
      %p338 = pneg %p190
      %p339 = pneg %p187
      %p340 = pneg %p211
      %p341 = pneg %p208
      %p342 = pneg %p232
      %p343 = pneg %p229
      %p344 = pneg %p258
      %p345 = pneg %p255
      %p346 = scmp.lt.s32.totalorder %s22, 1
      %s347 = scalar_select %p346, %s22, 1
      %s348 = smul.addr %s347, 8
      %s349 = smul.addr %s348, 8
      %s350 = scalar_lea.vmem %s10, %s349
      %p351 = scmp.lt.s32.totalorder %s22, 1
      %s352 = scalar_select %p351, %s22, 1
      %s353 = smul.addr %s352, 32
      %s354 = smul.addr %s353, 8
      %s355 = scalar_lea.vmem %s1, %s354
      %p356 = scmp.lt.s32.totalorder %s22, 1
      %s357 = scalar_select %p356, %s22, 1
      %s358 = smul.addr %s357, 8
      %s359 = smul.addr %s358, 8
      %s360 = scalar_lea.vmem %s10, %s359
      %v362 = vlaneseq
      %v363 = vshrl.u32 %v362, 7
      %v364 = vadd.s32 %v363, 8
      %v365 = vadd.s32 %v363, 16
      %v366 = vadd.s32 %v363, 24
      %v367 = vadd.s32 %v363, 32
      %v368 = vadd.s32 %v363, 40
      %v369 = vadd.s32 %v363, 48
      %v370 = vadd.s32 %v363, 56
      %v371 = vadd.s32 %v363, 64
      %v372 = vadd.s32 %v363, 72
      %v373 = vadd.s32 %v363, 80
      %v374 = vadd.s32 %v363, 88
      %v375 = vadd.s32 %v363, 96
      %v376 = vadd.s32 %v363, 104
      %v377 = vadd.s32 %v363, 112
      %v378 = vadd.s32 %v363, 120
      %v379 = vadd.s32 %v363, 128
      %v380 = vadd.s32 %v363, 136
      %v381 = vadd.s32 %v363, 144
      %v382 = vadd.s32 %v363, 152
      %v383 = vadd.s32 %v363, 160
      %v384 = vadd.s32 %v363, 168
      %v385 = vadd.s32 %v363, 176
      %v386 = vadd.s32 %v363, 184
      %v387 = vadd.s32 %v363, 192
      %v388 = vadd.s32 %v363, 200
      %v389 = vadd.s32 %v363, 208
      %v390 = vadd.s32 %v363, 216
      %v391 = vadd.s32 %v363, 224
      %v392 = vadd.s32 %v363, 232
      %v393 = vadd.s32 %v363, 240
      %v394 = vadd.s32 %v363, 248
      %vm395 = vcmp.lt.s32.totalorder %v363, 0
      %v396 = vsub.s32 0, %v363
      %v397 = vsel %vm395, %v396, %v363
      %v398 = vshrl.u32 %v397, 4
      %v399 = vand.u32 %v397, 15
      %v400 = vsub.s32 0, %v399
      %v401 = vsel %vm395, %v400, %v399
      %vm402 = vcmp.lt.s32.totalorder %v364, 0
      %v403 = vsub.s32 0, %v364
      %v404 = vsel %vm402, %v403, %v364
      %v405 = vshrl.u32 %v404, 4
      %v406 = vand.u32 %v404, 15
      %v407 = vsub.s32 0, %v406
      %v408 = vsel %vm402, %v407, %v406
      %vm409 = vcmp.lt.s32.totalorder %v365, 0
      %v410 = vsub.s32 0, %v365
      %v411 = vsel %vm409, %v410, %v365
      %v412 = vshrl.u32 %v411, 4
      %v413 = vand.u32 %v411, 15
      %v414 = vsub.s32 0, %v413
      %v415 = vsel %vm409, %v414, %v413
      %vm416 = vcmp.lt.s32.totalorder %v366, 0
      %v417 = vsub.s32 0, %v366
      %v418 = vsel %vm416, %v417, %v366
      %v419 = vshrl.u32 %v418, 4
      %v420 = vand.u32 %v418, 15
      %v421 = vsub.s32 0, %v420
      %v422 = vsel %vm416, %v421, %v420
      %vm423 = vcmp.lt.s32.totalorder %v367, 0
      %v424 = vsub.s32 0, %v367
      %v425 = vsel %vm423, %v424, %v367
      %v426 = vshrl.u32 %v425, 4
      %v427 = vand.u32 %v425, 15
      %v428 = vsub.s32 0, %v427
      %v429 = vsel %vm423, %v428, %v427
      %vm430 = vcmp.lt.s32.totalorder %v368, 0
      %v431 = vsub.s32 0, %v368
      %v432 = vsel %vm430, %v431, %v368
      %v433 = vshrl.u32 %v432, 4
      %v434 = vand.u32 %v432, 15
      %v435 = vsub.s32 0, %v434
      %v436 = vsel %vm430, %v435, %v434
      %vm437 = vcmp.lt.s32.totalorder %v369, 0
      %v438 = vsub.s32 0, %v369
      %v439 = vsel %vm437, %v438, %v369
      %v440 = vshrl.u32 %v439, 4
      %v441 = vand.u32 %v439, 15
      %v442 = vsub.s32 0, %v441
      %v443 = vsel %vm437, %v442, %v441
      %vm444 = vcmp.lt.s32.totalorder %v370, 0
      %v445 = vsub.s32 0, %v370
      %v446 = vsel %vm444, %v445, %v370
      %v447 = vshrl.u32 %v446, 4
      %v448 = vand.u32 %v446, 15
      %v449 = vsub.s32 0, %v448
      %v450 = vsel %vm444, %v449, %v448
      %vm451 = vcmp.lt.s32.totalorder %v371, 0
      %v452 = vsub.s32 0, %v371
      %v453 = vsel %vm451, %v452, %v371
      %v454 = vshrl.u32 %v453, 4
      %v455 = vand.u32 %v453, 15
      %v456 = vsub.s32 0, %v455
      %v457 = vsel %vm451, %v456, %v455
      %vm458 = vcmp.lt.s32.totalorder %v372, 0
      %v459 = vsub.s32 0, %v372
      %v460 = vsel %vm458, %v459, %v372
      %v461 = vshrl.u32 %v460, 4
      %v462 = vand.u32 %v460, 15
      %v463 = vsub.s32 0, %v462
      %v464 = vsel %vm458, %v463, %v462
      %vm465 = vcmp.lt.s32.totalorder %v373, 0
      %v466 = vsub.s32 0, %v373
      %v467 = vsel %vm465, %v466, %v373
      %v468 = vshrl.u32 %v467, 4
      %v469 = vand.u32 %v467, 15
      %v470 = vsub.s32 0, %v469
      %v471 = vsel %vm465, %v470, %v469
      %vm472 = vcmp.lt.s32.totalorder %v374, 0
      %v473 = vsub.s32 0, %v374
      %v474 = vsel %vm472, %v473, %v374
      %v475 = vshrl.u32 %v474, 4
      %v476 = vand.u32 %v474, 15
      %v477 = vsub.s32 0, %v476
      %v478 = vsel %vm472, %v477, %v476
      %vm479 = vcmp.lt.s32.totalorder %v375, 0
      %v480 = vsub.s32 0, %v375
      %v481 = vsel %vm479, %v480, %v375
      %v482 = vshrl.u32 %v481, 4
      %v483 = vand.u32 %v481, 15
      %v484 = vsub.s32 0, %v483
      %v485 = vsel %vm479, %v484, %v483
      %vm486 = vcmp.lt.s32.totalorder %v376, 0
      %v487 = vsub.s32 0, %v376
      %v488 = vsel %vm486, %v487, %v376
      %v489 = vshrl.u32 %v488, 4
      %v490 = vand.u32 %v488, 15
      %v491 = vsub.s32 0, %v490
      %v492 = vsel %vm486, %v491, %v490
      %vm493 = vcmp.lt.s32.totalorder %v377, 0
      %v494 = vsub.s32 0, %v377
      %v495 = vsel %vm493, %v494, %v377
      %v496 = vshrl.u32 %v495, 4
      %v497 = vand.u32 %v495, 15
      %v498 = vsub.s32 0, %v497
      %v499 = vsel %vm493, %v498, %v497
      %vm500 = vcmp.lt.s32.totalorder %v378, 0
      %v501 = vsub.s32 0, %v378
      %v502 = vsel %vm500, %v501, %v378
      %v503 = vshrl.u32 %v502, 4
      %v504 = vand.u32 %v502, 15
      %v505 = vsub.s32 0, %v504
      %v506 = vsel %vm500, %v505, %v504
      %vm507 = vcmp.lt.s32.totalorder %v379, 0
      %v508 = vsub.s32 0, %v379
      %v509 = vsel %vm507, %v508, %v379
      %v510 = vshrl.u32 %v509, 4
      %v511 = vand.u32 %v509, 15
      %v512 = vsub.s32 0, %v511
      %v513 = vsel %vm507, %v512, %v511
      %vm514 = vcmp.lt.s32.totalorder %v380, 0
      %v515 = vsub.s32 0, %v380
      %v516 = vsel %vm514, %v515, %v380
      %v517 = vshrl.u32 %v516, 4
      %v518 = vand.u32 %v516, 15
      %v519 = vsub.s32 0, %v518
      %v520 = vsel %vm514, %v519, %v518
      %vm521 = vcmp.lt.s32.totalorder %v381, 0
      %v522 = vsub.s32 0, %v381
      %v523 = vsel %vm521, %v522, %v381
      %v524 = vshrl.u32 %v523, 4
      %v525 = vand.u32 %v523, 15
      %v526 = vsub.s32 0, %v525
      %v527 = vsel %vm521, %v526, %v525
      %vm528 = vcmp.lt.s32.totalorder %v382, 0
      %v529 = vsub.s32 0, %v382
      %v530 = vsel %vm528, %v529, %v382
      %v531 = vshrl.u32 %v530, 4
      %v532 = vand.u32 %v530, 15
      %v533 = vsub.s32 0, %v532
      %v534 = vsel %vm528, %v533, %v532
      %vm535 = vcmp.lt.s32.totalorder %v383, 0
      %v536 = vsub.s32 0, %v383
      %v537 = vsel %vm535, %v536, %v383
      %v538 = vshrl.u32 %v537, 4
      %v539 = vand.u32 %v537, 15
      %v540 = vsub.s32 0, %v539
      %v541 = vsel %vm535, %v540, %v539
      %vm542 = vcmp.lt.s32.totalorder %v384, 0
      %v543 = vsub.s32 0, %v384
      %v544 = vsel %vm542, %v543, %v384
      %v545 = vshrl.u32 %v544, 4
      %v546 = vand.u32 %v544, 15
      %v547 = vsub.s32 0, %v546
      %v548 = vsel %vm542, %v547, %v546
      %vm549 = vcmp.lt.s32.totalorder %v385, 0
      %v550 = vsub.s32 0, %v385
      %v551 = vsel %vm549, %v550, %v385
      %v552 = vshrl.u32 %v551, 4
      %v553 = vand.u32 %v551, 15
      %v554 = vsub.s32 0, %v553
      %v555 = vsel %vm549, %v554, %v553
      %vm556 = vcmp.lt.s32.totalorder %v386, 0
      %v557 = vsub.s32 0, %v386
      %v558 = vsel %vm556, %v557, %v386
      %v559 = vshrl.u32 %v558, 4
      %v560 = vand.u32 %v558, 15
      %v561 = vsub.s32 0, %v560
      %v562 = vsel %vm556, %v561, %v560
      %vm563 = vcmp.lt.s32.totalorder %v387, 0
      %v564 = vsub.s32 0, %v387
      %v565 = vsel %vm563, %v564, %v387
      %v566 = vshrl.u32 %v565, 4
      %v567 = vand.u32 %v565, 15
      %v568 = vsub.s32 0, %v567
      %v569 = vsel %vm563, %v568, %v567
      %vm570 = vcmp.lt.s32.totalorder %v388, 0
      %v571 = vsub.s32 0, %v388
      %v572 = vsel %vm570, %v571, %v388
      %v573 = vshrl.u32 %v572, 4
      %v574 = vand.u32 %v572, 15
      %v575 = vsub.s32 0, %v574
      %v576 = vsel %vm570, %v575, %v574
      %vm577 = vcmp.lt.s32.totalorder %v389, 0
      %v578 = vsub.s32 0, %v389
      %v579 = vsel %vm577, %v578, %v389
      %v580 = vshrl.u32 %v579, 4
      %v581 = vand.u32 %v579, 15
      %v582 = vsub.s32 0, %v581
      %v583 = vsel %vm577, %v582, %v581
      %vm584 = vcmp.lt.s32.totalorder %v390, 0
      %v585 = vsub.s32 0, %v390
      %v586 = vsel %vm584, %v585, %v390
      %v587 = vshrl.u32 %v586, 4
      %v588 = vand.u32 %v586, 15
      %v589 = vsub.s32 0, %v588
      %v590 = vsel %vm584, %v589, %v588
      %vm591 = vcmp.lt.s32.totalorder %v391, 0
      %v592 = vsub.s32 0, %v391
      %v593 = vsel %vm591, %v592, %v391
      %v594 = vshrl.u32 %v593, 4
      %v595 = vand.u32 %v593, 15
      %v596 = vsub.s32 0, %v595
      %v597 = vsel %vm591, %v596, %v595
      %vm598 = vcmp.lt.s32.totalorder %v392, 0
      %v599 = vsub.s32 0, %v392
      %v600 = vsel %vm598, %v599, %v392
      %v601 = vshrl.u32 %v600, 4
      %v602 = vand.u32 %v600, 15
      %v603 = vsub.s32 0, %v602
      %v604 = vsel %vm598, %v603, %v602
      %vm605 = vcmp.lt.s32.totalorder %v393, 0
      %v606 = vsub.s32 0, %v393
      %v607 = vsel %vm605, %v606, %v393
      %v608 = vshrl.u32 %v607, 4
      %v609 = vand.u32 %v607, 15
      %v610 = vsub.s32 0, %v609
      %v611 = vsel %vm605, %v610, %v609
      %vm612 = vcmp.lt.s32.totalorder %v394, 0
      %v613 = vsub.s32 0, %v394
      %v614 = vsel %vm612, %v613, %v394
      %v615 = vshrl.u32 %v614, 4
      %v616 = vand.u32 %v614, 15
      %v617 = vsub.s32 0, %v616
      %v618 = vsel %vm612, %v617, %v616
      %vm619 = vcmp.ne.s32.totalorder %v401, 0
      %vm620 = vcmp.ne.s32.totalorder %v408, 0
      %vm621 = vcmp.ne.s32.totalorder %v415, 0
      %vm622 = vcmp.ne.s32.totalorder %v422, 0
      %vm623 = vcmp.ne.s32.totalorder %v429, 0
      %vm624 = vcmp.ne.s32.totalorder %v436, 0
      %vm625 = vcmp.ne.s32.totalorder %v443, 0
      %vm626 = vcmp.ne.s32.totalorder %v450, 0
      %vm627 = vcmp.ne.s32.totalorder %v457, 0
      %vm628 = vcmp.ne.s32.totalorder %v464, 0
      %vm629 = vcmp.ne.s32.totalorder %v471, 0
      %vm630 = vcmp.ne.s32.totalorder %v478, 0
      %vm631 = vcmp.ne.s32.totalorder %v485, 0
      %vm632 = vcmp.ne.s32.totalorder %v492, 0
      %vm633 = vcmp.ne.s32.totalorder %v499, 0
      %vm634 = vcmp.ne.s32.totalorder %v506, 0
      %vm635 = vcmp.ne.s32.totalorder %v513, 0
      %vm636 = vcmp.ne.s32.totalorder %v520, 0
      %vm637 = vcmp.ne.s32.totalorder %v527, 0
      %vm638 = vcmp.ne.s32.totalorder %v534, 0
      %vm639 = vcmp.ne.s32.totalorder %v541, 0
      %vm640 = vcmp.ne.s32.totalorder %v548, 0
      %vm641 = vcmp.ne.s32.totalorder %v555, 0
      %vm642 = vcmp.ne.s32.totalorder %v562, 0
      %vm643 = vcmp.ne.s32.totalorder %v569, 0
      %vm644 = vcmp.ne.s32.totalorder %v576, 0
      %vm645 = vcmp.ne.s32.totalorder %v583, 0
      %vm646 = vcmp.ne.s32.totalorder %v590, 0
      %vm647 = vcmp.ne.s32.totalorder %v597, 0
      %vm648 = vcmp.ne.s32.totalorder %v604, 0
      %vm649 = vcmp.ne.s32.totalorder %v611, 0
      %vm650 = vcmp.ne.s32.totalorder %v618, 0
      %vm651 = vcmp.lt.s32.totalorder %v401, 0
      %vm652 = vcmp.lt.s32.totalorder %v408, 0
      %vm653 = vcmp.lt.s32.totalorder %v415, 0
      %vm654 = vcmp.lt.s32.totalorder %v422, 0
      %vm655 = vcmp.lt.s32.totalorder %v429, 0
      %vm656 = vcmp.lt.s32.totalorder %v436, 0
      %vm657 = vcmp.lt.s32.totalorder %v443, 0
      %vm658 = vcmp.lt.s32.totalorder %v450, 0
      %vm659 = vcmp.lt.s32.totalorder %v457, 0
      %vm660 = vcmp.lt.s32.totalorder %v464, 0
      %vm661 = vcmp.lt.s32.totalorder %v471, 0
      %vm662 = vcmp.lt.s32.totalorder %v478, 0
      %vm663 = vcmp.lt.s32.totalorder %v485, 0
      %vm664 = vcmp.lt.s32.totalorder %v492, 0
      %vm665 = vcmp.lt.s32.totalorder %v499, 0
      %vm666 = vcmp.lt.s32.totalorder %v506, 0
      %vm667 = vcmp.lt.s32.totalorder %v513, 0
      %vm668 = vcmp.lt.s32.totalorder %v520, 0
      %vm669 = vcmp.lt.s32.totalorder %v527, 0
      %vm670 = vcmp.lt.s32.totalorder %v534, 0
      %vm671 = vcmp.lt.s32.totalorder %v541, 0
      %vm672 = vcmp.lt.s32.totalorder %v548, 0
      %vm673 = vcmp.lt.s32.totalorder %v555, 0
      %vm674 = vcmp.lt.s32.totalorder %v562, 0
      %vm675 = vcmp.lt.s32.totalorder %v569, 0
      %vm676 = vcmp.lt.s32.totalorder %v576, 0
      %vm677 = vcmp.lt.s32.totalorder %v583, 0
      %vm678 = vcmp.lt.s32.totalorder %v590, 0
      %vm679 = vcmp.lt.s32.totalorder %v597, 0
      %vm680 = vcmp.lt.s32.totalorder %v604, 0
      %vm681 = vcmp.lt.s32.totalorder %v611, 0
      %vm682 = vcmp.lt.s32.totalorder %v618, 0
      %vm683 = vmand %vm651, %vm619
      %vm684 = vmand %vm652, %vm620
      %vm685 = vmand %vm653, %vm621
      %vm686 = vmand %vm654, %vm622
      %vm687 = vmand %vm655, %vm623
      %vm688 = vmand %vm656, %vm624
      %vm689 = vmand %vm657, %vm625
      %vm690 = vmand %vm658, %vm626
      %vm691 = vmand %vm659, %vm627
      %vm692 = vmand %vm660, %vm628
      %vm693 = vmand %vm661, %vm629
      %vm694 = vmand %vm662, %vm630
      %vm695 = vmand %vm663, %vm631
      %vm696 = vmand %vm664, %vm632
      %vm697 = vmand %vm665, %vm633
      %vm698 = vmand %vm666, %vm634
      %vm699 = vmand %vm667, %vm635
      %vm700 = vmand %vm668, %vm636
      %vm701 = vmand %vm669, %vm637
      %vm702 = vmand %vm670, %vm638
      %vm703 = vmand %vm671, %vm639
      %vm704 = vmand %vm672, %vm640
      %vm705 = vmand %vm673, %vm641
      %vm706 = vmand %vm674, %vm642
      %vm707 = vmand %vm675, %vm643
      %vm708 = vmand %vm676, %vm644
      %vm709 = vmand %vm677, %vm645
      %vm710 = vmand %vm678, %vm646
      %vm711 = vmand %vm679, %vm647
      %vm712 = vmand %vm680, %vm648
      %vm713 = vmand %vm681, %vm649
      %vm714 = vmand %vm682, %vm650
      %v715 = vadd.s32 %v401, 16
      %v716 = vadd.s32 %v408, 16
      %v717 = vadd.s32 %v415, 16
      %v718 = vadd.s32 %v422, 16
      %v719 = vadd.s32 %v429, 16
      %v720 = vadd.s32 %v436, 16
      %v721 = vadd.s32 %v443, 16
      %v722 = vadd.s32 %v450, 16
      %v723 = vadd.s32 %v457, 16
      %v724 = vadd.s32 %v464, 16
      %v725 = vadd.s32 %v471, 16
      %v726 = vadd.s32 %v478, 16
      %v727 = vadd.s32 %v485, 16
      %v728 = vadd.s32 %v492, 16
      %v729 = vadd.s32 %v499, 16
      %v730 = vadd.s32 %v506, 16
      %v731 = vadd.s32 %v513, 16
      %v732 = vadd.s32 %v520, 16
      %v733 = vadd.s32 %v527, 16
      %v734 = vadd.s32 %v534, 16
      %v735 = vadd.s32 %v541, 16
      %v736 = vadd.s32 %v548, 16
      %v737 = vadd.s32 %v555, 16
      %v738 = vadd.s32 %v562, 16
      %v739 = vadd.s32 %v569, 16
      %v740 = vadd.s32 %v576, 16
      %v741 = vadd.s32 %v583, 16
      %v742 = vadd.s32 %v590, 16
      %v743 = vadd.s32 %v597, 16
      %v744 = vadd.s32 %v604, 16
      %v745 = vadd.s32 %v611, 16
      %v746 = vadd.s32 %v618, 16
      %v747 = vsel %vm683, %v715, %v401
      %v748 = vsel %vm684, %v716, %v408
      %v749 = vsel %vm685, %v717, %v415
      %v750 = vsel %vm686, %v718, %v422
      %v751 = vsel %vm687, %v719, %v429
      %v752 = vsel %vm688, %v720, %v436
      %v753 = vsel %vm689, %v721, %v443
      %v754 = vsel %vm690, %v722, %v450
      %v755 = vsel %vm691, %v723, %v457
      %v756 = vsel %vm692, %v724, %v464
      %v757 = vsel %vm693, %v725, %v471
      %v758 = vsel %vm694, %v726, %v478
      %v759 = vsel %vm695, %v727, %v485
      %v760 = vsel %vm696, %v728, %v492
      %v761 = vsel %vm697, %v729, %v499
      %v762 = vsel %vm698, %v730, %v506
      %v763 = vsel %vm699, %v731, %v513
      %v764 = vsel %vm700, %v732, %v520
      %v765 = vsel %vm701, %v733, %v527
      %v766 = vsel %vm702, %v734, %v534
      %v767 = vsel %vm703, %v735, %v541
      %v768 = vsel %vm704, %v736, %v548
      %v769 = vsel %vm705, %v737, %v555
      %v770 = vsel %vm706, %v738, %v562
      %v771 = vsel %vm707, %v739, %v569
      %v772 = vsel %vm708, %v740, %v576
      %v773 = vsel %vm709, %v741, %v583
      %v774 = vsel %vm710, %v742, %v590
      %v775 = vsel %vm711, %v743, %v597
      %v776 = vsel %vm712, %v744, %v604
      %v777 = vsel %vm713, %v745, %v611
      %v778 = vsel %vm714, %v746, %v618
      %vm779 = vcmp.ge.s32.totalorder %v747, 1
      %vm780 = vcmp.ge.s32.totalorder %v748, 1
      %vm781 = vcmp.ge.s32.totalorder %v749, 1
      %vm782 = vcmp.ge.s32.totalorder %v750, 1
      %vm783 = vcmp.ge.s32.totalorder %v751, 1
      %vm784 = vcmp.ge.s32.totalorder %v752, 1
      %vm785 = vcmp.ge.s32.totalorder %v753, 1
      %vm786 = vcmp.ge.s32.totalorder %v754, 1
      %vm787 = vcmp.ge.s32.totalorder %v755, 1
      %vm788 = vcmp.ge.s32.totalorder %v756, 1
      %vm789 = vcmp.ge.s32.totalorder %v757, 1
      %vm790 = vcmp.ge.s32.totalorder %v758, 1
      %vm791 = vcmp.ge.s32.totalorder %v759, 1
      %vm792 = vcmp.ge.s32.totalorder %v760, 1
      %vm793 = vcmp.ge.s32.totalorder %v761, 1
      %vm794 = vcmp.ge.s32.totalorder %v762, 1
      %vm795 = vcmp.ge.s32.totalorder %v763, 1
      %vm796 = vcmp.ge.s32.totalorder %v764, 1
      %vm797 = vcmp.ge.s32.totalorder %v765, 1
      %vm798 = vcmp.ge.s32.totalorder %v766, 1
      %vm799 = vcmp.ge.s32.totalorder %v767, 1
      %vm800 = vcmp.ge.s32.totalorder %v768, 1
      %vm801 = vcmp.ge.s32.totalorder %v769, 1
      %vm802 = vcmp.ge.s32.totalorder %v770, 1
      %vm803 = vcmp.ge.s32.totalorder %v771, 1
      %vm804 = vcmp.ge.s32.totalorder %v772, 1
      %vm805 = vcmp.ge.s32.totalorder %v773, 1
      %vm806 = vcmp.ge.s32.totalorder %v774, 1
      %vm807 = vcmp.ge.s32.totalorder %v775, 1
      %vm808 = vcmp.ge.s32.totalorder %v776, 1
      %vm809 = vcmp.ge.s32.totalorder %v777, 1
      %vm810 = vcmp.ge.s32.totalorder %v778, 1
      %v811 = vsel %vm779, 1, 0
      %v812 = vsel %vm780, 1, 0
      %v813 = vsel %vm781, 1, 0
      %v814 = vsel %vm782, 1, 0
      %v815 = vsel %vm783, 1, 0
      %v816 = vsel %vm784, 1, 0
      %v817 = vsel %vm785, 1, 0
      %v818 = vsel %vm786, 1, 0
      %v819 = vsel %vm787, 1, 0
      %v820 = vsel %vm788, 1, 0
      %v821 = vsel %vm789, 1, 0
      %v822 = vsel %vm790, 1, 0
      %v823 = vsel %vm791, 1, 0
      %v824 = vsel %vm792, 1, 0
      %v825 = vsel %vm793, 1, 0
      %v826 = vsel %vm794, 1, 0
      %v827 = vsel %vm795, 1, 0
      %v828 = vsel %vm796, 1, 0
      %v829 = vsel %vm797, 1, 0
      %v830 = vsel %vm798, 1, 0
      %v831 = vsel %vm799, 1, 0
      %v832 = vsel %vm800, 1, 0
      %v833 = vsel %vm801, 1, 0
      %v834 = vsel %vm802, 1, 0
      %v835 = vsel %vm803, 1, 0
      %v836 = vsel %vm804, 1, 0
      %v837 = vsel %vm805, 1, 0
      %v838 = vsel %vm806, 1, 0
      %v839 = vsel %vm807, 1, 0
      %v840 = vsel %vm808, 1, 0
      %v841 = vsel %vm809, 1, 0
      %v842 = vsel %vm810, 1, 0
      %v843 = vcvt.s32.f32 %v811
      %v844 = vcvt.s32.f32 %v812
      %v845 = vcvt.s32.f32 %v813
      %v846 = vcvt.s32.f32 %v814
      %v847 = vcvt.s32.f32 %v815
      %v848 = vcvt.s32.f32 %v816
      %v849 = vcvt.s32.f32 %v817
      %v850 = vcvt.s32.f32 %v818
      %v851 = vcvt.s32.f32 %v819
      %v852 = vcvt.s32.f32 %v820
      %v853 = vcvt.s32.f32 %v821
      %v854 = vcvt.s32.f32 %v822
      %v855 = vcvt.s32.f32 %v823
      %v856 = vcvt.s32.f32 %v824
      %v857 = vcvt.s32.f32 %v825
      %v858 = vcvt.s32.f32 %v826
      %v859 = vcvt.s32.f32 %v827
      %v860 = vcvt.s32.f32 %v828
      %v861 = vcvt.s32.f32 %v829
      %v862 = vcvt.s32.f32 %v830
      %v863 = vcvt.s32.f32 %v831
      %v864 = vcvt.s32.f32 %v832
      %v865 = vcvt.s32.f32 %v833
      %v866 = vcvt.s32.f32 %v834
      %v867 = vcvt.s32.f32 %v835
      %v868 = vcvt.s32.f32 %v836
      %v869 = vcvt.s32.f32 %v837
      %v870 = vcvt.s32.f32 %v838
      %v871 = vcvt.s32.f32 %v839
      %v872 = vcvt.s32.f32 %v840
      %v873 = vcvt.s32.f32 %v841
      %v874 = vcvt.s32.f32 %v842
      %v875 = vpack.c.bf16 %v844, %v843
      %v876 = vpack.c.bf16 %v846, %v845
      %v877 = vpack.c.bf16 %v848, %v847
      %v878 = vpack.c.bf16 %v850, %v849
      %v879 = vpack.c.bf16 %v852, %v851
      %v880 = vpack.c.bf16 %v854, %v853
      %v881 = vpack.c.bf16 %v856, %v855
      %v882 = vpack.c.bf16 %v858, %v857
      %v883 = vpack.c.bf16 %v860, %v859
      %v884 = vpack.c.bf16 %v862, %v861
      %v885 = vpack.c.bf16 %v864, %v863
      %v886 = vpack.c.bf16 %v866, %v865
      %v887 = vpack.c.bf16 %v868, %v867
      %v888 = vpack.c.bf16 %v870, %v869
      %v889 = vpack.c.bf16 %v872, %v871
      %v890 = vpack.c.bf16 %v874, %v873
      %vm891 = vcmp.le.s32.totalorder %v747, 14
      %vm892 = vcmp.le.s32.totalorder %v748, 14
      %vm893 = vcmp.le.s32.totalorder %v749, 14
      %vm894 = vcmp.le.s32.totalorder %v750, 14
      %vm895 = vcmp.le.s32.totalorder %v751, 14
      %vm896 = vcmp.le.s32.totalorder %v752, 14
      %vm897 = vcmp.le.s32.totalorder %v753, 14
      %vm898 = vcmp.le.s32.totalorder %v754, 14
      %vm899 = vcmp.le.s32.totalorder %v755, 14
      %vm900 = vcmp.le.s32.totalorder %v756, 14
      %vm901 = vcmp.le.s32.totalorder %v757, 14
      %vm902 = vcmp.le.s32.totalorder %v758, 14
      %vm903 = vcmp.le.s32.totalorder %v759, 14
      %vm904 = vcmp.le.s32.totalorder %v760, 14
      %vm905 = vcmp.le.s32.totalorder %v761, 14
      %vm906 = vcmp.le.s32.totalorder %v762, 14
      %vm907 = vcmp.le.s32.totalorder %v763, 14
      %vm908 = vcmp.le.s32.totalorder %v764, 14
      %vm909 = vcmp.le.s32.totalorder %v765, 14
      %vm910 = vcmp.le.s32.totalorder %v766, 14
      %vm911 = vcmp.le.s32.totalorder %v767, 14
      %vm912 = vcmp.le.s32.totalorder %v768, 14
      %vm913 = vcmp.le.s32.totalorder %v769, 14
      %vm914 = vcmp.le.s32.totalorder %v770, 14
      %vm915 = vcmp.le.s32.totalorder %v771, 14
      %vm916 = vcmp.le.s32.totalorder %v772, 14
      %vm917 = vcmp.le.s32.totalorder %v773, 14
      %vm918 = vcmp.le.s32.totalorder %v774, 14
      %vm919 = vcmp.le.s32.totalorder %v775, 14
      %vm920 = vcmp.le.s32.totalorder %v776, 14
      %vm921 = vcmp.le.s32.totalorder %v777, 14
      %vm922 = vcmp.le.s32.totalorder %v778, 14
      %v923 = vsel %vm891, 1, 0
      %v924 = vsel %vm892, 1, 0
      %v925 = vsel %vm893, 1, 0
      %v926 = vsel %vm894, 1, 0
      %v927 = vsel %vm895, 1, 0
      %v928 = vsel %vm896, 1, 0
      %v929 = vsel %vm897, 1, 0
      %v930 = vsel %vm898, 1, 0
      %v931 = vsel %vm899, 1, 0
      %v932 = vsel %vm900, 1, 0
      %v933 = vsel %vm901, 1, 0
      %v934 = vsel %vm902, 1, 0
      %v935 = vsel %vm903, 1, 0
      %v936 = vsel %vm904, 1, 0
      %v937 = vsel %vm905, 1, 0
      %v938 = vsel %vm906, 1, 0
      %v939 = vsel %vm907, 1, 0
      %v940 = vsel %vm908, 1, 0
      %v941 = vsel %vm909, 1, 0
      %v942 = vsel %vm910, 1, 0
      %v943 = vsel %vm911, 1, 0
      %v944 = vsel %vm912, 1, 0
      %v945 = vsel %vm913, 1, 0
      %v946 = vsel %vm914, 1, 0
      %v947 = vsel %vm915, 1, 0
      %v948 = vsel %vm916, 1, 0
      %v949 = vsel %vm917, 1, 0
      %v950 = vsel %vm918, 1, 0
      %v951 = vsel %vm919, 1, 0
      %v952 = vsel %vm920, 1, 0
      %v953 = vsel %vm921, 1, 0
      %v954 = vsel %vm922, 1, 0
      %v955 = vcvt.s32.f32 %v923
      %v956 = vcvt.s32.f32 %v924
      %v957 = vcvt.s32.f32 %v925
      %v958 = vcvt.s32.f32 %v926
      %v959 = vcvt.s32.f32 %v927
      %v960 = vcvt.s32.f32 %v928
      %v961 = vcvt.s32.f32 %v929
      %v962 = vcvt.s32.f32 %v930
      %v963 = vcvt.s32.f32 %v931
      %v964 = vcvt.s32.f32 %v932
      %v965 = vcvt.s32.f32 %v933
      %v966 = vcvt.s32.f32 %v934
      %v967 = vcvt.s32.f32 %v935
      %v968 = vcvt.s32.f32 %v936
      %v969 = vcvt.s32.f32 %v937
      %v970 = vcvt.s32.f32 %v938
      %v971 = vcvt.s32.f32 %v939
      %v972 = vcvt.s32.f32 %v940
      %v973 = vcvt.s32.f32 %v941
      %v974 = vcvt.s32.f32 %v942
      %v975 = vcvt.s32.f32 %v943
      %v976 = vcvt.s32.f32 %v944
      %v977 = vcvt.s32.f32 %v945
      %v978 = vcvt.s32.f32 %v946
      %v979 = vcvt.s32.f32 %v947
      %v980 = vcvt.s32.f32 %v948
      %v981 = vcvt.s32.f32 %v949
      %v982 = vcvt.s32.f32 %v950
      %v983 = vcvt.s32.f32 %v951
      %v984 = vcvt.s32.f32 %v952
      %v985 = vcvt.s32.f32 %v953
      %v986 = vcvt.s32.f32 %v954
      %v987 = vpack.c.bf16 %v956, %v955
      %v988 = vpack.c.bf16 %v958, %v957
      %v989 = vpack.c.bf16 %v960, %v959
      %v990 = vpack.c.bf16 %v962, %v961
      %v991 = vpack.c.bf16 %v964, %v963
      %v992 = vpack.c.bf16 %v966, %v965
      %v993 = vpack.c.bf16 %v968, %v967
      %v994 = vpack.c.bf16 %v970, %v969
      %v995 = vpack.c.bf16 %v972, %v971
      %v996 = vpack.c.bf16 %v974, %v973
      %v997 = vpack.c.bf16 %v976, %v975
      %v998 = vpack.c.bf16 %v978, %v977
      %v999 = vpack.c.bf16 %v980, %v979
      %v1000 = vpack.c.bf16 %v982, %v981
      %v1001 = vpack.c.bf16 %v984, %v983
      %v1002 = vpack.c.bf16 %v986, %v985
      %vm1003 = vcmask 64512
      %1004 = vst.msk [vmem:[#allocation2] sm:$0xff] %vm1003, 0.0
      %1005 = vst.msk [vmem:[#allocation2 + $0x8] sm:$0xff] %vm1003, 0.0
      %vm1006 = vcmask 57344
      %1007 = vst.msk [vmem:[#allocation2 + $0x10] sm:$0x1] %vm1006, 0.0
      %1008 = vst.msk [vmem:[#allocation2 + $0x111] sm:$0xff] %vm1003, 0.0
      %1009 = vst.msk [vmem:[#allocation2 + $0x119] sm:$0xff] %vm1003, 0.0
      %1010 = vst.msk [vmem:[#allocation2 + $0x121] sm:$0x1] %vm1006, 0.0
      %v1011 = vld [vmem:[%s355] sm:$0xff]
      %v1012 = vld [vmem:[%s355 + $0x8] sm:$0xff]
      %v1013 = vld [vmem:[%s355 + $0x10] sm:$0xff]
      %v1014 = vld [vmem:[%s355 + $0x18] sm:$0xff]
      %v1015 = vld [vmem:[%s355 + $0x20] sm:$0xff]
      %v1016 = vld [vmem:[%s355 + $0x28] sm:$0xff]
      %v1017 = vld [vmem:[%s355 + $0x30] sm:$0xff]
      %v1018 = vld [vmem:[%s355 + $0x38] sm:$0xff]
      %v1019 = vld [vmem:[%s355 + $0x40] sm:$0xff]
      %v1020 = vld [vmem:[%s355 + $0x48] sm:$0xff]
      %v1021 = vld [vmem:[%s355 + $0x50] sm:$0xff]
      %v1022 = vld [vmem:[%s355 + $0x58] sm:$0xff]
      %v1023 = vld [vmem:[%s355 + $0x60] sm:$0xff]
      %v1024 = vld [vmem:[%s355 + $0x68] sm:$0xff]
      %v1025 = vld [vmem:[%s355 + $0x70] sm:$0xff]
      %v1026 = vld [vmem:[%s355 + $0x78] sm:$0xff]
      %v1027 = vld [vmem:[%s355 + $0x80] sm:$0xff]
      %v1028 = vld [vmem:[%s355 + $0x88] sm:$0xff]
      %v1029 = vld [vmem:[%s355 + $0x90] sm:$0xff]
      %v1030 = vld [vmem:[%s355 + $0x98] sm:$0xff]
      %v1031 = vld [vmem:[%s355 + $0xa0] sm:$0xff]
      %v1032 = vld [vmem:[%s355 + $0xa8] sm:$0xff]
      %v1033 = vld [vmem:[%s355 + $0xb0] sm:$0xff]
      %v1034 = vld [vmem:[%s355 + $0xb8] sm:$0xff]
      %v1035 = vld [vmem:[%s355 + $0xc0] sm:$0xff]
      %v1036 = vld [vmem:[%s355 + $0xc8] sm:$0xff]
      %v1037 = vld [vmem:[%s355 + $0xd0] sm:$0xff]
      %v1038 = vld [vmem:[%s355 + $0xd8] sm:$0xff]
      %v1039 = vld [vmem:[%s355 + $0xe0] sm:$0xff]
      %v1040 = vld [vmem:[%s355 + $0xe8] sm:$0xff]
      %v1041 = vld [vmem:[%s355 + $0xf0] sm:$0xff]
      %v1042 = vld [vmem:[%s355 + $0xf8] sm:$0xff]
      %v1043 = vpack.c.bf16 %v1012, %v1011
      %v1044 = vpack.c.bf16 %v1014, %v1013
      %v1045 = vpack.c.bf16 %v1016, %v1015
      %v1046 = vpack.c.bf16 %v1018, %v1017
      %v1047 = vpack.c.bf16 %v1020, %v1019
      %v1048 = vpack.c.bf16 %v1022, %v1021
      %v1049 = vpack.c.bf16 %v1024, %v1023
      %v1050 = vpack.c.bf16 %v1026, %v1025
      %v1051 = vpack.c.bf16 %v1028, %v1027
      %v1052 = vpack.c.bf16 %v1030, %v1029
      %v1053 = vpack.c.bf16 %v1032, %v1031
      %v1054 = vpack.c.bf16 %v1034, %v1033
      %v1055 = vpack.c.bf16 %v1036, %v1035
      %v1056 = vpack.c.bf16 %v1038, %v1037
      %v1057 = vpack.c.bf16 %v1040, %v1039
      %v1058 = vpack.c.bf16 %v1042, %v1041
      %v1059 = vld [vmem:[%s2] sm:$0x3]
      %v1060 = vld [vmem:[%s3] sm:$0x1]
      %v1062 = vlaneseq
      %v1063 = vshrl.u32 %v1062, 7
      %v1064 = vsub.s32 0, %v1063
      %v1065 = vrot.slane %v1060, %v1064
      %vm1067 = vcmask 23552
      %v1069 = vsel %vm1067, %v1043, 0
      %v1072 = vsel %vm1067, %v1044, 0
      %v1075 = vsel %vm1067, %v1045, 0
      %v1078 = vsel %vm1067, %v1046, 0
      %v1081 = vsel %vm1067, %v1047, 0
      %v1084 = vsel %vm1067, %v1048, 0
      %v1087 = vsel %vm1067, %v1049, 0
      %v1090 = vsel %vm1067, %v1050, 0
      %v1093 = vsel %vm1067, %v1051, 0
      %v1096 = vsel %vm1067, %v1052, 0
      %v1099 = vsel %vm1067, %v1053, 0
      %v1102 = vsel %vm1067, %v1054, 0
      %v1105 = vsel %vm1067, %v1055, 0
      %v1108 = vsel %vm1067, %v1056, 0
      %v1111 = vsel %vm1067, %v1057, 0
      %v1114 = vsel %vm1067, %v1058, 0
      %vm1116 = vcmask 1040384
      %vm1117 = vcmask 1041408
      %v1118 = vsel %vm1116, 4294967295, 65535
      %v1119 = vsel %vm1117, %v1118, 0
      %v1121 = vand.u32 %v1059, %v1119
      %1123 = vmatprep.subr.bf16.mxu0 0
      %1124 = vmatpush1.bf16.msra.mxu0 %v1121
      %1125 = vmatprep.subr.bf16.mxu0 0
      %1126 = vmatpush1.bf16.msra.mxu0 0
      %1127 = vmatprep.subr.bf16.mxu0 0
      %1128 = vmatpush1.bf16.msra.mxu0 0
      %1129 = vmatprep.subr.bf16.mxu0 0
      %1130 = vmatpush1.bf16.msra.mxu0 0
      %1131 = vmatprep.subr.bf16.mxu0 0
      %1132 = vmatpush1.bf16.msra.mxu0 0
      %1133 = vmatprep.subr.bf16.mxu0 0
      %1134 = vmatpush1.bf16.msra.mxu0 0
      %1135 = vmatprep.subr.bf16.mxu0 0
      %1136 = vmatpush1.bf16.msra.mxu0 0
      %1137 = vmatprep.subr.bf16.mxu0 0
      %1138 = vmatpush1.bf16.msra.mxu0 0
      %1139 = vmatprep.subr.bf16.mxu0 0
      %1140 = vmatpush1.bf16.msra.mxu0 0
      %1141 = vmatprep.subr.bf16.mxu0 0
      %1142 = vmatpush1.bf16.msra.mxu0 0
      %1143 = vmatprep.subr.bf16.mxu0 0
      %1144 = vmatpush1.bf16.msra.mxu0 0
      %1145 = vmatprep.subr.bf16.mxu0 0
      %1146 = vmatpush1.bf16.msra.mxu0 0
      %1147 = vmatprep.subr.bf16.mxu0 0
      %1148 = vmatpush1.bf16.msra.mxu0 0
      %1149 = vmatprep.subr.bf16.mxu0 0
      %1150 = vmatpush1.bf16.msra.mxu0 0
      %1151 = vmatprep.subr.bf16.mxu0 0
      %1152 = vmatpush1.bf16.msra.mxu0 0
      %1153 = vmatprep.subr.bf16.mxu0 0
      %1154 = vmatpush1.bf16.msra.mxu0 0
      %1155 = vmatprep.mubr.bf16.mxu0 0
      %1156 = vmatmul.mubr.bf16.gmra.mrb[0].mxu0 %v1069
      %v1157 = vpop.f32.mrb[0].mxu0
      %v1158 = vadd.f32 %v1065, %v1157
      %v1159 = vpop.f32.mrb[0].mxu0
      %v1160 = vpop.f32.mrb[0].mxu0
      %v1161 = vadd.f32 %v1065, %v1160
      %v1162 = vpop.f32.mrb[0].mxu0
      %1163 = vmatprep.mubr.bf16.mxu0 0
      %1164 = vmatmul.mubr.bf16.gmra.mrb[0].mxu0 %v1072
      %v1165 = vpop.f32.mrb[0].mxu0
      %v1166 = vadd.f32 %v1065, %v1165
      %v1167 = vpop.f32.mrb[0].mxu0
      %v1168 = vpop.f32.mrb[0].mxu0
      %v1169 = vadd.f32 %v1065, %v1168
      %v1170 = vpop.f32.mrb[0].mxu0
      %1171 = vmatprep.mubr.bf16.mxu0 0
      %1172 = vmatmul.mubr.bf16.gmra.mrb[0].mxu0 %v1075
      %v1173 = vpop.f32.mrb[0].mxu0
      %v1174 = vadd.f32 %v1065, %v1173
      %v1175 = vpop.f32.mrb[0].mxu0
      %v1176 = vpop.f32.mrb[0].mxu0
      %v1177 = vadd.f32 %v1065, %v1176
      %v1178 = vpop.f32.mrb[0].mxu0
      %1179 = vmatprep.mubr.bf16.mxu0 0
      %1180 = vmatmul.mubr.bf16.gmra.mrb[0].mxu0 %v1078
      %v1181 = vpop.f32.mrb[0].mxu0
      %v1182 = vadd.f32 %v1065, %v1181
      %v1183 = vpop.f32.mrb[0].mxu0
      %v1184 = vpop.f32.mrb[0].mxu0
      %v1185 = vadd.f32 %v1065, %v1184
      %v1186 = vpop.f32.mrb[0].mxu0
      %1187 = vmatprep.mubr.bf16.mxu0 0
      %1188 = vmatmul.mubr.bf16.gmra.mrb[0].mxu0 %v1081
      %v1189 = vpop.f32.mrb[0].mxu0
      %v1190 = vadd.f32 %v1065, %v1189
      %v1191 = vpop.f32.mrb[0].mxu0
      %v1192 = vpop.f32.mrb[0].mxu0
      %v1193 = vadd.f32 %v1065, %v1192
      %v1194 = vpop.f32.mrb[0].mxu0
      %1195 = vmatprep.mubr.bf16.mxu0 0
      %1196 = vmatmul.mubr.bf16.gmra.mrb[0].mxu0 %v1084
      %v1197 = vpop.f32.mrb[0].mxu0
      %v1198 = vadd.f32 %v1065, %v1197
      %v1199 = vpop.f32.mrb[0].mxu0
      %v1200 = vpop.f32.mrb[0].mxu0
      %v1201 = vadd.f32 %v1065, %v1200
      %v1202 = vpop.f32.mrb[0].mxu0
      %1203 = vmatprep.mubr.bf16.mxu0 0
      %1204 = vmatmul.mubr.bf16.gmra.mrb[0].mxu0 %v1087
      %v1205 = vpop.f32.mrb[0].mxu0
      %v1206 = vadd.f32 %v1065, %v1205
      %v1207 = vpop.f32.mrb[0].mxu0
      %v1208 = vpop.f32.mrb[0].mxu0
      %v1209 = vadd.f32 %v1065, %v1208
      %v1210 = vpop.f32.mrb[0].mxu0
      %1211 = vmatprep.mubr.bf16.mxu0 0
      %1212 = vmatmul.mubr.bf16.gmra.mrb[0].mxu0 %v1090
      %v1213 = vpop.f32.mrb[0].mxu0
      %v1214 = vadd.f32 %v1065, %v1213
      %v1215 = vpop.f32.mrb[0].mxu0
      %v1216 = vpop.f32.mrb[0].mxu0
      %v1217 = vadd.f32 %v1065, %v1216
      %v1218 = vpop.f32.mrb[0].mxu0
      %1219 = vmatprep.mubr.bf16.mxu0 0
      %1220 = vmatmul.mubr.bf16.gmra.mrb[0].mxu0 %v1093
      %v1221 = vpop.f32.mrb[0].mxu0
      %v1222 = vadd.f32 %v1065, %v1221
      %v1223 = vpop.f32.mrb[0].mxu0
      %v1224 = vpop.f32.mrb[0].mxu0
      %v1225 = vadd.f32 %v1065, %v1224
      %v1226 = vpop.f32.mrb[0].mxu0
      %1227 = vmatprep.mubr.bf16.mxu0 0
      %1228 = vmatmul.mubr.bf16.gmra.mrb[0].mxu0 %v1096
      %v1229 = vpop.f32.mrb[0].mxu0
      %v1230 = vadd.f32 %v1065, %v1229
      %v1231 = vpop.f32.mrb[0].mxu0
      %v1232 = vpop.f32.mrb[0].mxu0
      %v1233 = vadd.f32 %v1065, %v1232
      %v1234 = vpop.f32.mrb[0].mxu0
      %1235 = vmatprep.mubr.bf16.mxu0 0
      %1236 = vmatmul.mubr.bf16.gmra.mrb[0].mxu0 %v1099
      %v1237 = vpop.f32.mrb[0].mxu0
      %v1238 = vadd.f32 %v1065, %v1237
      %v1239 = vpop.f32.mrb[0].mxu0
      %v1240 = vpop.f32.mrb[0].mxu0
      %v1241 = vadd.f32 %v1065, %v1240
      %v1242 = vpop.f32.mrb[0].mxu0
      %1243 = vmatprep.mubr.bf16.mxu0 0
      %1244 = vmatmul.mubr.bf16.gmra.mrb[0].mxu0 %v1102
      %v1245 = vpop.f32.mrb[0].mxu0
      %v1246 = vadd.f32 %v1065, %v1245
      %v1247 = vpop.f32.mrb[0].mxu0
      %v1248 = vpop.f32.mrb[0].mxu0
      %v1249 = vadd.f32 %v1065, %v1248
      %v1250 = vpop.f32.mrb[0].mxu0
      %1251 = vmatprep.mubr.bf16.mxu0 0
      %1252 = vmatmul.mubr.bf16.gmra.mrb[0].mxu0 %v1105
      %v1253 = vpop.f32.mrb[0].mxu0
      %v1254 = vadd.f32 %v1065, %v1253
      %v1255 = vpop.f32.mrb[0].mxu0
      %v1256 = vpop.f32.mrb[0].mxu0
      %v1257 = vadd.f32 %v1065, %v1256
      %v1258 = vpop.f32.mrb[0].mxu0
      %1259 = vmatprep.mubr.bf16.mxu0 0
      %1260 = vmatmul.mubr.bf16.gmra.mrb[0].mxu0 %v1108
      %v1261 = vpop.f32.mrb[0].mxu0
      %v1262 = vadd.f32 %v1065, %v1261
      %v1263 = vpop.f32.mrb[0].mxu0
      %v1264 = vpop.f32.mrb[0].mxu0
      %v1265 = vadd.f32 %v1065, %v1264
      %v1266 = vpop.f32.mrb[0].mxu0
      %1267 = vmatprep.mubr.bf16.mxu0 0
      %1268 = vmatmul.mubr.bf16.gmra.mrb[0].mxu0 %v1111
      %v1269 = vpop.f32.mrb[0].mxu0
      %v1270 = vadd.f32 %v1065, %v1269
      %v1271 = vpop.f32.mrb[0].mxu0
      %v1272 = vpop.f32.mrb[0].mxu0
      %v1273 = vadd.f32 %v1065, %v1272
      %v1274 = vpop.f32.mrb[0].mxu0
      %1275 = vmatprep.mubr.bf16.mxu0 0
      %1276 = vmatmul.mubr.bf16.gmra.mrb[0].mxu0 %v1114
      %v1277 = vpop.f32.mrb[0].mxu0
      %v1278 = vadd.f32 %v1065, %v1277
      %v1279 = vpop.f32.mrb[0].mxu0
      %v1280 = vpop.f32.mrb[0].mxu0
      %v1281 = vadd.f32 %v1065, %v1280
      %v1282 = vpop.f32.mrb[0].mxu0
      %1283 = vdwg.mxu0
      %vm1284 = vcmp.gt.f32.partialorder %v1158, 0.0
      %vm1285 = vcmp.gt.f32.partialorder %v1161, 0.0
      %vm1286 = vcmp.gt.f32.partialorder %v1166, 0.0
      %vm1287 = vcmp.gt.f32.partialorder %v1169, 0.0
      %vm1288 = vcmp.gt.f32.partialorder %v1174, 0.0
      %vm1289 = vcmp.gt.f32.partialorder %v1177, 0.0
      %vm1290 = vcmp.gt.f32.partialorder %v1182, 0.0
      %vm1291 = vcmp.gt.f32.partialorder %v1185, 0.0
      %vm1292 = vcmp.gt.f32.partialorder %v1190, 0.0
      %vm1293 = vcmp.gt.f32.partialorder %v1193, 0.0
      %vm1294 = vcmp.gt.f32.partialorder %v1198, 0.0
      %vm1295 = vcmp.gt.f32.partialorder %v1201, 0.0
      %vm1296 = vcmp.gt.f32.partialorder %v1206, 0.0
      %vm1297 = vcmp.gt.f32.partialorder %v1209, 0.0
      %vm1298 = vcmp.gt.f32.partialorder %v1214, 0.0
      %vm1299 = vcmp.gt.f32.partialorder %v1217, 0.0
      %vm1300 = vcmp.gt.f32.partialorder %v1222, 0.0
      %vm1301 = vcmp.gt.f32.partialorder %v1225, 0.0
      %vm1302 = vcmp.gt.f32.partialorder %v1230, 0.0
      %vm1303 = vcmp.gt.f32.partialorder %v1233, 0.0
      %vm1304 = vcmp.gt.f32.partialorder %v1238, 0.0
      %vm1305 = vcmp.gt.f32.partialorder %v1241, 0.0
      %vm1306 = vcmp.gt.f32.partialorder %v1246, 0.0
      %vm1307 = vcmp.gt.f32.partialorder %v1249, 0.0
      %vm1308 = vcmp.gt.f32.partialorder %v1254, 0.0
      %vm1309 = vcmp.gt.f32.partialorder %v1257, 0.0
      %vm1310 = vcmp.gt.f32.partialorder %v1262, 0.0
      %vm1311 = vcmp.gt.f32.partialorder %v1265, 0.0
      %vm1312 = vcmp.gt.f32.partialorder %v1270, 0.0
      %vm1313 = vcmp.gt.f32.partialorder %v1273, 0.0
      %vm1314 = vcmp.gt.f32.partialorder %v1278, 0.0
      %vm1315 = vcmp.gt.f32.partialorder %v1281, 0.0
      %v1316 = vmul.f32 %v1158, 0.2
      %v1317 = vmul.f32 %v1161, 0.2
      %v1318 = vmul.f32 %v1166, 0.2
      %v1319 = vmul.f32 %v1169, 0.2
      %v1320 = vmul.f32 %v1174, 0.2
      %v1321 = vmul.f32 %v1177, 0.2
      %v1322 = vmul.f32 %v1182, 0.2
      %v1323 = vmul.f32 %v1185, 0.2
      %v1324 = vmul.f32 %v1190, 0.2
      %v1325 = vmul.f32 %v1193, 0.2
      %v1326 = vmul.f32 %v1198, 0.2
      %v1327 = vmul.f32 %v1201, 0.2
      %v1328 = vmul.f32 %v1206, 0.2
      %v1329 = vmul.f32 %v1209, 0.2
      %v1330 = vmul.f32 %v1214, 0.2
      %v1331 = vmul.f32 %v1217, 0.2
      %v1332 = vmul.f32 %v1222, 0.2
      %v1333 = vmul.f32 %v1225, 0.2
      %v1334 = vmul.f32 %v1230, 0.2
      %v1335 = vmul.f32 %v1233, 0.2
      %v1336 = vmul.f32 %v1238, 0.2
      %v1337 = vmul.f32 %v1241, 0.2
      %v1338 = vmul.f32 %v1246, 0.2
      %v1339 = vmul.f32 %v1249, 0.2
      %v1340 = vmul.f32 %v1254, 0.2
      %v1341 = vmul.f32 %v1257, 0.2
      %v1342 = vmul.f32 %v1262, 0.2
      %v1343 = vmul.f32 %v1265, 0.2
      %v1344 = vmul.f32 %v1270, 0.2
      %v1345 = vmul.f32 %v1273, 0.2
      %v1346 = vmul.f32 %v1278, 0.2
      %v1347 = vmul.f32 %v1281, 0.2
      %v1348 = vsel %vm1284, %v1158, %v1316
      %v1349 = vsel %vm1285, %v1161, %v1317
      %v1350 = vsel %vm1286, %v1166, %v1318
      %v1351 = vsel %vm1287, %v1169, %v1319
      %v1352 = vsel %vm1288, %v1174, %v1320
      %v1353 = vsel %vm1289, %v1177, %v1321
      %v1354 = vsel %vm1290, %v1182, %v1322
      %v1355 = vsel %vm1291, %v1185, %v1323
      %v1356 = vsel %vm1292, %v1190, %v1324
      %v1357 = vsel %vm1293, %v1193, %v1325
      %v1358 = vsel %vm1294, %v1198, %v1326
      %v1359 = vsel %vm1295, %v1201, %v1327
      %v1360 = vsel %vm1296, %v1206, %v1328
      %v1361 = vsel %vm1297, %v1209, %v1329
      %v1362 = vsel %vm1298, %v1214, %v1330
      %v1363 = vsel %vm1299, %v1217, %v1331
      %v1364 = vsel %vm1300, %v1222, %v1332
      %v1365 = vsel %vm1301, %v1225, %v1333
      %v1366 = vsel %vm1302, %v1230, %v1334
      %v1367 = vsel %vm1303, %v1233, %v1335
      %v1368 = vsel %vm1304, %v1238, %v1336
      %v1369 = vsel %vm1305, %v1241, %v1337
      %v1370 = vsel %vm1306, %v1246, %v1338
      %v1371 = vsel %vm1307, %v1249, %v1339
      %v1372 = vsel %vm1308, %v1254, %v1340
      %v1373 = vsel %vm1309, %v1257, %v1341
      %v1374 = vsel %vm1310, %v1262, %v1342
      %v1375 = vsel %vm1311, %v1265, %v1343
      %v1376 = vsel %vm1312, %v1270, %v1344
      %v1377 = vsel %vm1313, %v1273, %v1345
      %v1378 = vsel %vm1314, %v1278, %v1346
      %v1379 = vsel %vm1315, %v1281, %v1347
      %1380 = vst.msk [vmem:[#allocation2 + $0x11] sm:$0xff] %vm1003, %v1348
      %1381 = vst.msk [vmem:[#allocation2 + $0x19] sm:$0xff] %vm1003, %v1349
      %1382 = vst.msk [vmem:[#allocation2 + $0x21] sm:$0xff] %vm1003, %v1350
      %1383 = vst.msk [vmem:[#allocation2 + $0x29] sm:$0xff] %vm1003, %v1351
      %1384 = vst.msk [vmem:[#allocation2 + $0x31] sm:$0xff] %vm1003, %v1352
      %1385 = vst.msk [vmem:[#allocation2 + $0x39] sm:$0xff] %vm1003, %v1353
      %1386 = vst.msk [vmem:[#allocation2 + $0x41] sm:$0xff] %vm1003, %v1354
      %1387 = vst.msk [vmem:[#allocation2 + $0x49] sm:$0xff] %vm1003, %v1355
      %1388 = vst.msk [vmem:[#allocation2 + $0x51] sm:$0xff] %vm1003, %v1356
      %1389 = vst.msk [vmem:[#allocation2 + $0x59] sm:$0xff] %vm1003, %v1357
      %1390 = vst.msk [vmem:[#allocation2 + $0x61] sm:$0xff] %vm1003, %v1358
      %1391 = vst.msk [vmem:[#allocation2 + $0x69] sm:$0xff] %vm1003, %v1359
      %1392 = vst.msk [vmem:[#allocation2 + $0x71] sm:$0xff] %vm1003, %v1360
      %1393 = vst.msk [vmem:[#allocation2 + $0x79] sm:$0xff] %vm1003, %v1361
      %1394 = vst.msk [vmem:[#allocation2 + $0x81] sm:$0xff] %vm1003, %v1362
      %1395 = vst.msk [vmem:[#allocation2 + $0x89] sm:$0xff] %vm1003, %v1363
      %1396 = vst.msk [vmem:[#allocation2 + $0x91] sm:$0xff] %vm1003, %v1364
      %1397 = vst.msk [vmem:[#allocation2 + $0x99] sm:$0xff] %vm1003, %v1365
      %1398 = vst.msk [vmem:[#allocation2 + $0xa1] sm:$0xff] %vm1003, %v1366
      %1399 = vst.msk [vmem:[#allocation2 + $0xa9] sm:$0xff] %vm1003, %v1367
      %1400 = vst.msk [vmem:[#allocation2 + $0xb1] sm:$0xff] %vm1003, %v1368
      %1401 = vst.msk [vmem:[#allocation2 + $0xb9] sm:$0xff] %vm1003, %v1369
      %1402 = vst.msk [vmem:[#allocation2 + $0xc1] sm:$0xff] %vm1003, %v1370
      %1403 = vst.msk [vmem:[#allocation2 + $0xc9] sm:$0xff] %vm1003, %v1371
      %1404 = vst.msk [vmem:[#allocation2 + $0xd1] sm:$0xff] %vm1003, %v1372
      %1405 = vst.msk [vmem:[#allocation2 + $0xd9] sm:$0xff] %vm1003, %v1373
      %1406 = vst.msk [vmem:[#allocation2 + $0xe1] sm:$0xff] %vm1003, %v1374
      %1407 = vst.msk [vmem:[#allocation2 + $0xe9] sm:$0xff] %vm1003, %v1375
      %1408 = vst.msk [vmem:[#allocation2 + $0xf1] sm:$0xff] %vm1003, %v1376
      %1409 = vst.msk [vmem:[#allocation2 + $0xf9] sm:$0xff] %vm1003, %v1377
      %1410 = vst.msk [vmem:[#allocation2 + $0x101] sm:$0xff] %vm1003, %v1378
      %1411 = vst.msk [vmem:[#allocation2 + $0x109] sm:$0xff] %vm1003, %v1379
      %v1412 = vld [vmem:[#allocation2] sm:$0xff]
      %v1413 = vld [vmem:[#allocation2 + $0x8] sm:$0xff]
      %v1414 = vld [vmem:[#allocation2 + $0x10] sm:$0xff]
      %v1415 = vld [vmem:[#allocation2 + $0x18] sm:$0xff]
      %v1416 = vld [vmem:[#allocation2 + $0x20] sm:$0xff]
      %v1417 = vld [vmem:[#allocation2 + $0x28] sm:$0xff]
      %v1418 = vld [vmem:[#allocation2 + $0x30] sm:$0xff]
      %v1419 = vld [vmem:[#allocation2 + $0x38] sm:$0xff]
      %v1420 = vld [vmem:[#allocation2 + $0x40] sm:$0xff]
      %v1421 = vld [vmem:[#allocation2 + $0x48] sm:$0xff]
      %v1422 = vld [vmem:[#allocation2 + $0x50] sm:$0xff]
      %v1423 = vld [vmem:[#allocation2 + $0x58] sm:$0xff]
      %v1424 = vld [vmem:[#allocation2 + $0x60] sm:$0xff]
      %v1425 = vld [vmem:[#allocation2 + $0x68] sm:$0xff]
      %v1426 = vld [vmem:[#allocation2 + $0x70] sm:$0xff]
      %v1427 = vld [vmem:[#allocation2 + $0x78] sm:$0xff]
      %v1428 = vld [vmem:[#allocation2 + $0x80] sm:$0xff]
      %v1429 = vld [vmem:[#allocation2 + $0x88] sm:$0xff]
      %v1430 = vld [vmem:[#allocation2 + $0x90] sm:$0xff]
      %v1431 = vld [vmem:[#allocation2 + $0x98] sm:$0xff]
      %v1432 = vld [vmem:[#allocation2 + $0xa0] sm:$0xff]
      %v1433 = vld [vmem:[#allocation2 + $0xa8] sm:$0xff]
      %v1434 = vld [vmem:[#allocation2 + $0xb0] sm:$0xff]
      %v1435 = vld [vmem:[#allocation2 + $0xb8] sm:$0xff]
      %v1436 = vld [vmem:[#allocation2 + $0xc0] sm:$0xff]
      %v1437 = vld [vmem:[#allocation2 + $0xc8] sm:$0xff]
      %v1438 = vld [vmem:[#allocation2 + $0xd0] sm:$0xff]
      %v1439 = vld [vmem:[#allocation2 + $0xd8] sm:$0xff]
      %v1440 = vld [vmem:[#allocation2 + $0xe0] sm:$0xff]
      %v1441 = vld [vmem:[#allocation2 + $0xe8] sm:$0xff]
      %v1442 = vld [vmem:[#allocation2 + $0xf0] sm:$0xff]
      %v1443 = vld [vmem:[#allocation2 + $0xf8] sm:$0xff]
      %v1444 = vpack.c.bf16 %v1413, %v1412
      %v1445 = vpack.c.bf16 %v1415, %v1414
      %v1446 = vpack.c.bf16 %v1417, %v1416
      %v1447 = vpack.c.bf16 %v1419, %v1418
      %v1448 = vpack.c.bf16 %v1421, %v1420
      %v1449 = vpack.c.bf16 %v1423, %v1422
      %v1450 = vpack.c.bf16 %v1425, %v1424
      %v1451 = vpack.c.bf16 %v1427, %v1426
      %v1452 = vpack.c.bf16 %v1429, %v1428
      %v1453 = vpack.c.bf16 %v1431, %v1430
      %v1454 = vpack.c.bf16 %v1433, %v1432
      %v1455 = vpack.c.bf16 %v1435, %v1434
      %v1456 = vpack.c.bf16 %v1437, %v1436
      %v1457 = vpack.c.bf16 %v1439, %v1438
      %v1458 = vpack.c.bf16 %v1441, %v1440
      %v1459 = vpack.c.bf16 %v1443, %v1442
      %v1460 = vmul.bf16 %v1444, %v875
      %v1461 = vmul.bf16 %v1445, %v876
      %v1462 = vmul.bf16 %v1446, %v877
      %v1463 = vmul.bf16 %v1447, %v878
      %v1464 = vmul.bf16 %v1448, %v879
      %v1465 = vmul.bf16 %v1449, %v880
      %v1466 = vmul.bf16 %v1450, %v881
      %v1467 = vmul.bf16 %v1451, %v882
      %v1468 = vmul.bf16 %v1452, %v883
      %v1469 = vmul.bf16 %v1453, %v884
      %v1470 = vmul.bf16 %v1454, %v885
      %v1471 = vmul.bf16 %v1455, %v886
      %v1472 = vmul.bf16 %v1456, %v887
      %v1473 = vmul.bf16 %v1457, %v888
      %v1474 = vmul.bf16 %v1458, %v889
      %v1475 = vmul.bf16 %v1459, %v890
      %v1476 = vld [vmem:[#allocation2 + $0x1] sm:$0xff]
      %v1477 = vld [vmem:[#allocation2 + $0x9] sm:$0xff]
      %v1478 = vld [vmem:[#allocation2 + $0x11] sm:$0xff]
      %v1479 = vld [vmem:[#allocation2 + $0x19] sm:$0xff]
      %v1480 = vld [vmem:[#allocation2 + $0x21] sm:$0xff]
      %v1481 = vld [vmem:[#allocation2 + $0x29] sm:$0xff]
      %v1482 = vld [vmem:[#allocation2 + $0x31] sm:$0xff]
      %v1483 = vld [vmem:[#allocation2 + $0x39] sm:$0xff]
      %v1484 = vld [vmem:[#allocation2 + $0x41] sm:$0xff]
      %v1485 = vld [vmem:[#allocation2 + $0x49] sm:$0xff]
      %v1486 = vld [vmem:[#allocation2 + $0x51] sm:$0xff]
      %v1487 = vld [vmem:[#allocation2 + $0x59] sm:$0xff]
      %v1488 = vld [vmem:[#allocation2 + $0x61] sm:$0xff]
      %v1489 = vld [vmem:[#allocation2 + $0x69] sm:$0xff]
      %v1490 = vld [vmem:[#allocation2 + $0x71] sm:$0xff]
      %v1491 = vld [vmem:[#allocation2 + $0x79] sm:$0xff]
      %v1492 = vld [vmem:[#allocation2 + $0x81] sm:$0xff]
      %v1493 = vld [vmem:[#allocation2 + $0x89] sm:$0xff]
      %v1494 = vld [vmem:[#allocation2 + $0x91] sm:$0xff]
      %v1495 = vld [vmem:[#allocation2 + $0x99] sm:$0xff]
      %v1496 = vld [vmem:[#allocation2 + $0xa1] sm:$0xff]
      %v1497 = vld [vmem:[#allocation2 + $0xa9] sm:$0xff]
      %v1498 = vld [vmem:[#allocation2 + $0xb1] sm:$0xff]
      %v1499 = vld [vmem:[#allocation2 + $0xb9] sm:$0xff]
      %v1500 = vld [vmem:[#allocation2 + $0xc1] sm:$0xff]
      %v1501 = vld [vmem:[#allocation2 + $0xc9] sm:$0xff]
      %v1502 = vld [vmem:[#allocation2 + $0xd1] sm:$0xff]
      %v1503 = vld [vmem:[#allocation2 + $0xd9] sm:$0xff]
      %v1504 = vld [vmem:[#allocation2 + $0xe1] sm:$0xff]
      %v1505 = vld [vmem:[#allocation2 + $0xe9] sm:$0xff]
      %v1506 = vld [vmem:[#allocation2 + $0xf1] sm:$0xff]
      %v1507 = vld [vmem:[#allocation2 + $0xf9] sm:$0xff]
      %v1508 = vpack.c.bf16 %v1477, %v1476
      %v1509 = vpack.c.bf16 %v1479, %v1478
      %v1510 = vpack.c.bf16 %v1481, %v1480
      %v1511 = vpack.c.bf16 %v1483, %v1482
      %v1512 = vpack.c.bf16 %v1485, %v1484
      %v1513 = vpack.c.bf16 %v1487, %v1486
      %v1514 = vpack.c.bf16 %v1489, %v1488
      %v1515 = vpack.c.bf16 %v1491, %v1490
      %v1516 = vpack.c.bf16 %v1493, %v1492
      %v1517 = vpack.c.bf16 %v1495, %v1494
      %v1518 = vpack.c.bf16 %v1497, %v1496
      %v1519 = vpack.c.bf16 %v1499, %v1498
      %v1520 = vpack.c.bf16 %v1501, %v1500
      %v1521 = vpack.c.bf16 %v1503, %v1502
      %v1522 = vpack.c.bf16 %v1505, %v1504
      %v1523 = vpack.c.bf16 %v1507, %v1506
      %v1524 = vld [vmem:[#allocation2 + $0x2] sm:$0xff]
      %v1525 = vld [vmem:[#allocation2 + $0xa] sm:$0xff]
      %v1526 = vld [vmem:[#allocation2 + $0x12] sm:$0xff]
      %v1527 = vld [vmem:[#allocation2 + $0x1a] sm:$0xff]
      %v1528 = vld [vmem:[#allocation2 + $0x22] sm:$0xff]
      %v1529 = vld [vmem:[#allocation2 + $0x2a] sm:$0xff]
      %v1530 = vld [vmem:[#allocation2 + $0x32] sm:$0xff]
      %v1531 = vld [vmem:[#allocation2 + $0x3a] sm:$0xff]
      %v1532 = vld [vmem:[#allocation2 + $0x42] sm:$0xff]
      %v1533 = vld [vmem:[#allocation2 + $0x4a] sm:$0xff]
      %v1534 = vld [vmem:[#allocation2 + $0x52] sm:$0xff]
      %v1535 = vld [vmem:[#allocation2 + $0x5a] sm:$0xff]
      %v1536 = vld [vmem:[#allocation2 + $0x62] sm:$0xff]
      %v1537 = vld [vmem:[#allocation2 + $0x6a] sm:$0xff]
      %v1538 = vld [vmem:[#allocation2 + $0x72] sm:$0xff]
      %v1539 = vld [vmem:[#allocation2 + $0x7a] sm:$0xff]
      %v1540 = vld [vmem:[#allocation2 + $0x82] sm:$0xff]
      %v1541 = vld [vmem:[#allocation2 + $0x8a] sm:$0xff]
      %v1542 = vld [vmem:[#allocation2 + $0x92] sm:$0xff]
      %v1543 = vld [vmem:[#allocation2 + $0x9a] sm:$0xff]
      %v1544 = vld [vmem:[#allocation2 + $0xa2] sm:$0xff]
      %v1545 = vld [vmem:[#allocation2 + $0xaa] sm:$0xff]
      %v1546 = vld [vmem:[#allocation2 + $0xb2] sm:$0xff]
      %v1547 = vld [vmem:[#allocation2 + $0xba] sm:$0xff]
      %v1548 = vld [vmem:[#allocation2 + $0xc2] sm:$0xff]
      %v1549 = vld [vmem:[#allocation2 + $0xca] sm:$0xff]
      %v1550 = vld [vmem:[#allocation2 + $0xd2] sm:$0xff]
      %v1551 = vld [vmem:[#allocation2 + $0xda] sm:$0xff]
      %v1552 = vld [vmem:[#allocation2 + $0xe2] sm:$0xff]
      %v1553 = vld [vmem:[#allocation2 + $0xea] sm:$0xff]
      %v1554 = vld [vmem:[#allocation2 + $0xf2] sm:$0xff]
      %v1555 = vld [vmem:[#allocation2 + $0xfa] sm:$0xff]
      %v1556 = vpack.c.bf16 %v1525, %v1524
      %v1557 = vpack.c.bf16 %v1527, %v1526
      %v1558 = vpack.c.bf16 %v1529, %v1528
      %v1559 = vpack.c.bf16 %v1531, %v1530
      %v1560 = vpack.c.bf16 %v1533, %v1532
      %v1561 = vpack.c.bf16 %v1535, %v1534
      %v1562 = vpack.c.bf16 %v1537, %v1536
      %v1563 = vpack.c.bf16 %v1539, %v1538
      %v1564 = vpack.c.bf16 %v1541, %v1540
      %v1565 = vpack.c.bf16 %v1543, %v1542
      %v1566 = vpack.c.bf16 %v1545, %v1544
      %v1567 = vpack.c.bf16 %v1547, %v1546
      %v1568 = vpack.c.bf16 %v1549, %v1548
      %v1569 = vpack.c.bf16 %v1551, %v1550
      %v1570 = vpack.c.bf16 %v1553, %v1552
      %v1571 = vpack.c.bf16 %v1555, %v1554
      %v1572 = vmul.bf16 %v1556, %v987
      %v1573 = vmul.bf16 %v1557, %v988
      %v1574 = vmul.bf16 %v1558, %v989
      %v1575 = vmul.bf16 %v1559, %v990
      %v1576 = vmul.bf16 %v1560, %v991
      %v1577 = vmul.bf16 %v1561, %v992
      %v1578 = vmul.bf16 %v1562, %v993
      %v1579 = vmul.bf16 %v1563, %v994
      %v1580 = vmul.bf16 %v1564, %v995
      %v1581 = vmul.bf16 %v1565, %v996
      %v1582 = vmul.bf16 %v1566, %v997
      %v1583 = vmul.bf16 %v1567, %v998
      %v1584 = vmul.bf16 %v1568, %v999
      %v1585 = vmul.bf16 %v1569, %v1000
      %v1586 = vmul.bf16 %v1570, %v1001
      %v1587 = vmul.bf16 %v1571, %v1002
      %v1588 = vld [vmem:[#allocation2 + $0x100] sm:$0xff]
      %v1589 = vld [vmem:[#allocation2 + $0x108] sm:$0xff]
      %v1590 = vpack.c.bf16 %v1589, %v1588
      %v1591 = vmul.bf16 %v1445, %v875
      %v1592 = vmul.bf16 %v1446, %v876
      %v1593 = vmul.bf16 %v1447, %v877
      %v1594 = vmul.bf16 %v1448, %v878
      %v1595 = vmul.bf16 %v1449, %v879
      %v1596 = vmul.bf16 %v1450, %v880
      %v1597 = vmul.bf16 %v1451, %v881
      %v1598 = vmul.bf16 %v1452, %v882
      %v1599 = vmul.bf16 %v1453, %v883
      %v1600 = vmul.bf16 %v1454, %v884
      %v1601 = vmul.bf16 %v1455, %v885
      %v1602 = vmul.bf16 %v1456, %v886
      %v1603 = vmul.bf16 %v1457, %v887
      %v1604 = vmul.bf16 %v1458, %v888
      %v1605 = vmul.bf16 %v1459, %v889
      %v1606 = vmul.bf16 %v1590, %v890
      %v1607 = vld [vmem:[#allocation2 + $0x101] sm:$0xff]
      %v1608 = vld [vmem:[#allocation2 + $0x109] sm:$0xff]
      %v1609 = vpack.c.bf16 %v1608, %v1607
      %v1610 = vld [vmem:[#allocation2 + $0x102] sm:$0xff]
      %v1611 = vld [vmem:[#allocation2 + $0x10a] sm:$0xff]
      %v1612 = vpack.c.bf16 %v1611, %v1610
      %v1613 = vmul.bf16 %v1557, %v987
      %v1614 = vmul.bf16 %v1558, %v988
      %v1615 = vmul.bf16 %v1559, %v989
      %v1616 = vmul.bf16 %v1560, %v990
      %v1617 = vmul.bf16 %v1561, %v991
      %v1618 = vmul.bf16 %v1562, %v992
      %v1619 = vmul.bf16 %v1563, %v993
      %v1620 = vmul.bf16 %v1564, %v994
      %v1621 = vmul.bf16 %v1565, %v995
      %v1622 = vmul.bf16 %v1566, %v996
      %v1623 = vmul.bf16 %v1567, %v997
      %v1624 = vmul.bf16 %v1568, %v998
      %v1625 = vmul.bf16 %v1569, %v999
      %v1626 = vmul.bf16 %v1570, %v1000
      %v1627 = vmul.bf16 %v1571, %v1001
      %v1628 = vmul.bf16 %v1612, %v1002
      %v1629 = vld [vmem:[#allocation2 + $0x110] sm:$0xff]
      %v1630 = vld [vmem:[#allocation2 + $0x118] sm:$0xff]
      %v1631 = vpack.c.bf16 %v1630, %v1629
      %v1632 = vmul.bf16 %v1446, %v875
      %v1633 = vmul.bf16 %v1447, %v876
      %v1634 = vmul.bf16 %v1448, %v877
      %v1635 = vmul.bf16 %v1449, %v878
      %v1636 = vmul.bf16 %v1450, %v879
      %v1637 = vmul.bf16 %v1451, %v880
      %v1638 = vmul.bf16 %v1452, %v881
      %v1639 = vmul.bf16 %v1453, %v882
      %v1640 = vmul.bf16 %v1454, %v883
      %v1641 = vmul.bf16 %v1455, %v884
      %v1642 = vmul.bf16 %v1456, %v885
      %v1643 = vmul.bf16 %v1457, %v886
      %v1644 = vmul.bf16 %v1458, %v887
      %v1645 = vmul.bf16 %v1459, %v888
      %v1646 = vmul.bf16 %v1590, %v889
      %v1647 = vmul.bf16 %v1631, %v890
      %v1648 = vld [vmem:[#allocation2 + $0x111] sm:$0xff]
      %v1649 = vld [vmem:[#allocation2 + $0x119] sm:$0xff]
      %v1650 = vpack.c.bf16 %v1649, %v1648
      %v1651 = vld [vmem:[#allocation2 + $0x112] sm:$0xff]
      %v1652 = vld [vmem:[#allocation2 + $0x11a] sm:$0xff]
      %v1653 = vpack.c.bf16 %v1652, %v1651
      %v1654 = vmul.bf16 %v1558, %v987
      %v1655 = vmul.bf16 %v1559, %v988
      %v1656 = vmul.bf16 %v1560, %v989
      %v1657 = vmul.bf16 %v1561, %v990
      %v1658 = vmul.bf16 %v1562, %v991
      %v1659 = vmul.bf16 %v1563, %v992
      %v1660 = vmul.bf16 %v1564, %v993
      %v1661 = vmul.bf16 %v1565, %v994
      %v1662 = vmul.bf16 %v1566, %v995
      %v1663 = vmul.bf16 %v1567, %v996
      %v1664 = vmul.bf16 %v1568, %v997
      %v1665 = vmul.bf16 %v1569, %v998
      %v1666 = vmul.bf16 %v1570, %v999
      %v1667 = vmul.bf16 %v1571, %v1000
      %v1668 = vmul.bf16 %v1612, %v1001
      %v1669 = vmul.bf16 %v1653, %v1002
      %1686 = vrot.lane.b32.xlu0 %v1508, 8
      %v1687 = vpop.permute.xlu0 %1686
      %1688 = vrot.lane.b32.xlu0 %v1509, 8
      %v1689 = vpop.permute.xlu0 %1688
      %1690 = vrot.lane.b32.xlu0 %v1510, 8
      %v1691 = vpop.permute.xlu0 %1690
      %1692 = vrot.lane.b32.xlu0 %v1511, 8
      %v1693 = vpop.permute.xlu0 %1692
      %1694 = vrot.lane.b32.xlu0 %v1512, 8
      %v1695 = vpop.permute.xlu0 %1694
      %1696 = vrot.lane.b32.xlu0 %v1513, 8
      %v1697 = vpop.permute.xlu0 %1696
      %1698 = vrot.lane.b32.xlu0 %v1514, 8
      %v1699 = vpop.permute.xlu0 %1698
      %1700 = vrot.lane.b32.xlu0 %v1515, 8
      %v1701 = vpop.permute.xlu0 %1700
      %1702 = vrot.lane.b32.xlu0 %v1516, 8
      %v1703 = vpop.permute.xlu0 %1702
      %1704 = vrot.lane.b32.xlu0 %v1517, 8
      %v1705 = vpop.permute.xlu0 %1704
      %1706 = vrot.lane.b32.xlu0 %v1518, 8
      %v1707 = vpop.permute.xlu0 %1706
      %1708 = vrot.lane.b32.xlu0 %v1519, 8
      %v1709 = vpop.permute.xlu0 %1708
      %1710 = vrot.lane.b32.xlu0 %v1520, 8
      %v1711 = vpop.permute.xlu0 %1710
      %1712 = vrot.lane.b32.xlu0 %v1521, 8
      %v1713 = vpop.permute.xlu0 %1712
      %1714 = vrot.lane.b32.xlu0 %v1522, 8
      %v1715 = vpop.permute.xlu0 %1714
      %1716 = vrot.lane.b32.xlu0 %v1523, 8
      %v1717 = vpop.permute.xlu0 %1716
      %1734 = vrot.lane.b32.xlu0 %v1572, 16
      %v1735 = vpop.permute.xlu0 %1734
      %1736 = vrot.lane.b32.xlu0 %v1573, 16
      %v1737 = vpop.permute.xlu0 %1736
      %1738 = vrot.lane.b32.xlu0 %v1574, 16
      %v1739 = vpop.permute.xlu0 %1738
      %1740 = vrot.lane.b32.xlu0 %v1575, 16
      %v1741 = vpop.permute.xlu0 %1740
      %1742 = vrot.lane.b32.xlu0 %v1576, 16
      %v1743 = vpop.permute.xlu0 %1742
      %1744 = vrot.lane.b32.xlu0 %v1577, 16
      %v1745 = vpop.permute.xlu0 %1744
      %1746 = vrot.lane.b32.xlu0 %v1578, 16
      %v1747 = vpop.permute.xlu0 %1746
      %1748 = vrot.lane.b32.xlu0 %v1579, 16
      %v1749 = vpop.permute.xlu0 %1748
      %1750 = vrot.lane.b32.xlu0 %v1580, 16
      %v1751 = vpop.permute.xlu0 %1750
      %1752 = vrot.lane.b32.xlu0 %v1581, 16
      %v1753 = vpop.permute.xlu0 %1752
      %1754 = vrot.lane.b32.xlu0 %v1582, 16
      %v1755 = vpop.permute.xlu0 %1754
      %1756 = vrot.lane.b32.xlu0 %v1583, 16
      %v1757 = vpop.permute.xlu0 %1756
      %1758 = vrot.lane.b32.xlu0 %v1584, 16
      %v1759 = vpop.permute.xlu0 %1758
      %1760 = vrot.lane.b32.xlu0 %v1585, 16
      %v1761 = vpop.permute.xlu0 %1760
      %1762 = vrot.lane.b32.xlu0 %v1586, 16
      %v1763 = vpop.permute.xlu0 %1762
      %1764 = vrot.lane.b32.xlu0 %v1587, 16
      %v1765 = vpop.permute.xlu0 %1764
      %1782 = vrot.lane.b32.xlu0 %v1591, 24
      %v1783 = vpop.permute.xlu0 %1782
      %1784 = vrot.lane.b32.xlu0 %v1592, 24
      %v1785 = vpop.permute.xlu0 %1784
      %1786 = vrot.lane.b32.xlu0 %v1593, 24
      %v1787 = vpop.permute.xlu0 %1786
      %1788 = vrot.lane.b32.xlu0 %v1594, 24
      %v1789 = vpop.permute.xlu0 %1788
      %1790 = vrot.lane.b32.xlu0 %v1595, 24
      %v1791 = vpop.permute.xlu0 %1790
      %1792 = vrot.lane.b32.xlu0 %v1596, 24
      %v1793 = vpop.permute.xlu0 %1792
      %1794 = vrot.lane.b32.xlu0 %v1597, 24
      %v1795 = vpop.permute.xlu0 %1794
      %1796 = vrot.lane.b32.xlu0 %v1598, 24
      %v1797 = vpop.permute.xlu0 %1796
      %1798 = vrot.lane.b32.xlu0 %v1599, 24
      %v1799 = vpop.permute.xlu0 %1798
      %1800 = vrot.lane.b32.xlu0 %v1600, 24
      %v1801 = vpop.permute.xlu0 %1800
      %1802 = vrot.lane.b32.xlu0 %v1601, 24
      %v1803 = vpop.permute.xlu0 %1802
      %1804 = vrot.lane.b32.xlu0 %v1602, 24
      %v1805 = vpop.permute.xlu0 %1804
      %1806 = vrot.lane.b32.xlu0 %v1603, 24
      %v1807 = vpop.permute.xlu0 %1806
      %1808 = vrot.lane.b32.xlu0 %v1604, 24
      %v1809 = vpop.permute.xlu0 %1808
      %1810 = vrot.lane.b32.xlu0 %v1605, 24
      %v1811 = vpop.permute.xlu0 %1810
      %1812 = vrot.lane.b32.xlu0 %v1606, 24
      %v1813 = vpop.permute.xlu0 %1812
      %1815 = vrot.lane.b32.xlu0 %v1509, 32
      %v1816 = vpop.permute.xlu0 %1815
      %1817 = vrot.lane.b32.xlu0 %v1510, 32
      %v1818 = vpop.permute.xlu0 %1817
      %1819 = vrot.lane.b32.xlu0 %v1511, 32
      %v1820 = vpop.permute.xlu0 %1819
      %1821 = vrot.lane.b32.xlu0 %v1512, 32
      %v1822 = vpop.permute.xlu0 %1821
      %1823 = vrot.lane.b32.xlu0 %v1513, 32
      %v1824 = vpop.permute.xlu0 %1823
      %1825 = vrot.lane.b32.xlu0 %v1514, 32
      %v1826 = vpop.permute.xlu0 %1825
      %1827 = vrot.lane.b32.xlu0 %v1515, 32
      %v1828 = vpop.permute.xlu0 %1827
      %1829 = vrot.lane.b32.xlu0 %v1516, 32
      %v1830 = vpop.permute.xlu0 %1829
      %1831 = vrot.lane.b32.xlu0 %v1517, 32
      %v1832 = vpop.permute.xlu0 %1831
      %1833 = vrot.lane.b32.xlu0 %v1518, 32
      %v1834 = vpop.permute.xlu0 %1833
      %1835 = vrot.lane.b32.xlu0 %v1519, 32
      %v1836 = vpop.permute.xlu0 %1835
      %1837 = vrot.lane.b32.xlu0 %v1520, 32
      %v1838 = vpop.permute.xlu0 %1837
      %1839 = vrot.lane.b32.xlu0 %v1521, 32
      %v1840 = vpop.permute.xlu0 %1839
      %1841 = vrot.lane.b32.xlu0 %v1522, 32
      %v1842 = vpop.permute.xlu0 %1841
      %1843 = vrot.lane.b32.xlu0 %v1523, 32
      %v1844 = vpop.permute.xlu0 %1843
      %1845 = vrot.lane.b32.xlu0 %v1609, 32
      %v1846 = vpop.permute.xlu0 %1845
      %1863 = vrot.lane.b32.xlu0 %v1613, 40
      %v1864 = vpop.permute.xlu0 %1863
      %1865 = vrot.lane.b32.xlu0 %v1614, 40
      %v1866 = vpop.permute.xlu0 %1865
      %1867 = vrot.lane.b32.xlu0 %v1615, 40
      %v1868 = vpop.permute.xlu0 %1867
      %1869 = vrot.lane.b32.xlu0 %v1616, 40
      %v1870 = vpop.permute.xlu0 %1869
      %1871 = vrot.lane.b32.xlu0 %v1617, 40
      %v1872 = vpop.permute.xlu0 %1871
      %1873 = vrot.lane.b32.xlu0 %v1618, 40
      %v1874 = vpop.permute.xlu0 %1873
      %1875 = vrot.lane.b32.xlu0 %v1619, 40
      %v1876 = vpop.permute.xlu0 %1875
      %1877 = vrot.lane.b32.xlu0 %v1620, 40
      %v1878 = vpop.permute.xlu0 %1877
      %1879 = vrot.lane.b32.xlu0 %v1621, 40
      %v1880 = vpop.permute.xlu0 %1879
      %1881 = vrot.lane.b32.xlu0 %v1622, 40
      %v1882 = vpop.permute.xlu0 %1881
      %1883 = vrot.lane.b32.xlu0 %v1623, 40
      %v1884 = vpop.permute.xlu0 %1883
      %1885 = vrot.lane.b32.xlu0 %v1624, 40
      %v1886 = vpop.permute.xlu0 %1885
      %1887 = vrot.lane.b32.xlu0 %v1625, 40
      %v1888 = vpop.permute.xlu0 %1887
      %1889 = vrot.lane.b32.xlu0 %v1626, 40
      %v1890 = vpop.permute.xlu0 %1889
      %1891 = vrot.lane.b32.xlu0 %v1627, 40
      %v1892 = vpop.permute.xlu0 %1891
      %1893 = vrot.lane.b32.xlu0 %v1628, 40
      %v1894 = vpop.permute.xlu0 %1893
      %1911 = vrot.lane.b32.xlu0 %v1632, 48
      %v1912 = vpop.permute.xlu0 %1911
      %1913 = vrot.lane.b32.xlu0 %v1633, 48
      %v1914 = vpop.permute.xlu0 %1913
      %1915 = vrot.lane.b32.xlu0 %v1634, 48
      %v1916 = vpop.permute.xlu0 %1915
      %1917 = vrot.lane.b32.xlu0 %v1635, 48
      %v1918 = vpop.permute.xlu0 %1917
      %1919 = vrot.lane.b32.xlu0 %v1636, 48
      %v1920 = vpop.permute.xlu0 %1919
      %1921 = vrot.lane.b32.xlu0 %v1637, 48
      %v1922 = vpop.permute.xlu0 %1921
      %1923 = vrot.lane.b32.xlu0 %v1638, 48
      %v1924 = vpop.permute.xlu0 %1923
      %1925 = vrot.lane.b32.xlu0 %v1639, 48
      %v1926 = vpop.permute.xlu0 %1925
      %1927 = vrot.lane.b32.xlu0 %v1640, 48
      %v1928 = vpop.permute.xlu0 %1927
      %1929 = vrot.lane.b32.xlu0 %v1641, 48
      %v1930 = vpop.permute.xlu0 %1929
      %1931 = vrot.lane.b32.xlu0 %v1642, 48
      %v1932 = vpop.permute.xlu0 %1931
      %1933 = vrot.lane.b32.xlu0 %v1643, 48
      %v1934 = vpop.permute.xlu0 %1933
      %1935 = vrot.lane.b32.xlu0 %v1644, 48
      %v1936 = vpop.permute.xlu0 %1935
      %1937 = vrot.lane.b32.xlu0 %v1645, 48
      %v1938 = vpop.permute.xlu0 %1937
      %1939 = vrot.lane.b32.xlu0 %v1646, 48
      %v1940 = vpop.permute.xlu0 %1939
      %1941 = vrot.lane.b32.xlu0 %v1647, 48
      %v1942 = vpop.permute.xlu0 %1941
      %1944 = vrot.lane.b32.xlu0 %v1510, 56
      %v1945 = vpop.permute.xlu0 %1944
      %1946 = vrot.lane.b32.xlu0 %v1511, 56
      %v1947 = vpop.permute.xlu0 %1946
      %1948 = vrot.lane.b32.xlu0 %v1512, 56
      %v1949 = vpop.permute.xlu0 %1948
      %1950 = vrot.lane.b32.xlu0 %v1513, 56
      %v1951 = vpop.permute.xlu0 %1950
      %1952 = vrot.lane.b32.xlu0 %v1514, 56
      %v1953 = vpop.permute.xlu0 %1952
      %1954 = vrot.lane.b32.xlu0 %v1515, 56
      %v1955 = vpop.permute.xlu0 %1954
      %1956 = vrot.lane.b32.xlu0 %v1516, 56
      %v1957 = vpop.permute.xlu0 %1956
      %1958 = vrot.lane.b32.xlu0 %v1517, 56
      %v1959 = vpop.permute.xlu0 %1958
      %1960 = vrot.lane.b32.xlu0 %v1518, 56
      %v1961 = vpop.permute.xlu0 %1960
      %1962 = vrot.lane.b32.xlu0 %v1519, 56
      %v1963 = vpop.permute.xlu0 %1962
      %1964 = vrot.lane.b32.xlu0 %v1520, 56
      %v1965 = vpop.permute.xlu0 %1964
      %1966 = vrot.lane.b32.xlu0 %v1521, 56
      %v1967 = vpop.permute.xlu0 %1966
      %1968 = vrot.lane.b32.xlu0 %v1522, 56
      %v1969 = vpop.permute.xlu0 %1968
      %1970 = vrot.lane.b32.xlu0 %v1523, 56
      %v1971 = vpop.permute.xlu0 %1970
      %1972 = vrot.lane.b32.xlu0 %v1609, 56
      %v1973 = vpop.permute.xlu0 %1972
      %1974 = vrot.lane.b32.xlu0 %v1650, 56
      %v1975 = vpop.permute.xlu0 %1974
      %1992 = vrot.lane.b32.xlu0 %v1654, 64
      %v1993 = vpop.permute.xlu0 %1992
      %1994 = vrot.lane.b32.xlu0 %v1655, 64
      %v1995 = vpop.permute.xlu0 %1994
      %1996 = vrot.lane.b32.xlu0 %v1656, 64
      %v1997 = vpop.permute.xlu0 %1996
      %1998 = vrot.lane.b32.xlu0 %v1657, 64
      %v1999 = vpop.permute.xlu0 %1998
      %2000 = vrot.lane.b32.xlu0 %v1658, 64
      %v2001 = vpop.permute.xlu0 %2000
      %2002 = vrot.lane.b32.xlu0 %v1659, 64
      %v2003 = vpop.permute.xlu0 %2002
      %2004 = vrot.lane.b32.xlu0 %v1660, 64
      %v2005 = vpop.permute.xlu0 %2004
      %2006 = vrot.lane.b32.xlu0 %v1661, 64
      %v2007 = vpop.permute.xlu0 %2006
      %2008 = vrot.lane.b32.xlu0 %v1662, 64
      %v2009 = vpop.permute.xlu0 %2008
      %2010 = vrot.lane.b32.xlu0 %v1663, 64
      %v2011 = vpop.permute.xlu0 %2010
      %2012 = vrot.lane.b32.xlu0 %v1664, 64
      %v2013 = vpop.permute.xlu0 %2012
      %2014 = vrot.lane.b32.xlu0 %v1665, 64
      %v2015 = vpop.permute.xlu0 %2014
      %2016 = vrot.lane.b32.xlu0 %v1666, 64
      %v2017 = vpop.permute.xlu0 %2016
      %2018 = vrot.lane.b32.xlu0 %v1667, 64
      %v2019 = vpop.permute.xlu0 %2018
      %2020 = vrot.lane.b32.xlu0 %v1668, 64
      %v2021 = vpop.permute.xlu0 %2020
      %2022 = vrot.lane.b32.xlu0 %v1669, 64
      %v2023 = vpop.permute.xlu0 %2022
      %v2026 = vsel %vm1003, %v1460, %v1687
      %v2029 = vsel %vm1003, %v1461, %v1689
      %v2032 = vsel %vm1003, %v1462, %v1691
      %v2035 = vsel %vm1003, %v1463, %v1693
      %v2038 = vsel %vm1003, %v1464, %v1695
      %v2041 = vsel %vm1003, %v1465, %v1697
      %v2044 = vsel %vm1003, %v1466, %v1699
      %v2047 = vsel %vm1003, %v1467, %v1701
      %v2050 = vsel %vm1003, %v1468, %v1703
      %v2053 = vsel %vm1003, %v1469, %v1705
      %v2056 = vsel %vm1003, %v1470, %v1707
      %v2059 = vsel %vm1003, %v1471, %v1709
      %v2062 = vsel %vm1003, %v1472, %v1711
      %v2065 = vsel %vm1003, %v1473, %v1713
      %v2068 = vsel %vm1003, %v1474, %v1715
      %v2071 = vsel %vm1003, %v1475, %v1717
      %vm2072 = vcmask 130048
      %v2074 = vsel %vm2072, %v2026, %v1735
      %v2076 = vsel %vm2072, %v2029, %v1737
      %v2078 = vsel %vm2072, %v2032, %v1739
      %v2080 = vsel %vm2072, %v2035, %v1741
      %v2082 = vsel %vm2072, %v2038, %v1743
      %v2084 = vsel %vm2072, %v2041, %v1745
      %v2086 = vsel %vm2072, %v2044, %v1747
      %v2088 = vsel %vm2072, %v2047, %v1749
      %v2090 = vsel %vm2072, %v2050, %v1751
      %v2092 = vsel %vm2072, %v2053, %v1753
      %v2094 = vsel %vm2072, %v2056, %v1755
      %v2096 = vsel %vm2072, %v2059, %v1757
      %v2098 = vsel %vm2072, %v2062, %v1759
      %v2100 = vsel %vm2072, %v2065, %v1761
      %v2102 = vsel %vm2072, %v2068, %v1763
      %v2104 = vsel %vm2072, %v2071, %v1765
      %vm2105 = vcmask 195584
      %v2107 = vsel %vm2105, %v2074, %v1783
      %v2109 = vsel %vm2105, %v2076, %v1785
      %v2111 = vsel %vm2105, %v2078, %v1787
      %v2113 = vsel %vm2105, %v2080, %v1789
      %v2115 = vsel %vm2105, %v2082, %v1791
      %v2117 = vsel %vm2105, %v2084, %v1793
      %v2119 = vsel %vm2105, %v2086, %v1795
      %v2121 = vsel %vm2105, %v2088, %v1797
      %v2123 = vsel %vm2105, %v2090, %v1799
      %v2125 = vsel %vm2105, %v2092, %v1801
      %v2127 = vsel %vm2105, %v2094, %v1803
      %v2129 = vsel %vm2105, %v2096, %v1805
      %v2131 = vsel %vm2105, %v2098, %v1807
      %v2133 = vsel %vm2105, %v2100, %v1809
      %v2135 = vsel %vm2105, %v2102, %v1811
      %v2137 = vsel %vm2105, %v2104, %v1813
      %vm2138 = vcmask 261120
      %v2140 = vsel %vm2138, %v2107, %v1816
      %v2142 = vsel %vm2138, %v2109, %v1818
      %v2144 = vsel %vm2138, %v2111, %v1820
      %v2146 = vsel %vm2138, %v2113, %v1822
      %v2148 = vsel %vm2138, %v2115, %v1824
      %v2150 = vsel %vm2138, %v2117, %v1826
      %v2152 = vsel %vm2138, %v2119, %v1828
      %v2154 = vsel %vm2138, %v2121, %v1830
      %v2156 = vsel %vm2138, %v2123, %v1832
      %v2158 = vsel %vm2138, %v2125, %v1834
      %v2160 = vsel %vm2138, %v2127, %v1836
      %v2162 = vsel %vm2138, %v2129, %v1838
      %v2164 = vsel %vm2138, %v2131, %v1840
      %v2166 = vsel %vm2138, %v2133, %v1842
      %v2168 = vsel %vm2138, %v2135, %v1844
      %v2170 = vsel %vm2138, %v2137, %v1846
      %vm2171 = vcmask 326656
      %v2173 = vsel %vm2171, %v2140, %v1864
      %v2175 = vsel %vm2171, %v2142, %v1866
      %v2177 = vsel %vm2171, %v2144, %v1868
      %v2179 = vsel %vm2171, %v2146, %v1870
      %v2181 = vsel %vm2171, %v2148, %v1872
      %v2183 = vsel %vm2171, %v2150, %v1874
      %v2185 = vsel %vm2171, %v2152, %v1876
      %v2187 = vsel %vm2171, %v2154, %v1878
      %v2189 = vsel %vm2171, %v2156, %v1880
      %v2191 = vsel %vm2171, %v2158, %v1882
      %v2193 = vsel %vm2171, %v2160, %v1884
      %v2195 = vsel %vm2171, %v2162, %v1886
      %v2197 = vsel %vm2171, %v2164, %v1888
      %v2199 = vsel %vm2171, %v2166, %v1890
      %v2201 = vsel %vm2171, %v2168, %v1892
      %v2203 = vsel %vm2171, %v2170, %v1894
      %vm2204 = vcmask 392192
      %v2206 = vsel %vm2204, %v2173, %v1912
      %v2208 = vsel %vm2204, %v2175, %v1914
      %v2210 = vsel %vm2204, %v2177, %v1916
      %v2212 = vsel %vm2204, %v2179, %v1918
      %v2214 = vsel %vm2204, %v2181, %v1920
      %v2216 = vsel %vm2204, %v2183, %v1922
      %v2218 = vsel %vm2204, %v2185, %v1924
      %v2220 = vsel %vm2204, %v2187, %v1926
      %v2222 = vsel %vm2204, %v2189, %v1928
      %v2224 = vsel %vm2204, %v2191, %v1930
      %v2226 = vsel %vm2204, %v2193, %v1932
      %v2228 = vsel %vm2204, %v2195, %v1934
      %v2230 = vsel %vm2204, %v2197, %v1936
      %v2232 = vsel %vm2204, %v2199, %v1938
      %v2234 = vsel %vm2204, %v2201, %v1940
      %v2236 = vsel %vm2204, %v2203, %v1942
      %vm2237 = vcmask 457728
      %v2239 = vsel %vm2237, %v2206, %v1945
      %v2241 = vsel %vm2237, %v2208, %v1947
      %v2243 = vsel %vm2237, %v2210, %v1949
      %v2245 = vsel %vm2237, %v2212, %v1951
      %v2247 = vsel %vm2237, %v2214, %v1953
      %v2249 = vsel %vm2237, %v2216, %v1955
      %v2251 = vsel %vm2237, %v2218, %v1957
      %v2253 = vsel %vm2237, %v2220, %v1959
      %v2255 = vsel %vm2237, %v2222, %v1961
      %v2257 = vsel %vm2237, %v2224, %v1963
      %v2259 = vsel %vm2237, %v2226, %v1965
      %v2261 = vsel %vm2237, %v2228, %v1967
      %v2263 = vsel %vm2237, %v2230, %v1969
      %v2265 = vsel %vm2237, %v2232, %v1971
      %v2267 = vsel %vm2237, %v2234, %v1973
      %v2269 = vsel %vm2237, %v2236, %v1975
      %vm2270 = vcmask 523264
      %v2272 = vsel %vm2270, %v2239, %v1993
      %v2274 = vsel %vm2270, %v2241, %v1995
      %v2276 = vsel %vm2270, %v2243, %v1997
      %v2278 = vsel %vm2270, %v2245, %v1999
      %v2280 = vsel %vm2270, %v2247, %v2001
      %v2282 = vsel %vm2270, %v2249, %v2003
      %v2284 = vsel %vm2270, %v2251, %v2005
      %v2286 = vsel %vm2270, %v2253, %v2007
      %v2288 = vsel %vm2270, %v2255, %v2009
      %v2290 = vsel %vm2270, %v2257, %v2011
      %v2292 = vsel %vm2270, %v2259, %v2013
      %v2294 = vsel %vm2270, %v2261, %v2015
      %v2296 = vsel %vm2270, %v2263, %v2017
      %v2298 = vsel %vm2270, %v2265, %v2019
      %v2300 = vsel %vm2270, %v2267, %v2021
      %v2302 = vsel %vm2270, %v2269, %v2023
      %v2303 = vld [vmem:[%s6] sm:$0xf]
      %v2304 = vld [vmem:[%s6 + $0x4] sm:$0xf]
      %v2305 = vld [vmem:[%s6 + $0x8] sm:$0xf]
      %v2306 = vld [vmem:[%s6 + $0xc] sm:$0xf]
      %v2307 = vld [vmem:[%s6 + $0x10] sm:$0xf]
      %v2308 = vld [vmem:[%s6 + $0x14] sm:$0xf]
      %v2309 = vld [vmem:[%s6 + $0x18] sm:$0xf]
      %v2310 = vld [vmem:[%s6 + $0x1c] sm:$0xf]
      %v2311 = vld [vmem:[%s6 + $0x20] sm:$0xf]
      %v2312 = vld [vmem:[%s7] sm:$0x1]
      %v2314 = vlaneseq
      %v2315 = vshrl.u32 %v2314, 7
      %v2316 = vsub.s32 0, %v2315
      %v2317 = vrot.slane %v2312, %v2316
      %v2328 = vunpack.c.l.b16 %v2303
      %v2329 = vunpack.c.l.b16 %v2304
      %v2330 = vunpack.c.l.b16 %v2305
      %v2331 = vunpack.c.l.b16 %v2306
      %v2332 = vunpack.c.l.b16 %v2307
      %v2333 = vunpack.c.l.b16 %v2308
      %v2334 = vunpack.c.l.b16 %v2309
      %v2335 = vunpack.c.l.b16 %v2310
      %v2336 = vunpack.c.l.b16 %v2311
      %v2337 = vpack.c.b16 %v2329, %v2328
      %v2338 = vpack.c.b16 %v2331, %v2330
      %v2339 = vpack.c.b16 %v2333, %v2332
      %v2340 = vpack.c.b16 %v2335, %v2334
      %v2341 = vpack.c.b16 %v2336, %v2336
      %vm2346 = vcmask 588800
      %v2347 = vsel %vm2346, %v2272, 0
      %v2349 = vsel %vm2346, %v2274, 0
      %v2351 = vsel %vm2346, %v2276, 0
      %v2353 = vsel %vm2346, %v2278, 0
      %v2355 = vsel %vm2346, %v2280, 0
      %v2357 = vsel %vm2346, %v2282, 0
      %v2359 = vsel %vm2346, %v2284, 0
      %v2361 = vsel %vm2346, %v2286, 0
      %v2363 = vsel %vm2346, %v2288, 0
      %v2365 = vsel %vm2346, %v2290, 0
      %v2367 = vsel %vm2346, %v2292, 0
      %v2369 = vsel %vm2346, %v2294, 0
      %v2371 = vsel %vm2346, %v2296, 0
      %v2373 = vsel %vm2346, %v2298, 0
      %v2375 = vsel %vm2346, %v2300, 0
      %v2377 = vsel %vm2346, %v2302, 0
      %vm2379 = vcmask 1043456
      %v2381 = vsel %vm2379, %v2341, 0
      %2383 = vmatprep.subr.bf16.mxu0 0
      %2384 = vmatpush1.bf16.msra.mxu0 %v2337
      %2385 = vmatprep.subr.bf16.mxu0 0
      %2386 = vmatpush1.bf16.msra.mxu0 %v2338
      %2387 = vmatprep.subr.bf16.mxu0 0
      %2388 = vmatpush1.bf16.msra.mxu0 %v2339
      %2389 = vmatprep.subr.bf16.mxu0 0
      %2390 = vmatpush1.bf16.msra.mxu0 %v2340
      %2391 = vmatprep.subr.bf16.mxu0 0
      %2392 = vmatpush1.bf16.msra.mxu0 %v2381
      %2393 = vmatprep.subr.bf16.mxu0 0
      %2394 = vmatpush1.bf16.msra.mxu0 0
      %2395 = vmatprep.subr.bf16.mxu0 0
      %2396 = vmatpush1.bf16.msra.mxu0 0
      %2397 = vmatprep.subr.bf16.mxu0 0
      %2398 = vmatpush1.bf16.msra.mxu0 0
      %2399 = vmatprep.subr.bf16.mxu0 0
      %2400 = vmatpush1.bf16.msra.mxu0 0
      %2401 = vmatprep.subr.bf16.mxu0 0
      %2402 = vmatpush1.bf16.msra.mxu0 0
      %2403 = vmatprep.subr.bf16.mxu0 0
      %2404 = vmatpush1.bf16.msra.mxu0 0
      %2405 = vmatprep.subr.bf16.mxu0 0
      %2406 = vmatpush1.bf16.msra.mxu0 0
      %2407 = vmatprep.subr.bf16.mxu0 0
      %2408 = vmatpush1.bf16.msra.mxu0 0
      %2409 = vmatprep.subr.bf16.mxu0 0
      %2410 = vmatpush1.bf16.msra.mxu0 0
      %2411 = vmatprep.subr.bf16.mxu0 0
      %2412 = vmatpush1.bf16.msra.mxu0 0
      %2413 = vmatprep.subr.bf16.mxu0 0
      %2414 = vmatpush1.bf16.msra.mxu0 0
      %2415 = vmatprep.mubr.bf16.mxu0 0
      %2416 = vmatmul.mubr.bf16.gmra.mrb[0].mxu0 %v2347
      %v2417 = vpop.f32.mrb[0].mxu0
      %v2418 = vadd.f32 %v2317, %v2417
      %v2419 = vpop.f32.mrb[0].mxu0
      %v2420 = vpop.f32.mrb[0].mxu0
      %v2421 = vadd.f32 %v2317, %v2420
      %v2422 = vpop.f32.mrb[0].mxu0
      %2423 = vmatprep.mubr.bf16.mxu0 0
      %2424 = vmatmul.mubr.bf16.gmra.mrb[0].mxu0 %v2349
      %v2425 = vpop.f32.mrb[0].mxu0
      %v2426 = vadd.f32 %v2317, %v2425
      %v2427 = vpop.f32.mrb[0].mxu0
      %v2428 = vpop.f32.mrb[0].mxu0
      %v2429 = vadd.f32 %v2317, %v2428
      %v2430 = vpop.f32.mrb[0].mxu0
      %2431 = vmatprep.mubr.bf16.mxu0 0
      %2432 = vmatmul.mubr.bf16.gmra.mrb[0].mxu0 %v2351
      %v2433 = vpop.f32.mrb[0].mxu0
      %v2434 = vadd.f32 %v2317, %v2433
      %v2435 = vpop.f32.mrb[0].mxu0
      %v2436 = vpop.f32.mrb[0].mxu0
      %v2437 = vadd.f32 %v2317, %v2436
      %v2438 = vpop.f32.mrb[0].mxu0
      %2439 = vmatprep.mubr.bf16.mxu0 0
      %2440 = vmatmul.mubr.bf16.gmra.mrb[0].mxu0 %v2353
      %v2441 = vpop.f32.mrb[0].mxu0
      %v2442 = vadd.f32 %v2317, %v2441
      %v2443 = vpop.f32.mrb[0].mxu0
      %v2444 = vpop.f32.mrb[0].mxu0
      %v2445 = vadd.f32 %v2317, %v2444
      %v2446 = vpop.f32.mrb[0].mxu0
      %2447 = vmatprep.mubr.bf16.mxu0 0
      %2448 = vmatmul.mubr.bf16.gmra.mrb[0].mxu0 %v2355
      %v2449 = vpop.f32.mrb[0].mxu0
      %v2450 = vadd.f32 %v2317, %v2449
      %v2451 = vpop.f32.mrb[0].mxu0
      %v2452 = vpop.f32.mrb[0].mxu0
      %v2453 = vadd.f32 %v2317, %v2452
      %v2454 = vpop.f32.mrb[0].mxu0
      %2455 = vmatprep.mubr.bf16.mxu0 0
      %2456 = vmatmul.mubr.bf16.gmra.mrb[0].mxu0 %v2357
      %v2457 = vpop.f32.mrb[0].mxu0
      %v2458 = vadd.f32 %v2317, %v2457
      %v2459 = vpop.f32.mrb[0].mxu0
      %v2460 = vpop.f32.mrb[0].mxu0
      %v2461 = vadd.f32 %v2317, %v2460
      %v2462 = vpop.f32.mrb[0].mxu0
      %2463 = vmatprep.mubr.bf16.mxu0 0
      %2464 = vmatmul.mubr.bf16.gmra.mrb[0].mxu0 %v2359
      %v2465 = vpop.f32.mrb[0].mxu0
      %v2466 = vadd.f32 %v2317, %v2465
      %v2467 = vpop.f32.mrb[0].mxu0
      %v2468 = vpop.f32.mrb[0].mxu0
      %v2469 = vadd.f32 %v2317, %v2468
      %v2470 = vpop.f32.mrb[0].mxu0
      %2471 = vmatprep.mubr.bf16.mxu0 0
      %2472 = vmatmul.mubr.bf16.gmra.mrb[0].mxu0 %v2361
      %v2473 = vpop.f32.mrb[0].mxu0
      %v2474 = vadd.f32 %v2317, %v2473
      %v2475 = vpop.f32.mrb[0].mxu0
      %v2476 = vpop.f32.mrb[0].mxu0
      %v2477 = vadd.f32 %v2317, %v2476
      %v2478 = vpop.f32.mrb[0].mxu0
      %2479 = vmatprep.mubr.bf16.mxu0 0
      %2480 = vmatmul.mubr.bf16.gmra.mrb[0].mxu0 %v2363
      %v2481 = vpop.f32.mrb[0].mxu0
      %v2482 = vadd.f32 %v2317, %v2481
      %v2483 = vpop.f32.mrb[0].mxu0
      %v2484 = vpop.f32.mrb[0].mxu0
      %v2485 = vadd.f32 %v2317, %v2484
      %v2486 = vpop.f32.mrb[0].mxu0
      %2487 = vmatprep.mubr.bf16.mxu0 0
      %2488 = vmatmul.mubr.bf16.gmra.mrb[0].mxu0 %v2365
      %v2489 = vpop.f32.mrb[0].mxu0
      %v2490 = vadd.f32 %v2317, %v2489
      %v2491 = vpop.f32.mrb[0].mxu0
      %v2492 = vpop.f32.mrb[0].mxu0
      %v2493 = vadd.f32 %v2317, %v2492
      %v2494 = vpop.f32.mrb[0].mxu0
      %2495 = vmatprep.mubr.bf16.mxu0 0
      %2496 = vmatmul.mubr.bf16.gmra.mrb[0].mxu0 %v2367
      %v2497 = vpop.f32.mrb[0].mxu0
      %v2498 = vadd.f32 %v2317, %v2497
      %v2499 = vpop.f32.mrb[0].mxu0
      %v2500 = vpop.f32.mrb[0].mxu0
      %v2501 = vadd.f32 %v2317, %v2500
      %v2502 = vpop.f32.mrb[0].mxu0
      %2503 = vmatprep.mubr.bf16.mxu0 0
      %2504 = vmatmul.mubr.bf16.gmra.mrb[0].mxu0 %v2369
      %v2505 = vpop.f32.mrb[0].mxu0
      %v2506 = vadd.f32 %v2317, %v2505
      %v2507 = vpop.f32.mrb[0].mxu0
      %v2508 = vpop.f32.mrb[0].mxu0
      %v2509 = vadd.f32 %v2317, %v2508
      %v2510 = vpop.f32.mrb[0].mxu0
      %2511 = vmatprep.mubr.bf16.mxu0 0
      %2512 = vmatmul.mubr.bf16.gmra.mrb[0].mxu0 %v2371
      %v2513 = vpop.f32.mrb[0].mxu0
      %v2514 = vadd.f32 %v2317, %v2513
      %v2515 = vpop.f32.mrb[0].mxu0
      %v2516 = vpop.f32.mrb[0].mxu0
      %v2517 = vadd.f32 %v2317, %v2516
      %v2518 = vpop.f32.mrb[0].mxu0
      %2519 = vmatprep.mubr.bf16.mxu0 0
      %2520 = vmatmul.mubr.bf16.gmra.mrb[0].mxu0 %v2373
      %v2521 = vpop.f32.mrb[0].mxu0
      %v2522 = vadd.f32 %v2317, %v2521
      %v2523 = vpop.f32.mrb[0].mxu0
      %v2524 = vpop.f32.mrb[0].mxu0
      %v2525 = vadd.f32 %v2317, %v2524
      %v2526 = vpop.f32.mrb[0].mxu0
      %2527 = vmatprep.mubr.bf16.mxu0 0
      %2528 = vmatmul.mubr.bf16.gmra.mrb[0].mxu0 %v2375
      %v2529 = vpop.f32.mrb[0].mxu0
      %v2530 = vadd.f32 %v2317, %v2529
      %v2531 = vpop.f32.mrb[0].mxu0
      %v2532 = vpop.f32.mrb[0].mxu0
      %v2533 = vadd.f32 %v2317, %v2532
      %v2534 = vpop.f32.mrb[0].mxu0
      %2535 = vmatprep.mubr.bf16.mxu0 0
      %2536 = vmatmul.mubr.bf16.gmra.mrb[0].mxu0 %v2377
      %v2537 = vpop.f32.mrb[0].mxu0
      %v2538 = vadd.f32 %v2317, %v2537
      %v2539 = vpop.f32.mrb[0].mxu0
      %v2540 = vpop.f32.mrb[0].mxu0
      %v2541 = vadd.f32 %v2317, %v2540
      %v2542 = vpop.f32.mrb[0].mxu0
      %2543 = vdwg.mxu0
      %vm2544 = vcmp.gt.f32.partialorder %v2418, 0.0
      %vm2545 = vcmp.gt.f32.partialorder %v2421, 0.0
      %vm2546 = vcmp.gt.f32.partialorder %v2426, 0.0
      %vm2547 = vcmp.gt.f32.partialorder %v2429, 0.0
      %vm2548 = vcmp.gt.f32.partialorder %v2434, 0.0
      %vm2549 = vcmp.gt.f32.partialorder %v2437, 0.0
      %vm2550 = vcmp.gt.f32.partialorder %v2442, 0.0
      %vm2551 = vcmp.gt.f32.partialorder %v2445, 0.0
      %vm2552 = vcmp.gt.f32.partialorder %v2450, 0.0
      %vm2553 = vcmp.gt.f32.partialorder %v2453, 0.0
      %vm2554 = vcmp.gt.f32.partialorder %v2458, 0.0
      %vm2555 = vcmp.gt.f32.partialorder %v2461, 0.0
      %vm2556 = vcmp.gt.f32.partialorder %v2466, 0.0
      %vm2557 = vcmp.gt.f32.partialorder %v2469, 0.0
      %vm2558 = vcmp.gt.f32.partialorder %v2474, 0.0
      %vm2559 = vcmp.gt.f32.partialorder %v2477, 0.0
      %vm2560 = vcmp.gt.f32.partialorder %v2482, 0.0
      %vm2561 = vcmp.gt.f32.partialorder %v2485, 0.0
      %vm2562 = vcmp.gt.f32.partialorder %v2490, 0.0
      %vm2563 = vcmp.gt.f32.partialorder %v2493, 0.0
      %vm2564 = vcmp.gt.f32.partialorder %v2498, 0.0
      %vm2565 = vcmp.gt.f32.partialorder %v2501, 0.0
      %vm2566 = vcmp.gt.f32.partialorder %v2506, 0.0
      %vm2567 = vcmp.gt.f32.partialorder %v2509, 0.0
      %vm2568 = vcmp.gt.f32.partialorder %v2514, 0.0
      %vm2569 = vcmp.gt.f32.partialorder %v2517, 0.0
      %vm2570 = vcmp.gt.f32.partialorder %v2522, 0.0
      %vm2571 = vcmp.gt.f32.partialorder %v2525, 0.0
      %vm2572 = vcmp.gt.f32.partialorder %v2530, 0.0
      %vm2573 = vcmp.gt.f32.partialorder %v2533, 0.0
      %vm2574 = vcmp.gt.f32.partialorder %v2538, 0.0
      %vm2575 = vcmp.gt.f32.partialorder %v2541, 0.0
      %v2576 = vmul.f32 %v2418, 0.2
      %v2577 = vmul.f32 %v2421, 0.2
      %v2578 = vmul.f32 %v2426, 0.2
      %v2579 = vmul.f32 %v2429, 0.2
      %v2580 = vmul.f32 %v2434, 0.2
      %v2581 = vmul.f32 %v2437, 0.2
      %v2582 = vmul.f32 %v2442, 0.2
      %v2583 = vmul.f32 %v2445, 0.2
      %v2584 = vmul.f32 %v2450, 0.2
      %v2585 = vmul.f32 %v2453, 0.2
      %v2586 = vmul.f32 %v2458, 0.2
      %v2587 = vmul.f32 %v2461, 0.2
      %v2588 = vmul.f32 %v2466, 0.2
      %v2589 = vmul.f32 %v2469, 0.2
      %v2590 = vmul.f32 %v2474, 0.2
      %v2591 = vmul.f32 %v2477, 0.2
      %v2592 = vmul.f32 %v2482, 0.2
      %v2593 = vmul.f32 %v2485, 0.2
      %v2594 = vmul.f32 %v2490, 0.2
      %v2595 = vmul.f32 %v2493, 0.2
      %v2596 = vmul.f32 %v2498, 0.2
      %v2597 = vmul.f32 %v2501, 0.2
      %v2598 = vmul.f32 %v2506, 0.2
      %v2599 = vmul.f32 %v2509, 0.2
      %v2600 = vmul.f32 %v2514, 0.2
      %v2601 = vmul.f32 %v2517, 0.2
      %v2602 = vmul.f32 %v2522, 0.2
      %v2603 = vmul.f32 %v2525, 0.2
      %v2604 = vmul.f32 %v2530, 0.2
      %v2605 = vmul.f32 %v2533, 0.2
      %v2606 = vmul.f32 %v2538, 0.2
      %v2607 = vmul.f32 %v2541, 0.2
      %v2608 = vsel %vm2544, %v2418, %v2576
      %v2609 = vsel %vm2545, %v2421, %v2577
      %v2610 = vsel %vm2546, %v2426, %v2578
      %v2611 = vsel %vm2547, %v2429, %v2579
      %v2612 = vsel %vm2548, %v2434, %v2580
      %v2613 = vsel %vm2549, %v2437, %v2581
      %v2614 = vsel %vm2550, %v2442, %v2582
      %v2615 = vsel %vm2551, %v2445, %v2583
      %v2616 = vsel %vm2552, %v2450, %v2584
      %v2617 = vsel %vm2553, %v2453, %v2585
      %v2618 = vsel %vm2554, %v2458, %v2586
      %v2619 = vsel %vm2555, %v2461, %v2587
      %v2620 = vsel %vm2556, %v2466, %v2588
      %v2621 = vsel %vm2557, %v2469, %v2589
      %v2622 = vsel %vm2558, %v2474, %v2590
      %v2623 = vsel %vm2559, %v2477, %v2591
      %v2624 = vsel %vm2560, %v2482, %v2592
      %v2625 = vsel %vm2561, %v2485, %v2593
      %v2626 = vsel %vm2562, %v2490, %v2594
      %v2627 = vsel %vm2563, %v2493, %v2595
      %v2628 = vsel %vm2564, %v2498, %v2596
      %v2629 = vsel %vm2565, %v2501, %v2597
      %v2630 = vsel %vm2566, %v2506, %v2598
      %v2631 = vsel %vm2567, %v2509, %v2599
      %v2632 = vsel %vm2568, %v2514, %v2600
      %v2633 = vsel %vm2569, %v2517, %v2601
      %v2634 = vsel %vm2570, %v2522, %v2602
      %v2635 = vsel %vm2571, %v2525, %v2603
      %v2636 = vsel %vm2572, %v2530, %v2604
      %v2637 = vsel %vm2573, %v2533, %v2605
      %v2638 = vsel %vm2574, %v2538, %v2606
      %v2639 = vsel %vm2575, %v2541, %v2607
      %2640 = vst.msk [vmem:[#allocation2 + $0x11] sm:$0xff] %vm1003, %v2608
      %2641 = vst.msk [vmem:[#allocation2 + $0x19] sm:$0xff] %vm1003, %v2609
      %2642 = vst.msk [vmem:[#allocation2 + $0x21] sm:$0xff] %vm1003, %v2610
      %2643 = vst.msk [vmem:[#allocation2 + $0x29] sm:$0xff] %vm1003, %v2611
      %2644 = vst.msk [vmem:[#allocation2 + $0x31] sm:$0xff] %vm1003, %v2612
      %2645 = vst.msk [vmem:[#allocation2 + $0x39] sm:$0xff] %vm1003, %v2613
      %2646 = vst.msk [vmem:[#allocation2 + $0x41] sm:$0xff] %vm1003, %v2614
      %2647 = vst.msk [vmem:[#allocation2 + $0x49] sm:$0xff] %vm1003, %v2615
      %2648 = vst.msk [vmem:[#allocation2 + $0x51] sm:$0xff] %vm1003, %v2616
      %2649 = vst.msk [vmem:[#allocation2 + $0x59] sm:$0xff] %vm1003, %v2617
      %2650 = vst.msk [vmem:[#allocation2 + $0x61] sm:$0xff] %vm1003, %v2618
      %2651 = vst.msk [vmem:[#allocation2 + $0x69] sm:$0xff] %vm1003, %v2619
      %2652 = vst.msk [vmem:[#allocation2 + $0x71] sm:$0xff] %vm1003, %v2620
      %2653 = vst.msk [vmem:[#allocation2 + $0x79] sm:$0xff] %vm1003, %v2621
      %2654 = vst.msk [vmem:[#allocation2 + $0x81] sm:$0xff] %vm1003, %v2622
      %2655 = vst.msk [vmem:[#allocation2 + $0x89] sm:$0xff] %vm1003, %v2623
      %2656 = vst.msk [vmem:[#allocation2 + $0x91] sm:$0xff] %vm1003, %v2624
      %2657 = vst.msk [vmem:[#allocation2 + $0x99] sm:$0xff] %vm1003, %v2625
      %2658 = vst.msk [vmem:[#allocation2 + $0xa1] sm:$0xff] %vm1003, %v2626
      %2659 = vst.msk [vmem:[#allocation2 + $0xa9] sm:$0xff] %vm1003, %v2627
      %2660 = vst.msk [vmem:[#allocation2 + $0xb1] sm:$0xff] %vm1003, %v2628
      %2661 = vst.msk [vmem:[#allocation2 + $0xb9] sm:$0xff] %vm1003, %v2629
      %2662 = vst.msk [vmem:[#allocation2 + $0xc1] sm:$0xff] %vm1003, %v2630
      %2663 = vst.msk [vmem:[#allocation2 + $0xc9] sm:$0xff] %vm1003, %v2631
      %2664 = vst.msk [vmem:[#allocation2 + $0xd1] sm:$0xff] %vm1003, %v2632
      %2665 = vst.msk [vmem:[#allocation2 + $0xd9] sm:$0xff] %vm1003, %v2633
      %2666 = vst.msk [vmem:[#allocation2 + $0xe1] sm:$0xff] %vm1003, %v2634
      %2667 = vst.msk [vmem:[#allocation2 + $0xe9] sm:$0xff] %vm1003, %v2635
      %2668 = vst.msk [vmem:[#allocation2 + $0xf1] sm:$0xff] %vm1003, %v2636
      %2669 = vst.msk [vmem:[#allocation2 + $0xf9] sm:$0xff] %vm1003, %v2637
      %2670 = vst.msk [vmem:[#allocation2 + $0x101] sm:$0xff] %vm1003, %v2638
      %2671 = vst.msk [vmem:[#allocation2 + $0x109] sm:$0xff] %vm1003, %v2639
      %v2672 = vld [vmem:[#allocation2] sm:$0xff]
      %v2673 = vld [vmem:[#allocation2 + $0x8] sm:$0xff]
      %v2674 = vld [vmem:[#allocation2 + $0x10] sm:$0xff]
      %v2675 = vld [vmem:[#allocation2 + $0x18] sm:$0xff]
      %v2676 = vld [vmem:[#allocation2 + $0x20] sm:$0xff]
      %v2677 = vld [vmem:[#allocation2 + $0x28] sm:$0xff]
      %v2678 = vld [vmem:[#allocation2 + $0x30] sm:$0xff]
      %v2679 = vld [vmem:[#allocation2 + $0x38] sm:$0xff]
      %v2680 = vld [vmem:[#allocation2 + $0x40] sm:$0xff]
      %v2681 = vld [vmem:[#allocation2 + $0x48] sm:$0xff]
      %v2682 = vld [vmem:[#allocation2 + $0x50] sm:$0xff]
      %v2683 = vld [vmem:[#allocation2 + $0x58] sm:$0xff]
      %v2684 = vld [vmem:[#allocation2 + $0x60] sm:$0xff]
      %v2685 = vld [vmem:[#allocation2 + $0x68] sm:$0xff]
      %v2686 = vld [vmem:[#allocation2 + $0x70] sm:$0xff]
      %v2687 = vld [vmem:[#allocation2 + $0x78] sm:$0xff]
      %v2688 = vld [vmem:[#allocation2 + $0x80] sm:$0xff]
      %v2689 = vld [vmem:[#allocation2 + $0x88] sm:$0xff]
      %v2690 = vld [vmem:[#allocation2 + $0x90] sm:$0xff]
      %v2691 = vld [vmem:[#allocation2 + $0x98] sm:$0xff]
      %v2692 = vld [vmem:[#allocation2 + $0xa0] sm:$0xff]
      %v2693 = vld [vmem:[#allocation2 + $0xa8] sm:$0xff]
      %v2694 = vld [vmem:[#allocation2 + $0xb0] sm:$0xff]
      %v2695 = vld [vmem:[#allocation2 + $0xb8] sm:$0xff]
      %v2696 = vld [vmem:[#allocation2 + $0xc0] sm:$0xff]
      %v2697 = vld [vmem:[#allocation2 + $0xc8] sm:$0xff]
      %v2698 = vld [vmem:[#allocation2 + $0xd0] sm:$0xff]
      %v2699 = vld [vmem:[#allocation2 + $0xd8] sm:$0xff]
      %v2700 = vld [vmem:[#allocation2 + $0xe0] sm:$0xff]
      %v2701 = vld [vmem:[#allocation2 + $0xe8] sm:$0xff]
      %v2702 = vld [vmem:[#allocation2 + $0xf0] sm:$0xff]
      %v2703 = vld [vmem:[#allocation2 + $0xf8] sm:$0xff]
      %v2704 = vpack.c.bf16 %v2673, %v2672
      %v2705 = vpack.c.bf16 %v2675, %v2674
      %v2706 = vpack.c.bf16 %v2677, %v2676
      %v2707 = vpack.c.bf16 %v2679, %v2678
      %v2708 = vpack.c.bf16 %v2681, %v2680
      %v2709 = vpack.c.bf16 %v2683, %v2682
      %v2710 = vpack.c.bf16 %v2685, %v2684
      %v2711 = vpack.c.bf16 %v2687, %v2686
      %v2712 = vpack.c.bf16 %v2689, %v2688
      %v2713 = vpack.c.bf16 %v2691, %v2690
      %v2714 = vpack.c.bf16 %v2693, %v2692
      %v2715 = vpack.c.bf16 %v2695, %v2694
      %v2716 = vpack.c.bf16 %v2697, %v2696
      %v2717 = vpack.c.bf16 %v2699, %v2698
      %v2718 = vpack.c.bf16 %v2701, %v2700
      %v2719 = vpack.c.bf16 %v2703, %v2702
      %v2720 = vmul.bf16 %v2704, %v875
      %v2721 = vmul.bf16 %v2705, %v876
      %v2722 = vmul.bf16 %v2706, %v877
      %v2723 = vmul.bf16 %v2707, %v878
      %v2724 = vmul.bf16 %v2708, %v879
      %v2725 = vmul.bf16 %v2709, %v880
      %v2726 = vmul.bf16 %v2710, %v881
      %v2727 = vmul.bf16 %v2711, %v882
      %v2728 = vmul.bf16 %v2712, %v883
      %v2729 = vmul.bf16 %v2713, %v884
      %v2730 = vmul.bf16 %v2714, %v885
      %v2731 = vmul.bf16 %v2715, %v886
      %v2732 = vmul.bf16 %v2716, %v887
      %v2733 = vmul.bf16 %v2717, %v888
      %v2734 = vmul.bf16 %v2718, %v889
      %v2735 = vmul.bf16 %v2719, %v890
      %v2736 = vld [vmem:[#allocation2 + $0x1] sm:$0xff]
      %v2737 = vld [vmem:[#allocation2 + $0x9] sm:$0xff]
      %v2738 = vld [vmem:[#allocation2 + $0x11] sm:$0xff]
      %v2739 = vld [vmem:[#allocation2 + $0x19] sm:$0xff]
      %v2740 = vld [vmem:[#allocation2 + $0x21] sm:$0xff]
      %v2741 = vld [vmem:[#allocation2 + $0x29] sm:$0xff]
      %v2742 = vld [vmem:[#allocation2 + $0x31] sm:$0xff]
      %v2743 = vld [vmem:[#allocation2 + $0x39] sm:$0xff]
      %v2744 = vld [vmem:[#allocation2 + $0x41] sm:$0xff]
      %v2745 = vld [vmem:[#allocation2 + $0x49] sm:$0xff]
      %v2746 = vld [vmem:[#allocation2 + $0x51] sm:$0xff]
      %v2747 = vld [vmem:[#allocation2 + $0x59] sm:$0xff]
      %v2748 = vld [vmem:[#allocation2 + $0x61] sm:$0xff]
      %v2749 = vld [vmem:[#allocation2 + $0x69] sm:$0xff]
      %v2750 = vld [vmem:[#allocation2 + $0x71] sm:$0xff]
      %v2751 = vld [vmem:[#allocation2 + $0x79] sm:$0xff]
      %v2752 = vld [vmem:[#allocation2 + $0x81] sm:$0xff]
      %v2753 = vld [vmem:[#allocation2 + $0x89] sm:$0xff]
      %v2754 = vld [vmem:[#allocation2 + $0x91] sm:$0xff]
      %v2755 = vld [vmem:[#allocation2 + $0x99] sm:$0xff]
      %v2756 = vld [vmem:[#allocation2 + $0xa1] sm:$0xff]
      %v2757 = vld [vmem:[#allocation2 + $0xa9] sm:$0xff]
      %v2758 = vld [vmem:[#allocation2 + $0xb1] sm:$0xff]
      %v2759 = vld [vmem:[#allocation2 + $0xb9] sm:$0xff]
      %v2760 = vld [vmem:[#allocation2 + $0xc1] sm:$0xff]
      %v2761 = vld [vmem:[#allocation2 + $0xc9] sm:$0xff]
      %v2762 = vld [vmem:[#allocation2 + $0xd1] sm:$0xff]
      %v2763 = vld [vmem:[#allocation2 + $0xd9] sm:$0xff]
      %v2764 = vld [vmem:[#allocation2 + $0xe1] sm:$0xff]
      %v2765 = vld [vmem:[#allocation2 + $0xe9] sm:$0xff]
      %v2766 = vld [vmem:[#allocation2 + $0xf1] sm:$0xff]
      %v2767 = vld [vmem:[#allocation2 + $0xf9] sm:$0xff]
      %v2768 = vpack.c.bf16 %v2737, %v2736
      %v2769 = vpack.c.bf16 %v2739, %v2738
      %v2770 = vpack.c.bf16 %v2741, %v2740
      %v2771 = vpack.c.bf16 %v2743, %v2742
      %v2772 = vpack.c.bf16 %v2745, %v2744
      %v2773 = vpack.c.bf16 %v2747, %v2746
      %v2774 = vpack.c.bf16 %v2749, %v2748
      %v2775 = vpack.c.bf16 %v2751, %v2750
      %v2776 = vpack.c.bf16 %v2753, %v2752
      %v2777 = vpack.c.bf16 %v2755, %v2754
      %v2778 = vpack.c.bf16 %v2757, %v2756
      %v2779 = vpack.c.bf16 %v2759, %v2758
      %v2780 = vpack.c.bf16 %v2761, %v2760
      %v2781 = vpack.c.bf16 %v2763, %v2762
      %v2782 = vpack.c.bf16 %v2765, %v2764
      %v2783 = vpack.c.bf16 %v2767, %v2766
      %v2784 = vld [vmem:[#allocation2 + $0x2] sm:$0xff]
      %v2785 = vld [vmem:[#allocation2 + $0xa] sm:$0xff]
      %v2786 = vld [vmem:[#allocation2 + $0x12] sm:$0xff]
      %v2787 = vld [vmem:[#allocation2 + $0x1a] sm:$0xff]
      %v2788 = vld [vmem:[#allocation2 + $0x22] sm:$0xff]
      %v2789 = vld [vmem:[#allocation2 + $0x2a] sm:$0xff]
      %v2790 = vld [vmem:[#allocation2 + $0x32] sm:$0xff]
      %v2791 = vld [vmem:[#allocation2 + $0x3a] sm:$0xff]
      %v2792 = vld [vmem:[#allocation2 + $0x42] sm:$0xff]
      %v2793 = vld [vmem:[#allocation2 + $0x4a] sm:$0xff]
      %v2794 = vld [vmem:[#allocation2 + $0x52] sm:$0xff]
      %v2795 = vld [vmem:[#allocation2 + $0x5a] sm:$0xff]
      %v2796 = vld [vmem:[#allocation2 + $0x62] sm:$0xff]
      %v2797 = vld [vmem:[#allocation2 + $0x6a] sm:$0xff]
      %v2798 = vld [vmem:[#allocation2 + $0x72] sm:$0xff]
      %v2799 = vld [vmem:[#allocation2 + $0x7a] sm:$0xff]
      %v2800 = vld [vmem:[#allocation2 + $0x82] sm:$0xff]
      %v2801 = vld [vmem:[#allocation2 + $0x8a] sm:$0xff]
      %v2802 = vld [vmem:[#allocation2 + $0x92] sm:$0xff]
      %v2803 = vld [vmem:[#allocation2 + $0x9a] sm:$0xff]
      %v2804 = vld [vmem:[#allocation2 + $0xa2] sm:$0xff]
      %v2805 = vld [vmem:[#allocation2 + $0xaa] sm:$0xff]
      %v2806 = vld [vmem:[#allocation2 + $0xb2] sm:$0xff]
      %v2807 = vld [vmem:[#allocation2 + $0xba] sm:$0xff]
      %v2808 = vld [vmem:[#allocation2 + $0xc2] sm:$0xff]
      %v2809 = vld [vmem:[#allocation2 + $0xca] sm:$0xff]
      %v2810 = vld [vmem:[#allocation2 + $0xd2] sm:$0xff]
      %v2811 = vld [vmem:[#allocation2 + $0xda] sm:$0xff]
      %v2812 = vld [vmem:[#allocation2 + $0xe2] sm:$0xff]
      %v2813 = vld [vmem:[#allocation2 + $0xea] sm:$0xff]
      %v2814 = vld [vmem:[#allocation2 + $0xf2] sm:$0xff]
      %v2815 = vld [vmem:[#allocation2 + $0xfa] sm:$0xff]
      %v2816 = vpack.c.bf16 %v2785, %v2784
      %v2817 = vpack.c.bf16 %v2787, %v2786
      %v2818 = vpack.c.bf16 %v2789, %v2788
      %v2819 = vpack.c.bf16 %v2791, %v2790
      %v2820 = vpack.c.bf16 %v2793, %v2792
      %v2821 = vpack.c.bf16 %v2795, %v2794
      %v2822 = vpack.c.bf16 %v2797, %v2796
      %v2823 = vpack.c.bf16 %v2799, %v2798
      %v2824 = vpack.c.bf16 %v2801, %v2800
      %v2825 = vpack.c.bf16 %v2803, %v2802
      %v2826 = vpack.c.bf16 %v2805, %v2804
      %v2827 = vpack.c.bf16 %v2807, %v2806
      %v2828 = vpack.c.bf16 %v2809, %v2808
      %v2829 = vpack.c.bf16 %v2811, %v2810
      %v2830 = vpack.c.bf16 %v2813, %v2812
      %v2831 = vpack.c.bf16 %v2815, %v2814
      %v2832 = vmul.bf16 %v2816, %v987
      %v2833 = vmul.bf16 %v2817, %v988
      %v2834 = vmul.bf16 %v2818, %v989
      %v2835 = vmul.bf16 %v2819, %v990
      %v2836 = vmul.bf16 %v2820, %v991
      %v2837 = vmul.bf16 %v2821, %v992
      %v2838 = vmul.bf16 %v2822, %v993
      %v2839 = vmul.bf16 %v2823, %v994
      %v2840 = vmul.bf16 %v2824, %v995
      %v2841 = vmul.bf16 %v2825, %v996
      %v2842 = vmul.bf16 %v2826, %v997
      %v2843 = vmul.bf16 %v2827, %v998
      %v2844 = vmul.bf16 %v2828, %v999
      %v2845 = vmul.bf16 %v2829, %v1000
      %v2846 = vmul.bf16 %v2830, %v1001
      %v2847 = vmul.bf16 %v2831, %v1002
      %v2848 = vld [vmem:[#allocation2 + $0x100] sm:$0xff]
      %v2849 = vld [vmem:[#allocation2 + $0x108] sm:$0xff]
      %v2850 = vpack.c.bf16 %v2849, %v2848
      %v2851 = vmul.bf16 %v2705, %v875
      %v2852 = vmul.bf16 %v2706, %v876
      %v2853 = vmul.bf16 %v2707, %v877
      %v2854 = vmul.bf16 %v2708, %v878
      %v2855 = vmul.bf16 %v2709, %v879
      %v2856 = vmul.bf16 %v2710, %v880
      %v2857 = vmul.bf16 %v2711, %v881
      %v2858 = vmul.bf16 %v2712, %v882
      %v2859 = vmul.bf16 %v2713, %v883
      %v2860 = vmul.bf16 %v2714, %v884
      %v2861 = vmul.bf16 %v2715, %v885
      %v2862 = vmul.bf16 %v2716, %v886
      %v2863 = vmul.bf16 %v2717, %v887
      %v2864 = vmul.bf16 %v2718, %v888
      %v2865 = vmul.bf16 %v2719, %v889
      %v2866 = vmul.bf16 %v2850, %v890
      %v2867 = vld [vmem:[#allocation2 + $0x101] sm:$0xff]
      %v2868 = vld [vmem:[#allocation2 + $0x109] sm:$0xff]
      %v2869 = vpack.c.bf16 %v2868, %v2867
      %v2870 = vld [vmem:[#allocation2 + $0x102] sm:$0xff]
      %v2871 = vld [vmem:[#allocation2 + $0x10a] sm:$0xff]
      %v2872 = vpack.c.bf16 %v2871, %v2870
      %v2873 = vmul.bf16 %v2817, %v987
      %v2874 = vmul.bf16 %v2818, %v988
      %v2875 = vmul.bf16 %v2819, %v989
      %v2876 = vmul.bf16 %v2820, %v990
      %v2877 = vmul.bf16 %v2821, %v991
      %v2878 = vmul.bf16 %v2822, %v992
      %v2879 = vmul.bf16 %v2823, %v993
      %v2880 = vmul.bf16 %v2824, %v994
      %v2881 = vmul.bf16 %v2825, %v995
      %v2882 = vmul.bf16 %v2826, %v996
      %v2883 = vmul.bf16 %v2827, %v997
      %v2884 = vmul.bf16 %v2828, %v998
      %v2885 = vmul.bf16 %v2829, %v999
      %v2886 = vmul.bf16 %v2830, %v1000
      %v2887 = vmul.bf16 %v2831, %v1001
      %v2888 = vmul.bf16 %v2872, %v1002
      %v2889 = vld [vmem:[#allocation2 + $0x110] sm:$0xff]
      %v2890 = vld [vmem:[#allocation2 + $0x118] sm:$0xff]
      %v2891 = vpack.c.bf16 %v2890, %v2889
      %v2892 = vmul.bf16 %v2706, %v875
      %v2893 = vmul.bf16 %v2707, %v876
      %v2894 = vmul.bf16 %v2708, %v877
      %v2895 = vmul.bf16 %v2709, %v878
      %v2896 = vmul.bf16 %v2710, %v879
      %v2897 = vmul.bf16 %v2711, %v880
      %v2898 = vmul.bf16 %v2712, %v881
      %v2899 = vmul.bf16 %v2713, %v882
      %v2900 = vmul.bf16 %v2714, %v883
      %v2901 = vmul.bf16 %v2715, %v884
      %v2902 = vmul.bf16 %v2716, %v885
      %v2903 = vmul.bf16 %v2717, %v886
      %v2904 = vmul.bf16 %v2718, %v887
      %v2905 = vmul.bf16 %v2719, %v888
      %v2906 = vmul.bf16 %v2850, %v889
      %v2907 = vmul.bf16 %v2891, %v890
      %v2908 = vld [vmem:[#allocation2 + $0x111] sm:$0xff]
      %v2909 = vld [vmem:[#allocation2 + $0x119] sm:$0xff]
      %v2910 = vpack.c.bf16 %v2909, %v2908
      %v2911 = vld [vmem:[#allocation2 + $0x112] sm:$0xff]
      %v2912 = vld [vmem:[#allocation2 + $0x11a] sm:$0xff]
      %v2913 = vpack.c.bf16 %v2912, %v2911
      %v2914 = vmul.bf16 %v2818, %v987
      %v2915 = vmul.bf16 %v2819, %v988
      %v2916 = vmul.bf16 %v2820, %v989
      %v2917 = vmul.bf16 %v2821, %v990
      %v2918 = vmul.bf16 %v2822, %v991
      %v2919 = vmul.bf16 %v2823, %v992
      %v2920 = vmul.bf16 %v2824, %v993
      %v2921 = vmul.bf16 %v2825, %v994
      %v2922 = vmul.bf16 %v2826, %v995
      %v2923 = vmul.bf16 %v2827, %v996
      %v2924 = vmul.bf16 %v2828, %v997
      %v2925 = vmul.bf16 %v2829, %v998
      %v2926 = vmul.bf16 %v2830, %v999
      %v2927 = vmul.bf16 %v2831, %v1000
      %v2928 = vmul.bf16 %v2872, %v1001
      %v2929 = vmul.bf16 %v2913, %v1002
      %2946 = vrot.lane.b32.xlu0 %v2768, 8
      %v2947 = vpop.permute.xlu0 %2946
      %2948 = vrot.lane.b32.xlu0 %v2769, 8
      %v2949 = vpop.permute.xlu0 %2948
      %2950 = vrot.lane.b32.xlu0 %v2770, 8
      %v2951 = vpop.permute.xlu0 %2950
      %2952 = vrot.lane.b32.xlu0 %v2771, 8
      %v2953 = vpop.permute.xlu0 %2952
      %2954 = vrot.lane.b32.xlu0 %v2772, 8
      %v2955 = vpop.permute.xlu0 %2954
      %2956 = vrot.lane.b32.xlu0 %v2773, 8
      %v2957 = vpop.permute.xlu0 %2956
      %2958 = vrot.lane.b32.xlu0 %v2774, 8
      %v2959 = vpop.permute.xlu0 %2958
      %2960 = vrot.lane.b32.xlu0 %v2775, 8
      %v2961 = vpop.permute.xlu0 %2960
      %2962 = vrot.lane.b32.xlu0 %v2776, 8
      %v2963 = vpop.permute.xlu0 %2962
      %2964 = vrot.lane.b32.xlu0 %v2777, 8
      %v2965 = vpop.permute.xlu0 %2964
      %2966 = vrot.lane.b32.xlu0 %v2778, 8
      %v2967 = vpop.permute.xlu0 %2966
      %2968 = vrot.lane.b32.xlu0 %v2779, 8
      %v2969 = vpop.permute.xlu0 %2968
      %2970 = vrot.lane.b32.xlu0 %v2780, 8
      %v2971 = vpop.permute.xlu0 %2970
      %2972 = vrot.lane.b32.xlu0 %v2781, 8
      %v2973 = vpop.permute.xlu0 %2972
      %2974 = vrot.lane.b32.xlu0 %v2782, 8
      %v2975 = vpop.permute.xlu0 %2974
      %2976 = vrot.lane.b32.xlu0 %v2783, 8
      %v2977 = vpop.permute.xlu0 %2976
      %2994 = vrot.lane.b32.xlu0 %v2832, 16
      %v2995 = vpop.permute.xlu0 %2994
      %2996 = vrot.lane.b32.xlu0 %v2833, 16
      %v2997 = vpop.permute.xlu0 %2996
      %2998 = vrot.lane.b32.xlu0 %v2834, 16
      %v2999 = vpop.permute.xlu0 %2998
      %3000 = vrot.lane.b32.xlu0 %v2835, 16
      %v3001 = vpop.permute.xlu0 %3000
      %3002 = vrot.lane.b32.xlu0 %v2836, 16
      %v3003 = vpop.permute.xlu0 %3002
      %3004 = vrot.lane.b32.xlu0 %v2837, 16
      %v3005 = vpop.permute.xlu0 %3004
      %3006 = vrot.lane.b32.xlu0 %v2838, 16
      %v3007 = vpop.permute.xlu0 %3006
      %3008 = vrot.lane.b32.xlu0 %v2839, 16
      %v3009 = vpop.permute.xlu0 %3008
      %3010 = vrot.lane.b32.xlu0 %v2840, 16
      %v3011 = vpop.permute.xlu0 %3010
      %3012 = vrot.lane.b32.xlu0 %v2841, 16
      %v3013 = vpop.permute.xlu0 %3012
      %3014 = vrot.lane.b32.xlu0 %v2842, 16
      %v3015 = vpop.permute.xlu0 %3014
      %3016 = vrot.lane.b32.xlu0 %v2843, 16
      %v3017 = vpop.permute.xlu0 %3016
      %3018 = vrot.lane.b32.xlu0 %v2844, 16
      %v3019 = vpop.permute.xlu0 %3018
      %3020 = vrot.lane.b32.xlu0 %v2845, 16
      %v3021 = vpop.permute.xlu0 %3020
      %3022 = vrot.lane.b32.xlu0 %v2846, 16
      %v3023 = vpop.permute.xlu0 %3022
      %3024 = vrot.lane.b32.xlu0 %v2847, 16
      %v3025 = vpop.permute.xlu0 %3024
      %3042 = vrot.lane.b32.xlu0 %v2851, 24
      %v3043 = vpop.permute.xlu0 %3042
      %3044 = vrot.lane.b32.xlu0 %v2852, 24
      %v3045 = vpop.permute.xlu0 %3044
      %3046 = vrot.lane.b32.xlu0 %v2853, 24
      %v3047 = vpop.permute.xlu0 %3046
      %3048 = vrot.lane.b32.xlu0 %v2854, 24
      %v3049 = vpop.permute.xlu0 %3048
      %3050 = vrot.lane.b32.xlu0 %v2855, 24
      %v3051 = vpop.permute.xlu0 %3050
      %3052 = vrot.lane.b32.xlu0 %v2856, 24
      %v3053 = vpop.permute.xlu0 %3052
      %3054 = vrot.lane.b32.xlu0 %v2857, 24
      %v3055 = vpop.permute.xlu0 %3054
      %3056 = vrot.lane.b32.xlu0 %v2858, 24
      %v3057 = vpop.permute.xlu0 %3056
      %3058 = vrot.lane.b32.xlu0 %v2859, 24
      %v3059 = vpop.permute.xlu0 %3058
      %3060 = vrot.lane.b32.xlu0 %v2860, 24
      %v3061 = vpop.permute.xlu0 %3060
      %3062 = vrot.lane.b32.xlu0 %v2861, 24
      %v3063 = vpop.permute.xlu0 %3062
      %3064 = vrot.lane.b32.xlu0 %v2862, 24
      %v3065 = vpop.permute.xlu0 %3064
      %3066 = vrot.lane.b32.xlu0 %v2863, 24
      %v3067 = vpop.permute.xlu0 %3066
      %3068 = vrot.lane.b32.xlu0 %v2864, 24
      %v3069 = vpop.permute.xlu0 %3068
      %3070 = vrot.lane.b32.xlu0 %v2865, 24
      %v3071 = vpop.permute.xlu0 %3070
      %3072 = vrot.lane.b32.xlu0 %v2866, 24
      %v3073 = vpop.permute.xlu0 %3072
      %3075 = vrot.lane.b32.xlu0 %v2769, 32
      %v3076 = vpop.permute.xlu0 %3075
      %3077 = vrot.lane.b32.xlu0 %v2770, 32
      %v3078 = vpop.permute.xlu0 %3077
      %3079 = vrot.lane.b32.xlu0 %v2771, 32
      %v3080 = vpop.permute.xlu0 %3079
      %3081 = vrot.lane.b32.xlu0 %v2772, 32
      %v3082 = vpop.permute.xlu0 %3081
      %3083 = vrot.lane.b32.xlu0 %v2773, 32
      %v3084 = vpop.permute.xlu0 %3083
      %3085 = vrot.lane.b32.xlu0 %v2774, 32
      %v3086 = vpop.permute.xlu0 %3085
      %3087 = vrot.lane.b32.xlu0 %v2775, 32
      %v3088 = vpop.permute.xlu0 %3087
      %3089 = vrot.lane.b32.xlu0 %v2776, 32
      %v3090 = vpop.permute.xlu0 %3089
      %3091 = vrot.lane.b32.xlu0 %v2777, 32
      %v3092 = vpop.permute.xlu0 %3091
      %3093 = vrot.lane.b32.xlu0 %v2778, 32
      %v3094 = vpop.permute.xlu0 %3093
      %3095 = vrot.lane.b32.xlu0 %v2779, 32
      %v3096 = vpop.permute.xlu0 %3095
      %3097 = vrot.lane.b32.xlu0 %v2780, 32
      %v3098 = vpop.permute.xlu0 %3097
      %3099 = vrot.lane.b32.xlu0 %v2781, 32
      %v3100 = vpop.permute.xlu0 %3099
      %3101 = vrot.lane.b32.xlu0 %v2782, 32
      %v3102 = vpop.permute.xlu0 %3101
      %3103 = vrot.lane.b32.xlu0 %v2783, 32
      %v3104 = vpop.permute.xlu0 %3103
      %3105 = vrot.lane.b32.xlu0 %v2869, 32
      %v3106 = vpop.permute.xlu0 %3105
      %3123 = vrot.lane.b32.xlu0 %v2873, 40
      %v3124 = vpop.permute.xlu0 %3123
      %3125 = vrot.lane.b32.xlu0 %v2874, 40
      %v3126 = vpop.permute.xlu0 %3125
      %3127 = vrot.lane.b32.xlu0 %v2875, 40
      %v3128 = vpop.permute.xlu0 %3127
      %3129 = vrot.lane.b32.xlu0 %v2876, 40
      %v3130 = vpop.permute.xlu0 %3129
      %3131 = vrot.lane.b32.xlu0 %v2877, 40
      %v3132 = vpop.permute.xlu0 %3131
      %3133 = vrot.lane.b32.xlu0 %v2878, 40
      %v3134 = vpop.permute.xlu0 %3133
      %3135 = vrot.lane.b32.xlu0 %v2879, 40
      %v3136 = vpop.permute.xlu0 %3135
      %3137 = vrot.lane.b32.xlu0 %v2880, 40
      %v3138 = vpop.permute.xlu0 %3137
      %3139 = vrot.lane.b32.xlu0 %v2881, 40
      %v3140 = vpop.permute.xlu0 %3139
      %3141 = vrot.lane.b32.xlu0 %v2882, 40
      %v3142 = vpop.permute.xlu0 %3141
      %3143 = vrot.lane.b32.xlu0 %v2883, 40
      %v3144 = vpop.permute.xlu0 %3143
      %3145 = vrot.lane.b32.xlu0 %v2884, 40
      %v3146 = vpop.permute.xlu0 %3145
      %3147 = vrot.lane.b32.xlu0 %v2885, 40
      %v3148 = vpop.permute.xlu0 %3147
      %3149 = vrot.lane.b32.xlu0 %v2886, 40
      %v3150 = vpop.permute.xlu0 %3149
      %3151 = vrot.lane.b32.xlu0 %v2887, 40
      %v3152 = vpop.permute.xlu0 %3151
      %3153 = vrot.lane.b32.xlu0 %v2888, 40
      %v3154 = vpop.permute.xlu0 %3153
      %3171 = vrot.lane.b32.xlu0 %v2892, 48
      %v3172 = vpop.permute.xlu0 %3171
      %3173 = vrot.lane.b32.xlu0 %v2893, 48
      %v3174 = vpop.permute.xlu0 %3173
      %3175 = vrot.lane.b32.xlu0 %v2894, 48
      %v3176 = vpop.permute.xlu0 %3175
      %3177 = vrot.lane.b32.xlu0 %v2895, 48
      %v3178 = vpop.permute.xlu0 %3177
      %3179 = vrot.lane.b32.xlu0 %v2896, 48
      %v3180 = vpop.permute.xlu0 %3179
      %3181 = vrot.lane.b32.xlu0 %v2897, 48
      %v3182 = vpop.permute.xlu0 %3181
      %3183 = vrot.lane.b32.xlu0 %v2898, 48
      %v3184 = vpop.permute.xlu0 %3183
      %3185 = vrot.lane.b32.xlu0 %v2899, 48
      %v3186 = vpop.permute.xlu0 %3185
      %3187 = vrot.lane.b32.xlu0 %v2900, 48
      %v3188 = vpop.permute.xlu0 %3187
      %3189 = vrot.lane.b32.xlu0 %v2901, 48
      %v3190 = vpop.permute.xlu0 %3189
      %3191 = vrot.lane.b32.xlu0 %v2902, 48
      %v3192 = vpop.permute.xlu0 %3191
      %3193 = vrot.lane.b32.xlu0 %v2903, 48
      %v3194 = vpop.permute.xlu0 %3193
      %3195 = vrot.lane.b32.xlu0 %v2904, 48
      %v3196 = vpop.permute.xlu0 %3195
      %3197 = vrot.lane.b32.xlu0 %v2905, 48
      %v3198 = vpop.permute.xlu0 %3197
      %3199 = vrot.lane.b32.xlu0 %v2906, 48
      %v3200 = vpop.permute.xlu0 %3199
      %3201 = vrot.lane.b32.xlu0 %v2907, 48
      %v3202 = vpop.permute.xlu0 %3201
      %3204 = vrot.lane.b32.xlu0 %v2770, 56
      %v3205 = vpop.permute.xlu0 %3204
      %3206 = vrot.lane.b32.xlu0 %v2771, 56
      %v3207 = vpop.permute.xlu0 %3206
      %3208 = vrot.lane.b32.xlu0 %v2772, 56
      %v3209 = vpop.permute.xlu0 %3208
      %3210 = vrot.lane.b32.xlu0 %v2773, 56
      %v3211 = vpop.permute.xlu0 %3210
      %3212 = vrot.lane.b32.xlu0 %v2774, 56
      %v3213 = vpop.permute.xlu0 %3212
      %3214 = vrot.lane.b32.xlu0 %v2775, 56
      %v3215 = vpop.permute.xlu0 %3214
      %3216 = vrot.lane.b32.xlu0 %v2776, 56
      %v3217 = vpop.permute.xlu0 %3216
      %3218 = vrot.lane.b32.xlu0 %v2777, 56
      %v3219 = vpop.permute.xlu0 %3218
      %3220 = vrot.lane.b32.xlu0 %v2778, 56
      %v3221 = vpop.permute.xlu0 %3220
      %3222 = vrot.lane.b32.xlu0 %v2779, 56
      %v3223 = vpop.permute.xlu0 %3222
      %3224 = vrot.lane.b32.xlu0 %v2780, 56
      %v3225 = vpop.permute.xlu0 %3224
      %3226 = vrot.lane.b32.xlu0 %v2781, 56
      %v3227 = vpop.permute.xlu0 %3226
      %3228 = vrot.lane.b32.xlu0 %v2782, 56
      %v3229 = vpop.permute.xlu0 %3228
      %3230 = vrot.lane.b32.xlu0 %v2783, 56
      %v3231 = vpop.permute.xlu0 %3230
      %3232 = vrot.lane.b32.xlu0 %v2869, 56
      %v3233 = vpop.permute.xlu0 %3232
      %3234 = vrot.lane.b32.xlu0 %v2910, 56
      %v3235 = vpop.permute.xlu0 %3234
      %3252 = vrot.lane.b32.xlu0 %v2914, 64
      %v3253 = vpop.permute.xlu0 %3252
      %3254 = vrot.lane.b32.xlu0 %v2915, 64
      %v3255 = vpop.permute.xlu0 %3254
      %3256 = vrot.lane.b32.xlu0 %v2916, 64
      %v3257 = vpop.permute.xlu0 %3256
      %3258 = vrot.lane.b32.xlu0 %v2917, 64
      %v3259 = vpop.permute.xlu0 %3258
      %3260 = vrot.lane.b32.xlu0 %v2918, 64
      %v3261 = vpop.permute.xlu0 %3260
      %3262 = vrot.lane.b32.xlu0 %v2919, 64
      %v3263 = vpop.permute.xlu0 %3262
      %3264 = vrot.lane.b32.xlu0 %v2920, 64
      %v3265 = vpop.permute.xlu0 %3264
      %3266 = vrot.lane.b32.xlu0 %v2921, 64
      %v3267 = vpop.permute.xlu0 %3266
      %3268 = vrot.lane.b32.xlu0 %v2922, 64
      %v3269 = vpop.permute.xlu0 %3268
      %3270 = vrot.lane.b32.xlu0 %v2923, 64
      %v3271 = vpop.permute.xlu0 %3270
      %3272 = vrot.lane.b32.xlu0 %v2924, 64
      %v3273 = vpop.permute.xlu0 %3272
      %3274 = vrot.lane.b32.xlu0 %v2925, 64
      %v3275 = vpop.permute.xlu0 %3274
      %3276 = vrot.lane.b32.xlu0 %v2926, 64
      %v3277 = vpop.permute.xlu0 %3276
      %3278 = vrot.lane.b32.xlu0 %v2927, 64
      %v3279 = vpop.permute.xlu0 %3278
      %3280 = vrot.lane.b32.xlu0 %v2928, 64
      %v3281 = vpop.permute.xlu0 %3280
      %3282 = vrot.lane.b32.xlu0 %v2929, 64
      %v3283 = vpop.permute.xlu0 %3282
      %v3286 = vsel %vm1003, %v2720, %v2947
      %v3289 = vsel %vm1003, %v2721, %v2949
      %v3292 = vsel %vm1003, %v2722, %v2951
      %v3295 = vsel %vm1003, %v2723, %v2953
      %v3298 = vsel %vm1003, %v2724, %v2955
      %v3301 = vsel %vm1003, %v2725, %v2957
      %v3304 = vsel %vm1003, %v2726, %v2959
      %v3307 = vsel %vm1003, %v2727, %v2961
      %v3310 = vsel %vm1003, %v2728, %v2963
      %v3313 = vsel %vm1003, %v2729, %v2965
      %v3316 = vsel %vm1003, %v2730, %v2967
      %v3319 = vsel %vm1003, %v2731, %v2969
      %v3322 = vsel %vm1003, %v2732, %v2971
      %v3325 = vsel %vm1003, %v2733, %v2973
      %v3328 = vsel %vm1003, %v2734, %v2975
      %v3331 = vsel %vm1003, %v2735, %v2977
      %v3333 = vsel %vm2072, %v3286, %v2995
      %v3335 = vsel %vm2072, %v3289, %v2997
      %v3337 = vsel %vm2072, %v3292, %v2999
      %v3339 = vsel %vm2072, %v3295, %v3001
      %v3341 = vsel %vm2072, %v3298, %v3003
      %v3343 = vsel %vm2072, %v3301, %v3005
      %v3345 = vsel %vm2072, %v3304, %v3007
      %v3347 = vsel %vm2072, %v3307, %v3009
      %v3349 = vsel %vm2072, %v3310, %v3011
      %v3351 = vsel %vm2072, %v3313, %v3013
      %v3353 = vsel %vm2072, %v3316, %v3015
      %v3355 = vsel %vm2072, %v3319, %v3017
      %v3357 = vsel %vm2072, %v3322, %v3019
      %v3359 = vsel %vm2072, %v3325, %v3021
      %v3361 = vsel %vm2072, %v3328, %v3023
      %v3363 = vsel %vm2072, %v3331, %v3025
      %v3365 = vsel %vm2105, %v3333, %v3043
      %v3367 = vsel %vm2105, %v3335, %v3045
      %v3369 = vsel %vm2105, %v3337, %v3047
      %v3371 = vsel %vm2105, %v3339, %v3049
      %v3373 = vsel %vm2105, %v3341, %v3051
      %v3375 = vsel %vm2105, %v3343, %v3053
      %v3377 = vsel %vm2105, %v3345, %v3055
      %v3379 = vsel %vm2105, %v3347, %v3057
      %v3381 = vsel %vm2105, %v3349, %v3059
      %v3383 = vsel %vm2105, %v3351, %v3061
      %v3385 = vsel %vm2105, %v3353, %v3063
      %v3387 = vsel %vm2105, %v3355, %v3065
      %v3389 = vsel %vm2105, %v3357, %v3067
      %v3391 = vsel %vm2105, %v3359, %v3069
      %v3393 = vsel %vm2105, %v3361, %v3071
      %v3395 = vsel %vm2105, %v3363, %v3073
      %v3397 = vsel %vm2138, %v3365, %v3076
      %v3399 = vsel %vm2138, %v3367, %v3078
      %v3401 = vsel %vm2138, %v3369, %v3080
      %v3403 = vsel %vm2138, %v3371, %v3082
      %v3405 = vsel %vm2138, %v3373, %v3084
      %v3407 = vsel %vm2138, %v3375, %v3086
      %v3409 = vsel %vm2138, %v3377, %v3088
      %v3411 = vsel %vm2138, %v3379, %v3090
      %v3413 = vsel %vm2138, %v3381, %v3092
      %v3415 = vsel %vm2138, %v3383, %v3094
      %v3417 = vsel %vm2138, %v3385, %v3096
      %v3419 = vsel %vm2138, %v3387, %v3098
      %v3421 = vsel %vm2138, %v3389, %v3100
      %v3423 = vsel %vm2138, %v3391, %v3102
      %v3425 = vsel %vm2138, %v3393, %v3104
      %v3427 = vsel %vm2138, %v3395, %v3106
      %v3429 = vsel %vm2171, %v3397, %v3124
      %v3431 = vsel %vm2171, %v3399, %v3126
      %v3433 = vsel %vm2171, %v3401, %v3128
      %v3435 = vsel %vm2171, %v3403, %v3130
      %v3437 = vsel %vm2171, %v3405, %v3132
      %v3439 = vsel %vm2171, %v3407, %v3134
      %v3441 = vsel %vm2171, %v3409, %v3136
      %v3443 = vsel %vm2171, %v3411, %v3138
      %v3445 = vsel %vm2171, %v3413, %v3140
      %v3447 = vsel %vm2171, %v3415, %v3142
      %v3449 = vsel %vm2171, %v3417, %v3144
      %v3451 = vsel %vm2171, %v3419, %v3146
      %v3453 = vsel %vm2171, %v3421, %v3148
      %v3455 = vsel %vm2171, %v3423, %v3150
      %v3457 = vsel %vm2171, %v3425, %v3152
      %v3459 = vsel %vm2171, %v3427, %v3154
      %v3461 = vsel %vm2204, %v3429, %v3172
      %v3463 = vsel %vm2204, %v3431, %v3174
      %v3465 = vsel %vm2204, %v3433, %v3176
      %v3467 = vsel %vm2204, %v3435, %v3178
      %v3469 = vsel %vm2204, %v3437, %v3180
      %v3471 = vsel %vm2204, %v3439, %v3182
      %v3473 = vsel %vm2204, %v3441, %v3184
      %v3475 = vsel %vm2204, %v3443, %v3186
      %v3477 = vsel %vm2204, %v3445, %v3188
      %v3479 = vsel %vm2204, %v3447, %v3190
      %v3481 = vsel %vm2204, %v3449, %v3192
      %v3483 = vsel %vm2204, %v3451, %v3194
      %v3485 = vsel %vm2204, %v3453, %v3196
      %v3487 = vsel %vm2204, %v3455, %v3198
      %v3489 = vsel %vm2204, %v3457, %v3200
      %v3491 = vsel %vm2204, %v3459, %v3202
      %v3493 = vsel %vm2237, %v3461, %v3205
      %v3495 = vsel %vm2237, %v3463, %v3207
      %v3497 = vsel %vm2237, %v3465, %v3209
      %v3499 = vsel %vm2237, %v3467, %v3211
      %v3501 = vsel %vm2237, %v3469, %v3213
      %v3503 = vsel %vm2237, %v3471, %v3215
      %v3505 = vsel %vm2237, %v3473, %v3217
      %v3507 = vsel %vm2237, %v3475, %v3219
      %v3509 = vsel %vm2237, %v3477, %v3221
      %v3511 = vsel %vm2237, %v3479, %v3223
      %v3513 = vsel %vm2237, %v3481, %v3225
      %v3515 = vsel %vm2237, %v3483, %v3227
      %v3517 = vsel %vm2237, %v3485, %v3229
      %v3519 = vsel %vm2237, %v3487, %v3231
      %v3521 = vsel %vm2237, %v3489, %v3233
      %v3523 = vsel %vm2237, %v3491, %v3235
      %v3525 = vsel %vm2270, %v3493, %v3253
      %v3527 = vsel %vm2270, %v3495, %v3255
      %v3529 = vsel %vm2270, %v3497, %v3257
      %v3531 = vsel %vm2270, %v3499, %v3259
      %v3533 = vsel %vm2270, %v3501, %v3261
      %v3535 = vsel %vm2270, %v3503, %v3263
      %v3537 = vsel %vm2270, %v3505, %v3265
      %v3539 = vsel %vm2270, %v3507, %v3267
      %v3541 = vsel %vm2270, %v3509, %v3269
      %v3543 = vsel %vm2270, %v3511, %v3271
      %v3545 = vsel %vm2270, %v3513, %v3273
      %v3547 = vsel %vm2270, %v3515, %v3275
      %v3549 = vsel %vm2270, %v3517, %v3277
      %v3551 = vsel %vm2270, %v3519, %v3279
      %v3553 = vsel %vm2270, %v3521, %v3281
      %v3555 = vsel %vm2270, %v3523, %v3283
      %v3556 = vld [vmem:[%s8] sm:$0xf]
      %v3557 = vld [vmem:[%s8 + $0x4] sm:$0xf]
      %v3558 = vld [vmem:[%s8 + $0x8] sm:$0xf]
      %v3559 = vld [vmem:[%s8 + $0xc] sm:$0xf]
      %v3560 = vld [vmem:[%s8 + $0x10] sm:$0xf]
      %v3561 = vld [vmem:[%s8 + $0x14] sm:$0xf]
      %v3562 = vld [vmem:[%s8 + $0x18] sm:$0xf]
      %v3563 = vld [vmem:[%s8 + $0x1c] sm:$0xf]
      %v3564 = vld [vmem:[%s8 + $0x20] sm:$0xf]
      %v3565 = vld [vmem:[%s9] sm:$0x1]
      %v3567 = vlaneseq
      %v3568 = vshrl.u32 %v3567, 7
      %v3569 = vsub.s32 0, %v3568
      %v3570 = vrot.slane %v3565, %v3569
      %v3581 = vunpack.c.l.b16 %v3556
      %v3582 = vunpack.c.l.b16 %v3557
      %v3583 = vunpack.c.l.b16 %v3558
      %v3584 = vunpack.c.l.b16 %v3559
      %v3585 = vunpack.c.l.b16 %v3560
      %v3586 = vunpack.c.l.b16 %v3561
      %v3587 = vunpack.c.l.b16 %v3562
      %v3588 = vunpack.c.l.b16 %v3563
      %v3589 = vunpack.c.l.b16 %v3564
      %v3590 = vpack.c.b16 %v3582, %v3581
      %v3591 = vpack.c.b16 %v3584, %v3583
      %v3592 = vpack.c.b16 %v3586, %v3585
      %v3593 = vpack.c.b16 %v3588, %v3587
      %v3594 = vpack.c.b16 %v3589, %v3589
      %v3599 = vsel %vm2346, %v3525, 0
      %v3601 = vsel %vm2346, %v3527, 0
      %v3603 = vsel %vm2346, %v3529, 0
      %v3605 = vsel %vm2346, %v3531, 0
      %v3607 = vsel %vm2346, %v3533, 0
      %v3609 = vsel %vm2346, %v3535, 0
      %v3611 = vsel %vm2346, %v3537, 0
      %v3613 = vsel %vm2346, %v3539, 0
      %v3615 = vsel %vm2346, %v3541, 0
      %v3617 = vsel %vm2346, %v3543, 0
      %v3619 = vsel %vm2346, %v3545, 0
      %v3621 = vsel %vm2346, %v3547, 0
      %v3623 = vsel %vm2346, %v3549, 0
      %v3625 = vsel %vm2346, %v3551, 0
      %v3627 = vsel %vm2346, %v3553, 0
      %v3629 = vsel %vm2346, %v3555, 0
      %v3632 = vsel %vm2379, %v3594, 0
      %3634 = vmatprep.subr.bf16.mxu0 0
      %3635 = vmatpush1.bf16.msra.mxu0 %v3590
      %3636 = vmatprep.subr.bf16.mxu0 0
      %3637 = vmatpush1.bf16.msra.mxu0 %v3591
      %3638 = vmatprep.subr.bf16.mxu0 0
      %3639 = vmatpush1.bf16.msra.mxu0 %v3592
      %3640 = vmatprep.subr.bf16.mxu0 0
      %3641 = vmatpush1.bf16.msra.mxu0 %v3593
      %3642 = vmatprep.subr.bf16.mxu0 0
      %3643 = vmatpush1.bf16.msra.mxu0 %v3632
      %3644 = vmatprep.subr.bf16.mxu0 0
      %3645 = vmatpush1.bf16.msra.mxu0 0
      %3646 = vmatprep.subr.bf16.mxu0 0
      %3647 = vmatpush1.bf16.msra.mxu0 0
      %3648 = vmatprep.subr.bf16.mxu0 0
      %3649 = vmatpush1.bf16.msra.mxu0 0
      %3650 = vmatprep.subr.bf16.mxu0 0
      %3651 = vmatpush1.bf16.msra.mxu0 0
      %3652 = vmatprep.subr.bf16.mxu0 0
      %3653 = vmatpush1.bf16.msra.mxu0 0
      %3654 = vmatprep.subr.bf16.mxu0 0
      %3655 = vmatpush1.bf16.msra.mxu0 0
      %3656 = vmatprep.subr.bf16.mxu0 0
      %3657 = vmatpush1.bf16.msra.mxu0 0
      %3658 = vmatprep.subr.bf16.mxu0 0
      %3659 = vmatpush1.bf16.msra.mxu0 0
      %3660 = vmatprep.subr.bf16.mxu0 0
      %3661 = vmatpush1.bf16.msra.mxu0 0
      %3662 = vmatprep.subr.bf16.mxu0 0
      %3663 = vmatpush1.bf16.msra.mxu0 0
      %3664 = vmatprep.subr.bf16.mxu0 0
      %3665 = vmatpush1.bf16.msra.mxu0 0
      %3666 = vmatprep.mubr.bf16.mxu0 0
      %3667 = vmatmul.mubr.bf16.gmra.mrb[0].mxu0 %v3599
      %v3668 = vpop.f32.mrb[0].mxu0
      %v3669 = vadd.f32 %v3570, %v3668
      %v3670 = vpop.f32.mrb[0].mxu0
      %v3671 = vpop.f32.mrb[0].mxu0
      %v3672 = vadd.f32 %v3570, %v3671
      %v3673 = vpop.f32.mrb[0].mxu0
      %3674 = vmatprep.mubr.bf16.mxu0 0
      %3675 = vmatmul.mubr.bf16.gmra.mrb[0].mxu0 %v3601
      %v3676 = vpop.f32.mrb[0].mxu0
      %v3677 = vadd.f32 %v3570, %v3676
      %v3678 = vpop.f32.mrb[0].mxu0
      %v3679 = vpop.f32.mrb[0].mxu0
      %v3680 = vadd.f32 %v3570, %v3679
      %v3681 = vpop.f32.mrb[0].mxu0
      %3682 = vmatprep.mubr.bf16.mxu0 0
      %3683 = vmatmul.mubr.bf16.gmra.mrb[0].mxu0 %v3603
      %v3684 = vpop.f32.mrb[0].mxu0
      %v3685 = vadd.f32 %v3570, %v3684
      %v3686 = vpop.f32.mrb[0].mxu0
      %v3687 = vpop.f32.mrb[0].mxu0
      %v3688 = vadd.f32 %v3570, %v3687
      %v3689 = vpop.f32.mrb[0].mxu0
      %3690 = vmatprep.mubr.bf16.mxu0 0
      %3691 = vmatmul.mubr.bf16.gmra.mrb[0].mxu0 %v3605
      %v3692 = vpop.f32.mrb[0].mxu0
      %v3693 = vadd.f32 %v3570, %v3692
      %v3694 = vpop.f32.mrb[0].mxu0
      %v3695 = vpop.f32.mrb[0].mxu0
      %v3696 = vadd.f32 %v3570, %v3695
      %v3697 = vpop.f32.mrb[0].mxu0
      %3698 = vmatprep.mubr.bf16.mxu0 0
      %3699 = vmatmul.mubr.bf16.gmra.mrb[0].mxu0 %v3607
      %v3700 = vpop.f32.mrb[0].mxu0
      %v3701 = vadd.f32 %v3570, %v3700
      %v3702 = vpop.f32.mrb[0].mxu0
      %v3703 = vpop.f32.mrb[0].mxu0
      %v3704 = vadd.f32 %v3570, %v3703
      %v3705 = vpop.f32.mrb[0].mxu0
      %3706 = vmatprep.mubr.bf16.mxu0 0
      %3707 = vmatmul.mubr.bf16.gmra.mrb[0].mxu0 %v3609
      %v3708 = vpop.f32.mrb[0].mxu0
      %v3709 = vadd.f32 %v3570, %v3708
      %v3710 = vpop.f32.mrb[0].mxu0
      %v3711 = vpop.f32.mrb[0].mxu0
      %v3712 = vadd.f32 %v3570, %v3711
      %v3713 = vpop.f32.mrb[0].mxu0
      %3714 = vmatprep.mubr.bf16.mxu0 0
      %3715 = vmatmul.mubr.bf16.gmra.mrb[0].mxu0 %v3611
      %v3716 = vpop.f32.mrb[0].mxu0
      %v3717 = vadd.f32 %v3570, %v3716
      %v3718 = vpop.f32.mrb[0].mxu0
      %v3719 = vpop.f32.mrb[0].mxu0
      %v3720 = vadd.f32 %v3570, %v3719
      %v3721 = vpop.f32.mrb[0].mxu0
      %3722 = vmatprep.mubr.bf16.mxu0 0
      %3723 = vmatmul.mubr.bf16.gmra.mrb[0].mxu0 %v3613
      %v3724 = vpop.f32.mrb[0].mxu0
      %v3725 = vadd.f32 %v3570, %v3724
      %v3726 = vpop.f32.mrb[0].mxu0
      %v3727 = vpop.f32.mrb[0].mxu0
      %v3728 = vadd.f32 %v3570, %v3727
      %v3729 = vpop.f32.mrb[0].mxu0
      %3730 = vmatprep.mubr.bf16.mxu0 0
      %3731 = vmatmul.mubr.bf16.gmra.mrb[0].mxu0 %v3615
      %v3732 = vpop.f32.mrb[0].mxu0
      %v3733 = vadd.f32 %v3570, %v3732
      %v3734 = vpop.f32.mrb[0].mxu0
      %v3735 = vpop.f32.mrb[0].mxu0
      %v3736 = vadd.f32 %v3570, %v3735
      %v3737 = vpop.f32.mrb[0].mxu0
      %3738 = vmatprep.mubr.bf16.mxu0 0
      %3739 = vmatmul.mubr.bf16.gmra.mrb[0].mxu0 %v3617
      %v3740 = vpop.f32.mrb[0].mxu0
      %v3741 = vadd.f32 %v3570, %v3740
      %v3742 = vpop.f32.mrb[0].mxu0
      %v3743 = vpop.f32.mrb[0].mxu0
      %v3744 = vadd.f32 %v3570, %v3743
      %v3745 = vpop.f32.mrb[0].mxu0
      %3746 = vmatprep.mubr.bf16.mxu0 0
      %3747 = vmatmul.mubr.bf16.gmra.mrb[0].mxu0 %v3619
      %v3748 = vpop.f32.mrb[0].mxu0
      %v3749 = vadd.f32 %v3570, %v3748
      %v3750 = vpop.f32.mrb[0].mxu0
      %v3751 = vpop.f32.mrb[0].mxu0
      %v3752 = vadd.f32 %v3570, %v3751
      %v3753 = vpop.f32.mrb[0].mxu0
      %3754 = vmatprep.mubr.bf16.mxu0 0
      %3755 = vmatmul.mubr.bf16.gmra.mrb[0].mxu0 %v3621
      %v3756 = vpop.f32.mrb[0].mxu0
      %v3757 = vadd.f32 %v3570, %v3756
      %v3758 = vpop.f32.mrb[0].mxu0
      %v3759 = vpop.f32.mrb[0].mxu0
      %v3760 = vadd.f32 %v3570, %v3759
      %v3761 = vpop.f32.mrb[0].mxu0
      %3762 = vmatprep.mubr.bf16.mxu0 0
      %3763 = vmatmul.mubr.bf16.gmra.mrb[0].mxu0 %v3623
      %v3764 = vpop.f32.mrb[0].mxu0
      %v3765 = vadd.f32 %v3570, %v3764
      %v3766 = vpop.f32.mrb[0].mxu0
      %v3767 = vpop.f32.mrb[0].mxu0
      %v3768 = vadd.f32 %v3570, %v3767
      %v3769 = vpop.f32.mrb[0].mxu0
      %3770 = vmatprep.mubr.bf16.mxu0 0
      %3771 = vmatmul.mubr.bf16.gmra.mrb[0].mxu0 %v3625
      %v3772 = vpop.f32.mrb[0].mxu0
      %v3773 = vadd.f32 %v3570, %v3772
      %v3774 = vpop.f32.mrb[0].mxu0
      %v3775 = vpop.f32.mrb[0].mxu0
      %v3776 = vadd.f32 %v3570, %v3775
      %v3777 = vpop.f32.mrb[0].mxu0
      %3778 = vmatprep.mubr.bf16.mxu0 0
      %3779 = vmatmul.mubr.bf16.gmra.mrb[0].mxu0 %v3627
      %v3780 = vpop.f32.mrb[0].mxu0
      %v3781 = vadd.f32 %v3570, %v3780
      %v3782 = vpop.f32.mrb[0].mxu0
      %v3783 = vpop.f32.mrb[0].mxu0
      %v3784 = vadd.f32 %v3570, %v3783
      %v3785 = vpop.f32.mrb[0].mxu0
      %3786 = vmatprep.mubr.bf16.mxu0 0
      %3787 = vmatmul.mubr.bf16.gmra.mrb[0].mxu0 %v3629
      %v3788 = vpop.f32.mrb[0].mxu0
      %v3789 = vadd.f32 %v3570, %v3788
      %v3790 = vpop.f32.mrb[0].mxu0
      %v3791 = vpop.f32.mrb[0].mxu0
      %v3792 = vadd.f32 %v3570, %v3791
      %v3793 = vpop.f32.mrb[0].mxu0
      %3794 = vdwg.mxu0
      %vm3795 = vcmp.gt.f32.partialorder %v3669, 0.0
      %vm3796 = vcmp.gt.f32.partialorder %v3672, 0.0
      %vm3797 = vcmp.gt.f32.partialorder %v3677, 0.0
      %vm3798 = vcmp.gt.f32.partialorder %v3680, 0.0
      %vm3799 = vcmp.gt.f32.partialorder %v3685, 0.0
      %vm3800 = vcmp.gt.f32.partialorder %v3688, 0.0
      %vm3801 = vcmp.gt.f32.partialorder %v3693, 0.0
      %vm3802 = vcmp.gt.f32.partialorder %v3696, 0.0
      %vm3803 = vcmp.gt.f32.partialorder %v3701, 0.0
      %vm3804 = vcmp.gt.f32.partialorder %v3704, 0.0
      %vm3805 = vcmp.gt.f32.partialorder %v3709, 0.0
      %vm3806 = vcmp.gt.f32.partialorder %v3712, 0.0
      %vm3807 = vcmp.gt.f32.partialorder %v3717, 0.0
      %vm3808 = vcmp.gt.f32.partialorder %v3720, 0.0
      %vm3809 = vcmp.gt.f32.partialorder %v3725, 0.0
      %vm3810 = vcmp.gt.f32.partialorder %v3728, 0.0
      %vm3811 = vcmp.gt.f32.partialorder %v3733, 0.0
      %vm3812 = vcmp.gt.f32.partialorder %v3736, 0.0
      %vm3813 = vcmp.gt.f32.partialorder %v3741, 0.0
      %vm3814 = vcmp.gt.f32.partialorder %v3744, 0.0
      %vm3815 = vcmp.gt.f32.partialorder %v3749, 0.0
      %vm3816 = vcmp.gt.f32.partialorder %v3752, 0.0
      %vm3817 = vcmp.gt.f32.partialorder %v3757, 0.0
      %vm3818 = vcmp.gt.f32.partialorder %v3760, 0.0
      %vm3819 = vcmp.gt.f32.partialorder %v3765, 0.0
      %vm3820 = vcmp.gt.f32.partialorder %v3768, 0.0
      %vm3821 = vcmp.gt.f32.partialorder %v3773, 0.0
      %vm3822 = vcmp.gt.f32.partialorder %v3776, 0.0
      %vm3823 = vcmp.gt.f32.partialorder %v3781, 0.0
      %vm3824 = vcmp.gt.f32.partialorder %v3784, 0.0
      %vm3825 = vcmp.gt.f32.partialorder %v3789, 0.0
      %vm3826 = vcmp.gt.f32.partialorder %v3792, 0.0
      %v3827 = vmul.f32 %v3669, 0.2
      %v3828 = vmul.f32 %v3672, 0.2
      %v3829 = vmul.f32 %v3677, 0.2
      %v3830 = vmul.f32 %v3680, 0.2
      %v3831 = vmul.f32 %v3685, 0.2
      %v3832 = vmul.f32 %v3688, 0.2
      %v3833 = vmul.f32 %v3693, 0.2
      %v3834 = vmul.f32 %v3696, 0.2
      %v3835 = vmul.f32 %v3701, 0.2
      %v3836 = vmul.f32 %v3704, 0.2
      %v3837 = vmul.f32 %v3709, 0.2
      %v3838 = vmul.f32 %v3712, 0.2
      %v3839 = vmul.f32 %v3717, 0.2
      %v3840 = vmul.f32 %v3720, 0.2
      %v3841 = vmul.f32 %v3725, 0.2
      %v3842 = vmul.f32 %v3728, 0.2
      %v3843 = vmul.f32 %v3733, 0.2
      %v3844 = vmul.f32 %v3736, 0.2
      %v3845 = vmul.f32 %v3741, 0.2
      %v3846 = vmul.f32 %v3744, 0.2
      %v3847 = vmul.f32 %v3749, 0.2
      %v3848 = vmul.f32 %v3752, 0.2
      %v3849 = vmul.f32 %v3757, 0.2
      %v3850 = vmul.f32 %v3760, 0.2
      %v3851 = vmul.f32 %v3765, 0.2
      %v3852 = vmul.f32 %v3768, 0.2
      %v3853 = vmul.f32 %v3773, 0.2
      %v3854 = vmul.f32 %v3776, 0.2
      %v3855 = vmul.f32 %v3781, 0.2
      %v3856 = vmul.f32 %v3784, 0.2
      %v3857 = vmul.f32 %v3789, 0.2
      %v3858 = vmul.f32 %v3792, 0.2
      %v3859 = vsel %vm3795, %v3669, %v3827
      %v3860 = vsel %vm3796, %v3672, %v3828
      %v3861 = vsel %vm3797, %v3677, %v3829
      %v3862 = vsel %vm3798, %v3680, %v3830
      %v3863 = vsel %vm3799, %v3685, %v3831
      %v3864 = vsel %vm3800, %v3688, %v3832
      %v3865 = vsel %vm3801, %v3693, %v3833
      %v3866 = vsel %vm3802, %v3696, %v3834
      %v3867 = vsel %vm3803, %v3701, %v3835
      %v3868 = vsel %vm3804, %v3704, %v3836
      %v3869 = vsel %vm3805, %v3709, %v3837
      %v3870 = vsel %vm3806, %v3712, %v3838
      %v3871 = vsel %vm3807, %v3717, %v3839
      %v3872 = vsel %vm3808, %v3720, %v3840
      %v3873 = vsel %vm3809, %v3725, %v3841
      %v3874 = vsel %vm3810, %v3728, %v3842
      %v3875 = vsel %vm3811, %v3733, %v3843
      %v3876 = vsel %vm3812, %v3736, %v3844
      %v3877 = vsel %vm3813, %v3741, %v3845
      %v3878 = vsel %vm3814, %v3744, %v3846
      %v3879 = vsel %vm3815, %v3749, %v3847
      %v3880 = vsel %vm3816, %v3752, %v3848
      %v3881 = vsel %vm3817, %v3757, %v3849
      %v3882 = vsel %vm3818, %v3760, %v3850
      %v3883 = vsel %vm3819, %v3765, %v3851
      %v3884 = vsel %vm3820, %v3768, %v3852
      %v3885 = vsel %vm3821, %v3773, %v3853
      %v3886 = vsel %vm3822, %v3776, %v3854
      %v3887 = vsel %vm3823, %v3781, %v3855
      %v3888 = vsel %vm3824, %v3784, %v3856
      %v3889 = vsel %vm3825, %v3789, %v3857
      %v3890 = vsel %vm3826, %v3792, %v3858
      %v3891 = vadd.f32 %v3859, %v3861
      %v3892 = vadd.f32 %v3860, %v3862
      %v3893 = vadd.f32 %v3863, %v3865
      %v3894 = vadd.f32 %v3864, %v3866
      %v3895 = vadd.f32 %v3867, %v3869
      %v3896 = vadd.f32 %v3868, %v3870
      %v3897 = vadd.f32 %v3871, %v3873
      %v3898 = vadd.f32 %v3872, %v3874
      %v3899 = vadd.f32 %v3875, %v3877
      %v3900 = vadd.f32 %v3876, %v3878
      %v3901 = vadd.f32 %v3879, %v3881
      %v3902 = vadd.f32 %v3880, %v3882
      %v3903 = vadd.f32 %v3883, %v3885
      %v3904 = vadd.f32 %v3884, %v3886
      %v3905 = vadd.f32 %v3887, %v3889
      %v3906 = vadd.f32 %v3888, %v3890
      %3907 = vst.msk [vmem:[#allocation3] sm:$0xff] %vm2072, %v3891
      %3908 = vst.msk [vmem:[#allocation3 + $0x8] sm:$0xff] %vm2072, %v3892
      %3909 = vst.msk [vmem:[#allocation3 + $0x10] sm:$0xff] %vm2072, %v3893
      %3910 = vst.msk [vmem:[#allocation3 + $0x18] sm:$0xff] %vm2072, %v3894
      %3911 = vst.msk [vmem:[#allocation3 + $0x20] sm:$0xff] %vm2072, %v3895
      %3912 = vst.msk [vmem:[#allocation3 + $0x28] sm:$0xff] %vm2072, %v3896
      %3913 = vst.msk [vmem:[#allocation3 + $0x30] sm:$0xff] %vm2072, %v3897
      %3914 = vst.msk [vmem:[#allocation3 + $0x38] sm:$0xff] %vm2072, %v3898
      %3915 = vst.msk [vmem:[#allocation3 + $0x40] sm:$0xff] %vm2072, %v3899
      %3916 = vst.msk [vmem:[#allocation3 + $0x48] sm:$0xff] %vm2072, %v3900
      %3917 = vst.msk [vmem:[#allocation3 + $0x50] sm:$0xff] %vm2072, %v3901
      %3918 = vst.msk [vmem:[#allocation3 + $0x58] sm:$0xff] %vm2072, %v3902
      %3919 = vst.msk [vmem:[#allocation3 + $0x60] sm:$0xff] %vm2072, %v3903
      %3920 = vst.msk [vmem:[#allocation3 + $0x68] sm:$0xff] %vm2072, %v3904
      %3921 = vst.msk [vmem:[#allocation3 + $0x70] sm:$0xff] %vm2072, %v3905
      %3922 = vst.msk [vmem:[#allocation3 + $0x78] sm:$0xff] %vm2072, %v3906
      %v3923 = vld [vmem:[#allocation3] ss:$2 sm:$0xff]
      %s3924 = scalar_lea.vmem [#allocation3], 16
      %v3925 = vld [vmem:[%s3924] ss:$2 sm:$0xff]
      %s3926 = scalar_lea.vmem [#allocation3], 32
      %v3927 = vld [vmem:[%s3926] ss:$2 sm:$0xff]
      %s3928 = scalar_lea.vmem [#allocation3], 48
      %v3929 = vld [vmem:[%s3928] ss:$2 sm:$0xff]
      %s3930 = scalar_lea.vmem [#allocation3], 64
      %v3931 = vld [vmem:[%s3930] ss:$2 sm:$0xff]
      %s3932 = scalar_lea.vmem [#allocation3], 80
      %v3933 = vld [vmem:[%s3932] ss:$2 sm:$0xff]
      %s3934 = scalar_lea.vmem [#allocation3], 96
      %v3935 = vld [vmem:[%s3934] ss:$2 sm:$0xff]
      %s3936 = scalar_lea.vmem [#allocation3], 112
      %v3937 = vld [vmem:[%s3936] ss:$2 sm:$0xff]
      %s3938 = scalar_lea.vmem [#allocation3], 1
      %v3939 = vld [vmem:[%s3938] ss:$2 sm:$0xff]
      %s3940 = scalar_lea.vmem [#allocation3], 17
      %v3941 = vld [vmem:[%s3940] ss:$2 sm:$0xff]
      %s3942 = scalar_lea.vmem [#allocation3], 33
      %v3943 = vld [vmem:[%s3942] ss:$2 sm:$0xff]
      %s3944 = scalar_lea.vmem [#allocation3], 49
      %v3945 = vld [vmem:[%s3944] ss:$2 sm:$0xff]
      %s3946 = scalar_lea.vmem [#allocation3], 65
      %v3947 = vld [vmem:[%s3946] ss:$2 sm:$0xff]
      %s3948 = scalar_lea.vmem [#allocation3], 81
      %v3949 = vld [vmem:[%s3948] ss:$2 sm:$0xff]
      %s3950 = scalar_lea.vmem [#allocation3], 97
      %v3951 = vld [vmem:[%s3950] ss:$2 sm:$0xff]
      %s3952 = scalar_lea.vmem [#allocation3], 113
      %v3953 = vld [vmem:[%s3952] ss:$2 sm:$0xff]
      %v3954 = vadd.f32 %v3923, %v3939
      %v3955 = vadd.f32 %v3925, %v3941
      %v3956 = vadd.f32 %v3927, %v3943
      %v3957 = vadd.f32 %v3929, %v3945
      %v3958 = vadd.f32 %v3931, %v3947
      %v3959 = vadd.f32 %v3933, %v3949
      %v3960 = vadd.f32 %v3935, %v3951
      %v3961 = vadd.f32 %v3937, %v3953
      %v3962 = vmul.f32 %v3954, 0.25
      %v3963 = vmul.f32 %v3955, 0.25
      %v3964 = vmul.f32 %v3956, 0.25
      %v3965 = vmul.f32 %v3957, 0.25
      %v3966 = vmul.f32 %v3958, 0.25
      %v3967 = vmul.f32 %v3959, 0.25
      %v3968 = vmul.f32 %v3960, 0.25
      %v3969 = vmul.f32 %v3961, 0.25
      %v3970 = vadd.f32 %v1011, %v1013
      %v3971 = vadd.f32 %v1012, %v1014
      %v3972 = vadd.f32 %v1015, %v1017
      %v3973 = vadd.f32 %v1016, %v1018
      %v3974 = vadd.f32 %v1019, %v1021
      %v3975 = vadd.f32 %v1020, %v1022
      %v3976 = vadd.f32 %v1023, %v1025
      %v3977 = vadd.f32 %v1024, %v1026
      %v3978 = vadd.f32 %v1027, %v1029
      %v3979 = vadd.f32 %v1028, %v1030
      %v3980 = vadd.f32 %v1031, %v1033
      %v3981 = vadd.f32 %v1032, %v1034
      %v3982 = vadd.f32 %v1035, %v1037
      %v3983 = vadd.f32 %v1036, %v1038
      %v3984 = vadd.f32 %v1039, %v1041
      %v3985 = vadd.f32 %v1040, %v1042
      %3986 = vst.msk [vmem:[#allocation4] sm:$0xff] %vm1067, %v3970
      %3987 = vst.msk [vmem:[#allocation4 + $0x8] sm:$0xff] %vm1067, %v3971
      %3988 = vst.msk [vmem:[#allocation4 + $0x10] sm:$0xff] %vm1067, %v3972
      %3989 = vst.msk [vmem:[#allocation4 + $0x18] sm:$0xff] %vm1067, %v3973
      %3990 = vst.msk [vmem:[#allocation4 + $0x20] sm:$0xff] %vm1067, %v3974
      %3991 = vst.msk [vmem:[#allocation4 + $0x28] sm:$0xff] %vm1067, %v3975
      %3992 = vst.msk [vmem:[#allocation4 + $0x30] sm:$0xff] %vm1067, %v3976
      %3993 = vst.msk [vmem:[#allocation4 + $0x38] sm:$0xff] %vm1067, %v3977
      %3994 = vst.msk [vmem:[#allocation4 + $0x40] sm:$0xff] %vm1067, %v3978
      %3995 = vst.msk [vmem:[#allocation4 + $0x48] sm:$0xff] %vm1067, %v3979
      %3996 = vst.msk [vmem:[#allocation4 + $0x50] sm:$0xff] %vm1067, %v3980
      %3997 = vst.msk [vmem:[#allocation4 + $0x58] sm:$0xff] %vm1067, %v3981
      %3998 = vst.msk [vmem:[#allocation4 + $0x60] sm:$0xff] %vm1067, %v3982
      %3999 = vst.msk [vmem:[#allocation4 + $0x68] sm:$0xff] %vm1067, %v3983
      %4000 = vst.msk [vmem:[#allocation4 + $0x70] sm:$0xff] %vm1067, %v3984
      %4001 = vst.msk [vmem:[#allocation4 + $0x78] sm:$0xff] %vm1067, %v3985
      %v4002 = vld [vmem:[#allocation4] ss:$2 sm:$0xff]
      %s4003 = scalar_lea.vmem [#allocation4], 16
      %v4004 = vld [vmem:[%s4003] ss:$2 sm:$0xff]
      %s4005 = scalar_lea.vmem [#allocation4], 32
      %v4006 = vld [vmem:[%s4005] ss:$2 sm:$0xff]
      %s4007 = scalar_lea.vmem [#allocation4], 48
      %v4008 = vld [vmem:[%s4007] ss:$2 sm:$0xff]
      %s4009 = scalar_lea.vmem [#allocation4], 64
      %v4010 = vld [vmem:[%s4009] ss:$2 sm:$0xff]
      %s4011 = scalar_lea.vmem [#allocation4], 80
      %v4012 = vld [vmem:[%s4011] ss:$2 sm:$0xff]
      %s4013 = scalar_lea.vmem [#allocation4], 96
      %v4014 = vld [vmem:[%s4013] ss:$2 sm:$0xff]
      %s4015 = scalar_lea.vmem [#allocation4], 112
      %v4016 = vld [vmem:[%s4015] ss:$2 sm:$0xff]
      %s4017 = scalar_lea.vmem [#allocation4], 1
      %v4018 = vld [vmem:[%s4017] ss:$2 sm:$0xff]
      %s4019 = scalar_lea.vmem [#allocation4], 17
      %v4020 = vld [vmem:[%s4019] ss:$2 sm:$0xff]
      %s4021 = scalar_lea.vmem [#allocation4], 33
      %v4022 = vld [vmem:[%s4021] ss:$2 sm:$0xff]
      %s4023 = scalar_lea.vmem [#allocation4], 49
      %v4024 = vld [vmem:[%s4023] ss:$2 sm:$0xff]
      %s4025 = scalar_lea.vmem [#allocation4], 65
      %v4026 = vld [vmem:[%s4025] ss:$2 sm:$0xff]
      %s4027 = scalar_lea.vmem [#allocation4], 81
      %v4028 = vld [vmem:[%s4027] ss:$2 sm:$0xff]
      %s4029 = scalar_lea.vmem [#allocation4], 97
      %v4030 = vld [vmem:[%s4029] ss:$2 sm:$0xff]
      %s4031 = scalar_lea.vmem [#allocation4], 113
      %v4032 = vld [vmem:[%s4031] ss:$2 sm:$0xff]
      %v4033 = vadd.f32 %v4002, %v4018
      %v4034 = vadd.f32 %v4004, %v4020
      %v4035 = vadd.f32 %v4006, %v4022
      %v4036 = vadd.f32 %v4008, %v4024
      %v4037 = vadd.f32 %v4010, %v4026
      %v4038 = vadd.f32 %v4012, %v4028
      %v4039 = vadd.f32 %v4014, %v4030
      %v4040 = vadd.f32 %v4016, %v4032
      %v4041 = vmul.f32 %v4033, 0.25
      %v4042 = vmul.f32 %v4034, 0.25
      %v4043 = vmul.f32 %v4035, 0.25
      %v4044 = vmul.f32 %v4036, 0.25
      %v4045 = vmul.f32 %v4037, 0.25
      %v4046 = vmul.f32 %v4038, 0.25
      %v4047 = vmul.f32 %v4039, 0.25
      %v4048 = vmul.f32 %v4040, 0.25
      %v4049 = vpack.c.bf16 %v4042, %v4041
      %v4050 = vpack.c.bf16 %v4044, %v4043
      %v4051 = vpack.c.bf16 %v4046, %v4045
      %v4052 = vpack.c.bf16 %v4048, %v4047
      %v4053 = vld [vmem:[%s4] sm:$0x3]
      %v4054 = vld [vmem:[%s5] sm:$0x1]
      %v4056 = vlaneseq
      %v4057 = vshrl.u32 %v4056, 7
      %v4058 = vsub.s32 0, %v4057
      %v4059 = vrot.slane %v4054, %v4058
      %v4062 = vsel %vm1067, %v4049, 0
      %v4065 = vsel %vm1067, %v4050, 0
      %v4068 = vsel %vm1067, %v4051, 0
      %v4071 = vsel %vm1067, %v4052, 0
      %v4074 = vand.u32 %v4053, %v1119
      %4076 = vmatprep.subr.bf16.mxu0 0
      %4077 = vmatpush1.bf16.msra.mxu0 %v4074
      %4078 = vmatprep.subr.bf16.mxu0 0
      %4079 = vmatpush1.bf16.msra.mxu0 0
      %4080 = vmatprep.subr.bf16.mxu0 0
      %4081 = vmatpush1.bf16.msra.mxu0 0
      %4082 = vmatprep.subr.bf16.mxu0 0
      %4083 = vmatpush1.bf16.msra.mxu0 0
      %4084 = vmatprep.subr.bf16.mxu0 0
      %4085 = vmatpush1.bf16.msra.mxu0 0
      %4086 = vmatprep.subr.bf16.mxu0 0
      %4087 = vmatpush1.bf16.msra.mxu0 0
      %4088 = vmatprep.subr.bf16.mxu0 0
      %4089 = vmatpush1.bf16.msra.mxu0 0
      %4090 = vmatprep.subr.bf16.mxu0 0
      %4091 = vmatpush1.bf16.msra.mxu0 0
      %4092 = vmatprep.subr.bf16.mxu0 0
      %4093 = vmatpush1.bf16.msra.mxu0 0
      %4094 = vmatprep.subr.bf16.mxu0 0
      %4095 = vmatpush1.bf16.msra.mxu0 0
      %4096 = vmatprep.subr.bf16.mxu0 0
      %4097 = vmatpush1.bf16.msra.mxu0 0
      %4098 = vmatprep.subr.bf16.mxu0 0
      %4099 = vmatpush1.bf16.msra.mxu0 0
      %4100 = vmatprep.subr.bf16.mxu0 0
      %4101 = vmatpush1.bf16.msra.mxu0 0
      %4102 = vmatprep.subr.bf16.mxu0 0
      %4103 = vmatpush1.bf16.msra.mxu0 0
      %4104 = vmatprep.subr.bf16.mxu0 0
      %4105 = vmatpush1.bf16.msra.mxu0 0
      %4106 = vmatprep.subr.bf16.mxu0 0
      %4107 = vmatpush1.bf16.msra.mxu0 0
      %4108 = vmatprep.mubr.bf16.mxu0 0
      %4109 = vmatmul.mubr.bf16.gmra.mrb[0].mxu0 %v4062
      %v4110 = vpop.f32.mrb[0].mxu0
      %v4111 = vadd.f32 %v4059, %v4110
      %v4112 = vpop.f32.mrb[0].mxu0
      %v4113 = vpop.f32.mrb[0].mxu0
      %v4114 = vadd.f32 %v4059, %v4113
      %v4115 = vpop.f32.mrb[0].mxu0
      %4116 = vmatprep.mubr.bf16.mxu0 0
      %4117 = vmatmul.mubr.bf16.gmra.mrb[0].mxu0 %v4065
      %v4118 = vpop.f32.mrb[0].mxu0
      %v4119 = vadd.f32 %v4059, %v4118
      %v4120 = vpop.f32.mrb[0].mxu0
      %v4121 = vpop.f32.mrb[0].mxu0
      %v4122 = vadd.f32 %v4059, %v4121
      %v4123 = vpop.f32.mrb[0].mxu0
      %4124 = vmatprep.mubr.bf16.mxu0 0
      %4125 = vmatmul.mubr.bf16.gmra.mrb[0].mxu0 %v4068
      %v4126 = vpop.f32.mrb[0].mxu0
      %v4127 = vadd.f32 %v4059, %v4126
      %v4128 = vpop.f32.mrb[0].mxu0
      %v4129 = vpop.f32.mrb[0].mxu0
      %v4130 = vadd.f32 %v4059, %v4129
      %v4131 = vpop.f32.mrb[0].mxu0
      %4132 = vmatprep.mubr.bf16.mxu0 0
      %4133 = vmatmul.mubr.bf16.gmra.mrb[0].mxu0 %v4071
      %v4134 = vpop.f32.mrb[0].mxu0
      %v4135 = vadd.f32 %v4059, %v4134
      %v4136 = vpop.f32.mrb[0].mxu0
      %v4137 = vpop.f32.mrb[0].mxu0
      %v4138 = vadd.f32 %v4059, %v4137
      %v4139 = vpop.f32.mrb[0].mxu0
      %4140 = vdwg.mxu0
      %vm4141 = vcmp.gt.f32.partialorder %v4111, 0.0
      %vm4142 = vcmp.gt.f32.partialorder %v4114, 0.0
      %vm4143 = vcmp.gt.f32.partialorder %v4119, 0.0
      %vm4144 = vcmp.gt.f32.partialorder %v4122, 0.0
      %vm4145 = vcmp.gt.f32.partialorder %v4127, 0.0
      %vm4146 = vcmp.gt.f32.partialorder %v4130, 0.0
      %vm4147 = vcmp.gt.f32.partialorder %v4135, 0.0
      %vm4148 = vcmp.gt.f32.partialorder %v4138, 0.0
      %v4149 = vmul.f32 %v4111, 0.2
      %v4150 = vmul.f32 %v4114, 0.2
      %v4151 = vmul.f32 %v4119, 0.2
      %v4152 = vmul.f32 %v4122, 0.2
      %v4153 = vmul.f32 %v4127, 0.2
      %v4154 = vmul.f32 %v4130, 0.2
      %v4155 = vmul.f32 %v4135, 0.2
      %v4156 = vmul.f32 %v4138, 0.2
      %v4157 = vsel %vm4141, %v4111, %v4149
      %v4158 = vsel %vm4142, %v4114, %v4150
      %v4159 = vsel %vm4143, %v4119, %v4151
      %v4160 = vsel %vm4144, %v4122, %v4152
      %v4161 = vsel %vm4145, %v4127, %v4153
      %v4162 = vsel %vm4146, %v4130, %v4154
      %v4163 = vsel %vm4147, %v4135, %v4155
      %v4164 = vsel %vm4148, %v4138, %v4156
      %s4165 = sld [smem:[#allocation5]]
      %v4166 = vstv %s4165
      %v4167 = vmul.f32 %v4166, %v3962
      %v4168 = vmul.f32 %v4166, %v3963
      %v4169 = vmul.f32 %v4166, %v3964
      %v4170 = vmul.f32 %v4166, %v3965
      %v4171 = vmul.f32 %v4166, %v3966
      %v4172 = vmul.f32 %v4166, %v3967
      %v4173 = vmul.f32 %v4166, %v3968
      %v4174 = vmul.f32 %v4166, %v3969
      %s4175 = ssub.f32 1.0, %s4165
      %v4176 = vstv %s4175
      %v4177 = vmul.f32 %v4176, %v4157
      %v4178 = vmul.f32 %v4176, %v4158
      %v4179 = vmul.f32 %v4176, %v4159
      %v4180 = vmul.f32 %v4176, %v4160
      %v4181 = vmul.f32 %v4176, %v4161
      %v4182 = vmul.f32 %v4176, %v4162
      %v4183 = vmul.f32 %v4176, %v4163
      %v4184 = vmul.f32 %v4176, %v4164
      %v4185 = vadd.f32 %v4167, %v4177
      %v4186 = vadd.f32 %v4168, %v4178
      %v4187 = vadd.f32 %v4169, %v4179
      %v4188 = vadd.f32 %v4170, %v4180
      %v4189 = vadd.f32 %v4171, %v4181
      %v4190 = vadd.f32 %v4172, %v4182
      %v4191 = vadd.f32 %v4173, %v4183
      %v4192 = vadd.f32 %v4174, %v4184
      %4193 = vst.msk [vmem:[%s360] sm:$0xff] %vm2072, %v4185
      %4194 = vst.msk [vmem:[%s360 + $0x8] sm:$0xff] %vm2072, %v4186
      %4195 = vst.msk [vmem:[%s360 + $0x10] sm:$0xff] %vm2072, %v4187
      %4196 = vst.msk [vmem:[%s360 + $0x18] sm:$0xff] %vm2072, %v4188
      %4197 = vst.msk [vmem:[%s360 + $0x20] sm:$0xff] %vm2072, %v4189
      %4198 = vst.msk [vmem:[%s360 + $0x28] sm:$0xff] %vm2072, %v4190
      %4199 = vst.msk [vmem:[%s360 + $0x30] sm:$0xff] %vm2072, %v4191
      %4200 = vst.msk [vmem:[%s360 + $0x38] sm:$0xff] %vm2072, %v4192
      %p4201 = scmp.lt.s32.totalorder %s22, 1
      %s4202 = scalar_select %p4201, %s22, 1
      %s4203 = smul.addr %s4202, 8
      %s4204 = smul.addr %s4203, 8
      %s4205 = scalar_lea.vmem %s10, %s4204
      // Predicated region
      $region61: #{_lambda_.3} parent=59 // pred_check
        %p4206 = pneg %p255
      $region62: #{_lambda_.3} parent=59 // pred_check_branch
        %4208 = sbr.rel (%p4206) target = $region64
      $region63: #{_lambda_.3} parent=59 // pred_region
        _
      $region64: #{_lambda_.3} parent=59 // pred_fallthru
        _
    $region60: #{_lambda_.3} parent=5 // pred_fallthru
      _
    %p4209 = scmp.le.s32.totalorder 2, %s17
    // Predicated region
    $region65: #{_lambda_.3} parent=5 // pred_check
      %p4210 = pneg %p4209
    $region66: #{_lambda_.3} parent=5 // pred_check_branch
      %4212 = sbr.rel (%p4210) target = $region68
    $region67: #{_lambda_.3} parent=5 // pred_region
      %s4213 = ssub.s32 %s17, 2
      // Predicated region
      $region69: #{_lambda_.3} parent=67 // pred_check
        %p4214 = pneg %p261
      $region70: #{_lambda_.3} parent=67 // pred_check_branch
        %4216 = sbr.rel (%p4214) target = $region72
      $region71: #{_lambda_.3} parent=67 // pred_region
        %p4217 = scmp.lt.s32.totalorder %s23, 1
        %s4218 = scalar_select %p4217, %s23, 1
        %s4219 = smul.addr %s4218, 8
        %s4220 = smul.addr %s4219, 8
        %s4221 = scalar_lea.vmem %s10, %s4220
      $region72: #{_lambda_.3} parent=67 // pred_fallthru
        _
    $region68: #{_lambda_.3} parent=5 // pred_fallthru
      _
  $region6: #{_lambda_.3} parent=0 // loop_footer
    %s21 = sadd.s32 1, %s17
  $region7: #{_lambda_.3} parent=0 // loop_footer_branch
    %16 = sbr.rel target = $region3
  $region8: #{_lambda_.3} parent=0 // loop_exit
    _

</llo_original>
